<compile_context>
chip_gen: v7x
topology: tpu7x:2x2x1
jax: 0.10.0
libtpu: 0.0.40
codegen_flags: <defaults>
</compile_context>

<pallas_src>
import functools

import jax
import jax.numpy as jnp
from jax.experimental import pallas as pl
from jax.experimental.pallas import tpu as pltpu


# ----------------------------------------------------------------------------
# Fused InceptionC kernel (one batch element per grid step)
# ----------------------------------------------------------------------------
def _inception_c_kernel(
    x_ref,                               # (1, H, W, Cin)  unpadded NHWC input block
    w1_ref, b1_ref,                      # branch1x1      : (Cin, 192) bf16, (1, 192) f32
    wa1_ref, ba1_ref,                    # branch7x7_1    : (Cin, c7)
    wa2_ref, ba2_ref,                    # branch7x7_2    : (7, c7, c7)   [1x7]
    wa3_ref, ba3_ref,                    # branch7x7_3    : (7, c7, 192)  [7x1]
    wb1_ref, bb1_ref,                    # branch7x7dbl_1 : (Cin, c7)
    wb2_ref, bb2_ref,                    # branch7x7dbl_2 : (7, c7, c7)   [7x1]
    wb3_ref, bb3_ref,                    # branch7x7dbl_3 : (7, c7, c7)   [1x7]
    wb4_ref, bb4_ref,                    # branch7x7dbl_4 : (7, c7, c7)   [7x1]
    wb5_ref, bb5_ref,                    # branch7x7dbl_5 : (7, c7, 192)  [1x7]
    wp_ref, bp_ref,                      # branch_pool 1x1: (Cin, 192)
    o_ref,                               # (1, 4, H, W, 192)
    cw_ref,                              # (H,   W+6, c7)  bf16 scratch canvas (1x7 input)
    ch_ref,                              # (H+6, W,   c7)  bf16 scratch canvas (7x1 input)
    cp_ref,                              # (H+2, W+2, 192) f32  scratch canvas (pool input)
    *, H, W, Cin, c7):
    f32 = jnp.float32
    bf16 = jnp.bfloat16
    odt = o_ref.dtype

    # Zero the canvases: the halo rings must be exact zeros (same-padding semantics); the
    # interiors are fully overwritten below before every read.
    cw_ref[...] = jnp.zeros_like(cw_ref)
    ch_ref[...] = jnp.zeros_like(ch_ref)
    cp_ref[...] = jnp.zeros_like(cp_ref)

    # One contiguous reshape + one bf16 cast of the input, reused by all four 1x1 matmuls.
    xb = x_ref[0].reshape(H * W, Cin).astype(bf16)          # (H*W, Cin) bf16

    def mm(lhs_bf16, w_ref):
        # bf16 x bf16 -> f32 accumulate on the MXU (BN scale already folded into w).
        return jnp.dot(lhs_bf16, w_ref[...], preferred_element_type=f32)

    def bias_relu(y, b_ref):
        return jnp.maximum(y + b_ref[...], 0.0)

    # ---- branch1x1: 1x1 conv, write back immediately ----------------------------
    b1 = bias_relu(mm(xb, w1_ref), b1_ref)                  # (H*W, 192) f32
    o_ref[0, 0] = b1.reshape(H, W, 192).astype(odt)

    # ---- branch_pool: 1x1 (scale folded) -> separable 3x3 avg -> +bias -> relu ---
    # Valid because the conv has no bias: avgpool(conv_s(x)) == conv_s(avgpool(x)).
    cp_ref[1:1 + H, 1:1 + W, :] = mm(xb, wp_ref).reshape(H, W, 192)
    cp = cp_ref[...]                                        # (H+2, W+2, 192) f32
    rows = cp[0:H, :, :] + cp[1:H + 1, :, :] + cp[2:H + 2, :, :]       # (H, W+2, 192)
    pool = rows[:, 0:W, :] + rows[:, 1:W + 1, :] + rows[:, 2:W + 2, :]  # (H, W, 192)
    pool = pool * (1.0 / 9.0)                               # count_include_pad=True
    o_ref[0, 3] = jnp.maximum(pool + bp_ref[...], 0.0).astype(odt)

    # ---- 7-tap separable conv: reads a zero-haloed canvas, interior-only output ---
    def conv7(canvas_ref, axis, w_ref, b_ref):
        t = canvas_ref[...]                                 # bf16
        cout = w_ref.shape[-1]
        acc = None
        for k in range(7):
            tap = t[k:k + H, :, :] if axis == 0 else t[:, k:k + W, :]
            d = jnp.dot(tap.reshape(H * W, c7), w_ref[k], preferred_element_type=f32)
            acc = d if acc is None else acc + d
        return bias_relu(acc, b_ref).reshape(H, W, cout)    # f32

    # ---- branch7x7: 1x1 -> 1x7 -> 7x1 (all intermediates stay on-chip, bf16) ------
    cw_ref[:, 3:3 + W, :] = bias_relu(mm(xb, wa1_ref), ba1_ref).reshape(H, W, c7).astype(bf16)
    a2 = conv7(cw_ref, 1, wa2_ref, ba2_ref)                 # (H, W, c7) f32
    ch_ref[3:3 + H, :, :] = a2.astype(bf16)
    o_ref[0, 1] = conv7(ch_ref, 0, wa3_ref, ba3_ref).astype(odt)

    # ---- branch7x7dbl: 1x1 -> 7x1 -> 1x7 -> 7x1 -> 1x7 (canvases ping-pong) -------
    ch_ref[3:3 + H, :, :] = bias_relu(mm(xb, wb1_ref), bb1_ref).reshape(H, W, c7).astype(bf16)
    cw_ref[:, 3:3 + W, :] = conv7(ch_ref, 0, wb2_ref, bb2_ref).astype(bf16)
    ch_ref[3:3 + H, :, :] = conv7(cw_ref, 1, wb3_ref, bb3_ref).astype(bf16)
    cw_ref[:, 3:3 + W, :] = conv7(ch_ref, 0, wb4_ref, bb4_ref).astype(bf16)
    o_ref[0, 2] = conv7(cw_ref, 1, wb5_ref, bb5_ref).astype(odt)


# ----------------------------------------------------------------------------
# Wrapper
# ----------------------------------------------------------------------------
def _fold_conv_bn(p):
    """Fold eval-BN scale into the conv weight (bf16), return (weight, bias(1,Cout) f32)."""
    w = p["w"] * p["scale"]                         # (kh, kw, Cin, Cout) * (Cout,)
    bias = p["bias"].reshape(1, -1).astype(jnp.float32)
    kh, kw, cin, cout = w.shape
    if kh == 1 and kw == 1:
        w2 = w.reshape(cin, cout)
    else:
        w2 = w.reshape(7, cin, cout)                # exactly one of (kh, kw) is 7
    return w2.astype(jnp.bfloat16), bias


def _vmem_limit_bytes():
    # Per-generation limit: headroom under v7x's 64 MiB, more room on 128 MiB chips.
    try:
        cap = int(pltpu.get_tpu_info().vmem_capacity_bytes)
        return max(32 * 1024 * 1024, min(cap - 8 * 1024 * 1024, 96 * 1024 * 1024))
    except Exception:
        return 48 * 1024 * 1024


def inception_c_forward(x_nchw, params):
    N, Cin, H, W = x_nchw.shape
    c7 = int(params["branch7x7_1"]["w"].shape[-1])

    # NCHW (PyTorch) -> NHWC (lane-dense channels). No padding copy in HBM: all halo
    # handling happens on zeroed VMEM scratch canvases inside the kernel.
    x = jnp.transpose(x_nchw, (0, 2, 3, 1))

    names = ["branch1x1",
             "branch7x7_1", "branch7x7_2", "branch7x7_3",
             "branch7x7dbl_1", "branch7x7dbl_2", "branch7x7dbl_3",
             "branch7x7dbl_4", "branch7x7dbl_5",
             "branch_pool"]
    operands = [x]
    for nm in names:
        w, b = _fold_conv_bn(params[nm])
        operands += [w, b]

    def const_spec(shape):
        nd = len(shape)
        return pl.BlockSpec(tuple(shape), lambda n, _nd=nd: (0,) * _nd)

    in_specs = [pl.BlockSpec((1, H, W, Cin), lambda n: (n, 0, 0, 0))]
    in_specs += [const_spec(op.shape) for op in operands[1:]]

    kernel = functools.partial(_inception_c_kernel, H=H, W=W, Cin=Cin, c7=c7)

    out5 = pl.pallas_call(
        kernel,
        out_shape=jax.ShapeDtypeStruct((N, 4, H, W, 192), x.dtype),
        grid=(N,),
        in_specs=in_specs,
        out_specs=pl.BlockSpec((1, 4, H, W, 192), lambda n: (n, 0, 0, 0, 0)),
        scratch_shapes=[
            pltpu.VMEM((H, W + 6, c7), jnp.bfloat16),      # 1x7-conv input canvas
            pltpu.VMEM((H + 6, W, c7), jnp.bfloat16),      # 7x1-conv input canvas
            pltpu.VMEM((H + 2, W + 2, 192), jnp.float32),  # avg-pool input canvas
        ],
        compiler_params=pltpu.CompilerParams(
            dimension_semantics=("parallel",),
            vmem_limit_bytes=_vmem_limit_bytes(),
        ),
    )(*operands)

    # (N, 4, H, W, 192) -> (N, 4, 192, H, W) -> (N, 768, H, W) == torch.cat(branches, dim=1)
    return jnp.transpose(out5, (0, 1, 4, 2, 3)).reshape(N, 4 * 192, H, W)


# ----------------------------------------------------------------------------
# Deterministic synthetic parameters (Conv weight + eval BN folded to scale/bias)
# ----------------------------------------------------------------------------
def make_basic_conv2d_params(key, cin, cout, kh, kw, eps=0.001):
    k_w, k_g, k_b, k_m, k_v = jax.random.split(key, 5)
    w = 0.1 * jax.random.normal(k_w, (cout, cin, kh, kw), jnp.float32)
    w = jnp.transpose(w, (2, 3, 1, 0))            # (Cout,Cin,kh,kw) -> (kh,kw,Cin,Cout)
    gamma = 1.0 + 0.1 * jax.random.normal(k_g, (cout,), jnp.float32)
    beta = 0.1 * jax.random.normal(k_b, (cout,), jnp.float32)
    running_mean = 0.1 * jax.random.normal(k_m, (cout,), jnp.float32)
    running_var = 1.0 + 0.1 * jnp.abs(jax.random.normal(k_v, (cout,), jnp.float32))
    scale = gamma / jnp.sqrt(running_var + eps)
    bias = beta - running_mean * scale
    return {"w": w, "scale": scale, "bias": bias, "kh": kh, "kw": kw}


def make_inception_c_params(key, in_channels, channels_7x7):
    c7 = channels_7x7
    keys = jax.random.split(key, 10)
    return {
        "branch1x1":      make_basic_conv2d_params(keys[0], in_channels, 192, 1, 1),
        "branch7x7_1":    make_basic_conv2d_params(keys[1], in_channels, c7, 1, 1),
        "branch7x7_2":    make_basic_conv2d_params(keys[2], c7, c7, 1, 7),
        "branch7x7_3":    make_basic_conv2d_params(keys[3], c7, 192, 7, 1),
        "branch7x7dbl_1": make_basic_conv2d_params(keys[4], in_channels, c7, 1, 1),
        "branch7x7dbl_2": make_basic_conv2d_params(keys[5], c7, c7, 7, 1),
        "branch7x7dbl_3": make_basic_conv2d_params(keys[6], c7, c7, 1, 7),
        "branch7x7dbl_4": make_basic_conv2d_params(keys[7], c7, c7, 7, 1),
        "branch7x7dbl_5": make_basic_conv2d_params(keys[8], c7, 192, 1, 7),
        "branch_pool":    make_basic_conv2d_params(keys[9], in_channels, 192, 1, 1),
    }


# ----------------------------------------------------------------------------
# Pure-JAX reference (mirrors the PyTorch module op-for-op, f32) for validation
# ----------------------------------------------------------------------------
def _conv_bn_relu_ref(x_nhwc, p):
    kh, kw = p["kh"], p["kw"]
    y = jax.lax.conv_general_dilated(
        x_nhwc, p["w"], window_strides=(1, 1),
        padding=((kh // 2, kh // 2), (kw // 2, kw // 2)),
        dimension_numbers=("NHWC", "HWIO", "NHWC"),
        precision=jax.lax.Precision.HIGHEST)
    return jnp.maximum(y * p["scale"] + p["bias"], 0.0)


def _avg_pool3x3_ref(x_nhwc):
    H, W = x_nhwc.shape[1], x_nhwc.shape[2]
    xpad = jnp.pad(x_nhwc, ((0, 0), (1, 1), (1, 1), (0, 0)))
    acc = jnp.zeros_like(x_nhwc)
    for i in range(3):
        for j in range(3):
            acc = acc + xpad[:, i:i + H, j:j + W, :]
    return acc / 9.0


def inception_c_reference(x_nchw, params):
    x = jnp.transpose(x_nchw, (0, 2, 3, 1))
    b1 = _conv_bn_relu_ref(x, params["branch1x1"])
    b7 = _conv_bn_relu_ref(x, params["branch7x7_1"])
    b7 = _conv_bn_relu_ref(b7, params["branch7x7_2"])
    b7 = _conv_bn_relu_ref(b7, params["branch7x7_3"])
    bd = _conv_bn_relu_ref(x, params["branch7x7dbl_1"])
    bd = _conv_bn_relu_ref(bd, params["branch7x7dbl_2"])
    bd = _conv_bn_relu_ref(bd, params["branch7x7dbl_3"])
    bd = _conv_bn_relu_ref(bd, params["branch7x7dbl_4"])
    bd = _conv_bn_relu_ref(bd, params["branch7x7dbl_5"])
    bp = _conv_bn_relu_ref(_avg_pool3x3_ref(x), params["branch_pool"])
    out = jnp.concatenate([b1, b7, bd, bp], axis=-1)
    return jnp.transpose(out, (0, 3, 1, 2))


if __name__ == "__main__":
    key = jax.random.PRNGKey(0)
    k_x, k_p = jax.random.split(key)

    N, C_in, H, W = 2, 8, 8, 8
    channels_7x7 = 8

    x = jax.random.normal(k_x, (N, C_in, H, W), jnp.float32)
    params = make_inception_c_params(k_p, C_in, channels_7x7)

    out = jax.block_until_ready(inception_c_forward(x, params))

    assert out.shape == (N, 192 * 4, H, W), out.shape
    assert out.dtype == jnp.float32
    assert bool(jnp.all(out >= 0.0))  # ReLU outputs

    ref = jax.block_until_ready(inception_c_reference(x, params))
    max_err = float(jnp.max(jnp.abs(out - ref)))
    # Tolerance loosened vs the f32 reference because the kernel uses bf16 MXU operands
    # (weights and activations) with f32 accumulation.
    assert max_err < 6e-2, f"max |pallas - reference| = {max_err}"

    print("KERNEL_OK")
</pallas_src>

<mosaic_0001>
module attributes {stable_mosaic.version = 11 : i64} {
  func.func @_inception_c_kernel(%arg0: i32, %arg1: memref<1x8x8x8xf32, #tpu.memory_space<vmem>>, %arg2: memref<8x192xbf16, #tpu.memory_space<vmem>>, %arg3: memref<1x192xf32, #tpu.memory_space<vmem>>, %arg4: memref<8x8xbf16, #tpu.memory_space<vmem>>, %arg5: memref<1x8xf32, #tpu.memory_space<vmem>>, %arg6: memref<7x8x8xbf16, #tpu.memory_space<vmem>>, %arg7: memref<1x8xf32, #tpu.memory_space<vmem>>, %arg8: memref<7x8x192xbf16, #tpu.memory_space<vmem>>, %arg9: memref<1x192xf32, #tpu.memory_space<vmem>>, %arg10: memref<8x8xbf16, #tpu.memory_space<vmem>>, %arg11: memref<1x8xf32, #tpu.memory_space<vmem>>, %arg12: memref<7x8x8xbf16, #tpu.memory_space<vmem>>, %arg13: memref<1x8xf32, #tpu.memory_space<vmem>>, %arg14: memref<7x8x8xbf16, #tpu.memory_space<vmem>>, %arg15: memref<1x8xf32, #tpu.memory_space<vmem>>, %arg16: memref<7x8x8xbf16, #tpu.memory_space<vmem>>, %arg17: memref<1x8xf32, #tpu.memory_space<vmem>>, %arg18: memref<7x8x192xbf16, #tpu.memory_space<vmem>>, %arg19: memref<1x192xf32, #tpu.memory_space<vmem>>, %arg20: memref<8x192xbf16, #tpu.memory_space<vmem>>, %arg21: memref<1x192xf32, #tpu.memory_space<vmem>>, %arg22: memref<1x4x8x8x192xf32, #tpu.memory_space<vmem>>, %arg23: memref<8x14x8xbf16, #tpu.memory_space<vmem>>, %arg24: memref<14x8x8xbf16, #tpu.memory_space<vmem>>, %arg25: memref<10x10x192xf32, #tpu.memory_space<vmem>>) attributes {dimension_semantics = [#tpu.dimension_semantics<parallel>], iteration_bounds = array<i64: 2>, scalar_prefetch = 0 : i64, scratch_operands = 3 : i64, tpu.core_type = #tpu.core_type<tc>, window_params = [{transform_indices = @transform_0, window_bounds = array<i64: 1, 8, 8, 8>}, {pipeline_mode = #tpu.pipeline_mode<synchronous>, transform_indices = @transform_1, window_bounds = array<i64: 8, 192>}, {pipeline_mode = #tpu.pipeline_mode<synchronous>, transform_indices = @transform_2, window_bounds = array<i64: 1, 192>}, {pipeline_mode = #tpu.pipeline_mode<synchronous>, transform_indices = @transform_3, window_bounds = array<i64: 8, 8>}, {pipeline_mode = #tpu.pipeline_mode<synchronous>, transform_indices = @transform_4, window_bounds = array<i64: 1, 8>}, {pipeline_mode = #tpu.pipeline_mode<synchronous>, transform_indices = @transform_5, window_bounds = array<i64: 7, 8, 8>}, {pipeline_mode = #tpu.pipeline_mode<synchronous>, transform_indices = @transform_6, window_bounds = array<i64: 1, 8>}, {pipeline_mode = #tpu.pipeline_mode<synchronous>, transform_indices = @transform_7, window_bounds = array<i64: 7, 8, 192>}, {pipeline_mode = #tpu.pipeline_mode<synchronous>, transform_indices = @transform_8, window_bounds = array<i64: 1, 192>}, {pipeline_mode = #tpu.pipeline_mode<synchronous>, transform_indices = @transform_9, window_bounds = array<i64: 8, 8>}, {pipeline_mode = #tpu.pipeline_mode<synchronous>, transform_indices = @transform_10, window_bounds = array<i64: 1, 8>}, {pipeline_mode = #tpu.pipeline_mode<synchronous>, transform_indices = @transform_11, window_bounds = array<i64: 7, 8, 8>}, {pipeline_mode = #tpu.pipeline_mode<synchronous>, transform_indices = @transform_12, window_bounds = array<i64: 1, 8>}, {pipeline_mode = #tpu.pipeline_mode<synchronous>, transform_indices = @transform_13, window_bounds = array<i64: 7, 8, 8>}, {pipeline_mode = #tpu.pipeline_mode<synchronous>, transform_indices = @transform_14, window_bounds = array<i64: 1, 8>}, {pipeline_mode = #tpu.pipeline_mode<synchronous>, transform_indices = @transform_15, window_bounds = array<i64: 7, 8, 8>}, {pipeline_mode = #tpu.pipeline_mode<synchronous>, transform_indices = @transform_16, window_bounds = array<i64: 1, 8>}, {pipeline_mode = #tpu.pipeline_mode<synchronous>, transform_indices = @transform_17, window_bounds = array<i64: 7, 8, 192>}, {pipeline_mode = #tpu.pipeline_mode<synchronous>, transform_indices = @transform_18, window_bounds = array<i64: 1, 192>}, {pipeline_mode = #tpu.pipeline_mode<synchronous>, transform_indices = @transform_19, window_bounds = array<i64: 8, 192>}, {pipeline_mode = #tpu.pipeline_mode<synchronous>, transform_indices = @transform_20, window_bounds = array<i64: 1, 192>}, {transform_indices = @transform_21, window_bounds = array<i64: 1, 4, 8, 8, 192>}]} {
    %cst = arith.constant 0.000000e+00 : bf16
    %0 = vector.broadcast %cst : bf16 to vector<8x14x8xbf16>
    %c0 = arith.constant 0 : index
    %c0_0 = arith.constant 0 : index
    %c0_1 = arith.constant 0 : index
    %1 = vector.load %arg23[%c0, %c0_0, %c0_1] : memref<8x14x8xbf16, #tpu.memory_space<vmem>>, vector<8x14x8xbf16>
    tpu.vector_store %arg23[%c0, %c0_0, %c0_1], %0 {strides = array<i32>} : memref<8x14x8xbf16, #tpu.memory_space<vmem>>, vector<8x14x8xbf16>,
    %cst_2 = arith.constant 0.000000e+00 : bf16
    %2 = vector.broadcast %cst_2 : bf16 to vector<14x8x8xbf16>
    %c0_3 = arith.constant 0 : index
    %c0_4 = arith.constant 0 : index
    %c0_5 = arith.constant 0 : index
    %3 = vector.load %arg24[%c0_3, %c0_4, %c0_5] : memref<14x8x8xbf16, #tpu.memory_space<vmem>>, vector<14x8x8xbf16>
    tpu.vector_store %arg24[%c0_3, %c0_4, %c0_5], %2 {strides = array<i32>} : memref<14x8x8xbf16, #tpu.memory_space<vmem>>, vector<14x8x8xbf16>,
    %cst_6 = arith.constant 0.000000e+00 : f32
    %4 = vector.broadcast %cst_6 : f32 to vector<10x10x192xf32>
    %c0_7 = arith.constant 0 : index
    %c0_8 = arith.constant 0 : index
    %c0_9 = arith.constant 0 : index
    %5 = vector.load %arg25[%c0_7, %c0_8, %c0_9] : memref<10x10x192xf32, #tpu.memory_space<vmem>>, vector<10x10x192xf32>
    tpu.vector_store %arg25[%c0_7, %c0_8, %c0_9], %4 {strides = array<i32>} : memref<10x10x192xf32, #tpu.memory_space<vmem>>, vector<10x10x192xf32>,
    %c0_10 = arith.constant 0 : index
    %c0_11 = arith.constant 0 : index
    %c0_12 = arith.constant 0 : index
    %c0_13 = arith.constant 0 : index
    %6 = vector.load %arg1[%c0_10, %c0_11, %c0_12, %c0_13] : memref<1x8x8x8xf32, #tpu.memory_space<vmem>>, vector<1x8x8x8xf32>
    %7 = vector.shape_cast %6 : vector<1x8x8x8xf32> to vector<8x8x8xf32>
    %8 = vector.shape_cast %7 : vector<8x8x8xf32> to vector<64x8xf32>
    %9 = arith.truncf %8 : vector<64x8xf32> to vector<64x8xbf16>
    %c0_14 = arith.constant 0 : index
    %c0_15 = arith.constant 0 : index
    %10 = vector.load %arg2[%c0_14, %c0_15] : memref<8x192xbf16, #tpu.memory_space<vmem>>, vector<8x192xbf16>
    %cst_16 = arith.constant dense<0.000000e+00> : vector<64x192xf32>
    %11 = tpu.matmul %9, %10, %cst_16 {dimension_numbers = #tpu.dot_dimension_numbers<[1], [0], [0], [1], [0, 0, 1, 1], [], []>} : vector<64x8xbf16>, vector<8x192xbf16>, vector<64x192xf32> -> vector<64x192xf32>
    %c0_17 = arith.constant 0 : index
    %c0_18 = arith.constant 0 : index
    %12 = vector.load %arg3[%c0_17, %c0_18] : memref<1x192xf32, #tpu.memory_space<vmem>>, vector<1x192xf32>
    %13 = vector.broadcast %12 : vector<1x192xf32> to vector<64x192xf32>
    %14 = arith.addf %11, %13 : vector<64x192xf32>
    %cst_19 = arith.constant 0.000000e+00 : f32
    %15 = vector.broadcast %cst_19 : f32 to vector<64x192xf32>
    %16 = arith.maximumf %14, %15 : vector<64x192xf32>
    %17 = vector.shape_cast %16 : vector<64x192xf32> to vector<8x8x192xf32>
    %c0_20 = arith.constant 0 : index
    %c0_21 = arith.constant 0 : index
    %c0_22 = arith.constant 0 : index
    %c0_23 = arith.constant 0 : index
    %c0_24 = arith.constant 0 : index
    %18 = vector.load %arg22[%c0_20, %c0_21, %c0_22, %c0_23, %c0_24] : memref<1x4x8x8x192xf32, #tpu.memory_space<vmem>>, vector<1x1x8x8x192xf32>
    %19 = vector.shape_cast %18 : vector<1x1x8x8x192xf32> to vector<8x8x192xf32>
    %20 = vector.shape_cast %17 : vector<8x8x192xf32> to vector<1x1x8x8x192xf32>
    tpu.vector_store %arg22[%c0_20, %c0_21, %c0_22, %c0_23, %c0_24], %20 {strides = array<i32>} : memref<1x4x8x8x192xf32, #tpu.memory_space<vmem>>, vector<1x1x8x8x192xf32>,
    %c0_25 = arith.constant 0 : index
    %c0_26 = arith.constant 0 : index
    %21 = vector.load %arg20[%c0_25, %c0_26] : memref<8x192xbf16, #tpu.memory_space<vmem>>, vector<8x192xbf16>
    %cst_27 = arith.constant dense<0.000000e+00> : vector<64x192xf32>
    %22 = tpu.matmul %9, %21, %cst_27 {dimension_numbers = #tpu.dot_dimension_numbers<[1], [0], [0], [1], [0, 0, 1, 1], [], []>} : vector<64x8xbf16>, vector<8x192xbf16>, vector<64x192xf32> -> vector<64x192xf32>
    %23 = vector.shape_cast %22 : vector<64x192xf32> to vector<8x8x192xf32>
    %c1 = arith.constant 1 : index
    %c1_28 = arith.constant 1 : index
    %c0_29 = arith.constant 0 : index
    %24 = vector.load %arg25[%c1, %c1_28, %c0_29] : memref<10x10x192xf32, #tpu.memory_space<vmem>>, vector<8x8x192xf32>
    tpu.vector_store %arg25[%c1, %c1_28, %c0_29], %23 {strides = array<i32>} : memref<10x10x192xf32, #tpu.memory_space<vmem>>, vector<8x8x192xf32>,
    %c0_30 = arith.constant 0 : index
    %c0_31 = arith.constant 0 : index
    %c0_32 = arith.constant 0 : index
    %25 = vector.load %arg25[%c0_30, %c0_31, %c0_32] : memref<10x10x192xf32, #tpu.memory_space<vmem>>, vector<10x10x192xf32>
    %26 = vector.extract_strided_slice %25 {offsets = [0, 0, 0], sizes = [8, 10, 192], strides = [1, 1, 1]} : vector<10x10x192xf32> to vector<8x10x192xf32>
    %27 = vector.extract_strided_slice %25 {offsets = [1, 0, 0], sizes = [8, 10, 192], strides = [1, 1, 1]} : vector<10x10x192xf32> to vector<8x10x192xf32>
    %28 = arith.addf %26, %27 : vector<8x10x192xf32>
    %29 = vector.extract_strided_slice %25 {offsets = [2, 0, 0], sizes = [8, 10, 192], strides = [1, 1, 1]} : vector<10x10x192xf32> to vector<8x10x192xf32>
    %30 = arith.addf %28, %29 : vector<8x10x192xf32>
    %31 = vector.extract_strided_slice %30 {offsets = [0, 0, 0], sizes = [8, 8, 192], strides = [1, 1, 1]} : vector<8x10x192xf32> to vector<8x8x192xf32>
    %32 = vector.extract_strided_slice %30 {offsets = [0, 1, 0], sizes = [8, 8, 192], strides = [1, 1, 1]} : vector<8x10x192xf32> to vector<8x8x192xf32>
    %33 = arith.addf %31, %32 : vector<8x8x192xf32>
    %34 = vector.extract_strided_slice %30 {offsets = [0, 2, 0], sizes = [8, 8, 192], strides = [1, 1, 1]} : vector<8x10x192xf32> to vector<8x8x192xf32>
    %35 = arith.addf %33, %34 : vector<8x8x192xf32>
    %cst_33 = arith.constant 0.111111112 : f32
    %36 = vector.broadcast %cst_33 : f32 to vector<8x8x192xf32>
    %37 = arith.mulf %35, %36 : vector<8x8x192xf32>
    %c0_34 = arith.constant 0 : index
    %c0_35 = arith.constant 0 : index
    %38 = vector.load %arg21[%c0_34, %c0_35] : memref<1x192xf32, #tpu.memory_space<vmem>>, vector<1x192xf32>
    %39 = vector.shape_cast %38 : vector<1x192xf32> to vector<1x1x192xf32>
    %40 = vector.broadcast %39 : vector<1x1x192xf32> to vector<8x8x192xf32>
    %41 = arith.addf %37, %40 : vector<8x8x192xf32>
    %cst_36 = arith.constant 0.000000e+00 : f32
    %42 = vector.broadcast %cst_36 : f32 to vector<8x8x192xf32>
    %43 = arith.maximumf %41, %42 : vector<8x8x192xf32>
    %c0_37 = arith.constant 0 : index
    %c3 = arith.constant 3 : index
    %c0_38 = arith.constant 0 : index
    %c0_39 = arith.constant 0 : index
    %c0_40 = arith.constant 0 : index
    %44 = vector.load %arg22[%c0_37, %c3, %c0_38, %c0_39, %c0_40] : memref<1x4x8x8x192xf32, #tpu.memory_space<vmem>>, vector<1x1x8x8x192xf32>
    %45 = vector.shape_cast %44 : vector<1x1x8x8x192xf32> to vector<8x8x192xf32>
    %46 = vector.shape_cast %43 : vector<8x8x192xf32> to vector<1x1x8x8x192xf32>
    tpu.vector_store %arg22[%c0_37, %c3, %c0_38, %c0_39, %c0_40], %46 {strides = array<i32>} : memref<1x4x8x8x192xf32, #tpu.memory_space<vmem>>, vector<1x1x8x8x192xf32>,
    %c0_41 = arith.constant 0 : index
    %c0_42 = arith.constant 0 : index
    %47 = vector.load %arg4[%c0_41, %c0_42] : memref<8x8xbf16, #tpu.memory_space<vmem>>, vector<8x8xbf16>
    %cst_43 = arith.constant dense<0.000000e+00> : vector<64x8xf32>
    %48 = tpu.matmul %9, %47, %cst_43 {dimension_numbers = #tpu.dot_dimension_numbers<[1], [0], [0], [1], [0, 0, 1, 1], [], []>} : vector<64x8xbf16>, vector<8x8xbf16>, vector<64x8xf32> -> vector<64x8xf32>
    %c0_44 = arith.constant 0 : index
    %c0_45 = arith.constant 0 : index
    %49 = vector.load %arg5[%c0_44, %c0_45] : memref<1x8xf32, #tpu.memory_space<vmem>>, vector<1x8xf32>
    %50 = vector.broadcast %49 : vector<1x8xf32> to vector<64x8xf32>
    %51 = arith.addf %48, %50 : vector<64x8xf32>
    %cst_46 = arith.constant 0.000000e+00 : f32
    %52 = vector.broadcast %cst_46 : f32 to vector<64x8xf32>
    %53 = arith.maximumf %51, %52 : vector<64x8xf32>
    %54 = vector.shape_cast %53 : vector<64x8xf32> to vector<8x8x8xf32>
    %55 = arith.truncf %54 : vector<8x8x8xf32> to vector<8x8x8xbf16>
    %c0_47 = arith.constant 0 : index
    %c3_48 = arith.constant 3 : index
    %c0_49 = arith.constant 0 : index
    %56 = vector.load %arg23[%c0_47, %c3_48, %c0_49] : memref<8x14x8xbf16, #tpu.memory_space<vmem>>, vector<8x8x8xbf16>
    tpu.vector_store %arg23[%c0_47, %c3_48, %c0_49], %55 {strides = array<i32>} : memref<8x14x8xbf16, #tpu.memory_space<vmem>>, vector<8x8x8xbf16>,
    %c0_50 = arith.constant 0 : index
    %c0_51 = arith.constant 0 : index
    %c0_52 = arith.constant 0 : index
    %57 = vector.load %arg23[%c0_50, %c0_51, %c0_52] : memref<8x14x8xbf16, #tpu.memory_space<vmem>>, vector<8x14x8xbf16>
    %58 = vector.extract_strided_slice %57 {offsets = [0, 0, 0], sizes = [8, 8, 8], strides = [1, 1, 1]} : vector<8x14x8xbf16> to vector<8x8x8xbf16>
    %59 = vector.shape_cast %58 : vector<8x8x8xbf16> to vector<64x8xbf16>
    %c0_53 = arith.constant 0 : index
    %c0_54 = arith.constant 0 : index
    %c0_55 = arith.constant 0 : index
    %60 = vector.load %arg6[%c0_53, %c0_54, %c0_55] : memref<7x8x8xbf16, #tpu.memory_space<vmem>>, vector<1x8x8xbf16>
    %61 = vector.shape_cast %60 : vector<1x8x8xbf16> to vector<8x8xbf16>
    %cst_56 = arith.constant dense<0.000000e+00> : vector<64x8xf32>
    %62 = tpu.matmul %59, %61, %cst_56 {dimension_numbers = #tpu.dot_dimension_numbers<[1], [0], [0], [1], [0, 0, 1, 1], [], []>} : vector<64x8xbf16>, vector<8x8xbf16>, vector<64x8xf32> -> vector<64x8xf32>
    %63 = vector.extract_strided_slice %57 {offsets = [0, 1, 0], sizes = [8, 8, 8], strides = [1, 1, 1]} : vector<8x14x8xbf16> to vector<8x8x8xbf16>
    %64 = vector.shape_cast %63 : vector<8x8x8xbf16> to vector<64x8xbf16>
    %c1_57 = arith.constant 1 : index
    %c0_58 = arith.constant 0 : index
    %c0_59 = arith.constant 0 : index
    %65 = vector.load %arg6[%c1_57, %c0_58, %c0_59] : memref<7x8x8xbf16, #tpu.memory_space<vmem>>, vector<1x8x8xbf16>
    %66 = vector.shape_cast %65 : vector<1x8x8xbf16> to vector<8x8xbf16>
    %cst_60 = arith.constant dense<0.000000e+00> : vector<64x8xf32>
    %67 = tpu.matmul %64, %66, %cst_60 {dimension_numbers = #tpu.dot_dimension_numbers<[1], [0], [0], [1], [0, 0, 1, 1], [], []>} : vector<64x8xbf16>, vector<8x8xbf16>, vector<64x8xf32> -> vector<64x8xf32>
    %68 = arith.addf %62, %67 : vector<64x8xf32>
    %69 = vector.extract_strided_slice %57 {offsets = [0, 2, 0], sizes = [8, 8, 8], strides = [1, 1, 1]} : vector<8x14x8xbf16> to vector<8x8x8xbf16>
    %70 = vector.shape_cast %69 : vector<8x8x8xbf16> to vector<64x8xbf16>
    %c2 = arith.constant 2 : index
    %c0_61 = arith.constant 0 : index
    %c0_62 = arith.constant 0 : index
    %71 = vector.load %arg6[%c2, %c0_61, %c0_62] : memref<7x8x8xbf16, #tpu.memory_space<vmem>>, vector<1x8x8xbf16>
    %72 = vector.shape_cast %71 : vector<1x8x8xbf16> to vector<8x8xbf16>
    %cst_63 = arith.constant dense<0.000000e+00> : vector<64x8xf32>
    %73 = tpu.matmul %70, %72, %cst_63 {dimension_numbers = #tpu.dot_dimension_numbers<[1], [0], [0], [1], [0, 0, 1, 1], [], []>} : vector<64x8xbf16>, vector<8x8xbf16>, vector<64x8xf32> -> vector<64x8xf32>
    %74 = arith.addf %68, %73 : vector<64x8xf32>
    %75 = vector.extract_strided_slice %57 {offsets = [0, 3, 0], sizes = [8, 8, 8], strides = [1, 1, 1]} : vector<8x14x8xbf16> to vector<8x8x8xbf16>
    %76 = vector.shape_cast %75 : vector<8x8x8xbf16> to vector<64x8xbf16>
    %c3_64 = arith.constant 3 : index
    %c0_65 = arith.constant 0 : index
    %c0_66 = arith.constant 0 : index
    %77 = vector.load %arg6[%c3_64, %c0_65, %c0_66] : memref<7x8x8xbf16, #tpu.memory_space<vmem>>, vector<1x8x8xbf16>
    %78 = vector.shape_cast %77 : vector<1x8x8xbf16> to vector<8x8xbf16>
    %cst_67 = arith.constant dense<0.000000e+00> : vector<64x8xf32>
    %79 = tpu.matmul %76, %78, %cst_67 {dimension_numbers = #tpu.dot_dimension_numbers<[1], [0], [0], [1], [0, 0, 1, 1], [], []>} : vector<64x8xbf16>, vector<8x8xbf16>, vector<64x8xf32> -> vector<64x8xf32>
    %80 = arith.addf %74, %79 : vector<64x8xf32>
    %81 = vector.extract_strided_slice %57 {offsets = [0, 4, 0], sizes = [8, 8, 8], strides = [1, 1, 1]} : vector<8x14x8xbf16> to vector<8x8x8xbf16>
    %82 = vector.shape_cast %81 : vector<8x8x8xbf16> to vector<64x8xbf16>
    %c4 = arith.constant 4 : index
    %c0_68 = arith.constant 0 : index
    %c0_69 = arith.constant 0 : index
    %83 = vector.load %arg6[%c4, %c0_68, %c0_69] : memref<7x8x8xbf16, #tpu.memory_space<vmem>>, vector<1x8x8xbf16>
    %84 = vector.shape_cast %83 : vector<1x8x8xbf16> to vector<8x8xbf16>
    %cst_70 = arith.constant dense<0.000000e+00> : vector<64x8xf32>
    %85 = tpu.matmul %82, %84, %cst_70 {dimension_numbers = #tpu.dot_dimension_numbers<[1], [0], [0], [1], [0, 0, 1, 1], [], []>} : vector<64x8xbf16>, vector<8x8xbf16>, vector<64x8xf32> -> vector<64x8xf32>
    %86 = arith.addf %80, %85 : vector<64x8xf32>
    %87 = vector.extract_strided_slice %57 {offsets = [0, 5, 0], sizes = [8, 8, 8], strides = [1, 1, 1]} : vector<8x14x8xbf16> to vector<8x8x8xbf16>
    %88 = vector.shape_cast %87 : vector<8x8x8xbf16> to vector<64x8xbf16>
    %c5 = arith.constant 5 : index
    %c0_71 = arith.constant 0 : index
    %c0_72 = arith.constant 0 : index
    %89 = vector.load %arg6[%c5, %c0_71, %c0_72] : memref<7x8x8xbf16, #tpu.memory_space<vmem>>, vector<1x8x8xbf16>
    %90 = vector.shape_cast %89 : vector<1x8x8xbf16> to vector<8x8xbf16>
    %cst_73 = arith.constant dense<0.000000e+00> : vector<64x8xf32>
    %91 = tpu.matmul %88, %90, %cst_73 {dimension_numbers = #tpu.dot_dimension_numbers<[1], [0], [0], [1], [0, 0, 1, 1], [], []>} : vector<64x8xbf16>, vector<8x8xbf16>, vector<64x8xf32> -> vector<64x8xf32>
    %92 = arith.addf %86, %91 : vector<64x8xf32>
    %93 = vector.extract_strided_slice %57 {offsets = [0, 6, 0], sizes = [8, 8, 8], strides = [1, 1, 1]} : vector<8x14x8xbf16> to vector<8x8x8xbf16>
    %94 = vector.shape_cast %93 : vector<8x8x8xbf16> to vector<64x8xbf16>
    %c6 = arith.constant 6 : index
    %c0_74 = arith.constant 0 : index
    %c0_75 = arith.constant 0 : index
    %95 = vector.load %arg6[%c6, %c0_74, %c0_75] : memref<7x8x8xbf16, #tpu.memory_space<vmem>>, vector<1x8x8xbf16>
    %96 = vector.shape_cast %95 : vector<1x8x8xbf16> to vector<8x8xbf16>
    %cst_76 = arith.constant dense<0.000000e+00> : vector<64x8xf32>
    %97 = tpu.matmul %94, %96, %cst_76 {dimension_numbers = #tpu.dot_dimension_numbers<[1], [0], [0], [1], [0, 0, 1, 1], [], []>} : vector<64x8xbf16>, vector<8x8xbf16>, vector<64x8xf32> -> vector<64x8xf32>
    %98 = arith.addf %92, %97 : vector<64x8xf32>
    %c0_77 = arith.constant 0 : index
    %c0_78 = arith.constant 0 : index
    %99 = vector.load %arg7[%c0_77, %c0_78] : memref<1x8xf32, #tpu.memory_space<vmem>>, vector<1x8xf32>
    %100 = vector.broadcast %99 : vector<1x8xf32> to vector<64x8xf32>
    %101 = arith.addf %98, %100 : vector<64x8xf32>
    %cst_79 = arith.constant 0.000000e+00 : f32
    %102 = vector.broadcast %cst_79 : f32 to vector<64x8xf32>
    %103 = arith.maximumf %101, %102 : vector<64x8xf32>
    %104 = vector.shape_cast %103 : vector<64x8xf32> to vector<8x8x8xf32>
    %105 = arith.truncf %104 : vector<8x8x8xf32> to vector<8x8x8xbf16>
    %c3_80 = arith.constant 3 : index
    %c0_81 = arith.constant 0 : index
    %c0_82 = arith.constant 0 : index
    %106 = vector.load %arg24[%c3_80, %c0_81, %c0_82] : memref<14x8x8xbf16, #tpu.memory_space<vmem>>, vector<8x8x8xbf16>
    tpu.vector_store %arg24[%c3_80, %c0_81, %c0_82], %105 {strides = array<i32>} : memref<14x8x8xbf16, #tpu.memory_space<vmem>>, vector<8x8x8xbf16>,
    %c0_83 = arith.constant 0 : index
    %c0_84 = arith.constant 0 : index
    %c0_85 = arith.constant 0 : index
    %107 = vector.load %arg24[%c0_83, %c0_84, %c0_85] : memref<14x8x8xbf16, #tpu.memory_space<vmem>>, vector<14x8x8xbf16>
    %108 = vector.extract_strided_slice %107 {offsets = [0, 0, 0], sizes = [8, 8, 8], strides = [1, 1, 1]} : vector<14x8x8xbf16> to vector<8x8x8xbf16>
    %109 = vector.shape_cast %108 : vector<8x8x8xbf16> to vector<64x8xbf16>
    %c0_86 = arith.constant 0 : index
    %c0_87 = arith.constant 0 : index
    %c0_88 = arith.constant 0 : index
    %110 = vector.load %arg8[%c0_86, %c0_87, %c0_88] : memref<7x8x192xbf16, #tpu.memory_space<vmem>>, vector<1x8x192xbf16>
    %111 = vector.shape_cast %110 : vector<1x8x192xbf16> to vector<8x192xbf16>
    %cst_89 = arith.constant dense<0.000000e+00> : vector<64x192xf32>
    %112 = tpu.matmul %109, %111, %cst_89 {dimension_numbers = #tpu.dot_dimension_numbers<[1], [0], [0], [1], [0, 0, 1, 1], [], []>} : vector<64x8xbf16>, vector<8x192xbf16>, vector<64x192xf32> -> vector<64x192xf32>
    %113 = vector.extract_strided_slice %107 {offsets = [1, 0, 0], sizes = [8, 8, 8], strides = [1, 1, 1]} : vector<14x8x8xbf16> to vector<8x8x8xbf16>
    %114 = vector.shape_cast %113 : vector<8x8x8xbf16> to vector<64x8xbf16>
    %c1_90 = arith.constant 1 : index
    %c0_91 = arith.constant 0 : index
    %c0_92 = arith.constant 0 : index
    %115 = vector.load %arg8[%c1_90, %c0_91, %c0_92] : memref<7x8x192xbf16, #tpu.memory_space<vmem>>, vector<1x8x192xbf16>
    %116 = vector.shape_cast %115 : vector<1x8x192xbf16> to vector<8x192xbf16>
    %cst_93 = arith.constant dense<0.000000e+00> : vector<64x192xf32>
    %117 = tpu.matmul %114, %116, %cst_93 {dimension_numbers = #tpu.dot_dimension_numbers<[1], [0], [0], [1], [0, 0, 1, 1], [], []>} : vector<64x8xbf16>, vector<8x192xbf16>, vector<64x192xf32> -> vector<64x192xf32>
    %118 = arith.addf %112, %117 : vector<64x192xf32>
    %119 = vector.extract_strided_slice %107 {offsets = [2, 0, 0], sizes = [8, 8, 8], strides = [1, 1, 1]} : vector<14x8x8xbf16> to vector<8x8x8xbf16>
    %120 = vector.shape_cast %119 : vector<8x8x8xbf16> to vector<64x8xbf16>
    %c2_94 = arith.constant 2 : index
    %c0_95 = arith.constant 0 : index
    %c0_96 = arith.constant 0 : index
    %121 = vector.load %arg8[%c2_94, %c0_95, %c0_96] : memref<7x8x192xbf16, #tpu.memory_space<vmem>>, vector<1x8x192xbf16>
    %122 = vector.shape_cast %121 : vector<1x8x192xbf16> to vector<8x192xbf16>
    %cst_97 = arith.constant dense<0.000000e+00> : vector<64x192xf32>
    %123 = tpu.matmul %120, %122, %cst_97 {dimension_numbers = #tpu.dot_dimension_numbers<[1], [0], [0], [1], [0, 0, 1, 1], [], []>} : vector<64x8xbf16>, vector<8x192xbf16>, vector<64x192xf32> -> vector<64x192xf32>
    %124 = arith.addf %118, %123 : vector<64x192xf32>
    %125 = vector.extract_strided_slice %107 {offsets = [3, 0, 0], sizes = [8, 8, 8], strides = [1, 1, 1]} : vector<14x8x8xbf16> to vector<8x8x8xbf16>
    %126 = vector.shape_cast %125 : vector<8x8x8xbf16> to vector<64x8xbf16>
    %c3_98 = arith.constant 3 : index
    %c0_99 = arith.constant 0 : index
    %c0_100 = arith.constant 0 : index
    %127 = vector.load %arg8[%c3_98, %c0_99, %c0_100] : memref<7x8x192xbf16, #tpu.memory_space<vmem>>, vector<1x8x192xbf16>
    %128 = vector.shape_cast %127 : vector<1x8x192xbf16> to vector<8x192xbf16>
    %cst_101 = arith.constant dense<0.000000e+00> : vector<64x192xf32>
    %129 = tpu.matmul %126, %128, %cst_101 {dimension_numbers = #tpu.dot_dimension_numbers<[1], [0], [0], [1], [0, 0, 1, 1], [], []>} : vector<64x8xbf16>, vector<8x192xbf16>, vector<64x192xf32> -> vector<64x192xf32>
    %130 = arith.addf %124, %129 : vector<64x192xf32>
    %131 = vector.extract_strided_slice %107 {offsets = [4, 0, 0], sizes = [8, 8, 8], strides = [1, 1, 1]} : vector<14x8x8xbf16> to vector<8x8x8xbf16>
    %132 = vector.shape_cast %131 : vector<8x8x8xbf16> to vector<64x8xbf16>
    %c4_102 = arith.constant 4 : index
    %c0_103 = arith.constant 0 : index
    %c0_104 = arith.constant 0 : index
    %133 = vector.load %arg8[%c4_102, %c0_103, %c0_104] : memref<7x8x192xbf16, #tpu.memory_space<vmem>>, vector<1x8x192xbf16>
    %134 = vector.shape_cast %133 : vector<1x8x192xbf16> to vector<8x192xbf16>
    %cst_105 = arith.constant dense<0.000000e+00> : vector<64x192xf32>
    %135 = tpu.matmul %132, %134, %cst_105 {dimension_numbers = #tpu.dot_dimension_numbers<[1], [0], [0], [1], [0, 0, 1, 1], [], []>} : vector<64x8xbf16>, vector<8x192xbf16>, vector<64x192xf32> -> vector<64x192xf32>
    %136 = arith.addf %130, %135 : vector<64x192xf32>
    %137 = vector.extract_strided_slice %107 {offsets = [5, 0, 0], sizes = [8, 8, 8], strides = [1, 1, 1]} : vector<14x8x8xbf16> to vector<8x8x8xbf16>
    %138 = vector.shape_cast %137 : vector<8x8x8xbf16> to vector<64x8xbf16>
    %c5_106 = arith.constant 5 : index
    %c0_107 = arith.constant 0 : index
    %c0_108 = arith.constant 0 : index
    %139 = vector.load %arg8[%c5_106, %c0_107, %c0_108] : memref<7x8x192xbf16, #tpu.memory_space<vmem>>, vector<1x8x192xbf16>
    %140 = vector.shape_cast %139 : vector<1x8x192xbf16> to vector<8x192xbf16>
    %cst_109 = arith.constant dense<0.000000e+00> : vector<64x192xf32>
    %141 = tpu.matmul %138, %140, %cst_109 {dimension_numbers = #tpu.dot_dimension_numbers<[1], [0], [0], [1], [0, 0, 1, 1], [], []>} : vector<64x8xbf16>, vector<8x192xbf16>, vector<64x192xf32> -> vector<64x192xf32>
    %142 = arith.addf %136, %141 : vector<64x192xf32>
    %143 = vector.extract_strided_slice %107 {offsets = [6, 0, 0], sizes = [8, 8, 8], strides = [1, 1, 1]} : vector<14x8x8xbf16> to vector<8x8x8xbf16>
    %144 = vector.shape_cast %143 : vector<8x8x8xbf16> to vector<64x8xbf16>
    %c6_110 = arith.constant 6 : index
    %c0_111 = arith.constant 0 : index
    %c0_112 = arith.constant 0 : index
    %145 = vector.load %arg8[%c6_110, %c0_111, %c0_112] : memref<7x8x192xbf16, #tpu.memory_space<vmem>>, vector<1x8x192xbf16>
    %146 = vector.shape_cast %145 : vector<1x8x192xbf16> to vector<8x192xbf16>
    %cst_113 = arith.constant dense<0.000000e+00> : vector<64x192xf32>
    %147 = tpu.matmul %144, %146, %cst_113 {dimension_numbers = #tpu.dot_dimension_numbers<[1], [0], [0], [1], [0, 0, 1, 1], [], []>} : vector<64x8xbf16>, vector<8x192xbf16>, vector<64x192xf32> -> vector<64x192xf32>
    %148 = arith.addf %142, %147 : vector<64x192xf32>
    %c0_114 = arith.constant 0 : index
    %c0_115 = arith.constant 0 : index
    %149 = vector.load %arg9[%c0_114, %c0_115] : memref<1x192xf32, #tpu.memory_space<vmem>>, vector<1x192xf32>
    %150 = vector.broadcast %149 : vector<1x192xf32> to vector<64x192xf32>
    %151 = arith.addf %148, %150 : vector<64x192xf32>
    %cst_116 = arith.constant 0.000000e+00 : f32
    %152 = vector.broadcast %cst_116 : f32 to vector<64x192xf32>
    %153 = arith.maximumf %151, %152 : vector<64x192xf32>
    %154 = vector.shape_cast %153 : vector<64x192xf32> to vector<8x8x192xf32>
    %c0_117 = arith.constant 0 : index
    %c1_118 = arith.constant 1 : index
    %c0_119 = arith.constant 0 : index
    %c0_120 = arith.constant 0 : index
    %c0_121 = arith.constant 0 : index
    %155 = vector.load %arg22[%c0_117, %c1_118, %c0_119, %c0_120, %c0_121] : memref<1x4x8x8x192xf32, #tpu.memory_space<vmem>>, vector<1x1x8x8x192xf32>
    %156 = vector.shape_cast %155 : vector<1x1x8x8x192xf32> to vector<8x8x192xf32>
    %157 = vector.shape_cast %154 : vector<8x8x192xf32> to vector<1x1x8x8x192xf32>
    tpu.vector_store %arg22[%c0_117, %c1_118, %c0_119, %c0_120, %c0_121], %157 {strides = array<i32>} : memref<1x4x8x8x192xf32, #tpu.memory_space<vmem>>, vector<1x1x8x8x192xf32>,
    %c0_122 = arith.constant 0 : index
    %c0_123 = arith.constant 0 : index
    %158 = vector.load %arg10[%c0_122, %c0_123] : memref<8x8xbf16, #tpu.memory_space<vmem>>, vector<8x8xbf16>
    %cst_124 = arith.constant dense<0.000000e+00> : vector<64x8xf32>
    %159 = tpu.matmul %9, %158, %cst_124 {dimension_numbers = #tpu.dot_dimension_numbers<[1], [0], [0], [1], [0, 0, 1, 1], [], []>} : vector<64x8xbf16>, vector<8x8xbf16>, vector<64x8xf32> -> vector<64x8xf32>
    %c0_125 = arith.constant 0 : index
    %c0_126 = arith.constant 0 : index
    %160 = vector.load %arg11[%c0_125, %c0_126] : memref<1x8xf32, #tpu.memory_space<vmem>>, vector<1x8xf32>
    %161 = vector.broadcast %160 : vector<1x8xf32> to vector<64x8xf32>
    %162 = arith.addf %159, %161 : vector<64x8xf32>
    %cst_127 = arith.constant 0.000000e+00 : f32
    %163 = vector.broadcast %cst_127 : f32 to vector<64x8xf32>
    %164 = arith.maximumf %162, %163 : vector<64x8xf32>
    %165 = vector.shape_cast %164 : vector<64x8xf32> to vector<8x8x8xf32>
    %166 = arith.truncf %165 : vector<8x8x8xf32> to vector<8x8x8xbf16>
    %c3_128 = arith.constant 3 : index
    %c0_129 = arith.constant 0 : index
    %c0_130 = arith.constant 0 : index
    %167 = vector.load %arg24[%c3_128, %c0_129, %c0_130] : memref<14x8x8xbf16, #tpu.memory_space<vmem>>, vector<8x8x8xbf16>
    tpu.vector_store %arg24[%c3_128, %c0_129, %c0_130], %166 {strides = array<i32>} : memref<14x8x8xbf16, #tpu.memory_space<vmem>>, vector<8x8x8xbf16>,
    %c0_131 = arith.constant 0 : index
    %c0_132 = arith.constant 0 : index
    %c0_133 = arith.constant 0 : index
    %168 = vector.load %arg24[%c0_131, %c0_132, %c0_133] : memref<14x8x8xbf16, #tpu.memory_space<vmem>>, vector<14x8x8xbf16>
    %169 = vector.extract_strided_slice %168 {offsets = [0, 0, 0], sizes = [8, 8, 8], strides = [1, 1, 1]} : vector<14x8x8xbf16> to vector<8x8x8xbf16>
    %170 = vector.shape_cast %169 : vector<8x8x8xbf16> to vector<64x8xbf16>
    %c0_134 = arith.constant 0 : index
    %c0_135 = arith.constant 0 : index
    %c0_136 = arith.constant 0 : index
    %171 = vector.load %arg12[%c0_134, %c0_135, %c0_136] : memref<7x8x8xbf16, #tpu.memory_space<vmem>>, vector<1x8x8xbf16>
    %172 = vector.shape_cast %171 : vector<1x8x8xbf16> to vector<8x8xbf16>
    %cst_137 = arith.constant dense<0.000000e+00> : vector<64x8xf32>
    %173 = tpu.matmul %170, %172, %cst_137 {dimension_numbers = #tpu.dot_dimension_numbers<[1], [0], [0], [1], [0, 0, 1, 1], [], []>} : vector<64x8xbf16>, vector<8x8xbf16>, vector<64x8xf32> -> vector<64x8xf32>
    %174 = vector.extract_strided_slice %168 {offsets = [1, 0, 0], sizes = [8, 8, 8], strides = [1, 1, 1]} : vector<14x8x8xbf16> to vector<8x8x8xbf16>
    %175 = vector.shape_cast %174 : vector<8x8x8xbf16> to vector<64x8xbf16>
    %c1_138 = arith.constant 1 : index
    %c0_139 = arith.constant 0 : index
    %c0_140 = arith.constant 0 : index
    %176 = vector.load %arg12[%c1_138, %c0_139, %c0_140] : memref<7x8x8xbf16, #tpu.memory_space<vmem>>, vector<1x8x8xbf16>
    %177 = vector.shape_cast %176 : vector<1x8x8xbf16> to vector<8x8xbf16>
    %cst_141 = arith.constant dense<0.000000e+00> : vector<64x8xf32>
    %178 = tpu.matmul %175, %177, %cst_141 {dimension_numbers = #tpu.dot_dimension_numbers<[1], [0], [0], [1], [0, 0, 1, 1], [], []>} : vector<64x8xbf16>, vector<8x8xbf16>, vector<64x8xf32> -> vector<64x8xf32>
    %179 = arith.addf %173, %178 : vector<64x8xf32>
    %180 = vector.extract_strided_slice %168 {offsets = [2, 0, 0], sizes = [8, 8, 8], strides = [1, 1, 1]} : vector<14x8x8xbf16> to vector<8x8x8xbf16>
    %181 = vector.shape_cast %180 : vector<8x8x8xbf16> to vector<64x8xbf16>
    %c2_142 = arith.constant 2 : index
    %c0_143 = arith.constant 0 : index
    %c0_144 = arith.constant 0 : index
    %182 = vector.load %arg12[%c2_142, %c0_143, %c0_144] : memref<7x8x8xbf16, #tpu.memory_space<vmem>>, vector<1x8x8xbf16>
    %183 = vector.shape_cast %182 : vector<1x8x8xbf16> to vector<8x8xbf16>
    %cst_145 = arith.constant dense<0.000000e+00> : vector<64x8xf32>
    %184 = tpu.matmul %181, %183, %cst_145 {dimension_numbers = #tpu.dot_dimension_numbers<[1], [0], [0], [1], [0, 0, 1, 1], [], []>} : vector<64x8xbf16>, vector<8x8xbf16>, vector<64x8xf32> -> vector<64x8xf32>
    %185 = arith.addf %179, %184 : vector<64x8xf32>
    %186 = vector.extract_strided_slice %168 {offsets = [3, 0, 0], sizes = [8, 8, 8], strides = [1, 1, 1]} : vector<14x8x8xbf16> to vector<8x8x8xbf16>
    %187 = vector.shape_cast %186 : vector<8x8x8xbf16> to vector<64x8xbf16>
    %c3_146 = arith.constant 3 : index
    %c0_147 = arith.constant 0 : index
    %c0_148 = arith.constant 0 : index
    %188 = vector.load %arg12[%c3_146, %c0_147, %c0_148] : memref<7x8x8xbf16, #tpu.memory_space<vmem>>, vector<1x8x8xbf16>
    %189 = vector.shape_cast %188 : vector<1x8x8xbf16> to vector<8x8xbf16>
    %cst_149 = arith.constant dense<0.000000e+00> : vector<64x8xf32>
    %190 = tpu.matmul %187, %189, %cst_149 {dimension_numbers = #tpu.dot_dimension_numbers<[1], [0], [0], [1], [0, 0, 1, 1], [], []>} : vector<64x8xbf16>, vector<8x8xbf16>, vector<64x8xf32> -> vector<64x8xf32>
    %191 = arith.addf %185, %190 : vector<64x8xf32>
    %192 = vector.extract_strided_slice %168 {offsets = [4, 0, 0], sizes = [8, 8, 8], strides = [1, 1, 1]} : vector<14x8x8xbf16> to vector<8x8x8xbf16>
    %193 = vector.shape_cast %192 : vector<8x8x8xbf16> to vector<64x8xbf16>
    %c4_150 = arith.constant 4 : index
    %c0_151 = arith.constant 0 : index
    %c0_152 = arith.constant 0 : index
    %194 = vector.load %arg12[%c4_150, %c0_151, %c0_152] : memref<7x8x8xbf16, #tpu.memory_space<vmem>>, vector<1x8x8xbf16>
    %195 = vector.shape_cast %194 : vector<1x8x8xbf16> to vector<8x8xbf16>
    %cst_153 = arith.constant dense<0.000000e+00> : vector<64x8xf32>
    %196 = tpu.matmul %193, %195, %cst_153 {dimension_numbers = #tpu.dot_dimension_numbers<[1], [0], [0], [1], [0, 0, 1, 1], [], []>} : vector<64x8xbf16>, vector<8x8xbf16>, vector<64x8xf32> -> vector<64x8xf32>
    %197 = arith.addf %191, %196 : vector<64x8xf32>
    %198 = vector.extract_strided_slice %168 {offsets = [5, 0, 0], sizes = [8, 8, 8], strides = [1, 1, 1]} : vector<14x8x8xbf16> to vector<8x8x8xbf16>
    %199 = vector.shape_cast %198 : vector<8x8x8xbf16> to vector<64x8xbf16>
    %c5_154 = arith.constant 5 : index
    %c0_155 = arith.constant 0 : index
    %c0_156 = arith.constant 0 : index
    %200 = vector.load %arg12[%c5_154, %c0_155, %c0_156] : memref<7x8x8xbf16, #tpu.memory_space<vmem>>, vector<1x8x8xbf16>
    %201 = vector.shape_cast %200 : vector<1x8x8xbf16> to vector<8x8xbf16>
    %cst_157 = arith.constant dense<0.000000e+00> : vector<64x8xf32>
    %202 = tpu.matmul %199, %201, %cst_157 {dimension_numbers = #tpu.dot_dimension_numbers<[1], [0], [0], [1], [0, 0, 1, 1], [], []>} : vector<64x8xbf16>, vector<8x8xbf16>, vector<64x8xf32> -> vector<64x8xf32>
    %203 = arith.addf %197, %202 : vector<64x8xf32>
    %204 = vector.extract_strided_slice %168 {offsets = [6, 0, 0], sizes = [8, 8, 8], strides = [1, 1, 1]} : vector<14x8x8xbf16> to vector<8x8x8xbf16>
    %205 = vector.shape_cast %204 : vector<8x8x8xbf16> to vector<64x8xbf16>
    %c6_158 = arith.constant 6 : index
    %c0_159 = arith.constant 0 : index
    %c0_160 = arith.constant 0 : index
    %206 = vector.load %arg12[%c6_158, %c0_159, %c0_160] : memref<7x8x8xbf16, #tpu.memory_space<vmem>>, vector<1x8x8xbf16>
    %207 = vector.shape_cast %206 : vector<1x8x8xbf16> to vector<8x8xbf16>
    %cst_161 = arith.constant dense<0.000000e+00> : vector<64x8xf32>
    %208 = tpu.matmul %205, %207, %cst_161 {dimension_numbers = #tpu.dot_dimension_numbers<[1], [0], [0], [1], [0, 0, 1, 1], [], []>} : vector<64x8xbf16>, vector<8x8xbf16>, vector<64x8xf32> -> vector<64x8xf32>
    %209 = arith.addf %203, %208 : vector<64x8xf32>
    %c0_162 = arith.constant 0 : index
    %c0_163 = arith.constant 0 : index
    %210 = vector.load %arg13[%c0_162, %c0_163] : memref<1x8xf32, #tpu.memory_space<vmem>>, vector<1x8xf32>
    %211 = vector.broadcast %210 : vector<1x8xf32> to vector<64x8xf32>
    %212 = arith.addf %209, %211 : vector<64x8xf32>
    %cst_164 = arith.constant 0.000000e+00 : f32
    %213 = vector.broadcast %cst_164 : f32 to vector<64x8xf32>
    %214 = arith.maximumf %212, %213 : vector<64x8xf32>
    %215 = vector.shape_cast %214 : vector<64x8xf32> to vector<8x8x8xf32>
    %216 = arith.truncf %215 : vector<8x8x8xf32> to vector<8x8x8xbf16>
    %c0_165 = arith.constant 0 : index
    %c3_166 = arith.constant 3 : index
    %c0_167 = arith.constant 0 : index
    %217 = vector.load %arg23[%c0_165, %c3_166, %c0_167] : memref<8x14x8xbf16, #tpu.memory_space<vmem>>, vector<8x8x8xbf16>
    tpu.vector_store %arg23[%c0_165, %c3_166, %c0_167], %216 {strides = array<i32>} : memref<8x14x8xbf16, #tpu.memory_space<vmem>>, vector<8x8x8xbf16>,
    %c0_168 = arith.constant 0 : index
    %c0_169 = arith.constant 0 : index
    %c0_170 = arith.constant 0 : index
    %218 = vector.load %arg23[%c0_168, %c0_169, %c0_170] : memref<8x14x8xbf16, #tpu.memory_space<vmem>>, vector<8x14x8xbf16>
    %219 = vector.extract_strided_slice %218 {offsets = [0, 0, 0], sizes = [8, 8, 8], strides = [1, 1, 1]} : vector<8x14x8xbf16> to vector<8x8x8xbf16>
    %220 = vector.shape_cast %219 : vector<8x8x8xbf16> to vector<64x8xbf16>
    %c0_171 = arith.constant 0 : index
    %c0_172 = arith.constant 0 : index
    %c0_173 = arith.constant 0 : index
    %221 = vector.load %arg14[%c0_171, %c0_172, %c0_173] : memref<7x8x8xbf16, #tpu.memory_space<vmem>>, vector<1x8x8xbf16>
    %222 = vector.shape_cast %221 : vector<1x8x8xbf16> to vector<8x8xbf16>
    %cst_174 = arith.constant dense<0.000000e+00> : vector<64x8xf32>
    %223 = tpu.matmul %220, %222, %cst_174 {dimension_numbers = #tpu.dot_dimension_numbers<[1], [0], [0], [1], [0, 0, 1, 1], [], []>} : vector<64x8xbf16>, vector<8x8xbf16>, vector<64x8xf32> -> vector<64x8xf32>
    %224 = vector.extract_strided_slice %218 {offsets = [0, 1, 0], sizes = [8, 8, 8], strides = [1, 1, 1]} : vector<8x14x8xbf16> to vector<8x8x8xbf16>
    %225 = vector.shape_cast %224 : vector<8x8x8xbf16> to vector<64x8xbf16>
    %c1_175 = arith.constant 1 : index
    %c0_176 = arith.constant 0 : index
    %c0_177 = arith.constant 0 : index
    %226 = vector.load %arg14[%c1_175, %c0_176, %c0_177] : memref<7x8x8xbf16, #tpu.memory_space<vmem>>, vector<1x8x8xbf16>
    %227 = vector.shape_cast %226 : vector<1x8x8xbf16> to vector<8x8xbf16>
    %cst_178 = arith.constant dense<0.000000e+00> : vector<64x8xf32>
    %228 = tpu.matmul %225, %227, %cst_178 {dimension_numbers = #tpu.dot_dimension_numbers<[1], [0], [0], [1], [0, 0, 1, 1], [], []>} : vector<64x8xbf16>, vector<8x8xbf16>, vector<64x8xf32> -> vector<64x8xf32>
    %229 = arith.addf %223, %228 : vector<64x8xf32>
    %230 = vector.extract_strided_slice %218 {offsets = [0, 2, 0], sizes = [8, 8, 8], strides = [1, 1, 1]} : vector<8x14x8xbf16> to vector<8x8x8xbf16>
    %231 = vector.shape_cast %230 : vector<8x8x8xbf16> to vector<64x8xbf16>
    %c2_179 = arith.constant 2 : index
    %c0_180 = arith.constant 0 : index
    %c0_181 = arith.constant 0 : index
    %232 = vector.load %arg14[%c2_179, %c0_180, %c0_181] : memref<7x8x8xbf16, #tpu.memory_space<vmem>>, vector<1x8x8xbf16>
    %233 = vector.shape_cast %232 : vector<1x8x8xbf16> to vector<8x8xbf16>
    %cst_182 = arith.constant dense<0.000000e+00> : vector<64x8xf32>
    %234 = tpu.matmul %231, %233, %cst_182 {dimension_numbers = #tpu.dot_dimension_numbers<[1], [0], [0], [1], [0, 0, 1, 1], [], []>} : vector<64x8xbf16>, vector<8x8xbf16>, vector<64x8xf32> -> vector<64x8xf32>
    %235 = arith.addf %229, %234 : vector<64x8xf32>
    %236 = vector.extract_strided_slice %218 {offsets = [0, 3, 0], sizes = [8, 8, 8], strides = [1, 1, 1]} : vector<8x14x8xbf16> to vector<8x8x8xbf16>
    %237 = vector.shape_cast %236 : vector<8x8x8xbf16> to vector<64x8xbf16>
    %c3_183 = arith.constant 3 : index
    %c0_184 = arith.constant 0 : index
    %c0_185 = arith.constant 0 : index
    %238 = vector.load %arg14[%c3_183, %c0_184, %c0_185] : memref<7x8x8xbf16, #tpu.memory_space<vmem>>, vector<1x8x8xbf16>
    %239 = vector.shape_cast %238 : vector<1x8x8xbf16> to vector<8x8xbf16>
    %cst_186 = arith.constant dense<0.000000e+00> : vector<64x8xf32>
    %240 = tpu.matmul %237, %239, %cst_186 {dimension_numbers = #tpu.dot_dimension_numbers<[1], [0], [0], [1], [0, 0, 1, 1], [], []>} : vector<64x8xbf16>, vector<8x8xbf16>, vector<64x8xf32> -> vector<64x8xf32>
    %241 = arith.addf %235, %240 : vector<64x8xf32>
    %242 = vector.extract_strided_slice %218 {offsets = [0, 4, 0], sizes = [8, 8, 8], strides = [1, 1, 1]} : vector<8x14x8xbf16> to vector<8x8x8xbf16>
    %243 = vector.shape_cast %242 : vector<8x8x8xbf16> to vector<64x8xbf16>
    %c4_187 = arith.constant 4 : index
    %c0_188 = arith.constant 0 : index
    %c0_189 = arith.constant 0 : index
    %244 = vector.load %arg14[%c4_187, %c0_188, %c0_189] : memref<7x8x8xbf16, #tpu.memory_space<vmem>>, vector<1x8x8xbf16>
    %245 = vector.shape_cast %244 : vector<1x8x8xbf16> to vector<8x8xbf16>
    %cst_190 = arith.constant dense<0.000000e+00> : vector<64x8xf32>
    %246 = tpu.matmul %243, %245, %cst_190 {dimension_numbers = #tpu.dot_dimension_numbers<[1], [0], [0], [1], [0, 0, 1, 1], [], []>} : vector<64x8xbf16>, vector<8x8xbf16>, vector<64x8xf32> -> vector<64x8xf32>
    %247 = arith.addf %241, %246 : vector<64x8xf32>
    %248 = vector.extract_strided_slice %218 {offsets = [0, 5, 0], sizes = [8, 8, 8], strides = [1, 1, 1]} : vector<8x14x8xbf16> to vector<8x8x8xbf16>
    %249 = vector.shape_cast %248 : vector<8x8x8xbf16> to vector<64x8xbf16>
    %c5_191 = arith.constant 5 : index
    %c0_192 = arith.constant 0 : index
    %c0_193 = arith.constant 0 : index
    %250 = vector.load %arg14[%c5_191, %c0_192, %c0_193] : memref<7x8x8xbf16, #tpu.memory_space<vmem>>, vector<1x8x8xbf16>
    %251 = vector.shape_cast %250 : vector<1x8x8xbf16> to vector<8x8xbf16>
    %cst_194 = arith.constant dense<0.000000e+00> : vector<64x8xf32>
    %252 = tpu.matmul %249, %251, %cst_194 {dimension_numbers = #tpu.dot_dimension_numbers<[1], [0], [0], [1], [0, 0, 1, 1], [], []>} : vector<64x8xbf16>, vector<8x8xbf16>, vector<64x8xf32> -> vector<64x8xf32>
    %253 = arith.addf %247, %252 : vector<64x8xf32>
    %254 = vector.extract_strided_slice %218 {offsets = [0, 6, 0], sizes = [8, 8, 8], strides = [1, 1, 1]} : vector<8x14x8xbf16> to vector<8x8x8xbf16>
    %255 = vector.shape_cast %254 : vector<8x8x8xbf16> to vector<64x8xbf16>
    %c6_195 = arith.constant 6 : index
    %c0_196 = arith.constant 0 : index
    %c0_197 = arith.constant 0 : index
    %256 = vector.load %arg14[%c6_195, %c0_196, %c0_197] : memref<7x8x8xbf16, #tpu.memory_space<vmem>>, vector<1x8x8xbf16>
    %257 = vector.shape_cast %256 : vector<1x8x8xbf16> to vector<8x8xbf16>
    %cst_198 = arith.constant dense<0.000000e+00> : vector<64x8xf32>
    %258 = tpu.matmul %255, %257, %cst_198 {dimension_numbers = #tpu.dot_dimension_numbers<[1], [0], [0], [1], [0, 0, 1, 1], [], []>} : vector<64x8xbf16>, vector<8x8xbf16>, vector<64x8xf32> -> vector<64x8xf32>
    %259 = arith.addf %253, %258 : vector<64x8xf32>
    %c0_199 = arith.constant 0 : index
    %c0_200 = arith.constant 0 : index
    %260 = vector.load %arg15[%c0_199, %c0_200] : memref<1x8xf32, #tpu.memory_space<vmem>>, vector<1x8xf32>
    %261 = vector.broadcast %260 : vector<1x8xf32> to vector<64x8xf32>
    %262 = arith.addf %259, %261 : vector<64x8xf32>
    %cst_201 = arith.constant 0.000000e+00 : f32
    %263 = vector.broadcast %cst_201 : f32 to vector<64x8xf32>
    %264 = arith.maximumf %262, %263 : vector<64x8xf32>
    %265 = vector.shape_cast %264 : vector<64x8xf32> to vector<8x8x8xf32>
    %266 = arith.truncf %265 : vector<8x8x8xf32> to vector<8x8x8xbf16>
    %c3_202 = arith.constant 3 : index
    %c0_203 = arith.constant 0 : index
    %c0_204 = arith.constant 0 : index
    %267 = vector.load %arg24[%c3_202, %c0_203, %c0_204] : memref<14x8x8xbf16, #tpu.memory_space<vmem>>, vector<8x8x8xbf16>
    tpu.vector_store %arg24[%c3_202, %c0_203, %c0_204], %266 {strides = array<i32>} : memref<14x8x8xbf16, #tpu.memory_space<vmem>>, vector<8x8x8xbf16>,
    %c0_205 = arith.constant 0 : index
    %c0_206 = arith.constant 0 : index
    %c0_207 = arith.constant 0 : index
    %268 = vector.load %arg24[%c0_205, %c0_206, %c0_207] : memref<14x8x8xbf16, #tpu.memory_space<vmem>>, vector<14x8x8xbf16>
    %269 = vector.extract_strided_slice %268 {offsets = [0, 0, 0], sizes = [8, 8, 8], strides = [1, 1, 1]} : vector<14x8x8xbf16> to vector<8x8x8xbf16>
    %270 = vector.shape_cast %269 : vector<8x8x8xbf16> to vector<64x8xbf16>
    %c0_208 = arith.constant 0 : index
    %c0_209 = arith.constant 0 : index
    %c0_210 = arith.constant 0 : index
    %271 = vector.load %arg16[%c0_208, %c0_209, %c0_210] : memref<7x8x8xbf16, #tpu.memory_space<vmem>>, vector<1x8x8xbf16>
    %272 = vector.shape_cast %271 : vector<1x8x8xbf16> to vector<8x8xbf16>
    %cst_211 = arith.constant dense<0.000000e+00> : vector<64x8xf32>
    %273 = tpu.matmul %270, %272, %cst_211 {dimension_numbers = #tpu.dot_dimension_numbers<[1], [0], [0], [1], [0, 0, 1, 1], [], []>} : vector<64x8xbf16>, vector<8x8xbf16>, vector<64x8xf32> -> vector<64x8xf32>
    %274 = vector.extract_strided_slice %268 {offsets = [1, 0, 0], sizes = [8, 8, 8], strides = [1, 1, 1]} : vector<14x8x8xbf16> to vector<8x8x8xbf16>
    %275 = vector.shape_cast %274 : vector<8x8x8xbf16> to vector<64x8xbf16>
    %c1_212 = arith.constant 1 : index
    %c0_213 = arith.constant 0 : index
    %c0_214 = arith.constant 0 : index
    %276 = vector.load %arg16[%c1_212, %c0_213, %c0_214] : memref<7x8x8xbf16, #tpu.memory_space<vmem>>, vector<1x8x8xbf16>
    %277 = vector.shape_cast %276 : vector<1x8x8xbf16> to vector<8x8xbf16>
    %cst_215 = arith.constant dense<0.000000e+00> : vector<64x8xf32>
    %278 = tpu.matmul %275, %277, %cst_215 {dimension_numbers = #tpu.dot_dimension_numbers<[1], [0], [0], [1], [0, 0, 1, 1], [], []>} : vector<64x8xbf16>, vector<8x8xbf16>, vector<64x8xf32> -> vector<64x8xf32>
    %279 = arith.addf %273, %278 : vector<64x8xf32>
    %280 = vector.extract_strided_slice %268 {offsets = [2, 0, 0], sizes = [8, 8, 8], strides = [1, 1, 1]} : vector<14x8x8xbf16> to vector<8x8x8xbf16>
    %281 = vector.shape_cast %280 : vector<8x8x8xbf16> to vector<64x8xbf16>
    %c2_216 = arith.constant 2 : index
    %c0_217 = arith.constant 0 : index
    %c0_218 = arith.constant 0 : index
    %282 = vector.load %arg16[%c2_216, %c0_217, %c0_218] : memref<7x8x8xbf16, #tpu.memory_space<vmem>>, vector<1x8x8xbf16>
    %283 = vector.shape_cast %282 : vector<1x8x8xbf16> to vector<8x8xbf16>
    %cst_219 = arith.constant dense<0.000000e+00> : vector<64x8xf32>
    %284 = tpu.matmul %281, %283, %cst_219 {dimension_numbers = #tpu.dot_dimension_numbers<[1], [0], [0], [1], [0, 0, 1, 1], [], []>} : vector<64x8xbf16>, vector<8x8xbf16>, vector<64x8xf32> -> vector<64x8xf32>
    %285 = arith.addf %279, %284 : vector<64x8xf32>
    %286 = vector.extract_strided_slice %268 {offsets = [3, 0, 0], sizes = [8, 8, 8], strides = [1, 1, 1]} : vector<14x8x8xbf16> to vector<8x8x8xbf16>
    %287 = vector.shape_cast %286 : vector<8x8x8xbf16> to vector<64x8xbf16>
    %c3_220 = arith.constant 3 : index
    %c0_221 = arith.constant 0 : index
    %c0_222 = arith.constant 0 : index
    %288 = vector.load %arg16[%c3_220, %c0_221, %c0_222] : memref<7x8x8xbf16, #tpu.memory_space<vmem>>, vector<1x8x8xbf16>
    %289 = vector.shape_cast %288 : vector<1x8x8xbf16> to vector<8x8xbf16>
    %cst_223 = arith.constant dense<0.000000e+00> : vector<64x8xf32>
    %290 = tpu.matmul %287, %289, %cst_223 {dimension_numbers = #tpu.dot_dimension_numbers<[1], [0], [0], [1], [0, 0, 1, 1], [], []>} : vector<64x8xbf16>, vector<8x8xbf16>, vector<64x8xf32> -> vector<64x8xf32>
    %291 = arith.addf %285, %290 : vector<64x8xf32>
    %292 = vector.extract_strided_slice %268 {offsets = [4, 0, 0], sizes = [8, 8, 8], strides = [1, 1, 1]} : vector<14x8x8xbf16> to vector<8x8x8xbf16>
    %293 = vector.shape_cast %292 : vector<8x8x8xbf16> to vector<64x8xbf16>
    %c4_224 = arith.constant 4 : index
    %c0_225 = arith.constant 0 : index
    %c0_226 = arith.constant 0 : index
    %294 = vector.load %arg16[%c4_224, %c0_225, %c0_226] : memref<7x8x8xbf16, #tpu.memory_space<vmem>>, vector<1x8x8xbf16>
    %295 = vector.shape_cast %294 : vector<1x8x8xbf16> to vector<8x8xbf16>
    %cst_227 = arith.constant dense<0.000000e+00> : vector<64x8xf32>
    %296 = tpu.matmul %293, %295, %cst_227 {dimension_numbers = #tpu.dot_dimension_numbers<[1], [0], [0], [1], [0, 0, 1, 1], [], []>} : vector<64x8xbf16>, vector<8x8xbf16>, vector<64x8xf32> -> vector<64x8xf32>
    %297 = arith.addf %291, %296 : vector<64x8xf32>
    %298 = vector.extract_strided_slice %268 {offsets = [5, 0, 0], sizes = [8, 8, 8], strides = [1, 1, 1]} : vector<14x8x8xbf16> to vector<8x8x8xbf16>
    %299 = vector.shape_cast %298 : vector<8x8x8xbf16> to vector<64x8xbf16>
    %c5_228 = arith.constant 5 : index
    %c0_229 = arith.constant 0 : index
    %c0_230 = arith.constant 0 : index
    %300 = vector.load %arg16[%c5_228, %c0_229, %c0_230] : memref<7x8x8xbf16, #tpu.memory_space<vmem>>, vector<1x8x8xbf16>
    %301 = vector.shape_cast %300 : vector<1x8x8xbf16> to vector<8x8xbf16>
    %cst_231 = arith.constant dense<0.000000e+00> : vector<64x8xf32>
    %302 = tpu.matmul %299, %301, %cst_231 {dimension_numbers = #tpu.dot_dimension_numbers<[1], [0], [0], [1], [0, 0, 1, 1], [], []>} : vector<64x8xbf16>, vector<8x8xbf16>, vector<64x8xf32> -> vector<64x8xf32>
    %303 = arith.addf %297, %302 : vector<64x8xf32>
    %304 = vector.extract_strided_slice %268 {offsets = [6, 0, 0], sizes = [8, 8, 8], strides = [1, 1, 1]} : vector<14x8x8xbf16> to vector<8x8x8xbf16>
    %305 = vector.shape_cast %304 : vector<8x8x8xbf16> to vector<64x8xbf16>
    %c6_232 = arith.constant 6 : index
    %c0_233 = arith.constant 0 : index
    %c0_234 = arith.constant 0 : index
    %306 = vector.load %arg16[%c6_232, %c0_233, %c0_234] : memref<7x8x8xbf16, #tpu.memory_space<vmem>>, vector<1x8x8xbf16>
    %307 = vector.shape_cast %306 : vector<1x8x8xbf16> to vector<8x8xbf16>
    %cst_235 = arith.constant dense<0.000000e+00> : vector<64x8xf32>
    %308 = tpu.matmul %305, %307, %cst_235 {dimension_numbers = #tpu.dot_dimension_numbers<[1], [0], [0], [1], [0, 0, 1, 1], [], []>} : vector<64x8xbf16>, vector<8x8xbf16>, vector<64x8xf32> -> vector<64x8xf32>
    %309 = arith.addf %303, %308 : vector<64x8xf32>
    %c0_236 = arith.constant 0 : index
    %c0_237 = arith.constant 0 : index
    %310 = vector.load %arg17[%c0_236, %c0_237] : memref<1x8xf32, #tpu.memory_space<vmem>>, vector<1x8xf32>
    %311 = vector.broadcast %310 : vector<1x8xf32> to vector<64x8xf32>
    %312 = arith.addf %309, %311 : vector<64x8xf32>
    %cst_238 = arith.constant 0.000000e+00 : f32
    %313 = vector.broadcast %cst_238 : f32 to vector<64x8xf32>
    %314 = arith.maximumf %312, %313 : vector<64x8xf32>
    %315 = vector.shape_cast %314 : vector<64x8xf32> to vector<8x8x8xf32>
    %316 = arith.truncf %315 : vector<8x8x8xf32> to vector<8x8x8xbf16>
    %c0_239 = arith.constant 0 : index
    %c3_240 = arith.constant 3 : index
    %c0_241 = arith.constant 0 : index
    %317 = vector.load %arg23[%c0_239, %c3_240, %c0_241] : memref<8x14x8xbf16, #tpu.memory_space<vmem>>, vector<8x8x8xbf16>
    tpu.vector_store %arg23[%c0_239, %c3_240, %c0_241], %316 {strides = array<i32>} : memref<8x14x8xbf16, #tpu.memory_space<vmem>>, vector<8x8x8xbf16>,
    %c0_242 = arith.constant 0 : index
    %c0_243 = arith.constant 0 : index
    %c0_244 = arith.constant 0 : index
    %318 = vector.load %arg23[%c0_242, %c0_243, %c0_244] : memref<8x14x8xbf16, #tpu.memory_space<vmem>>, vector<8x14x8xbf16>
    %319 = vector.extract_strided_slice %318 {offsets = [0, 0, 0], sizes = [8, 8, 8], strides = [1, 1, 1]} : vector<8x14x8xbf16> to vector<8x8x8xbf16>
    %320 = vector.shape_cast %319 : vector<8x8x8xbf16> to vector<64x8xbf16>
    %c0_245 = arith.constant 0 : index
    %c0_246 = arith.constant 0 : index
    %c0_247 = arith.constant 0 : index
    %321 = vector.load %arg18[%c0_245, %c0_246, %c0_247] : memref<7x8x192xbf16, #tpu.memory_space<vmem>>, vector<1x8x192xbf16>
    %322 = vector.shape_cast %321 : vector<1x8x192xbf16> to vector<8x192xbf16>
    %cst_248 = arith.constant dense<0.000000e+00> : vector<64x192xf32>
    %323 = tpu.matmul %320, %322, %cst_248 {dimension_numbers = #tpu.dot_dimension_numbers<[1], [0], [0], [1], [0, 0, 1, 1], [], []>} : vector<64x8xbf16>, vector<8x192xbf16>, vector<64x192xf32> -> vector<64x192xf32>
    %324 = vector.extract_strided_slice %318 {offsets = [0, 1, 0], sizes = [8, 8, 8], strides = [1, 1, 1]} : vector<8x14x8xbf16> to vector<8x8x8xbf16>
    %325 = vector.shape_cast %324 : vector<8x8x8xbf16> to vector<64x8xbf16>
    %c1_249 = arith.constant 1 : index
    %c0_250 = arith.constant 0 : index
    %c0_251 = arith.constant 0 : index
    %326 = vector.load %arg18[%c1_249, %c0_250, %c0_251] : memref<7x8x192xbf16, #tpu.memory_space<vmem>>, vector<1x8x192xbf16>
    %327 = vector.shape_cast %326 : vector<1x8x192xbf16> to vector<8x192xbf16>
    %cst_252 = arith.constant dense<0.000000e+00> : vector<64x192xf32>
    %328 = tpu.matmul %325, %327, %cst_252 {dimension_numbers = #tpu.dot_dimension_numbers<[1], [0], [0], [1], [0, 0, 1, 1], [], []>} : vector<64x8xbf16>, vector<8x192xbf16>, vector<64x192xf32> -> vector<64x192xf32>
    %329 = arith.addf %323, %328 : vector<64x192xf32>
    %330 = vector.extract_strided_slice %318 {offsets = [0, 2, 0], sizes = [8, 8, 8], strides = [1, 1, 1]} : vector<8x14x8xbf16> to vector<8x8x8xbf16>
    %331 = vector.shape_cast %330 : vector<8x8x8xbf16> to vector<64x8xbf16>
    %c2_253 = arith.constant 2 : index
    %c0_254 = arith.constant 0 : index
    %c0_255 = arith.constant 0 : index
    %332 = vector.load %arg18[%c2_253, %c0_254, %c0_255] : memref<7x8x192xbf16, #tpu.memory_space<vmem>>, vector<1x8x192xbf16>
    %333 = vector.shape_cast %332 : vector<1x8x192xbf16> to vector<8x192xbf16>
    %cst_256 = arith.constant dense<0.000000e+00> : vector<64x192xf32>
    %334 = tpu.matmul %331, %333, %cst_256 {dimension_numbers = #tpu.dot_dimension_numbers<[1], [0], [0], [1], [0, 0, 1, 1], [], []>} : vector<64x8xbf16>, vector<8x192xbf16>, vector<64x192xf32> -> vector<64x192xf32>
    %335 = arith.addf %329, %334 : vector<64x192xf32>
    %336 = vector.extract_strided_slice %318 {offsets = [0, 3, 0], sizes = [8, 8, 8], strides = [1, 1, 1]} : vector<8x14x8xbf16> to vector<8x8x8xbf16>
    %337 = vector.shape_cast %336 : vector<8x8x8xbf16> to vector<64x8xbf16>
    %c3_257 = arith.constant 3 : index
    %c0_258 = arith.constant 0 : index
    %c0_259 = arith.constant 0 : index
    %338 = vector.load %arg18[%c3_257, %c0_258, %c0_259] : memref<7x8x192xbf16, #tpu.memory_space<vmem>>, vector<1x8x192xbf16>
    %339 = vector.shape_cast %338 : vector<1x8x192xbf16> to vector<8x192xbf16>
    %cst_260 = arith.constant dense<0.000000e+00> : vector<64x192xf32>
    %340 = tpu.matmul %337, %339, %cst_260 {dimension_numbers = #tpu.dot_dimension_numbers<[1], [0], [0], [1], [0, 0, 1, 1], [], []>} : vector<64x8xbf16>, vector<8x192xbf16>, vector<64x192xf32> -> vector<64x192xf32>
    %341 = arith.addf %335, %340 : vector<64x192xf32>
    %342 = vector.extract_strided_slice %318 {offsets = [0, 4, 0], sizes = [8, 8, 8], strides = [1, 1, 1]} : vector<8x14x8xbf16> to vector<8x8x8xbf16>
    %343 = vector.shape_cast %342 : vector<8x8x8xbf16> to vector<64x8xbf16>
    %c4_261 = arith.constant 4 : index
    %c0_262 = arith.constant 0 : index
    %c0_263 = arith.constant 0 : index
    %344 = vector.load %arg18[%c4_261, %c0_262, %c0_263] : memref<7x8x192xbf16, #tpu.memory_space<vmem>>, vector<1x8x192xbf16>
    %345 = vector.shape_cast %344 : vector<1x8x192xbf16> to vector<8x192xbf16>
    %cst_264 = arith.constant dense<0.000000e+00> : vector<64x192xf32>
    %346 = tpu.matmul %343, %345, %cst_264 {dimension_numbers = #tpu.dot_dimension_numbers<[1], [0], [0], [1], [0, 0, 1, 1], [], []>} : vector<64x8xbf16>, vector<8x192xbf16>, vector<64x192xf32> -> vector<64x192xf32>
    %347 = arith.addf %341, %346 : vector<64x192xf32>
    %348 = vector.extract_strided_slice %318 {offsets = [0, 5, 0], sizes = [8, 8, 8], strides = [1, 1, 1]} : vector<8x14x8xbf16> to vector<8x8x8xbf16>
    %349 = vector.shape_cast %348 : vector<8x8x8xbf16> to vector<64x8xbf16>
    %c5_265 = arith.constant 5 : index
    %c0_266 = arith.constant 0 : index
    %c0_267 = arith.constant 0 : index
    %350 = vector.load %arg18[%c5_265, %c0_266, %c0_267] : memref<7x8x192xbf16, #tpu.memory_space<vmem>>, vector<1x8x192xbf16>
    %351 = vector.shape_cast %350 : vector<1x8x192xbf16> to vector<8x192xbf16>
    %cst_268 = arith.constant dense<0.000000e+00> : vector<64x192xf32>
    %352 = tpu.matmul %349, %351, %cst_268 {dimension_numbers = #tpu.dot_dimension_numbers<[1], [0], [0], [1], [0, 0, 1, 1], [], []>} : vector<64x8xbf16>, vector<8x192xbf16>, vector<64x192xf32> -> vector<64x192xf32>
    %353 = arith.addf %347, %352 : vector<64x192xf32>
    %354 = vector.extract_strided_slice %318 {offsets = [0, 6, 0], sizes = [8, 8, 8], strides = [1, 1, 1]} : vector<8x14x8xbf16> to vector<8x8x8xbf16>
    %355 = vector.shape_cast %354 : vector<8x8x8xbf16> to vector<64x8xbf16>
    %c6_269 = arith.constant 6 : index
    %c0_270 = arith.constant 0 : index
    %c0_271 = arith.constant 0 : index
    %356 = vector.load %arg18[%c6_269, %c0_270, %c0_271] : memref<7x8x192xbf16, #tpu.memory_space<vmem>>, vector<1x8x192xbf16>
    %357 = vector.shape_cast %356 : vector<1x8x192xbf16> to vector<8x192xbf16>
    %cst_272 = arith.constant dense<0.000000e+00> : vector<64x192xf32>
    %358 = tpu.matmul %355, %357, %cst_272 {dimension_numbers = #tpu.dot_dimension_numbers<[1], [0], [0], [1], [0, 0, 1, 1], [], []>} : vector<64x8xbf16>, vector<8x192xbf16>, vector<64x192xf32> -> vector<64x192xf32>
    %359 = arith.addf %353, %358 : vector<64x192xf32>
    %c0_273 = arith.constant 0 : index
    %c0_274 = arith.constant 0 : index
    %360 = vector.load %arg19[%c0_273, %c0_274] : memref<1x192xf32, #tpu.memory_space<vmem>>, vector<1x192xf32>
    %361 = vector.broadcast %360 : vector<1x192xf32> to vector<64x192xf32>
    %362 = arith.addf %359, %361 : vector<64x192xf32>
    %cst_275 = arith.constant 0.000000e+00 : f32
    %363 = vector.broadcast %cst_275 : f32 to vector<64x192xf32>
    %364 = arith.maximumf %362, %363 : vector<64x192xf32>
    %365 = vector.shape_cast %364 : vector<64x192xf32> to vector<8x8x192xf32>
    %c0_276 = arith.constant 0 : index
    %c2_277 = arith.constant 2 : index
    %c0_278 = arith.constant 0 : index
    %c0_279 = arith.constant 0 : index
    %c0_280 = arith.constant 0 : index
    %366 = vector.load %arg22[%c0_276, %c2_277, %c0_278, %c0_279, %c0_280] : memref<1x4x8x8x192xf32, #tpu.memory_space<vmem>>, vector<1x1x8x8x192xf32>
    %367 = vector.shape_cast %366 : vector<1x1x8x8x192xf32> to vector<8x8x192xf32>
    %368 = vector.shape_cast %365 : vector<8x8x192xf32> to vector<1x1x8x8x192xf32>
    tpu.vector_store %arg22[%c0_276, %c2_277, %c0_278, %c0_279, %c0_280], %368 {strides = array<i32>} : memref<1x4x8x8x192xf32, #tpu.memory_space<vmem>>, vector<1x1x8x8x192xf32>,
    return
  }
  func.func @transform_0(%arg0: i32) -> (i32, i32, i32, i32) {
    %c0_i32 = arith.constant 0 : i32
    %c0_i32_0 = arith.constant 0 : i32
    %c0_i32_1 = arith.constant 0 : i32
    %c0_i32_2 = arith.constant 0 : i32
    return %arg0, %c0_i32, %c0_i32_0, %c0_i32_1 : i32, i32, i32, i32
  }
  func.func @transform_1(%arg0: i32) -> (i32, i32) {
    %c0_i32 = arith.constant 0 : i32
    %c0_i32_0 = arith.constant 0 : i32
    %c0_i32_1 = arith.constant 0 : i32
    return %c0_i32, %c0_i32_0 : i32, i32
  }
  func.func @transform_2(%arg0: i32) -> (i32, i32) {
    %c0_i32 = arith.constant 0 : i32
    %c0_i32_0 = arith.constant 0 : i32
    %c0_i32_1 = arith.constant 0 : i32
    return %c0_i32, %c0_i32_0 : i32, i32
  }
  func.func @transform_3(%arg0: i32) -> (i32, i32) {
    %c0_i32 = arith.constant 0 : i32
    %c0_i32_0 = arith.constant 0 : i32
    %c0_i32_1 = arith.constant 0 : i32
    return %c0_i32, %c0_i32_0 : i32, i32
  }
  func.func @transform_4(%arg0: i32) -> (i32, i32) {
    %c0_i32 = arith.constant 0 : i32
    %c0_i32_0 = arith.constant 0 : i32
    %c0_i32_1 = arith.constant 0 : i32
    return %c0_i32, %c0_i32_0 : i32, i32
  }
  func.func @transform_5(%arg0: i32) -> (i32, i32, i32) {
    %c0_i32 = arith.constant 0 : i32
    %c0_i32_0 = arith.constant 0 : i32
    %c0_i32_1 = arith.constant 0 : i32
    %c0_i32_2 = arith.constant 0 : i32
    return %c0_i32, %c0_i32_0, %c0_i32_1 : i32, i32, i32
  }
  func.func @transform_6(%arg0: i32) -> (i32, i32) {
    %c0_i32 = arith.constant 0 : i32
    %c0_i32_0 = arith.constant 0 : i32
    %c0_i32_1 = arith.constant 0 : i32
    return %c0_i32, %c0_i32_0 : i32, i32
  }
  func.func @transform_7(%arg0: i32) -> (i32, i32, i32) {
    %c0_i32 = arith.constant 0 : i32
    %c0_i32_0 = arith.constant 0 : i32
    %c0_i32_1 = arith.constant 0 : i32
    %c0_i32_2 = arith.constant 0 : i32
    return %c0_i32, %c0_i32_0, %c0_i32_1 : i32, i32, i32
  }
  func.func @transform_8(%arg0: i32) -> (i32, i32) {
    %c0_i32 = arith.constant 0 : i32
    %c0_i32_0 = arith.constant 0 : i32
    %c0_i32_1 = arith.constant 0 : i32
    return %c0_i32, %c0_i32_0 : i32, i32
  }
  func.func @transform_9(%arg0: i32) -> (i32, i32) {
    %c0_i32 = arith.constant 0 : i32
    %c0_i32_0 = arith.constant 0 : i32
    %c0_i32_1 = arith.constant 0 : i32
    return %c0_i32, %c0_i32_0 : i32, i32
  }
  func.func @transform_10(%arg0: i32) -> (i32, i32) {
    %c0_i32 = arith.constant 0 : i32
    %c0_i32_0 = arith.constant 0 : i32
    %c0_i32_1 = arith.constant 0 : i32
    return %c0_i32, %c0_i32_0 : i32, i32
  }
  func.func @transform_11(%arg0: i32) -> (i32, i32, i32) {
    %c0_i32 = arith.constant 0 : i32
    %c0_i32_0 = arith.constant 0 : i32
    %c0_i32_1 = arith.constant 0 : i32
    %c0_i32_2 = arith.constant 0 : i32
    return %c0_i32, %c0_i32_0, %c0_i32_1 : i32, i32, i32
  }
  func.func @transform_12(%arg0: i32) -> (i32, i32) {
    %c0_i32 = arith.constant 0 : i32
    %c0_i32_0 = arith.constant 0 : i32
    %c0_i32_1 = arith.constant 0 : i32
    return %c0_i32, %c0_i32_0 : i32, i32
  }
  func.func @transform_13(%arg0: i32) -> (i32, i32, i32) {
    %c0_i32 = arith.constant 0 : i32
    %c0_i32_0 = arith.constant 0 : i32
    %c0_i32_1 = arith.constant 0 : i32
    %c0_i32_2 = arith.constant 0 : i32
    return %c0_i32, %c0_i32_0, %c0_i32_1 : i32, i32, i32
  }
  func.func @transform_14(%arg0: i32) -> (i32, i32) {
    %c0_i32 = arith.constant 0 : i32
    %c0_i32_0 = arith.constant 0 : i32
    %c0_i32_1 = arith.constant 0 : i32
    return %c0_i32, %c0_i32_0 : i32, i32
  }
  func.func @transform_15(%arg0: i32) -> (i32, i32, i32) {
    %c0_i32 = arith.constant 0 : i32
    %c0_i32_0 = arith.constant 0 : i32
    %c0_i32_1 = arith.constant 0 : i32
    %c0_i32_2 = arith.constant 0 : i32
    return %c0_i32, %c0_i32_0, %c0_i32_1 : i32, i32, i32
  }
  func.func @transform_16(%arg0: i32) -> (i32, i32) {
    %c0_i32 = arith.constant 0 : i32
    %c0_i32_0 = arith.constant 0 : i32
    %c0_i32_1 = arith.constant 0 : i32
    return %c0_i32, %c0_i32_0 : i32, i32
  }
  func.func @transform_17(%arg0: i32) -> (i32, i32, i32) {
    %c0_i32 = arith.constant 0 : i32
    %c0_i32_0 = arith.constant 0 : i32
    %c0_i32_1 = arith.constant 0 : i32
    %c0_i32_2 = arith.constant 0 : i32
    return %c0_i32, %c0_i32_0, %c0_i32_1 : i32, i32, i32
  }
  func.func @transform_18(%arg0: i32) -> (i32, i32) {
    %c0_i32 = arith.constant 0 : i32
    %c0_i32_0 = arith.constant 0 : i32
    %c0_i32_1 = arith.constant 0 : i32
    return %c0_i32, %c0_i32_0 : i32, i32
  }
  func.func @transform_19(%arg0: i32) -> (i32, i32) {
    %c0_i32 = arith.constant 0 : i32
    %c0_i32_0 = arith.constant 0 : i32
    %c0_i32_1 = arith.constant 0 : i32
    return %c0_i32, %c0_i32_0 : i32, i32
  }
  func.func @transform_20(%arg0: i32) -> (i32, i32) {
    %c0_i32 = arith.constant 0 : i32
    %c0_i32_0 = arith.constant 0 : i32
    %c0_i32_1 = arith.constant 0 : i32
    return %c0_i32, %c0_i32_0 : i32, i32
  }
  func.func @transform_21(%arg0: i32) -> (i32, i32, i32, i32, i32) {
    %c0_i32 = arith.constant 0 : i32
    %c0_i32_0 = arith.constant 0 : i32
    %c0_i32_1 = arith.constant 0 : i32
    %c0_i32_2 = arith.constant 0 : i32
    %c0_i32_3 = arith.constant 0 : i32
    return %arg0, %c0_i32, %c0_i32_0, %c0_i32_1, %c0_i32_2 : i32, i32, i32, i32, i32
  }
}

</mosaic_0001>

<llo_original>
// kernel: tpu_custom_call.1
$region0: #{tpu_custom_call.1}
  #allocation0 [shape = 'u32[]', space=smem, size = 0x4, offset = 0x4, fixed_abs, tag = 'smem constant byte address 0x4 - core index']
  #allocation1 [shape = 'u32[144,128]{1,0:T(1,128)}', space=vmem, size = 0x12000, scoped, tag = 'internal scratch']
  #allocation2 [shape = 'bf16[8,14,8]{2,1,0:T(8,128)(2,1)}', space=vmem, size = 0x8000, scoped, tag = 'scratch operand']
  #allocation3 [shape = 'bf16[14,8,8]{2,1,0:T(8,128)(2,1)}', space=vmem, size = 0x7000, scoped, tag = 'scratch operand']
  #allocation4 [shape = 'f32[10,10,192]{2,1,0:T(8,128)}', space=vmem, size = 0x28000, scoped, tag = 'scratch operand']
  %s0 = inlined_call_operand.hbm [shape: f32[2,8,8,8], index: 0, kind: input, shape index: {}]
  %s1 = inlined_call_operand.hbm [shape: bf16[8,192], index: 1, kind: input, shape index: {}]
  %s2 = inlined_call_operand.hbm [shape: f32[1,192], index: 2, kind: input, shape index: {}]
  %s3 = inlined_call_operand.hbm [shape: bf16[8,8], index: 3, kind: input, shape index: {}]
  %s4 = inlined_call_operand.hbm [shape: f32[1,8], index: 4, kind: input, shape index: {}]
  %s5 = inlined_call_operand.hbm [shape: bf16[7,8,8], index: 5, kind: input, shape index: {}]
  %s6 = inlined_call_operand.hbm [shape: f32[1,8], index: 6, kind: input, shape index: {}]
  %s7 = inlined_call_operand.hbm [shape: bf16[7,8,192], index: 7, kind: input, shape index: {}]
  %s8 = inlined_call_operand.hbm [shape: f32[1,192], index: 8, kind: input, shape index: {}]
  %s9 = inlined_call_operand.hbm [shape: bf16[8,8], index: 9, kind: input, shape index: {}]
  %s10 = inlined_call_operand.hbm [shape: f32[1,8], index: 10, kind: input, shape index: {}]
  %s11 = inlined_call_operand.hbm [shape: bf16[7,8,8], index: 11, kind: input, shape index: {}]
  %s12 = inlined_call_operand.hbm [shape: f32[1,8], index: 12, kind: input, shape index: {}]
  %s13 = inlined_call_operand.hbm [shape: bf16[7,8,8], index: 13, kind: input, shape index: {}]
  %s14 = inlined_call_operand.hbm [shape: f32[1,8], index: 14, kind: input, shape index: {}]
  %s15 = inlined_call_operand.hbm [shape: bf16[7,8,8], index: 15, kind: input, shape index: {}]
  %s16 = inlined_call_operand.hbm [shape: f32[1,8], index: 16, kind: input, shape index: {}]
  %s17 = inlined_call_operand.vmem [shape: bf16[7,8,192], index: 17, kind: input, shape index: {}]
  %s18 = inlined_call_operand.vmem [shape: f32[1,192], index: 18, kind: input, shape index: {}]
  %s19 = inlined_call_operand.vmem [shape: bf16[8,192], index: 19, kind: input, shape index: {}]
  %s20 = inlined_call_operand.vmem [shape: f32[1,192], index: 20, kind: input, shape index: {}]
  %s21 = inlined_call_operand.hbm [shape: f32[2,4,8,8,192], index: 21, kind: output, shape index: {}]
  %s22 = sld [smem:[#allocation0]]
  $region185: #{tpu_custom_call.1} parent=0
    _
  %s24 = ssub.s32 1, %s22
  %s25 = scalar_select 0, %s24, %s22
  $region1: #{tpu_custom_call.1} parent=0
    #allocation5 [shape = 'u8[65536]{0}', space=vmem, size = 0x10000, scoped, tag = 'input window, operand 0']
    #allocation6 [shape = 's32[2]{0}', space=sflag, size = 0x8, scoped, tag = 'scoped memory for tpu_custom_call.1']
    #allocation7 [shape = 's32[2]{0}', space=sflag, size = 0x8, scoped, tag = 'scoped memory for tpu_custom_call.1']
    #allocation8 [shape = 'u8[4096]{0}', space=vmem, size = 0x1000, scoped, tag = 'input window, operand 1, single buffered']
    #allocation9 [shape = 's32[1]{0}', space=sflag, size = 0x4, scoped, tag = 'scoped memory for tpu_custom_call.1']
    #allocation10 [shape = 'u8[1024]{0}', space=vmem, size = 0x400, scoped, tag = 'input window, operand 2, single buffered']
    #allocation11 [shape = 'u8[2048]{0}', space=vmem, size = 0x800, scoped, tag = 'input window, operand 3, single buffered']
    #allocation12 [shape = 's32[1]{0}', space=sflag, size = 0x4, scoped, tag = 'scoped memory for tpu_custom_call.1']
    #allocation13 [shape = 'u8[512]{0}', space=vmem, size = 0x400, scoped, tag = 'input window, operand 4, single buffered']
    #allocation14 [shape = 'u8[14336]{0}', space=vmem, size = 0x3800, scoped, tag = 'input window, operand 5, single buffered']
    #allocation15 [shape = 's32[1]{0}', space=sflag, size = 0x4, scoped, tag = 'scoped memory for tpu_custom_call.1']
    #allocation16 [shape = 'u8[512]{0}', space=vmem, size = 0x400, scoped, tag = 'input window, operand 6, single buffered']
    #allocation17 [shape = 'u8[28672]{0}', space=vmem, size = 0x7000, scoped, tag = 'input window, operand 7, single buffered']
    #allocation18 [shape = 's32[1]{0}', space=sflag, size = 0x4, scoped, tag = 'scoped memory for tpu_custom_call.1']
    #allocation19 [shape = 'u8[1024]{0}', space=vmem, size = 0x400, scoped, tag = 'input window, operand 8, single buffered']
    #allocation20 [shape = 'u8[2048]{0}', space=vmem, size = 0x800, scoped, tag = 'input window, operand 9, single buffered']
    #allocation21 [shape = 's32[1]{0}', space=sflag, size = 0x4, scoped, tag = 'scoped memory for tpu_custom_call.1']
    #allocation22 [shape = 'u8[512]{0}', space=vmem, size = 0x400, scoped, tag = 'input window, operand 10, single buffered']
    #allocation23 [shape = 'u8[14336]{0}', space=vmem, size = 0x3800, scoped, tag = 'input window, operand 11, single buffered']
    #allocation24 [shape = 's32[1]{0}', space=sflag, size = 0x4, scoped, tag = 'scoped memory for tpu_custom_call.1']
    #allocation25 [shape = 'u8[512]{0}', space=vmem, size = 0x400, scoped, tag = 'input window, operand 12, single buffered']
    #allocation26 [shape = 'u8[14336]{0}', space=vmem, size = 0x3800, scoped, tag = 'input window, operand 13, single buffered']
    #allocation27 [shape = 's32[1]{0}', space=sflag, size = 0x4, scoped, tag = 'scoped memory for tpu_custom_call.1']
    #allocation28 [shape = 'u8[512]{0}', space=vmem, size = 0x400, scoped, tag = 'input window, operand 14, single buffered']
    #allocation29 [shape = 'u8[14336]{0}', space=vmem, size = 0x3800, scoped, tag = 'input window, operand 15, single buffered']
    #allocation30 [shape = 's32[1]{0}', space=sflag, size = 0x4, scoped, tag = 'scoped memory for tpu_custom_call.1']
    #allocation31 [shape = 'u8[512]{0}', space=vmem, size = 0x400, scoped, tag = 'input window, operand 16, single buffered']
    #allocation32 [shape = 'u8[524288]{0}', space=vmem, size = 0x80000, scoped, tag = 'output window, operand 0']
    %26 = vsyncpa [#allocation6], 0
    %s27 = scalar_lea.sflag [#allocation6], 1
    %28 = vsyncpa %s27, 0
    %29 = vsyncpa [#allocation9], 0
    %30 = vsyncpa [#allocation12], 0
    %31 = vsyncpa [#allocation15], 0
    %32 = vsyncpa [#allocation18], 0
    %33 = vsyncpa [#allocation21], 0
    %34 = vsyncpa [#allocation24], 0
    %35 = vsyncpa [#allocation27], 0
    %36 = vsyncpa [#allocation30], 0
    %37 = vsyncpa [#allocation7], 0
    %s38 = scalar_lea.sflag [#allocation7], 1
    %39 = vsyncpa %s38, 0
    loop: start=0, step=1, limit=4
    $region2: #{tpu_custom_call.1} parent=1 // loop_pre_header
      _
    $region3: #{tpu_custom_call.1} parent=1 // loop_header
      %s41 = sphi 0, %s45
      %p42 = scmp.ge.s32.totalorder %s41, 4
      %s51 = sphi 0, %s53
      %s54 = sphi 0, %s51
      %s55 = sphi 0, %s54
      %s71 = sphi 0, %s55
      %s75 = sphi 0, %s75
      %s77 = sphi 0, %s75
      %s78 = sphi 0, %s77
      %s92 = sphi 0, %s78
      %s96 = sphi 0, %s96
      %s98 = sphi 0, %s96
      %s99 = sphi 0, %s98
      %s113 = sphi 0, %s99
      %s117 = sphi 0, %s117
      %s119 = sphi 0, %s117
      %s120 = sphi 0, %s119
      %s134 = sphi 0, %s120
      %s138 = sphi 0, %s138
      %s140 = sphi 0, %s138
      %s141 = sphi 0, %s140
      %s155 = sphi 0, %s141
      %s159 = sphi 0, %s159
      %s161 = sphi 0, %s159
      %s162 = sphi 0, %s161
      %s176 = sphi 0, %s162
      %s180 = sphi 0, %s180
      %s182 = sphi 0, %s180
      %s183 = sphi 0, %s182
      %s197 = sphi 0, %s183
      %s201 = sphi 0, %s201
      %s203 = sphi 0, %s201
      %s204 = sphi 0, %s203
      %s218 = sphi 0, %s204
      %s222 = sphi 0, %s222
      %s224 = sphi 0, %s222
      %s225 = sphi 0, %s224
      %s239 = sphi 0, %s225
      %s243 = sphi 0, %s243
      %s245 = sphi 0, %s243
      %s246 = sphi 0, %s245
      %s260 = sphi 0, %s246
      %s264 = sphi 0, %s264
      %s266 = sphi 0, %s264
      %s267 = sphi 0, %s266
      %s281 = sphi 0, %s267
      %s285 = sphi 0, %s285
      %s287 = sphi 0, %s285
      %s288 = sphi 0, %s287
      %s302 = sphi 0, %s288
      %s306 = sphi 0, %s306
      %s308 = sphi 0, %s306
      %s309 = sphi 0, %s308
      %s323 = sphi 0, %s309
      %s327 = sphi 0, %s327
      %s329 = sphi 0, %s327
      %s330 = sphi 0, %s329
      %s344 = sphi 0, %s330
      %s348 = sphi 0, %s348
      %s350 = sphi 0, %s348
      %s351 = sphi 0, %s350
      %s365 = sphi 0, %s351
      %s369 = sphi 0, %s369
      %s371 = sphi 0, %s369
      %s372 = sphi 0, %s371
      %s386 = sphi 0, %s372
      %s390 = sphi 0, %s390
      %s392 = sphi 0, %s390
      %s393 = sphi 0, %s392
      %s407 = sphi 0, %s393
      %s411 = sphi 0, %s411
      %s413 = sphi 0, %s411
      %s414 = sphi 0, %s413
      %s428 = sphi 0, %s414
      %s432 = sphi 0, %s432
      %s434 = sphi 0, %s432
      %s435 = sphi 0, %s434
      %s449 = sphi 0, %s435
      %s453 = sphi 0, %s453
      %s455 = sphi 0, %s453
      %s456 = sphi 0, %s455
      %s470 = sphi 0, %s456
      %s474 = sphi 0, %s474
      %s476 = sphi 0, %s474
      %s477 = sphi 0, %s476
      %s491 = sphi 0, %s477
      %s497 = sphi 0, %s499
      %s500 = sphi 0, %s497
      %s501 = sphi 0, %s500
      %s517 = sphi 0, %s501
    $region4: #{tpu_custom_call.1} parent=1 // loop_header_branch
      %44 = sbr.rel (%p42) target = $region8
    $region5: #{tpu_custom_call.1} parent=1 // loop_body
      %s46 = ssub.s32 %s41, 1
      %s47 = ssub.s32 %s41, 2
      %s48 = sadd.s32 %s41, 1
      %s49 = ssub.s32 %s41, %s48
      %p50 = scmp.eq.s32.totalorder %s49, 0
      %s52 = sadd.s32 %s51, 1
      %s53 = scalar_select %p50, %s51, %s52
      %p56 = pneg %p50
      %p57 = scmp.eq.s32.totalorder %s41, 1
      %p58 = por %p56, %p57
      %p59 = scmp.ne.s32.totalorder %s51, %s54
      %p60 = scmp.eq.s32.totalorder %s41, 0
      %p61 = por %p59, %p60
      %p62 = scmp.ne.s32.totalorder %s51, %s54
      %p63 = scmp.eq.s32.totalorder %s46, 1
      %p64 = por %p62, %p63
      %p65 = scmp.ne.s32.totalorder %s54, %s55
      %p66 = scmp.eq.s32.totalorder %s46, 0
      %p67 = por %p65, %p66
      %p68 = scmp.ne.s32.totalorder %s54, %s55
      %p69 = scmp.eq.s32.totalorder %s47, 1
      %p70 = por %p68, %p69
      %p72 = scmp.ne.s32.totalorder %s55, %s71
      %p73 = scmp.eq.s32.totalorder %s47, 0
      %p74 = por %p72, %p73
      %s76 = sadd.s32 %s75, 1
      %p79 = scmp.eq.s32.totalorder %s41, 1
      %p80 = scmp.ne.s32.totalorder %s75, %s77
      %p81 = scmp.eq.s32.totalorder %s41, 0
      %p82 = por %p80, %p81
      %p83 = scmp.ne.s32.totalorder %s75, %s77
      %p84 = scmp.eq.s32.totalorder %s46, 1
      %p85 = por %p83, %p84
      %p86 = scmp.ne.s32.totalorder %s77, %s78
      %p87 = scmp.eq.s32.totalorder %s46, 0
      %p88 = por %p86, %p87
      %p89 = scmp.ne.s32.totalorder %s77, %s78
      %p90 = scmp.eq.s32.totalorder %s47, 1
      %p91 = por %p89, %p90
      %p93 = scmp.ne.s32.totalorder %s78, %s92
      %p94 = scmp.eq.s32.totalorder %s47, 0
      %p95 = por %p93, %p94
      %s97 = sadd.s32 %s96, 1
      %p100 = scmp.eq.s32.totalorder %s41, 1
      %p101 = scmp.ne.s32.totalorder %s96, %s98
      %p102 = scmp.eq.s32.totalorder %s41, 0
      %p103 = por %p101, %p102
      %p104 = scmp.ne.s32.totalorder %s96, %s98
      %p105 = scmp.eq.s32.totalorder %s46, 1
      %p106 = por %p104, %p105
      %p107 = scmp.ne.s32.totalorder %s98, %s99
      %p108 = scmp.eq.s32.totalorder %s46, 0
      %p109 = por %p107, %p108
      %p110 = scmp.ne.s32.totalorder %s98, %s99
      %p111 = scmp.eq.s32.totalorder %s47, 1
      %p112 = por %p110, %p111
      %p114 = scmp.ne.s32.totalorder %s99, %s113
      %p115 = scmp.eq.s32.totalorder %s47, 0
      %p116 = por %p114, %p115
      %s118 = sadd.s32 %s117, 1
      %p121 = scmp.eq.s32.totalorder %s41, 1
      %p122 = scmp.ne.s32.totalorder %s117, %s119
      %p123 = scmp.eq.s32.totalorder %s41, 0
      %p124 = por %p122, %p123
      %p125 = scmp.ne.s32.totalorder %s117, %s119
      %p126 = scmp.eq.s32.totalorder %s46, 1
      %p127 = por %p125, %p126
      %p128 = scmp.ne.s32.totalorder %s119, %s120
      %p129 = scmp.eq.s32.totalorder %s46, 0
      %p130 = por %p128, %p129
      %p131 = scmp.ne.s32.totalorder %s119, %s120
      %p132 = scmp.eq.s32.totalorder %s47, 1
      %p133 = por %p131, %p132
      %p135 = scmp.ne.s32.totalorder %s120, %s134
      %p136 = scmp.eq.s32.totalorder %s47, 0
      %p137 = por %p135, %p136
      %s139 = sadd.s32 %s138, 1
      %p142 = scmp.eq.s32.totalorder %s41, 1
      %p143 = scmp.ne.s32.totalorder %s138, %s140
      %p144 = scmp.eq.s32.totalorder %s41, 0
      %p145 = por %p143, %p144
      %p146 = scmp.ne.s32.totalorder %s138, %s140
      %p147 = scmp.eq.s32.totalorder %s46, 1
      %p148 = por %p146, %p147
      %p149 = scmp.ne.s32.totalorder %s140, %s141
      %p150 = scmp.eq.s32.totalorder %s46, 0
      %p151 = por %p149, %p150
      %p152 = scmp.ne.s32.totalorder %s140, %s141
      %p153 = scmp.eq.s32.totalorder %s47, 1
      %p154 = por %p152, %p153
      %p156 = scmp.ne.s32.totalorder %s141, %s155
      %p157 = scmp.eq.s32.totalorder %s47, 0
      %p158 = por %p156, %p157
      %s160 = sadd.s32 %s159, 1
      %p163 = scmp.eq.s32.totalorder %s41, 1
      %p164 = scmp.ne.s32.totalorder %s159, %s161
      %p165 = scmp.eq.s32.totalorder %s41, 0
      %p166 = por %p164, %p165
      %p167 = scmp.ne.s32.totalorder %s159, %s161
      %p168 = scmp.eq.s32.totalorder %s46, 1
      %p169 = por %p167, %p168
      %p170 = scmp.ne.s32.totalorder %s161, %s162
      %p171 = scmp.eq.s32.totalorder %s46, 0
      %p172 = por %p170, %p171
      %p173 = scmp.ne.s32.totalorder %s161, %s162
      %p174 = scmp.eq.s32.totalorder %s47, 1
      %p175 = por %p173, %p174
      %p177 = scmp.ne.s32.totalorder %s162, %s176
      %p178 = scmp.eq.s32.totalorder %s47, 0
      %p179 = por %p177, %p178
      %s181 = sadd.s32 %s180, 1
      %p184 = scmp.eq.s32.totalorder %s41, 1
      %p185 = scmp.ne.s32.totalorder %s180, %s182
      %p186 = scmp.eq.s32.totalorder %s41, 0
      %p187 = por %p185, %p186
      %p188 = scmp.ne.s32.totalorder %s180, %s182
      %p189 = scmp.eq.s32.totalorder %s46, 1
      %p190 = por %p188, %p189
      %p191 = scmp.ne.s32.totalorder %s182, %s183
      %p192 = scmp.eq.s32.totalorder %s46, 0
      %p193 = por %p191, %p192
      %p194 = scmp.ne.s32.totalorder %s182, %s183
      %p195 = scmp.eq.s32.totalorder %s47, 1
      %p196 = por %p194, %p195
      %p198 = scmp.ne.s32.totalorder %s183, %s197
      %p199 = scmp.eq.s32.totalorder %s47, 0
      %p200 = por %p198, %p199
      %s202 = sadd.s32 %s201, 1
      %p205 = scmp.eq.s32.totalorder %s41, 1
      %p206 = scmp.ne.s32.totalorder %s201, %s203
      %p207 = scmp.eq.s32.totalorder %s41, 0
      %p208 = por %p206, %p207
      %p209 = scmp.ne.s32.totalorder %s201, %s203
      %p210 = scmp.eq.s32.totalorder %s46, 1
      %p211 = por %p209, %p210
      %p212 = scmp.ne.s32.totalorder %s203, %s204
      %p213 = scmp.eq.s32.totalorder %s46, 0
      %p214 = por %p212, %p213
      %p215 = scmp.ne.s32.totalorder %s203, %s204
      %p216 = scmp.eq.s32.totalorder %s47, 1
      %p217 = por %p215, %p216
      %p219 = scmp.ne.s32.totalorder %s204, %s218
      %p220 = scmp.eq.s32.totalorder %s47, 0
      %p221 = por %p219, %p220
      %s223 = sadd.s32 %s222, 1
      %p226 = scmp.eq.s32.totalorder %s41, 1
      %p227 = scmp.ne.s32.totalorder %s222, %s224
      %p228 = scmp.eq.s32.totalorder %s41, 0
      %p229 = por %p227, %p228
      %p230 = scmp.ne.s32.totalorder %s222, %s224
      %p231 = scmp.eq.s32.totalorder %s46, 1
      %p232 = por %p230, %p231
      %p233 = scmp.ne.s32.totalorder %s224, %s225
      %p234 = scmp.eq.s32.totalorder %s46, 0
      %p235 = por %p233, %p234
      %p236 = scmp.ne.s32.totalorder %s224, %s225
      %p237 = scmp.eq.s32.totalorder %s47, 1
      %p238 = por %p236, %p237
      %p240 = scmp.ne.s32.totalorder %s225, %s239
      %p241 = scmp.eq.s32.totalorder %s47, 0
      %p242 = por %p240, %p241
      %s244 = sadd.s32 %s243, 1
      %p247 = scmp.eq.s32.totalorder %s41, 1
      %p248 = scmp.ne.s32.totalorder %s243, %s245
      %p249 = scmp.eq.s32.totalorder %s41, 0
      %p250 = por %p248, %p249
      %p251 = scmp.ne.s32.totalorder %s243, %s245
      %p252 = scmp.eq.s32.totalorder %s46, 1
      %p253 = por %p251, %p252
      %p254 = scmp.ne.s32.totalorder %s245, %s246
      %p255 = scmp.eq.s32.totalorder %s46, 0
      %p256 = por %p254, %p255
      %p257 = scmp.ne.s32.totalorder %s245, %s246
      %p258 = scmp.eq.s32.totalorder %s47, 1
      %p259 = por %p257, %p258
      %p261 = scmp.ne.s32.totalorder %s246, %s260
      %p262 = scmp.eq.s32.totalorder %s47, 0
      %p263 = por %p261, %p262
      %s265 = sadd.s32 %s264, 1
      %p268 = scmp.eq.s32.totalorder %s41, 1
      %p269 = scmp.ne.s32.totalorder %s264, %s266
      %p270 = scmp.eq.s32.totalorder %s41, 0
      %p271 = por %p269, %p270
      %p272 = scmp.ne.s32.totalorder %s264, %s266
      %p273 = scmp.eq.s32.totalorder %s46, 1
      %p274 = por %p272, %p273
      %p275 = scmp.ne.s32.totalorder %s266, %s267
      %p276 = scmp.eq.s32.totalorder %s46, 0
      %p277 = por %p275, %p276
      %p278 = scmp.ne.s32.totalorder %s266, %s267
      %p279 = scmp.eq.s32.totalorder %s47, 1
      %p280 = por %p278, %p279
      %p282 = scmp.ne.s32.totalorder %s267, %s281
      %p283 = scmp.eq.s32.totalorder %s47, 0
      %p284 = por %p282, %p283
      %s286 = sadd.s32 %s285, 1
      %p289 = scmp.eq.s32.totalorder %s41, 1
      %p290 = scmp.ne.s32.totalorder %s285, %s287
      %p291 = scmp.eq.s32.totalorder %s41, 0
      %p292 = por %p290, %p291
      %p293 = scmp.ne.s32.totalorder %s285, %s287
      %p294 = scmp.eq.s32.totalorder %s46, 1
      %p295 = por %p293, %p294
      %p296 = scmp.ne.s32.totalorder %s287, %s288
      %p297 = scmp.eq.s32.totalorder %s46, 0
      %p298 = por %p296, %p297
      %p299 = scmp.ne.s32.totalorder %s287, %s288
      %p300 = scmp.eq.s32.totalorder %s47, 1
      %p301 = por %p299, %p300
      %p303 = scmp.ne.s32.totalorder %s288, %s302
      %p304 = scmp.eq.s32.totalorder %s47, 0
      %p305 = por %p303, %p304
      %s307 = sadd.s32 %s306, 1
      %p310 = scmp.eq.s32.totalorder %s41, 1
      %p311 = scmp.ne.s32.totalorder %s306, %s308
      %p312 = scmp.eq.s32.totalorder %s41, 0
      %p313 = por %p311, %p312
      %p314 = scmp.ne.s32.totalorder %s306, %s308
      %p315 = scmp.eq.s32.totalorder %s46, 1
      %p316 = por %p314, %p315
      %p317 = scmp.ne.s32.totalorder %s308, %s309
      %p318 = scmp.eq.s32.totalorder %s46, 0
      %p319 = por %p317, %p318
      %p320 = scmp.ne.s32.totalorder %s308, %s309
      %p321 = scmp.eq.s32.totalorder %s47, 1
      %p322 = por %p320, %p321
      %p324 = scmp.ne.s32.totalorder %s309, %s323
      %p325 = scmp.eq.s32.totalorder %s47, 0
      %p326 = por %p324, %p325
      %s328 = sadd.s32 %s327, 1
      %p331 = scmp.eq.s32.totalorder %s41, 1
      %p332 = scmp.ne.s32.totalorder %s327, %s329
      %p333 = scmp.eq.s32.totalorder %s41, 0
      %p334 = por %p332, %p333
      %p335 = scmp.ne.s32.totalorder %s327, %s329
      %p336 = scmp.eq.s32.totalorder %s46, 1
      %p337 = por %p335, %p336
      %p338 = scmp.ne.s32.totalorder %s329, %s330
      %p339 = scmp.eq.s32.totalorder %s46, 0
      %p340 = por %p338, %p339
      %p341 = scmp.ne.s32.totalorder %s329, %s330
      %p342 = scmp.eq.s32.totalorder %s47, 1
      %p343 = por %p341, %p342
      %p345 = scmp.ne.s32.totalorder %s330, %s344
      %p346 = scmp.eq.s32.totalorder %s47, 0
      %p347 = por %p345, %p346
      %s349 = sadd.s32 %s348, 1
      %p352 = scmp.eq.s32.totalorder %s41, 1
      %p353 = scmp.ne.s32.totalorder %s348, %s350
      %p354 = scmp.eq.s32.totalorder %s41, 0
      %p355 = por %p353, %p354
      %p356 = scmp.ne.s32.totalorder %s348, %s350
      %p357 = scmp.eq.s32.totalorder %s46, 1
      %p358 = por %p356, %p357
      %p359 = scmp.ne.s32.totalorder %s350, %s351
      %p360 = scmp.eq.s32.totalorder %s46, 0
      %p361 = por %p359, %p360
      %p362 = scmp.ne.s32.totalorder %s350, %s351
      %p363 = scmp.eq.s32.totalorder %s47, 1
      %p364 = por %p362, %p363
      %p366 = scmp.ne.s32.totalorder %s351, %s365
      %p367 = scmp.eq.s32.totalorder %s47, 0
      %p368 = por %p366, %p367
      %s370 = sadd.s32 %s369, 1
      %p373 = scmp.eq.s32.totalorder %s41, 1
      %p374 = scmp.ne.s32.totalorder %s369, %s371
      %p375 = scmp.eq.s32.totalorder %s41, 0
      %p376 = por %p374, %p375
      %p377 = scmp.ne.s32.totalorder %s369, %s371
      %p378 = scmp.eq.s32.totalorder %s46, 1
      %p379 = por %p377, %p378
      %p380 = scmp.ne.s32.totalorder %s371, %s372
      %p381 = scmp.eq.s32.totalorder %s46, 0
      %p382 = por %p380, %p381
      %p383 = scmp.ne.s32.totalorder %s371, %s372
      %p384 = scmp.eq.s32.totalorder %s47, 1
      %p385 = por %p383, %p384
      %p387 = scmp.ne.s32.totalorder %s372, %s386
      %p388 = scmp.eq.s32.totalorder %s47, 0
      %p389 = por %p387, %p388
      %s391 = sadd.s32 %s390, 1
      %p394 = scmp.eq.s32.totalorder %s41, 1
      %p395 = scmp.ne.s32.totalorder %s390, %s392
      %p396 = scmp.eq.s32.totalorder %s41, 0
      %p397 = por %p395, %p396
      %p398 = scmp.ne.s32.totalorder %s390, %s392
      %p399 = scmp.eq.s32.totalorder %s46, 1
      %p400 = por %p398, %p399
      %p401 = scmp.ne.s32.totalorder %s392, %s393
      %p402 = scmp.eq.s32.totalorder %s46, 0
      %p403 = por %p401, %p402
      %p404 = scmp.ne.s32.totalorder %s392, %s393
      %p405 = scmp.eq.s32.totalorder %s47, 1
      %p406 = por %p404, %p405
      %p408 = scmp.ne.s32.totalorder %s393, %s407
      %p409 = scmp.eq.s32.totalorder %s47, 0
      %p410 = por %p408, %p409
      %s412 = sadd.s32 %s411, 1
      %p415 = scmp.eq.s32.totalorder %s41, 1
      %p416 = scmp.ne.s32.totalorder %s411, %s413
      %p417 = scmp.eq.s32.totalorder %s41, 0
      %p418 = por %p416, %p417
      %p419 = scmp.ne.s32.totalorder %s411, %s413
      %p420 = scmp.eq.s32.totalorder %s46, 1
      %p421 = por %p419, %p420
      %p422 = scmp.ne.s32.totalorder %s413, %s414
      %p423 = scmp.eq.s32.totalorder %s46, 0
      %p424 = por %p422, %p423
      %p425 = scmp.ne.s32.totalorder %s413, %s414
      %p426 = scmp.eq.s32.totalorder %s47, 1
      %p427 = por %p425, %p426
      %p429 = scmp.ne.s32.totalorder %s414, %s428
      %p430 = scmp.eq.s32.totalorder %s47, 0
      %p431 = por %p429, %p430
      %s433 = sadd.s32 %s432, 1
      %p436 = scmp.eq.s32.totalorder %s41, 1
      %p437 = scmp.ne.s32.totalorder %s432, %s434
      %p438 = scmp.eq.s32.totalorder %s41, 0
      %p439 = por %p437, %p438
      %p440 = scmp.ne.s32.totalorder %s432, %s434
      %p441 = scmp.eq.s32.totalorder %s46, 1
      %p442 = por %p440, %p441
      %p443 = scmp.ne.s32.totalorder %s434, %s435
      %p444 = scmp.eq.s32.totalorder %s46, 0
      %p445 = por %p443, %p444
      %p446 = scmp.ne.s32.totalorder %s434, %s435
      %p447 = scmp.eq.s32.totalorder %s47, 1
      %p448 = por %p446, %p447
      %p450 = scmp.ne.s32.totalorder %s435, %s449
      %p451 = scmp.eq.s32.totalorder %s47, 0
      %p452 = por %p450, %p451
      %s454 = sadd.s32 %s453, 1
      %p457 = scmp.eq.s32.totalorder %s41, 1
      %p458 = scmp.ne.s32.totalorder %s453, %s455
      %p459 = scmp.eq.s32.totalorder %s41, 0
      %p460 = por %p458, %p459
      %p461 = scmp.ne.s32.totalorder %s453, %s455
      %p462 = scmp.eq.s32.totalorder %s46, 1
      %p463 = por %p461, %p462
      %p464 = scmp.ne.s32.totalorder %s455, %s456
      %p465 = scmp.eq.s32.totalorder %s46, 0
      %p466 = por %p464, %p465
      %p467 = scmp.ne.s32.totalorder %s455, %s456
      %p468 = scmp.eq.s32.totalorder %s47, 1
      %p469 = por %p467, %p468
      %p471 = scmp.ne.s32.totalorder %s456, %s470
      %p472 = scmp.eq.s32.totalorder %s47, 0
      %p473 = por %p471, %p472
      %s475 = sadd.s32 %s474, 1
      %p478 = scmp.eq.s32.totalorder %s41, 1
      %p479 = scmp.ne.s32.totalorder %s474, %s476
      %p480 = scmp.eq.s32.totalorder %s41, 0
      %p481 = por %p479, %p480
      %p482 = scmp.ne.s32.totalorder %s474, %s476
      %p483 = scmp.eq.s32.totalorder %s46, 1
      %p484 = por %p482, %p483
      %p485 = scmp.ne.s32.totalorder %s476, %s477
      %p486 = scmp.eq.s32.totalorder %s46, 0
      %p487 = por %p485, %p486
      %p488 = scmp.ne.s32.totalorder %s476, %s477
      %p489 = scmp.eq.s32.totalorder %s47, 1
      %p490 = por %p488, %p489
      %p492 = scmp.ne.s32.totalorder %s477, %s491
      %p493 = scmp.eq.s32.totalorder %s47, 0
      %p494 = por %p492, %p493
      %s495 = ssub.s32 %s41, %s48
      %p496 = scmp.eq.s32.totalorder %s495, 0
      %s498 = sadd.s32 %s497, 1
      %s499 = scalar_select %p496, %s497, %s498
      %p502 = pneg %p496
      %p503 = scmp.eq.s32.totalorder %s41, 1
      %p504 = por %p502, %p503
      %p505 = scmp.ne.s32.totalorder %s497, %s500
      %p506 = scmp.eq.s32.totalorder %s41, 0
      %p507 = por %p505, %p506
      %p508 = scmp.ne.s32.totalorder %s497, %s500
      %p509 = scmp.eq.s32.totalorder %s46, 1
      %p510 = por %p508, %p509
      %p511 = scmp.ne.s32.totalorder %s500, %s501
      %p512 = scmp.eq.s32.totalorder %s46, 0
      %p513 = por %p511, %p512
      %p514 = scmp.ne.s32.totalorder %s500, %s501
      %p515 = scmp.eq.s32.totalorder %s47, 1
      %p516 = por %p514, %p515
      %p518 = scmp.ne.s32.totalorder %s501, %s517
      %p519 = scmp.eq.s32.totalorder %s47, 0
      %p520 = por %p518, %p519
      %p521 = scmp.le.s32.totalorder 1, %s41
      %p522 = scmp.lt.s32.totalorder %s41, 3
      %p523 = pnand %p521, %p522
      %p524 = pneg %p523
      // Predicated region
      $region9: #{tpu_custom_call.1} parent=5 // pred_check
        _
      $region10: #{tpu_custom_call.1} parent=5 // pred_check_branch
        %526 = sbr.rel (%p523) target = $region12
      $region11: #{tpu_custom_call.1} parent=5 // pred_region
        %s527 = ssub.s32 %s41, 1
        // Predicated region
        $region13: #{tpu_custom_call.1} parent=11 // pred_check
          %p528 = pneg %p88
        $region14: #{tpu_custom_call.1} parent=11 // pred_check_branch
          %530 = sbr.rel (%p528) target = $region16
        $region15: #{tpu_custom_call.1} parent=11 // pred_region
          %s532 = ssub.s32 128, 128
          %533 = vsyncadd [#allocation9], %s532
          %s535 = sshll.u32 [#allocation8], 4
          %s536 = int_to_ptr.vmem [resolvable:$true] %s535
          %538 = dma.hbm_to_vmem [thread:$0]  %s1, 128, %s536, [#allocation9]
        $region16: #{tpu_custom_call.1} parent=11 // pred_fallthru
          _
        // Predicated region
        $region17: #{tpu_custom_call.1} parent=11 // pred_check
          %p539 = pneg %p109
        $region18: #{tpu_custom_call.1} parent=11 // pred_check_branch
          %541 = sbr.rel (%p539) target = $region20
        $region19: #{tpu_custom_call.1} parent=11 // pred_region
          %s543 = ssub.s32 32, 32
          %544 = vsyncadd [#allocation9], %s543
          %s546 = sshll.u32 [#allocation10], 4
          %s547 = int_to_ptr.vmem [resolvable:$true] %s546
          %549 = dma.hbm_to_vmem [thread:$0]  %s2, 32, %s547, [#allocation9]
        $region20: #{tpu_custom_call.1} parent=11 // pred_fallthru
          _
        // Predicated region
        $region21: #{tpu_custom_call.1} parent=11 // pred_check
          %p550 = pneg %p130
        $region22: #{tpu_custom_call.1} parent=11 // pred_check_branch
          %552 = sbr.rel (%p550) target = $region24
        $region23: #{tpu_custom_call.1} parent=11 // pred_region
          %s554 = ssub.s32 64, 64
          %555 = vsyncadd [#allocation12], %s554
          %s557 = sshll.u32 [#allocation11], 4
          %s558 = int_to_ptr.vmem [resolvable:$true] %s557
          %560 = dma.hbm_to_vmem [thread:$0]  %s3, 64, %s558, [#allocation12]
        $region24: #{tpu_custom_call.1} parent=11 // pred_fallthru
          _
        // Predicated region
        $region25: #{tpu_custom_call.1} parent=11 // pred_check
          %p561 = pneg %p151
        $region26: #{tpu_custom_call.1} parent=11 // pred_check_branch
          %563 = sbr.rel (%p561) target = $region28
        $region27: #{tpu_custom_call.1} parent=11 // pred_region
          %s565 = ssub.s32 16, 16
          %566 = vsyncadd [#allocation12], %s565
          %s568 = sshll.u32 [#allocation13], 4
          %s569 = int_to_ptr.vmem [resolvable:$true] %s568
          %571 = dma.hbm_to_vmem [thread:$0]  %s4, 16, %s569, [#allocation12]
        $region28: #{tpu_custom_call.1} parent=11 // pred_fallthru
          _
        // Predicated region
        $region29: #{tpu_custom_call.1} parent=11 // pred_check
          %p572 = pneg %p172
        $region30: #{tpu_custom_call.1} parent=11 // pred_check_branch
          %574 = sbr.rel (%p572) target = $region32
        $region31: #{tpu_custom_call.1} parent=11 // pred_region
          %s576 = ssub.s32 448, 448
          %577 = vsyncadd [#allocation15], %s576
          %s578 = sshll.u32 [#allocation14], 4
          %s579 = int_to_ptr.vmem [resolvable:$true] %s578
          %584 = dma.hbm_to_vmem [thread:$0]  %s5, 448, %s579, [#allocation15], 64, 64, 4
        $region32: #{tpu_custom_call.1} parent=11 // pred_fallthru
          _
        // Predicated region
        $region33: #{tpu_custom_call.1} parent=11 // pred_check
          %p585 = pneg %p193
        $region34: #{tpu_custom_call.1} parent=11 // pred_check_branch
          %587 = sbr.rel (%p585) target = $region36
        $region35: #{tpu_custom_call.1} parent=11 // pred_region
          %s589 = ssub.s32 16, 16
          %590 = vsyncadd [#allocation15], %s589
          %s592 = sshll.u32 [#allocation16], 4
          %s593 = int_to_ptr.vmem [resolvable:$true] %s592
          %595 = dma.hbm_to_vmem [thread:$0]  %s6, 16, %s593, [#allocation15]
        $region36: #{tpu_custom_call.1} parent=11 // pred_fallthru
          _
        // Predicated region
        $region37: #{tpu_custom_call.1} parent=11 // pred_check
          %p596 = pneg %p214
        $region38: #{tpu_custom_call.1} parent=11 // pred_check_branch
          %598 = sbr.rel (%p596) target = $region40
        $region39: #{tpu_custom_call.1} parent=11 // pred_region
          %s600 = ssub.s32 896, 896
          %601 = vsyncadd [#allocation18], %s600
          %s602 = sshll.u32 [#allocation17], 4
          %s603 = int_to_ptr.vmem [resolvable:$true] %s602
          %608 = dma.hbm_to_vmem [thread:$0]  %s7, 896, %s603, [#allocation18], 128, 128, 8
        $region40: #{tpu_custom_call.1} parent=11 // pred_fallthru
          _
        // Predicated region
        $region41: #{tpu_custom_call.1} parent=11 // pred_check
          %p609 = pneg %p235
        $region42: #{tpu_custom_call.1} parent=11 // pred_check_branch
          %611 = sbr.rel (%p609) target = $region44
        $region43: #{tpu_custom_call.1} parent=11 // pred_region
          %s613 = ssub.s32 32, 32
          %614 = vsyncadd [#allocation18], %s613
          %s616 = sshll.u32 [#allocation19], 4
          %s617 = int_to_ptr.vmem [resolvable:$true] %s616
          %619 = dma.hbm_to_vmem [thread:$0]  %s8, 32, %s617, [#allocation18]
        $region44: #{tpu_custom_call.1} parent=11 // pred_fallthru
          _
        // Predicated region
        $region45: #{tpu_custom_call.1} parent=11 // pred_check
          %p620 = pneg %p256
        $region46: #{tpu_custom_call.1} parent=11 // pred_check_branch
          %622 = sbr.rel (%p620) target = $region48
        $region47: #{tpu_custom_call.1} parent=11 // pred_region
          %s624 = ssub.s32 64, 64
          %625 = vsyncadd [#allocation21], %s624
          %s627 = sshll.u32 [#allocation20], 4
          %s628 = int_to_ptr.vmem [resolvable:$true] %s627
          %630 = dma.hbm_to_vmem [thread:$0]  %s9, 64, %s628, [#allocation21]
        $region48: #{tpu_custom_call.1} parent=11 // pred_fallthru
          _
        // Predicated region
        $region49: #{tpu_custom_call.1} parent=11 // pred_check
          %p631 = pneg %p277
        $region50: #{tpu_custom_call.1} parent=11 // pred_check_branch
          %633 = sbr.rel (%p631) target = $region52
        $region51: #{tpu_custom_call.1} parent=11 // pred_region
          %s635 = ssub.s32 16, 16
          %636 = vsyncadd [#allocation21], %s635
          %s638 = sshll.u32 [#allocation22], 4
          %s639 = int_to_ptr.vmem [resolvable:$true] %s638
          %641 = dma.hbm_to_vmem [thread:$0]  %s10, 16, %s639, [#allocation21]
        $region52: #{tpu_custom_call.1} parent=11 // pred_fallthru
          _
        // Predicated region
        $region53: #{tpu_custom_call.1} parent=11 // pred_check
          %p642 = pneg %p298
        $region54: #{tpu_custom_call.1} parent=11 // pred_check_branch
          %644 = sbr.rel (%p642) target = $region56
        $region55: #{tpu_custom_call.1} parent=11 // pred_region
          %s646 = ssub.s32 448, 448
          %647 = vsyncadd [#allocation24], %s646
          %s648 = sshll.u32 [#allocation23], 4
          %s649 = int_to_ptr.vmem [resolvable:$true] %s648
          %654 = dma.hbm_to_vmem [thread:$0]  %s11, 448, %s649, [#allocation24], 64, 64, 4
        $region56: #{tpu_custom_call.1} parent=11 // pred_fallthru
          _
        // Predicated region
        $region57: #{tpu_custom_call.1} parent=11 // pred_check
          %p655 = pneg %p319
        $region58: #{tpu_custom_call.1} parent=11 // pred_check_branch
          %657 = sbr.rel (%p655) target = $region60
        $region59: #{tpu_custom_call.1} parent=11 // pred_region
          %s659 = ssub.s32 16, 16
          %660 = vsyncadd [#allocation24], %s659
          %s662 = sshll.u32 [#allocation25], 4
          %s663 = int_to_ptr.vmem [resolvable:$true] %s662
          %665 = dma.hbm_to_vmem [thread:$0]  %s12, 16, %s663, [#allocation24]
        $region60: #{tpu_custom_call.1} parent=11 // pred_fallthru
          _
        // Predicated region
        $region61: #{tpu_custom_call.1} parent=11 // pred_check
          %p666 = pneg %p340
        $region62: #{tpu_custom_call.1} parent=11 // pred_check_branch
          %668 = sbr.rel (%p666) target = $region64
        $region63: #{tpu_custom_call.1} parent=11 // pred_region
          %s670 = ssub.s32 448, 448
          %671 = vsyncadd [#allocation27], %s670
          %s672 = sshll.u32 [#allocation26], 4
          %s673 = int_to_ptr.vmem [resolvable:$true] %s672
          %678 = dma.hbm_to_vmem [thread:$0]  %s13, 448, %s673, [#allocation27], 64, 64, 4
        $region64: #{tpu_custom_call.1} parent=11 // pred_fallthru
          _
        // Predicated region
        $region65: #{tpu_custom_call.1} parent=11 // pred_check
          %p679 = pneg %p361
        $region66: #{tpu_custom_call.1} parent=11 // pred_check_branch
          %681 = sbr.rel (%p679) target = $region68
        $region67: #{tpu_custom_call.1} parent=11 // pred_region
          %s683 = ssub.s32 16, 16
          %684 = vsyncadd [#allocation27], %s683
          %s686 = sshll.u32 [#allocation28], 4
          %s687 = int_to_ptr.vmem [resolvable:$true] %s686
          %689 = dma.hbm_to_vmem [thread:$0]  %s14, 16, %s687, [#allocation27]
        $region68: #{tpu_custom_call.1} parent=11 // pred_fallthru
          _
        // Predicated region
        $region69: #{tpu_custom_call.1} parent=11 // pred_check
          %p690 = pneg %p382
        $region70: #{tpu_custom_call.1} parent=11 // pred_check_branch
          %692 = sbr.rel (%p690) target = $region72
        $region71: #{tpu_custom_call.1} parent=11 // pred_region
          %s694 = ssub.s32 448, 448
          %695 = vsyncadd [#allocation30], %s694
          %s696 = sshll.u32 [#allocation29], 4
          %s697 = int_to_ptr.vmem [resolvable:$true] %s696
          %702 = dma.hbm_to_vmem [thread:$0]  %s15, 448, %s697, [#allocation30], 64, 64, 4
        $region72: #{tpu_custom_call.1} parent=11 // pred_fallthru
          _
        // Predicated region
        $region73: #{tpu_custom_call.1} parent=11 // pred_check
          %p703 = pneg %p403
        $region74: #{tpu_custom_call.1} parent=11 // pred_check_branch
          %705 = sbr.rel (%p703) target = $region76
        $region75: #{tpu_custom_call.1} parent=11 // pred_region
          %s707 = ssub.s32 16, 16
          %708 = vsyncadd [#allocation30], %s707
          %s710 = sshll.u32 [#allocation31], 4
          %s711 = int_to_ptr.vmem [resolvable:$true] %s710
          %713 = dma.hbm_to_vmem [thread:$0]  %s16, 16, %s711, [#allocation30]
        $region76: #{tpu_custom_call.1} parent=11 // pred_fallthru
          _
        // Predicated region
        $region77: #{tpu_custom_call.1} parent=11 // pred_check
          %p714 = pneg %p424
        $region78: #{tpu_custom_call.1} parent=11 // pred_check_branch
          %716 = sbr.rel (%p714) target = $region80
        $region79: #{tpu_custom_call.1} parent=11 // pred_region
          _
        $region80: #{tpu_custom_call.1} parent=11 // pred_fallthru
          _
        // Predicated region
        $region81: #{tpu_custom_call.1} parent=11 // pred_check
          %p717 = pneg %p445
        $region82: #{tpu_custom_call.1} parent=11 // pred_check_branch
          %719 = sbr.rel (%p717) target = $region84
        $region83: #{tpu_custom_call.1} parent=11 // pred_region
          _
        $region84: #{tpu_custom_call.1} parent=11 // pred_fallthru
          _
        // Predicated region
        $region85: #{tpu_custom_call.1} parent=11 // pred_check
          %p720 = pneg %p466
        $region86: #{tpu_custom_call.1} parent=11 // pred_check_branch
          %722 = sbr.rel (%p720) target = $region88
        $region87: #{tpu_custom_call.1} parent=11 // pred_region
          _
        $region88: #{tpu_custom_call.1} parent=11 // pred_fallthru
          _
        // Predicated region
        $region89: #{tpu_custom_call.1} parent=11 // pred_check
          %p723 = pneg %p487
        $region90: #{tpu_custom_call.1} parent=11 // pred_check_branch
          %725 = sbr.rel (%p723) target = $region92
        $region91: #{tpu_custom_call.1} parent=11 // pred_region
          _
        $region92: #{tpu_custom_call.1} parent=11 // pred_fallthru
          _
      $region12: #{tpu_custom_call.1} parent=5 // pred_fallthru
        _
      %p726 = scmp.lt.s32.totalorder %s41, 2
      // Predicated region
      $region93: #{tpu_custom_call.1} parent=5 // pred_check
        %p727 = pneg %p726
      $region94: #{tpu_custom_call.1} parent=5 // pred_check_branch
        %729 = sbr.rel (%p727) target = $region96
      $region95: #{tpu_custom_call.1} parent=5 // pred_region
        // Predicated region
        $region97: #{tpu_custom_call.1} parent=95 // pred_check
          %p730 = pneg %p61
        $region98: #{tpu_custom_call.1} parent=95 // pred_check_branch
          %732 = sbr.rel (%p730) target = $region100
        $region99: #{tpu_custom_call.1} parent=95 // pred_region
          %s733 = sand.u32 %s51, 1
          %s734 = scalar_lea.sflag [#allocation6], %s733
          %s735 = sand.u32 %s51, 1
          %s736 = smul.addr %s735, 64
          %s737 = scalar_lea.vmem [#allocation5], %s736
          %s739 = ssub.s32 1024, 1024
          %740 = vsyncadd %s734, %s739
          %s741 = smul.addr %s41, 8
          %s742 = smul.addr %s741, 128
          %s743 = scalar_lea.hbm %s0, %s742
          %s744 = sshll.u32 %s737, 4
          %s745 = int_to_ptr.vmem [resolvable:$true] %s744
          %750 = dma.hbm_to_vmem [thread:$0]  %s743, 1024, %s745, %s734, 128, 128, 8
        $region100: #{tpu_custom_call.1} parent=95 // pred_fallthru
          _
      $region96: #{tpu_custom_call.1} parent=5 // pred_fallthru
        _
      %p751 = scmp.le.s32.totalorder 1, %s41
      %p752 = scmp.lt.s32.totalorder %s41, 3
      %p753 = pnand %p751, %p752
      %p754 = pneg %p753
      // Predicated region
      $region101: #{tpu_custom_call.1} parent=5 // pred_check
        _
      $region102: #{tpu_custom_call.1} parent=5 // pred_check_branch
        %756 = sbr.rel (%p753) target = $region104
      $region103: #{tpu_custom_call.1} parent=5 // pred_region
        %s757 = ssub.s32 %s41, 1
        %s758 = sand.u32 %s54, 1
        %s759 = scalar_lea.sflag [#allocation6], %s758
        %s760 = sand.u32 %s54, 1
        %s761 = smul.addr %s760, 64
        %s762 = scalar_lea.vmem [#allocation5], %s761
        // Predicated region
        $region105: #{tpu_custom_call.1} parent=103 // pred_check
          %p763 = pneg %p67
        $region106: #{tpu_custom_call.1} parent=103 // pred_check_branch
          %765 = sbr.rel (%p763) target = $region108
        $region107: #{tpu_custom_call.1} parent=103 // pred_region
          %766 = dma.done %s759, 1024
        $region108: #{tpu_custom_call.1} parent=103 // pred_fallthru
          _
        // Predicated region
        $region109: #{tpu_custom_call.1} parent=103 // pred_check
          %p767 = pneg %p88
        $region110: #{tpu_custom_call.1} parent=103 // pred_check_branch
          %769 = sbr.rel (%p767) target = $region112
        $region111: #{tpu_custom_call.1} parent=103 // pred_region
          %770 = dma.done [#allocation9], 128
        $region112: #{tpu_custom_call.1} parent=103 // pred_fallthru
          _
        // Predicated region
        $region113: #{tpu_custom_call.1} parent=103 // pred_check
          %p771 = pneg %p109
        $region114: #{tpu_custom_call.1} parent=103 // pred_check_branch
          %773 = sbr.rel (%p771) target = $region116
        $region115: #{tpu_custom_call.1} parent=103 // pred_region
          %774 = dma.done [#allocation9], 32
        $region116: #{tpu_custom_call.1} parent=103 // pred_fallthru
          _
        // Predicated region
        $region117: #{tpu_custom_call.1} parent=103 // pred_check
          %p775 = pneg %p130
        $region118: #{tpu_custom_call.1} parent=103 // pred_check_branch
          %777 = sbr.rel (%p775) target = $region120
        $region119: #{tpu_custom_call.1} parent=103 // pred_region
          %778 = dma.done [#allocation12], 64
        $region120: #{tpu_custom_call.1} parent=103 // pred_fallthru
          _
        // Predicated region
        $region121: #{tpu_custom_call.1} parent=103 // pred_check
          %p779 = pneg %p151
        $region122: #{tpu_custom_call.1} parent=103 // pred_check_branch
          %781 = sbr.rel (%p779) target = $region124
        $region123: #{tpu_custom_call.1} parent=103 // pred_region
          %782 = dma.done [#allocation12], 16
        $region124: #{tpu_custom_call.1} parent=103 // pred_fallthru
          _
        // Predicated region
        $region125: #{tpu_custom_call.1} parent=103 // pred_check
          %p783 = pneg %p172
        $region126: #{tpu_custom_call.1} parent=103 // pred_check_branch
          %785 = sbr.rel (%p783) target = $region128
        $region127: #{tpu_custom_call.1} parent=103 // pred_region
          %786 = dma.done [#allocation15], 448
        $region128: #{tpu_custom_call.1} parent=103 // pred_fallthru
          _
        // Predicated region
        $region129: #{tpu_custom_call.1} parent=103 // pred_check
          %p787 = pneg %p193
        $region130: #{tpu_custom_call.1} parent=103 // pred_check_branch
          %789 = sbr.rel (%p787) target = $region132
        $region131: #{tpu_custom_call.1} parent=103 // pred_region
          %790 = dma.done [#allocation15], 16
        $region132: #{tpu_custom_call.1} parent=103 // pred_fallthru
          _
        // Predicated region
        $region133: #{tpu_custom_call.1} parent=103 // pred_check
          %p791 = pneg %p214
        $region134: #{tpu_custom_call.1} parent=103 // pred_check_branch
          %793 = sbr.rel (%p791) target = $region136
        $region135: #{tpu_custom_call.1} parent=103 // pred_region
          %794 = dma.done [#allocation18], 896
        $region136: #{tpu_custom_call.1} parent=103 // pred_fallthru
          _
        // Predicated region
        $region137: #{tpu_custom_call.1} parent=103 // pred_check
          %p795 = pneg %p235
        $region138: #{tpu_custom_call.1} parent=103 // pred_check_branch
          %797 = sbr.rel (%p795) target = $region140
        $region139: #{tpu_custom_call.1} parent=103 // pred_region
          %798 = dma.done [#allocation18], 32
        $region140: #{tpu_custom_call.1} parent=103 // pred_fallthru
          _
        // Predicated region
        $region141: #{tpu_custom_call.1} parent=103 // pred_check
          %p799 = pneg %p256
        $region142: #{tpu_custom_call.1} parent=103 // pred_check_branch
          %801 = sbr.rel (%p799) target = $region144
        $region143: #{tpu_custom_call.1} parent=103 // pred_region
          %802 = dma.done [#allocation21], 64
        $region144: #{tpu_custom_call.1} parent=103 // pred_fallthru
          _
        // Predicated region
        $region145: #{tpu_custom_call.1} parent=103 // pred_check
          %p803 = pneg %p277
        $region146: #{tpu_custom_call.1} parent=103 // pred_check_branch
          %805 = sbr.rel (%p803) target = $region148
        $region147: #{tpu_custom_call.1} parent=103 // pred_region
          %806 = dma.done [#allocation21], 16
        $region148: #{tpu_custom_call.1} parent=103 // pred_fallthru
          _
        // Predicated region
        $region149: #{tpu_custom_call.1} parent=103 // pred_check
          %p807 = pneg %p298
        $region150: #{tpu_custom_call.1} parent=103 // pred_check_branch
          %809 = sbr.rel (%p807) target = $region152
        $region151: #{tpu_custom_call.1} parent=103 // pred_region
          %810 = dma.done [#allocation24], 448
        $region152: #{tpu_custom_call.1} parent=103 // pred_fallthru
          _
        // Predicated region
        $region153: #{tpu_custom_call.1} parent=103 // pred_check
          %p811 = pneg %p319
        $region154: #{tpu_custom_call.1} parent=103 // pred_check_branch
          %813 = sbr.rel (%p811) target = $region156
        $region155: #{tpu_custom_call.1} parent=103 // pred_region
          %814 = dma.done [#allocation24], 16
        $region156: #{tpu_custom_call.1} parent=103 // pred_fallthru
          _
        // Predicated region
        $region157: #{tpu_custom_call.1} parent=103 // pred_check
          %p815 = pneg %p340
        $region158: #{tpu_custom_call.1} parent=103 // pred_check_branch
          %817 = sbr.rel (%p815) target = $region160
        $region159: #{tpu_custom_call.1} parent=103 // pred_region
          %818 = dma.done [#allocation27], 448
        $region160: #{tpu_custom_call.1} parent=103 // pred_fallthru
          _
        // Predicated region
        $region161: #{tpu_custom_call.1} parent=103 // pred_check
          %p819 = pneg %p361
        $region162: #{tpu_custom_call.1} parent=103 // pred_check_branch
          %821 = sbr.rel (%p819) target = $region164
        $region163: #{tpu_custom_call.1} parent=103 // pred_region
          %822 = dma.done [#allocation27], 16
        $region164: #{tpu_custom_call.1} parent=103 // pred_fallthru
          _
        // Predicated region
        $region165: #{tpu_custom_call.1} parent=103 // pred_check
          %p823 = pneg %p382
        $region166: #{tpu_custom_call.1} parent=103 // pred_check_branch
          %825 = sbr.rel (%p823) target = $region168
        $region167: #{tpu_custom_call.1} parent=103 // pred_region
          %826 = dma.done [#allocation30], 448
        $region168: #{tpu_custom_call.1} parent=103 // pred_fallthru
          _
        // Predicated region
        $region169: #{tpu_custom_call.1} parent=103 // pred_check
          %p827 = pneg %p403
        $region170: #{tpu_custom_call.1} parent=103 // pred_check_branch
          %829 = sbr.rel (%p827) target = $region172
        $region171: #{tpu_custom_call.1} parent=103 // pred_region
          %830 = dma.done [#allocation30], 16
        $region172: #{tpu_custom_call.1} parent=103 // pred_fallthru
          _
        %s831 = sand.u32 %s54, 1
        %s832 = scalar_lea.sflag [#allocation6], %s831
        %s833 = sand.u32 %s54, 1
        %s834 = smul.addr %s833, 64
        %s835 = scalar_lea.vmem [#allocation5], %s834
        %p836 = pneg %p67
        %p837 = pneg %p64
        %p838 = pneg %p88
        %p839 = pneg %p85
        %p840 = pneg %p109
        %p841 = pneg %p106
        %p842 = pneg %p130
        %p843 = pneg %p127
        %p844 = pneg %p151
        %p845 = pneg %p148
        %p846 = pneg %p172
        %p847 = pneg %p169
        %p848 = pneg %p193
        %p849 = pneg %p190
        %p850 = pneg %p214
        %p851 = pneg %p211
        %p852 = pneg %p235
        %p853 = pneg %p232
        %p854 = pneg %p256
        %p855 = pneg %p253
        %p856 = pneg %p277
        %p857 = pneg %p274
        %p858 = pneg %p298
        %p859 = pneg %p295
        %p860 = pneg %p319
        %p861 = pneg %p316
        %p862 = pneg %p340
        %p863 = pneg %p337
        %p864 = pneg %p361
        %p865 = pneg %p358
        %p866 = pneg %p382
        %p867 = pneg %p379
        %p868 = pneg %p403
        %p869 = pneg %p400
        %p870 = pneg %p424
        %p871 = pneg %p421
        %p872 = pneg %p445
        %p873 = pneg %p442
        %p874 = pneg %p466
        %p875 = pneg %p463
        %p876 = pneg %p487
        %p877 = pneg %p484
        %p878 = pneg %p513
        %p879 = pneg %p510
        %s880 = sand.u32 %s500, 1
        %s881 = scalar_lea.sflag [#allocation7], %s880
        %s882 = sand.u32 %s500, 1
        %s883 = smul.addr %s882, 512
        %s884 = scalar_lea.vmem [#allocation32], %s883
        %vm886 = vcmask 60416
        %887 = vst.msk [vmem:[#allocation2] sm:$0xf] %vm886, 0
        %vm888 = vcmask 59392
        %889 = vst.msk [vmem:[#allocation2 + $0x4] sm:$0x7] %vm888, 0
        %890 = vst.msk [vmem:[#allocation2 + $0x8] sm:$0xf] %vm886, 0
        %891 = vst.msk [vmem:[#allocation2 + $0xc] sm:$0x7] %vm888, 0
        %892 = vst.msk [vmem:[#allocation2 + $0x10] sm:$0xf] %vm886, 0
        %893 = vst.msk [vmem:[#allocation2 + $0x14] sm:$0x7] %vm888, 0
        %894 = vst.msk [vmem:[#allocation2 + $0x18] sm:$0xf] %vm886, 0
        %895 = vst.msk [vmem:[#allocation2 + $0x1c] sm:$0x7] %vm888, 0
        %896 = vst.msk [vmem:[#allocation2 + $0x20] sm:$0xf] %vm886, 0
        %897 = vst.msk [vmem:[#allocation2 + $0x24] sm:$0x7] %vm888, 0
        %898 = vst.msk [vmem:[#allocation2 + $0x28] sm:$0xf] %vm886, 0
        %899 = vst.msk [vmem:[#allocation2 + $0x2c] sm:$0x7] %vm888, 0
        %900 = vst.msk [vmem:[#allocation2 + $0x30] sm:$0xf] %vm886, 0
        %901 = vst.msk [vmem:[#allocation2 + $0x34] sm:$0x7] %vm888, 0
        %902 = vst.msk [vmem:[#allocation2 + $0x38] sm:$0xf] %vm886, 0
        %903 = vst.msk [vmem:[#allocation2 + $0x3c] sm:$0x7] %vm888, 0
        %904 = vst.msk [vmem:[#allocation3] sm:$0xf] %vm886, 0
        %905 = vst.msk [vmem:[#allocation3 + $0x4] sm:$0xf] %vm886, 0
        %906 = vst.msk [vmem:[#allocation3 + $0x8] sm:$0xf] %vm886, 0
        %907 = vst.msk [vmem:[#allocation3 + $0xc] sm:$0xf] %vm886, 0
        %908 = vst.msk [vmem:[#allocation3 + $0x10] sm:$0xf] %vm886, 0
        %909 = vst.msk [vmem:[#allocation3 + $0x14] sm:$0xf] %vm886, 0
        %910 = vst.msk [vmem:[#allocation3 + $0x18] sm:$0xf] %vm886, 0
        %911 = vst.msk [vmem:[#allocation3 + $0x1c] sm:$0xf] %vm886, 0
        %912 = vst.msk [vmem:[#allocation3 + $0x20] sm:$0xf] %vm886, 0
        %913 = vst.msk [vmem:[#allocation3 + $0x24] sm:$0xf] %vm886, 0
        %914 = vst.msk [vmem:[#allocation3 + $0x28] sm:$0xf] %vm886, 0
        %915 = vst.msk [vmem:[#allocation3 + $0x2c] sm:$0xf] %vm886, 0
        %916 = vst.msk [vmem:[#allocation3 + $0x30] sm:$0xf] %vm886, 0
        %917 = vst.msk [vmem:[#allocation3 + $0x34] sm:$0xf] %vm886, 0
        %918 = vst [vmem:[#allocation4] sm:$0xff] 0.0
        %vm919 = vcmask 523264
        %920 = vst.msk [vmem:[#allocation4 + $0x8] sm:$0xff] %vm919, 0.0
        %921 = vst [vmem:[#allocation4 + $0x10] sm:$0x3] 0.0
        %vm922 = vcmask 517120
        %923 = vst.msk [vmem:[#allocation4 + $0x18] sm:$0x3] %vm922, 0.0
        %924 = vst [vmem:[#allocation4 + $0x20] sm:$0xff] 0.0
        %925 = vst.msk [vmem:[#allocation4 + $0x28] sm:$0xff] %vm919, 0.0
        %926 = vst [vmem:[#allocation4 + $0x30] sm:$0x3] 0.0
        %927 = vst.msk [vmem:[#allocation4 + $0x38] sm:$0x3] %vm922, 0.0
        %928 = vst [vmem:[#allocation4 + $0x40] sm:$0xff] 0.0
        %929 = vst.msk [vmem:[#allocation4 + $0x48] sm:$0xff] %vm919, 0.0
        %930 = vst [vmem:[#allocation4 + $0x50] sm:$0x3] 0.0
        %931 = vst.msk [vmem:[#allocation4 + $0x58] sm:$0x3] %vm922, 0.0
        %932 = vst [vmem:[#allocation4 + $0x60] sm:$0xff] 0.0
        %933 = vst.msk [vmem:[#allocation4 + $0x68] sm:$0xff] %vm919, 0.0
        %934 = vst [vmem:[#allocation4 + $0x70] sm:$0x3] 0.0
        %935 = vst.msk [vmem:[#allocation4 + $0x78] sm:$0x3] %vm922, 0.0
        %936 = vst [vmem:[#allocation4 + $0x80] sm:$0xff] 0.0
        %937 = vst.msk [vmem:[#allocation4 + $0x88] sm:$0xff] %vm919, 0.0
        %938 = vst [vmem:[#allocation4 + $0x90] sm:$0x3] 0.0
        %939 = vst.msk [vmem:[#allocation4 + $0x98] sm:$0x3] %vm922, 0.0
        %940 = vst [vmem:[#allocation4 + $0xa0] sm:$0xff] 0.0
        %941 = vst.msk [vmem:[#allocation4 + $0xa8] sm:$0xff] %vm919, 0.0
        %942 = vst [vmem:[#allocation4 + $0xb0] sm:$0x3] 0.0
        %943 = vst.msk [vmem:[#allocation4 + $0xb8] sm:$0x3] %vm922, 0.0
        %944 = vst [vmem:[#allocation4 + $0xc0] sm:$0xff] 0.0
        %945 = vst.msk [vmem:[#allocation4 + $0xc8] sm:$0xff] %vm919, 0.0
        %946 = vst [vmem:[#allocation4 + $0xd0] sm:$0x3] 0.0
        %947 = vst.msk [vmem:[#allocation4 + $0xd8] sm:$0x3] %vm922, 0.0
        %948 = vst [vmem:[#allocation4 + $0xe0] sm:$0xff] 0.0
        %949 = vst.msk [vmem:[#allocation4 + $0xe8] sm:$0xff] %vm919, 0.0
        %950 = vst [vmem:[#allocation4 + $0xf0] sm:$0x3] 0.0
        %951 = vst.msk [vmem:[#allocation4 + $0xf8] sm:$0x3] %vm922, 0.0
        %952 = vst [vmem:[#allocation4 + $0x100] sm:$0xff] 0.0
        %953 = vst.msk [vmem:[#allocation4 + $0x108] sm:$0xff] %vm919, 0.0
        %954 = vst [vmem:[#allocation4 + $0x110] sm:$0x3] 0.0
        %955 = vst.msk [vmem:[#allocation4 + $0x118] sm:$0x3] %vm922, 0.0
        %956 = vst [vmem:[#allocation4 + $0x120] sm:$0xff] 0.0
        %957 = vst.msk [vmem:[#allocation4 + $0x128] sm:$0xff] %vm919, 0.0
        %958 = vst [vmem:[#allocation4 + $0x130] sm:$0x3] 0.0
        %959 = vst.msk [vmem:[#allocation4 + $0x138] sm:$0x3] %vm922, 0.0
        %v960 = vld [vmem:[%s762] sm:$0xff]
        %v961 = vld [vmem:[%s762 + $0x8] sm:$0xff]
        %v962 = vld [vmem:[%s762 + $0x10] sm:$0xff]
        %v963 = vld [vmem:[%s762 + $0x18] sm:$0xff]
        %v964 = vld [vmem:[%s762 + $0x20] sm:$0xff]
        %v965 = vld [vmem:[%s762 + $0x28] sm:$0xff]
        %v966 = vld [vmem:[%s762 + $0x30] sm:$0xff]
        %v967 = vld [vmem:[%s762 + $0x38] sm:$0xff]
        %v968 = vpack.c.bf16 %v961, %v960
        %v969 = vpack.c.bf16 %v963, %v962
        %v970 = vpack.c.bf16 %v965, %v964
        %v971 = vpack.c.bf16 %v967, %v966
        %v972 = vld [vmem:[#allocation8] sm:$0xff]
        %v973 = vld [vmem:[#allocation10] sm:$0x3]
        %v975 = vlaneseq
        %v976 = vshrl.u32 %v975, 7
        %v977 = vsub.s32 0, %v976
        %v978 = vrot.slane %v973, %v977
        %v979 = vlaneseq
        %v980 = vshrl.u32 %v979, 7
        %v981 = vsub.s32 1, %v980
        %v982 = vrot.slane %v973, %v981
        %v986 = vunpack.c.l.b16 %v972
        %v987 = vunpack.c.h.b16 %v972
        %v988 = vpack.c.b16 %v986, %v986
        %v989 = vpack.c.b16 %v987, %v987
        %vm990 = vcmask 64512
        %v992 = vsel %vm990, %v968, 0
        %v995 = vsel %vm990, %v969, 0
        %v998 = vsel %vm990, %v970, 0
        %v1001 = vsel %vm990, %v971, 0
        %vm1003 = vcmask 1043456
        %v1005 = vsel %vm1003, %v988, 0
        %v1008 = vsel %vm1003, %v989, 0
        %1010 = vmatprep.subr.bf16.mxu0 %v1008
        %1011 = vmatpush1.bf16.msra.mxu0 %v1005
        %1012 = vmatprep.subr.bf16.mxu0 0
        %1013 = vmatpush1.bf16.msra.mxu0 0
        %1014 = vmatprep.subr.bf16.mxu0 0
        %1015 = vmatpush1.bf16.msra.mxu0 0
        %1016 = vmatprep.subr.bf16.mxu0 0
        %1017 = vmatpush1.bf16.msra.mxu0 0
        %1018 = vmatprep.subr.bf16.mxu0 0
        %1019 = vmatpush1.bf16.msra.mxu0 0
        %1020 = vmatprep.subr.bf16.mxu0 0
        %1021 = vmatpush1.bf16.msra.mxu0 0
        %1022 = vmatprep.subr.bf16.mxu0 0
        %1023 = vmatpush1.bf16.msra.mxu0 0
        %1024 = vmatprep.subr.bf16.mxu0 0
        %1025 = vmatpush1.bf16.msra.mxu0 0
        %1026 = vmatprep.subr.bf16.mxu0 0
        %1027 = vmatpush1.bf16.msra.mxu0 0
        %1028 = vmatprep.subr.bf16.mxu0 0
        %1029 = vmatpush1.bf16.msra.mxu0 0
        %1030 = vmatprep.subr.bf16.mxu0 0
        %1031 = vmatpush1.bf16.msra.mxu0 0
        %1032 = vmatprep.subr.bf16.mxu0 0
        %1033 = vmatpush1.bf16.msra.mxu0 0
        %1034 = vmatprep.subr.bf16.mxu0 0
        %1035 = vmatpush1.bf16.msra.mxu0 0
        %1036 = vmatprep.subr.bf16.mxu0 0
        %1037 = vmatpush1.bf16.msra.mxu0 0
        %1038 = vmatprep.subr.bf16.mxu0 0
        %1039 = vmatpush1.bf16.msra.mxu0 0
        %1040 = vmatprep.subr.bf16.mxu0 0
        %1041 = vmatpush1.bf16.msra.mxu0 0
        %1042 = vmatprep.mubr.bf16.mxu0 0
        %1043 = vmatmul.mubr.bf16.gmra.mrb[0].mxu0 %v992
        %v1044 = vpop.f32.mrb[0].mxu0
        %v1045 = vadd.f32 %v978, %v1044
        %v1046 = vpop.f32.mrb[0].mxu0
        %v1047 = vadd.f32 %v982, %v1046
        %v1048 = vpop.f32.mrb[0].mxu0
        %v1049 = vadd.f32 %v978, %v1048
        %v1050 = vpop.f32.mrb[0].mxu0
        %v1051 = vadd.f32 %v982, %v1050
        %1052 = vmatprep.mubr.bf16.mxu0 0
        %1053 = vmatmul.mubr.bf16.gmra.mrb[0].mxu0 %v995
        %v1054 = vpop.f32.mrb[0].mxu0
        %v1055 = vadd.f32 %v978, %v1054
        %v1056 = vpop.f32.mrb[0].mxu0
        %v1057 = vadd.f32 %v982, %v1056
        %v1058 = vpop.f32.mrb[0].mxu0
        %v1059 = vadd.f32 %v978, %v1058
        %v1060 = vpop.f32.mrb[0].mxu0
        %v1061 = vadd.f32 %v982, %v1060
        %1062 = vmatprep.mubr.bf16.mxu0 0
        %1063 = vmatmul.mubr.bf16.gmra.mrb[0].mxu0 %v998
        %v1064 = vpop.f32.mrb[0].mxu0
        %v1065 = vadd.f32 %v978, %v1064
        %v1066 = vpop.f32.mrb[0].mxu0
        %v1067 = vadd.f32 %v982, %v1066
        %v1068 = vpop.f32.mrb[0].mxu0
        %v1069 = vadd.f32 %v978, %v1068
        %v1070 = vpop.f32.mrb[0].mxu0
        %v1071 = vadd.f32 %v982, %v1070
        %1072 = vmatprep.mubr.bf16.mxu0 0
        %1073 = vmatmul.mubr.bf16.gmra.mrb[0].mxu0 %v1001
        %v1074 = vpop.f32.mrb[0].mxu0
        %v1075 = vadd.f32 %v978, %v1074
        %v1076 = vpop.f32.mrb[0].mxu0
        %v1077 = vadd.f32 %v982, %v1076
        %v1078 = vpop.f32.mrb[0].mxu0
        %v1079 = vadd.f32 %v978, %v1078
        %v1080 = vpop.f32.mrb[0].mxu0
        %v1081 = vadd.f32 %v982, %v1080
        %1082 = vdwg.mxu0
        %v1083 = vmax.f32 %v1045, 0.0
        %v1084 = vmax.f32 %v1047, 0.0
        %v1085 = vmax.f32 %v1049, 0.0
        %v1086 = vmax.f32 %v1051, 0.0
        %v1087 = vmax.f32 %v1055, 0.0
        %v1088 = vmax.f32 %v1057, 0.0
        %v1089 = vmax.f32 %v1059, 0.0
        %v1090 = vmax.f32 %v1061, 0.0
        %v1091 = vmax.f32 %v1065, 0.0
        %v1092 = vmax.f32 %v1067, 0.0
        %v1093 = vmax.f32 %v1069, 0.0
        %v1094 = vmax.f32 %v1071, 0.0
        %v1095 = vmax.f32 %v1075, 0.0
        %v1096 = vmax.f32 %v1077, 0.0
        %v1097 = vmax.f32 %v1079, 0.0
        %v1098 = vmax.f32 %v1081, 0.0
        %1099 = vst [vmem:[%s884] sm:$0xff] %v1083
        %1100 = vst.msk [vmem:[%s884 + $0x8] sm:$0xff] %vm919, %v1084
        %1101 = vst [vmem:[%s884 + $0x10] sm:$0xff] %v1085
        %1102 = vst.msk [vmem:[%s884 + $0x18] sm:$0xff] %vm919, %v1086
        %1103 = vst [vmem:[%s884 + $0x20] sm:$0xff] %v1087
        %1104 = vst.msk [vmem:[%s884 + $0x28] sm:$0xff] %vm919, %v1088
        %1105 = vst [vmem:[%s884 + $0x30] sm:$0xff] %v1089
        %1106 = vst.msk [vmem:[%s884 + $0x38] sm:$0xff] %vm919, %v1090
        %1107 = vst [vmem:[%s884 + $0x40] sm:$0xff] %v1091
        %1108 = vst.msk [vmem:[%s884 + $0x48] sm:$0xff] %vm919, %v1092
        %1109 = vst [vmem:[%s884 + $0x50] sm:$0xff] %v1093
        %1110 = vst.msk [vmem:[%s884 + $0x58] sm:$0xff] %vm919, %v1094
        %1111 = vst [vmem:[%s884 + $0x60] sm:$0xff] %v1095
        %1112 = vst.msk [vmem:[%s884 + $0x68] sm:$0xff] %vm919, %v1096
        %1113 = vst [vmem:[%s884 + $0x70] sm:$0xff] %v1097
        %1114 = vst.msk [vmem:[%s884 + $0x78] sm:$0xff] %vm919, %v1098
        %v1115 = vld [vmem:[%s19] sm:$0xff]
        %v1117 = vunpack.c.l.b16 %v1115
        %v1118 = vunpack.c.h.b16 %v1115
        %v1119 = vpack.c.b16 %v1117, %v1117
        %v1120 = vpack.c.b16 %v1118, %v1118
        %v1122 = vsel %vm1003, %v1119, 0
        %v1125 = vsel %vm1003, %v1120, 0
        %1127 = vmatprep.subr.bf16.mxu0 %v1125
        %1128 = vmatpush1.bf16.msra.mxu0 %v1122
        %1129 = vmatprep.subr.bf16.mxu0 0
        %1130 = vmatpush1.bf16.msra.mxu0 0
        %1131 = vmatprep.subr.bf16.mxu0 0
        %1132 = vmatpush1.bf16.msra.mxu0 0
        %1133 = vmatprep.subr.bf16.mxu0 0
        %1134 = vmatpush1.bf16.msra.mxu0 0
        %1135 = vmatprep.subr.bf16.mxu0 0
        %1136 = vmatpush1.bf16.msra.mxu0 0
        %1137 = vmatprep.subr.bf16.mxu0 0
        %1138 = vmatpush1.bf16.msra.mxu0 0
        %1139 = vmatprep.subr.bf16.mxu0 0
        %1140 = vmatpush1.bf16.msra.mxu0 0
        %1141 = vmatprep.subr.bf16.mxu0 0
        %1142 = vmatpush1.bf16.msra.mxu0 0
        %1143 = vmatprep.subr.bf16.mxu0 0
        %1144 = vmatpush1.bf16.msra.mxu0 0
        %1145 = vmatprep.subr.bf16.mxu0 0
        %1146 = vmatpush1.bf16.msra.mxu0 0
        %1147 = vmatprep.subr.bf16.mxu0 0
        %1148 = vmatpush1.bf16.msra.mxu0 0
        %1149 = vmatprep.subr.bf16.mxu0 0
        %1150 = vmatpush1.bf16.msra.mxu0 0
        %1151 = vmatprep.subr.bf16.mxu0 0
        %1152 = vmatpush1.bf16.msra.mxu0 0
        %1153 = vmatprep.subr.bf16.mxu0 0
        %1154 = vmatpush1.bf16.msra.mxu0 0
        %1155 = vmatprep.subr.bf16.mxu0 0
        %1156 = vmatpush1.bf16.msra.mxu0 0
        %1157 = vmatprep.subr.bf16.mxu0 0
        %1158 = vmatpush1.bf16.msra.mxu0 0
        %1159 = vmatprep.mubr.bf16.mxu0 0
        %1160 = vmatmul.mubr.bf16.gmra.mrb[0].mxu0 %v992
        %v1161 = vpop.f32.mrb[0].mxu0
        %v1162 = vadd.f32 0.0, %v1161
        %v1163 = vpop.f32.mrb[0].mxu0
        %v1164 = vadd.f32 0.0, %v1163
        %v1165 = vpop.f32.mrb[0].mxu0
        %v1166 = vadd.f32 0.0, %v1165
        %v1167 = vpop.f32.mrb[0].mxu0
        %v1168 = vadd.f32 0.0, %v1167
        %1169 = vmatprep.mubr.bf16.mxu0 0
        %1170 = vmatmul.mubr.bf16.gmra.mrb[0].mxu0 %v995
        %v1171 = vpop.f32.mrb[0].mxu0
        %v1172 = vadd.f32 0.0, %v1171
        %v1173 = vpop.f32.mrb[0].mxu0
        %v1174 = vadd.f32 0.0, %v1173
        %v1175 = vpop.f32.mrb[0].mxu0
        %v1176 = vadd.f32 0.0, %v1175
        %v1177 = vpop.f32.mrb[0].mxu0
        %v1178 = vadd.f32 0.0, %v1177
        %1179 = vmatprep.mubr.bf16.mxu0 0
        %1180 = vmatmul.mubr.bf16.gmra.mrb[0].mxu0 %v998
        %v1181 = vpop.f32.mrb[0].mxu0
        %v1182 = vadd.f32 0.0, %v1181
        %v1183 = vpop.f32.mrb[0].mxu0
        %v1184 = vadd.f32 0.0, %v1183
        %v1185 = vpop.f32.mrb[0].mxu0
        %v1186 = vadd.f32 0.0, %v1185
        %v1187 = vpop.f32.mrb[0].mxu0
        %v1188 = vadd.f32 0.0, %v1187
        %1189 = vmatprep.mubr.bf16.mxu0 0
        %1190 = vmatmul.mubr.bf16.gmra.mrb[0].mxu0 %v1001
        %v1191 = vpop.f32.mrb[0].mxu0
        %v1192 = vadd.f32 0.0, %v1191
        %v1193 = vpop.f32.mrb[0].mxu0
        %v1194 = vadd.f32 0.0, %v1193
        %v1195 = vpop.f32.mrb[0].mxu0
        %v1196 = vadd.f32 0.0, %v1195
        %v1197 = vpop.f32.mrb[0].mxu0
        %v1198 = vadd.f32 0.0, %v1197
        %1199 = vdwg.mxu0
        %v1216 = vrot.slane %v1162, 7
        %v1217 = vrot.slane %v1164, 7
        %v1218 = vrot.slane %v1166, 7
        %v1219 = vrot.slane %v1168, 7
        %v1220 = vrot.slane %v1172, 7
        %v1221 = vrot.slane %v1174, 7
        %v1222 = vrot.slane %v1176, 7
        %v1223 = vrot.slane %v1178, 7
        %v1224 = vrot.slane %v1182, 7
        %v1225 = vrot.slane %v1184, 7
        %v1226 = vrot.slane %v1186, 7
        %v1227 = vrot.slane %v1188, 7
        %v1228 = vrot.slane %v1192, 7
        %v1229 = vrot.slane %v1194, 7
        %v1230 = vrot.slane %v1196, 7
        %v1231 = vrot.slane %v1198, 7
        %s1248 = scalar_lea.vmem [#allocation4], 32
        %1249 = vst [vmem:[%s1248] sm:$0xfe] %v1216
        %vm1250 = vcmask 523265
        %1251 = vst.msk [vmem:[%s1248 + $0x8] sm:$0xfe] %vm1250, %v1217
        %1252 = vst [vmem:[%s1248 + $0x10] sm:$0x1] %v1216
        %vm1253 = vcmask 516096
        %1254 = vst.msk [vmem:[%s1248 + $0x18] sm:$0x1] %vm1253, %v1217
        %1255 = vst [vmem:[%s1248 + $0x20] sm:$0xfe] %v1218
        %1256 = vst.msk [vmem:[%s1248 + $0x28] sm:$0xfe] %vm1250, %v1219
        %1257 = vst [vmem:[%s1248 + $0x30] sm:$0x1] %v1218
        %1258 = vst.msk [vmem:[%s1248 + $0x38] sm:$0x1] %vm1253, %v1219
        %1259 = vst [vmem:[%s1248 + $0x40] sm:$0xfe] %v1220
        %1260 = vst.msk [vmem:[%s1248 + $0x48] sm:$0xfe] %vm1250, %v1221
        %1261 = vst [vmem:[%s1248 + $0x50] sm:$0x1] %v1220
        %1262 = vst.msk [vmem:[%s1248 + $0x58] sm:$0x1] %vm1253, %v1221
        %1263 = vst [vmem:[%s1248 + $0x60] sm:$0xfe] %v1222
        %1264 = vst.msk [vmem:[%s1248 + $0x68] sm:$0xfe] %vm1250, %v1223
        %1265 = vst [vmem:[%s1248 + $0x70] sm:$0x1] %v1222
        %1266 = vst.msk [vmem:[%s1248 + $0x78] sm:$0x1] %vm1253, %v1223
        %1267 = vst [vmem:[%s1248 + $0x80] sm:$0xfe] %v1224
        %1268 = vst.msk [vmem:[%s1248 + $0x88] sm:$0xfe] %vm1250, %v1225
        %1269 = vst [vmem:[%s1248 + $0x90] sm:$0x1] %v1224
        %1270 = vst.msk [vmem:[%s1248 + $0x98] sm:$0x1] %vm1253, %v1225
        %1271 = vst [vmem:[%s1248 + $0xa0] sm:$0xfe] %v1226
        %1272 = vst.msk [vmem:[%s1248 + $0xa8] sm:$0xfe] %vm1250, %v1227
        %1273 = vst [vmem:[%s1248 + $0xb0] sm:$0x1] %v1226
        %1274 = vst.msk [vmem:[%s1248 + $0xb8] sm:$0x1] %vm1253, %v1227
        %1275 = vst [vmem:[%s1248 + $0xc0] sm:$0xfe] %v1228
        %1276 = vst.msk [vmem:[%s1248 + $0xc8] sm:$0xfe] %vm1250, %v1229
        %1277 = vst [vmem:[%s1248 + $0xd0] sm:$0x1] %v1228
        %1278 = vst.msk [vmem:[%s1248 + $0xd8] sm:$0x1] %vm1253, %v1229
        %1279 = vst [vmem:[%s1248 + $0xe0] sm:$0xfe] %v1230
        %1280 = vst.msk [vmem:[%s1248 + $0xe8] sm:$0xfe] %vm1250, %v1231
        %1281 = vst [vmem:[%s1248 + $0xf0] sm:$0x1] %v1230
        %1282 = vst.msk [vmem:[%s1248 + $0xf8] sm:$0x1] %vm1253, %v1231
        %v1283 = vld [vmem:[#allocation4] sm:$0xff]
        %v1284 = vld [vmem:[#allocation4 + $0x8] sm:$0xff]
        %v1285 = vld [vmem:[#allocation4 + $0x10] sm:$0x3]
        %v1286 = vld [vmem:[#allocation4 + $0x18] sm:$0x3]
        %v1287 = vld [vmem:[#allocation4 + $0x20] sm:$0xff]
        %v1288 = vld [vmem:[#allocation4 + $0x28] sm:$0xff]
        %v1289 = vld [vmem:[#allocation4 + $0x30] sm:$0x3]
        %v1290 = vld [vmem:[#allocation4 + $0x38] sm:$0x3]
        %v1291 = vld [vmem:[#allocation4 + $0x40] sm:$0xff]
        %v1292 = vld [vmem:[#allocation4 + $0x48] sm:$0xff]
        %v1293 = vld [vmem:[#allocation4 + $0x50] sm:$0x3]
        %v1294 = vld [vmem:[#allocation4 + $0x58] sm:$0x3]
        %v1295 = vld [vmem:[#allocation4 + $0x60] sm:$0xff]
        %v1296 = vld [vmem:[#allocation4 + $0x68] sm:$0xff]
        %v1297 = vld [vmem:[#allocation4 + $0x70] sm:$0x3]
        %v1298 = vld [vmem:[#allocation4 + $0x78] sm:$0x3]
        %v1299 = vld [vmem:[#allocation4 + $0x80] sm:$0xff]
        %v1300 = vld [vmem:[#allocation4 + $0x88] sm:$0xff]
        %v1301 = vld [vmem:[#allocation4 + $0x90] sm:$0x3]
        %v1302 = vld [vmem:[#allocation4 + $0x98] sm:$0x3]
        %v1303 = vld [vmem:[#allocation4 + $0xa0] sm:$0xff]
        %v1304 = vld [vmem:[#allocation4 + $0xa8] sm:$0xff]
        %v1305 = vld [vmem:[#allocation4 + $0xb0] sm:$0x3]
        %v1306 = vld [vmem:[#allocation4 + $0xb8] sm:$0x3]
        %v1307 = vld [vmem:[#allocation4 + $0xc0] sm:$0xff]
        %v1308 = vld [vmem:[#allocation4 + $0xc8] sm:$0xff]
        %v1309 = vld [vmem:[#allocation4 + $0xd0] sm:$0x3]
        %v1310 = vld [vmem:[#allocation4 + $0xd8] sm:$0x3]
        %v1311 = vld [vmem:[#allocation4 + $0xe0] sm:$0xff]
        %v1312 = vld [vmem:[#allocation4 + $0xe8] sm:$0xff]
        %v1313 = vld [vmem:[#allocation4 + $0xf0] sm:$0x3]
        %v1314 = vld [vmem:[#allocation4 + $0xf8] sm:$0x3]
        %v1315 = vld [vmem:[#allocation4 + $0x100] sm:$0xff]
        %v1316 = vld [vmem:[#allocation4 + $0x108] sm:$0xff]
        %v1317 = vld [vmem:[#allocation4 + $0x110] sm:$0x3]
        %v1318 = vld [vmem:[#allocation4 + $0x118] sm:$0x3]
        %v1319 = vld [vmem:[#allocation4 + $0x120] sm:$0xff]
        %v1320 = vld [vmem:[#allocation4 + $0x128] sm:$0xff]
        %v1321 = vld [vmem:[#allocation4 + $0x130] sm:$0x3]
        %v1322 = vld [vmem:[#allocation4 + $0x138] sm:$0x3]
        %v1323 = vadd.f32 %v1283, %v1287
        %v1324 = vadd.f32 %v1284, %v1288
        %v1325 = vadd.f32 %v1285, %v1289
        %v1326 = vadd.f32 %v1286, %v1290
        %v1327 = vadd.f32 %v1287, %v1291
        %v1328 = vadd.f32 %v1288, %v1292
        %v1329 = vadd.f32 %v1289, %v1293
        %v1330 = vadd.f32 %v1290, %v1294
        %v1331 = vadd.f32 %v1291, %v1295
        %v1332 = vadd.f32 %v1292, %v1296
        %v1333 = vadd.f32 %v1293, %v1297
        %v1334 = vadd.f32 %v1294, %v1298
        %v1335 = vadd.f32 %v1295, %v1299
        %v1336 = vadd.f32 %v1296, %v1300
        %v1337 = vadd.f32 %v1297, %v1301
        %v1338 = vadd.f32 %v1298, %v1302
        %v1339 = vadd.f32 %v1299, %v1303
        %v1340 = vadd.f32 %v1300, %v1304
        %v1341 = vadd.f32 %v1301, %v1305
        %v1342 = vadd.f32 %v1302, %v1306
        %v1343 = vadd.f32 %v1303, %v1307
        %v1344 = vadd.f32 %v1304, %v1308
        %v1345 = vadd.f32 %v1305, %v1309
        %v1346 = vadd.f32 %v1306, %v1310
        %v1347 = vadd.f32 %v1307, %v1311
        %v1348 = vadd.f32 %v1308, %v1312
        %v1349 = vadd.f32 %v1309, %v1313
        %v1350 = vadd.f32 %v1310, %v1314
        %v1351 = vadd.f32 %v1311, %v1315
        %v1352 = vadd.f32 %v1312, %v1316
        %v1353 = vadd.f32 %v1313, %v1317
        %v1354 = vadd.f32 %v1314, %v1318
        %v1355 = vadd.f32 %v1323, %v1291
        %v1356 = vadd.f32 %v1324, %v1292
        %v1357 = vadd.f32 %v1325, %v1293
        %v1358 = vadd.f32 %v1326, %v1294
        %v1359 = vadd.f32 %v1327, %v1295
        %v1360 = vadd.f32 %v1328, %v1296
        %v1361 = vadd.f32 %v1329, %v1297
        %v1362 = vadd.f32 %v1330, %v1298
        %v1363 = vadd.f32 %v1331, %v1299
        %v1364 = vadd.f32 %v1332, %v1300
        %v1365 = vadd.f32 %v1333, %v1301
        %v1366 = vadd.f32 %v1334, %v1302
        %v1367 = vadd.f32 %v1335, %v1303
        %v1368 = vadd.f32 %v1336, %v1304
        %v1369 = vadd.f32 %v1337, %v1305
        %v1370 = vadd.f32 %v1338, %v1306
        %v1371 = vadd.f32 %v1339, %v1307
        %v1372 = vadd.f32 %v1340, %v1308
        %v1373 = vadd.f32 %v1341, %v1309
        %v1374 = vadd.f32 %v1342, %v1310
        %v1375 = vadd.f32 %v1343, %v1311
        %v1376 = vadd.f32 %v1344, %v1312
        %v1377 = vadd.f32 %v1345, %v1313
        %v1378 = vadd.f32 %v1346, %v1314
        %v1379 = vadd.f32 %v1347, %v1315
        %v1380 = vadd.f32 %v1348, %v1316
        %v1381 = vadd.f32 %v1349, %v1317
        %v1382 = vadd.f32 %v1350, %v1318
        %v1383 = vadd.f32 %v1351, %v1319
        %v1384 = vadd.f32 %v1352, %v1320
        %v1385 = vadd.f32 %v1353, %v1321
        %v1386 = vadd.f32 %v1354, %v1322
        %vm1419 = vcmask 1046528
        %v1420 = vrot.slane %v1355, 1
        %v1421 = vrot.slane %v1357, 1
        %v1422 = vsel %vm1419, %v1420, %v1421
        %v1423 = vrot.slane %v1356, 1
        %v1424 = vrot.slane %v1358, 1
        %v1425 = vsel %vm1419, %v1423, %v1424
        %v1426 = vrot.slane %v1359, 1
        %v1427 = vrot.slane %v1361, 1
        %v1428 = vsel %vm1419, %v1426, %v1427
        %v1429 = vrot.slane %v1360, 1
        %v1430 = vrot.slane %v1362, 1
        %v1431 = vsel %vm1419, %v1429, %v1430
        %v1432 = vrot.slane %v1363, 1
        %v1433 = vrot.slane %v1365, 1
        %v1434 = vsel %vm1419, %v1432, %v1433
        %v1435 = vrot.slane %v1364, 1
        %v1436 = vrot.slane %v1366, 1
        %v1437 = vsel %vm1419, %v1435, %v1436
        %v1438 = vrot.slane %v1367, 1
        %v1439 = vrot.slane %v1369, 1
        %v1440 = vsel %vm1419, %v1438, %v1439
        %v1441 = vrot.slane %v1368, 1
        %v1442 = vrot.slane %v1370, 1
        %v1443 = vsel %vm1419, %v1441, %v1442
        %v1444 = vrot.slane %v1371, 1
        %v1445 = vrot.slane %v1373, 1
        %v1446 = vsel %vm1419, %v1444, %v1445
        %v1447 = vrot.slane %v1372, 1
        %v1448 = vrot.slane %v1374, 1
        %v1449 = vsel %vm1419, %v1447, %v1448
        %v1450 = vrot.slane %v1375, 1
        %v1451 = vrot.slane %v1377, 1
        %v1452 = vsel %vm1419, %v1450, %v1451
        %v1453 = vrot.slane %v1376, 1
        %v1454 = vrot.slane %v1378, 1
        %v1455 = vsel %vm1419, %v1453, %v1454
        %v1456 = vrot.slane %v1379, 1
        %v1457 = vrot.slane %v1381, 1
        %v1458 = vsel %vm1419, %v1456, %v1457
        %v1459 = vrot.slane %v1380, 1
        %v1460 = vrot.slane %v1382, 1
        %v1461 = vsel %vm1419, %v1459, %v1460
        %v1462 = vrot.slane %v1383, 1
        %v1463 = vrot.slane %v1385, 1
        %v1464 = vsel %vm1419, %v1462, %v1463
        %v1465 = vrot.slane %v1384, 1
        %v1466 = vrot.slane %v1386, 1
        %v1467 = vsel %vm1419, %v1465, %v1466
        %v1484 = vadd.f32 %v1355, %v1422
        %v1485 = vadd.f32 %v1356, %v1425
        %v1486 = vadd.f32 %v1359, %v1428
        %v1487 = vadd.f32 %v1360, %v1431
        %v1488 = vadd.f32 %v1363, %v1434
        %v1489 = vadd.f32 %v1364, %v1437
        %v1490 = vadd.f32 %v1367, %v1440
        %v1491 = vadd.f32 %v1368, %v1443
        %v1492 = vadd.f32 %v1371, %v1446
        %v1493 = vadd.f32 %v1372, %v1449
        %v1494 = vadd.f32 %v1375, %v1452
        %v1495 = vadd.f32 %v1376, %v1455
        %v1496 = vadd.f32 %v1379, %v1458
        %v1497 = vadd.f32 %v1380, %v1461
        %v1498 = vadd.f32 %v1383, %v1464
        %v1499 = vadd.f32 %v1384, %v1467
        %vm1500 = vcmask 1045504
        %v1501 = vrot.slane %v1355, 2
        %v1502 = vrot.slane %v1357, 2
        %v1503 = vsel %vm1500, %v1501, %v1502
        %v1504 = vrot.slane %v1356, 2
        %v1505 = vrot.slane %v1358, 2
        %v1506 = vsel %vm1500, %v1504, %v1505
        %v1507 = vrot.slane %v1359, 2
        %v1508 = vrot.slane %v1361, 2
        %v1509 = vsel %vm1500, %v1507, %v1508
        %v1510 = vrot.slane %v1360, 2
        %v1511 = vrot.slane %v1362, 2
        %v1512 = vsel %vm1500, %v1510, %v1511
        %v1513 = vrot.slane %v1363, 2
        %v1514 = vrot.slane %v1365, 2
        %v1515 = vsel %vm1500, %v1513, %v1514
        %v1516 = vrot.slane %v1364, 2
        %v1517 = vrot.slane %v1366, 2
        %v1518 = vsel %vm1500, %v1516, %v1517
        %v1519 = vrot.slane %v1367, 2
        %v1520 = vrot.slane %v1369, 2
        %v1521 = vsel %vm1500, %v1519, %v1520
        %v1522 = vrot.slane %v1368, 2
        %v1523 = vrot.slane %v1370, 2
        %v1524 = vsel %vm1500, %v1522, %v1523
        %v1525 = vrot.slane %v1371, 2
        %v1526 = vrot.slane %v1373, 2
        %v1527 = vsel %vm1500, %v1525, %v1526
        %v1528 = vrot.slane %v1372, 2
        %v1529 = vrot.slane %v1374, 2
        %v1530 = vsel %vm1500, %v1528, %v1529
        %v1531 = vrot.slane %v1375, 2
        %v1532 = vrot.slane %v1377, 2
        %v1533 = vsel %vm1500, %v1531, %v1532
        %v1534 = vrot.slane %v1376, 2
        %v1535 = vrot.slane %v1378, 2
        %v1536 = vsel %vm1500, %v1534, %v1535
        %v1537 = vrot.slane %v1379, 2
        %v1538 = vrot.slane %v1381, 2
        %v1539 = vsel %vm1500, %v1537, %v1538
        %v1540 = vrot.slane %v1380, 2
        %v1541 = vrot.slane %v1382, 2
        %v1542 = vsel %vm1500, %v1540, %v1541
        %v1543 = vrot.slane %v1383, 2
        %v1544 = vrot.slane %v1385, 2
        %v1545 = vsel %vm1500, %v1543, %v1544
        %v1546 = vrot.slane %v1384, 2
        %v1547 = vrot.slane %v1386, 2
        %v1548 = vsel %vm1500, %v1546, %v1547
        %v1565 = vadd.f32 %v1484, %v1503
        %v1566 = vadd.f32 %v1485, %v1506
        %v1567 = vadd.f32 %v1486, %v1509
        %v1568 = vadd.f32 %v1487, %v1512
        %v1569 = vadd.f32 %v1488, %v1515
        %v1570 = vadd.f32 %v1489, %v1518
        %v1571 = vadd.f32 %v1490, %v1521
        %v1572 = vadd.f32 %v1491, %v1524
        %v1573 = vadd.f32 %v1492, %v1527
        %v1574 = vadd.f32 %v1493, %v1530
        %v1575 = vadd.f32 %v1494, %v1533
        %v1576 = vadd.f32 %v1495, %v1536
        %v1577 = vadd.f32 %v1496, %v1539
        %v1578 = vadd.f32 %v1497, %v1542
        %v1579 = vadd.f32 %v1498, %v1545
        %v1580 = vadd.f32 %v1499, %v1548
        %v1581 = vmul.f32 %v1565, 0.11111111
        %v1582 = vmul.f32 %v1566, 0.11111111
        %v1583 = vmul.f32 %v1567, 0.11111111
        %v1584 = vmul.f32 %v1568, 0.11111111
        %v1585 = vmul.f32 %v1569, 0.11111111
        %v1586 = vmul.f32 %v1570, 0.11111111
        %v1587 = vmul.f32 %v1571, 0.11111111
        %v1588 = vmul.f32 %v1572, 0.11111111
        %v1589 = vmul.f32 %v1573, 0.11111111
        %v1590 = vmul.f32 %v1574, 0.11111111
        %v1591 = vmul.f32 %v1575, 0.11111111
        %v1592 = vmul.f32 %v1576, 0.11111111
        %v1593 = vmul.f32 %v1577, 0.11111111
        %v1594 = vmul.f32 %v1578, 0.11111111
        %v1595 = vmul.f32 %v1579, 0.11111111
        %v1596 = vmul.f32 %v1580, 0.11111111
        %v1597 = vld [vmem:[%s20] sm:$0x3]
        %v1599 = vlaneseq
        %v1600 = vshrl.u32 %v1599, 7
        %v1601 = vsub.s32 0, %v1600
        %v1602 = vrot.slane %v1597, %v1601
        %v1603 = vlaneseq
        %v1604 = vshrl.u32 %v1603, 7
        %v1605 = vsub.s32 1, %v1604
        %v1606 = vrot.slane %v1597, %v1605
        %v1609 = vadd.f32 %v1581, %v1602
        %v1610 = vadd.f32 %v1582, %v1606
        %v1611 = vadd.f32 %v1583, %v1602
        %v1612 = vadd.f32 %v1584, %v1606
        %v1613 = vadd.f32 %v1585, %v1602
        %v1614 = vadd.f32 %v1586, %v1606
        %v1615 = vadd.f32 %v1587, %v1602
        %v1616 = vadd.f32 %v1588, %v1606
        %v1617 = vadd.f32 %v1589, %v1602
        %v1618 = vadd.f32 %v1590, %v1606
        %v1619 = vadd.f32 %v1591, %v1602
        %v1620 = vadd.f32 %v1592, %v1606
        %v1621 = vadd.f32 %v1593, %v1602
        %v1622 = vadd.f32 %v1594, %v1606
        %v1623 = vadd.f32 %v1595, %v1602
        %v1624 = vadd.f32 %v1596, %v1606
        %v1625 = vmax.f32 %v1609, 0.0
        %v1626 = vmax.f32 %v1610, 0.0
        %v1627 = vmax.f32 %v1611, 0.0
        %v1628 = vmax.f32 %v1612, 0.0
        %v1629 = vmax.f32 %v1613, 0.0
        %v1630 = vmax.f32 %v1614, 0.0
        %v1631 = vmax.f32 %v1615, 0.0
        %v1632 = vmax.f32 %v1616, 0.0
        %v1633 = vmax.f32 %v1617, 0.0
        %v1634 = vmax.f32 %v1618, 0.0
        %v1635 = vmax.f32 %v1619, 0.0
        %v1636 = vmax.f32 %v1620, 0.0
        %v1637 = vmax.f32 %v1621, 0.0
        %v1638 = vmax.f32 %v1622, 0.0
        %v1639 = vmax.f32 %v1623, 0.0
        %v1640 = vmax.f32 %v1624, 0.0
        %s1641 = scalar_lea.vmem %s884, 384 [#allocation32]
        %1642 = vst [vmem:[%s1641] sm:$0xff] %v1625
        %1643 = vst.msk [vmem:[%s1641 + $0x8] sm:$0xff] %vm919, %v1626
        %1644 = vst [vmem:[%s1641 + $0x10] sm:$0xff] %v1627
        %1645 = vst.msk [vmem:[%s1641 + $0x18] sm:$0xff] %vm919, %v1628
        %1646 = vst [vmem:[%s1641 + $0x20] sm:$0xff] %v1629
        %1647 = vst.msk [vmem:[%s1641 + $0x28] sm:$0xff] %vm919, %v1630
        %1648 = vst [vmem:[%s1641 + $0x30] sm:$0xff] %v1631
        %1649 = vst.msk [vmem:[%s1641 + $0x38] sm:$0xff] %vm919, %v1632
        %1650 = vst [vmem:[%s1641 + $0x40] sm:$0xff] %v1633
        %1651 = vst.msk [vmem:[%s1641 + $0x48] sm:$0xff] %vm919, %v1634
        %1652 = vst [vmem:[%s1641 + $0x50] sm:$0xff] %v1635
        %1653 = vst.msk [vmem:[%s1641 + $0x58] sm:$0xff] %vm919, %v1636
        %1654 = vst [vmem:[%s1641 + $0x60] sm:$0xff] %v1637
        %1655 = vst.msk [vmem:[%s1641 + $0x68] sm:$0xff] %vm919, %v1638
        %1656 = vst [vmem:[%s1641 + $0x70] sm:$0xff] %v1639
        %1657 = vst.msk [vmem:[%s1641 + $0x78] sm:$0xff] %vm919, %v1640
        %v1658 = vld [vmem:[#allocation11] sm:$0xf]
        %v1659 = vld [vmem:[#allocation13] sm:$0x1]
        %v1661 = vlaneseq
        %v1662 = vshrl.u32 %v1661, 7
        %v1663 = vsub.s32 0, %v1662
        %v1664 = vrot.slane %v1659, %v1663
        %v1667 = vsel %vm1003, %v1658, 0
        %1669 = vmatprep.subr.bf16.mxu0 0
        %1670 = vmatpush1.bf16.msra.mxu0 %v1667
        %1671 = vmatprep.subr.bf16.mxu0 0
        %1672 = vmatpush1.bf16.msra.mxu0 0
        %1673 = vmatprep.subr.bf16.mxu0 0
        %1674 = vmatpush1.bf16.msra.mxu0 0
        %1675 = vmatprep.subr.bf16.mxu0 0
        %1676 = vmatpush1.bf16.msra.mxu0 0
        %1677 = vmatprep.subr.bf16.mxu0 0
        %1678 = vmatpush1.bf16.msra.mxu0 0
        %1679 = vmatprep.subr.bf16.mxu0 0
        %1680 = vmatpush1.bf16.msra.mxu0 0
        %1681 = vmatprep.subr.bf16.mxu0 0
        %1682 = vmatpush1.bf16.msra.mxu0 0
        %1683 = vmatprep.subr.bf16.mxu0 0
        %1684 = vmatpush1.bf16.msra.mxu0 0
        %1685 = vmatprep.subr.bf16.mxu0 0
        %1686 = vmatpush1.bf16.msra.mxu0 0
        %1687 = vmatprep.subr.bf16.mxu0 0
        %1688 = vmatpush1.bf16.msra.mxu0 0
        %1689 = vmatprep.subr.bf16.mxu0 0
        %1690 = vmatpush1.bf16.msra.mxu0 0
        %1691 = vmatprep.subr.bf16.mxu0 0
        %1692 = vmatpush1.bf16.msra.mxu0 0
        %1693 = vmatprep.subr.bf16.mxu0 0
        %1694 = vmatpush1.bf16.msra.mxu0 0
        %1695 = vmatprep.subr.bf16.mxu0 0
        %1696 = vmatpush1.bf16.msra.mxu0 0
        %1697 = vmatprep.subr.bf16.mxu0 0
        %1698 = vmatpush1.bf16.msra.mxu0 0
        %1699 = vmatprep.subr.bf16.mxu0 0
        %1700 = vmatpush1.bf16.msra.mxu0 0
        %1701 = vmatprep.mubr.bf16.mxu0 0
        %1702 = vmatmul.mubr.bf16.gmra.mrb[0].mxu0 %v992
        %v1703 = vpop.f32.mrb[0].mxu0
        %v1704 = vadd.f32 %v1664, %v1703
        %v1705 = vpop.f32.mrb[0].mxu0
        %v1706 = vpop.f32.mrb[0].mxu0
        %v1707 = vadd.f32 %v1664, %v1706
        %v1708 = vpop.f32.mrb[0].mxu0
        %1709 = vmatprep.mubr.bf16.mxu0 0
        %1710 = vmatmul.mubr.bf16.gmra.mrb[0].mxu0 %v995
        %v1711 = vpop.f32.mrb[0].mxu0
        %v1712 = vadd.f32 %v1664, %v1711
        %v1713 = vpop.f32.mrb[0].mxu0
        %v1714 = vpop.f32.mrb[0].mxu0
        %v1715 = vadd.f32 %v1664, %v1714
        %v1716 = vpop.f32.mrb[0].mxu0
        %1717 = vmatprep.mubr.bf16.mxu0 0
        %1718 = vmatmul.mubr.bf16.gmra.mrb[0].mxu0 %v998
        %v1719 = vpop.f32.mrb[0].mxu0
        %v1720 = vadd.f32 %v1664, %v1719
        %v1721 = vpop.f32.mrb[0].mxu0
        %v1722 = vpop.f32.mrb[0].mxu0
        %v1723 = vadd.f32 %v1664, %v1722
        %v1724 = vpop.f32.mrb[0].mxu0
        %1725 = vmatprep.mubr.bf16.mxu0 0
        %1726 = vmatmul.mubr.bf16.gmra.mrb[0].mxu0 %v1001
        %v1727 = vpop.f32.mrb[0].mxu0
        %v1728 = vadd.f32 %v1664, %v1727
        %v1729 = vpop.f32.mrb[0].mxu0
        %v1730 = vpop.f32.mrb[0].mxu0
        %v1731 = vadd.f32 %v1664, %v1730
        %v1732 = vpop.f32.mrb[0].mxu0
        %1733 = vdwg.mxu0
        %v1734 = vmax.f32 %v1704, 0.0
        %v1735 = vmax.f32 %v1707, 0.0
        %v1736 = vmax.f32 %v1712, 0.0
        %v1737 = vmax.f32 %v1715, 0.0
        %v1738 = vmax.f32 %v1720, 0.0
        %v1739 = vmax.f32 %v1723, 0.0
        %v1740 = vmax.f32 %v1728, 0.0
        %v1741 = vmax.f32 %v1731, 0.0
        %v1742 = vpack.c.bf16 %v1734, %v1734
        %v1743 = vpack.c.bf16 %v1735, %v1735
        %v1744 = vpack.c.bf16 %v1736, %v1736
        %v1745 = vpack.c.bf16 %v1737, %v1737
        %v1746 = vpack.c.bf16 %v1738, %v1738
        %v1747 = vpack.c.bf16 %v1739, %v1739
        %v1748 = vpack.c.bf16 %v1740, %v1740
        %v1749 = vpack.c.bf16 %v1741, %v1741
        %v1758 = vunpack.c.l.b16 %v1742
        %v1759 = vunpack.c.l.b16 %v1743
        %v1760 = vunpack.c.l.b16 %v1744
        %v1761 = vunpack.c.l.b16 %v1745
        %v1762 = vunpack.c.l.b16 %v1746
        %v1763 = vunpack.c.l.b16 %v1747
        %v1764 = vunpack.c.l.b16 %v1748
        %v1765 = vunpack.c.l.b16 %v1749
        %v1766 = vpack.c.b16 %v1758, %v1758
        %v1767 = vpack.c.b16 %v1759, %v1759
        %v1768 = vpack.c.b16 %v1760, %v1760
        %v1769 = vpack.c.b16 %v1761, %v1761
        %v1770 = vpack.c.b16 %v1762, %v1762
        %v1771 = vpack.c.b16 %v1763, %v1763
        %v1772 = vpack.c.b16 %v1764, %v1764
        %v1773 = vpack.c.b16 %v1765, %v1765
        %v1775 = vshrl.u32 %v1766, 16
        %v1777 = vrot.slane %v1775, 6
        %v1778 = vshll.u32 %v1766, 16
        %v1780 = vrot.slane %v1778, 7
        %v1781 = vor.u32 %v1777, %v1780
        %v1782 = vrot.slane %v1781, 4
        %v1784 = vshrl.u32 %v1767, 16
        %v1786 = vrot.slane %v1784, 6
        %v1787 = vshll.u32 %v1767, 16
        %v1789 = vrot.slane %v1787, 7
        %v1790 = vor.u32 %v1786, %v1789
        %v1791 = vrot.slane %v1790, 4
        %v1793 = vshrl.u32 %v1768, 16
        %v1795 = vrot.slane %v1793, 6
        %v1796 = vshll.u32 %v1768, 16
        %v1798 = vrot.slane %v1796, 7
        %v1799 = vor.u32 %v1795, %v1798
        %v1800 = vrot.slane %v1799, 4
        %v1802 = vshrl.u32 %v1769, 16
        %v1804 = vrot.slane %v1802, 6
        %v1805 = vshll.u32 %v1769, 16
        %v1807 = vrot.slane %v1805, 7
        %v1808 = vor.u32 %v1804, %v1807
        %v1809 = vrot.slane %v1808, 4
        %v1811 = vshrl.u32 %v1770, 16
        %v1813 = vrot.slane %v1811, 6
        %v1814 = vshll.u32 %v1770, 16
        %v1816 = vrot.slane %v1814, 7
        %v1817 = vor.u32 %v1813, %v1816
        %v1818 = vrot.slane %v1817, 4
        %v1820 = vshrl.u32 %v1771, 16
        %v1822 = vrot.slane %v1820, 6
        %v1823 = vshll.u32 %v1771, 16
        %v1825 = vrot.slane %v1823, 7
        %v1826 = vor.u32 %v1822, %v1825
        %v1827 = vrot.slane %v1826, 4
        %v1829 = vshrl.u32 %v1772, 16
        %v1831 = vrot.slane %v1829, 6
        %v1832 = vshll.u32 %v1772, 16
        %v1834 = vrot.slane %v1832, 7
        %v1835 = vor.u32 %v1831, %v1834
        %v1836 = vrot.slane %v1835, 4
        %v1838 = vshrl.u32 %v1773, 16
        %v1840 = vrot.slane %v1838, 6
        %v1841 = vshll.u32 %v1773, 16
        %v1843 = vrot.slane %v1841, 7
        %v1844 = vor.u32 %v1840, %v1843
        %v1845 = vrot.slane %v1844, 4
        %vm1862 = vcmask 60417
        %vm1863 = vsmask.f32 7942
        %vm1864 = vmand %vm1862, %vm1863
        %v1865 = vld [vmem:[#allocation2] sm:$0xe]
        %v1866 = vsel %vm1864, %v1781, %v1865
        %1867 = vst [vmem:[#allocation2] sm:$0xe] %v1866
        %vm1868 = vcmask 58368
        %vm1869 = vsmask.f32 1280
        %vm1870 = vmand %vm1868, %vm1869
        %v1871 = vld [vmem:[#allocation2 + $0x4] sm:$0x3]
        %v1872 = vsel %vm1870, %v1782, %v1871
        %1873 = vst [vmem:[#allocation2 + $0x4] sm:$0x3] %v1872
        %v1874 = vld [vmem:[#allocation2 + $0x8] sm:$0xe]
        %v1875 = vsel %vm1864, %v1790, %v1874
        %1876 = vst [vmem:[#allocation2 + $0x8] sm:$0xe] %v1875
        %v1877 = vld [vmem:[#allocation2 + $0xc] sm:$0x3]
        %v1878 = vsel %vm1870, %v1791, %v1877
        %1879 = vst [vmem:[#allocation2 + $0xc] sm:$0x3] %v1878
        %v1880 = vld [vmem:[#allocation2 + $0x10] sm:$0xe]
        %v1881 = vsel %vm1864, %v1799, %v1880
        %1882 = vst [vmem:[#allocation2 + $0x10] sm:$0xe] %v1881
        %v1883 = vld [vmem:[#allocation2 + $0x14] sm:$0x3]
        %v1884 = vsel %vm1870, %v1800, %v1883
        %1885 = vst [vmem:[#allocation2 + $0x14] sm:$0x3] %v1884
        %v1886 = vld [vmem:[#allocation2 + $0x18] sm:$0xe]
        %v1887 = vsel %vm1864, %v1808, %v1886
        %1888 = vst [vmem:[#allocation2 + $0x18] sm:$0xe] %v1887
        %v1889 = vld [vmem:[#allocation2 + $0x1c] sm:$0x3]
        %v1890 = vsel %vm1870, %v1809, %v1889
        %1891 = vst [vmem:[#allocation2 + $0x1c] sm:$0x3] %v1890
        %v1892 = vld [vmem:[#allocation2 + $0x20] sm:$0xe]
        %v1893 = vsel %vm1864, %v1817, %v1892
        %1894 = vst [vmem:[#allocation2 + $0x20] sm:$0xe] %v1893
        %v1895 = vld [vmem:[#allocation2 + $0x24] sm:$0x3]
        %v1896 = vsel %vm1870, %v1818, %v1895
        %1897 = vst [vmem:[#allocation2 + $0x24] sm:$0x3] %v1896
        %v1898 = vld [vmem:[#allocation2 + $0x28] sm:$0xe]
        %v1899 = vsel %vm1864, %v1826, %v1898
        %1900 = vst [vmem:[#allocation2 + $0x28] sm:$0xe] %v1899
        %v1901 = vld [vmem:[#allocation2 + $0x2c] sm:$0x3]
        %v1902 = vsel %vm1870, %v1827, %v1901
        %1903 = vst [vmem:[#allocation2 + $0x2c] sm:$0x3] %v1902
        %v1904 = vld [vmem:[#allocation2 + $0x30] sm:$0xe]
        %v1905 = vsel %vm1864, %v1835, %v1904
        %1906 = vst [vmem:[#allocation2 + $0x30] sm:$0xe] %v1905
        %v1907 = vld [vmem:[#allocation2 + $0x34] sm:$0x3]
        %v1908 = vsel %vm1870, %v1836, %v1907
        %1909 = vst [vmem:[#allocation2 + $0x34] sm:$0x3] %v1908
        %v1910 = vld [vmem:[#allocation2 + $0x38] sm:$0xe]
        %v1911 = vsel %vm1864, %v1844, %v1910
        %1912 = vst [vmem:[#allocation2 + $0x38] sm:$0xe] %v1911
        %v1913 = vld [vmem:[#allocation2 + $0x3c] sm:$0x3]
        %v1914 = vsel %vm1870, %v1845, %v1913
        %1915 = vst [vmem:[#allocation2 + $0x3c] sm:$0x3] %v1914
        %v1916 = vld [vmem:[#allocation2] sm:$0xf]
        %v1917 = vld [vmem:[#allocation2 + $0x4] sm:$0x7]
        %v1918 = vld [vmem:[#allocation2 + $0x8] sm:$0xf]
        %v1919 = vld [vmem:[#allocation2 + $0xc] sm:$0x7]
        %v1920 = vld [vmem:[#allocation2 + $0x10] sm:$0xf]
        %v1921 = vld [vmem:[#allocation2 + $0x14] sm:$0x7]
        %v1922 = vld [vmem:[#allocation2 + $0x18] sm:$0xf]
        %v1923 = vld [vmem:[#allocation2 + $0x1c] sm:$0x7]
        %v1924 = vld [vmem:[#allocation2 + $0x20] sm:$0xf]
        %v1925 = vld [vmem:[#allocation2 + $0x24] sm:$0x7]
        %v1926 = vld [vmem:[#allocation2 + $0x28] sm:$0xf]
        %v1927 = vld [vmem:[#allocation2 + $0x2c] sm:$0x7]
        %v1928 = vld [vmem:[#allocation2 + $0x30] sm:$0xf]
        %v1929 = vld [vmem:[#allocation2 + $0x34] sm:$0x7]
        %v1930 = vld [vmem:[#allocation2 + $0x38] sm:$0xf]
        %v1931 = vld [vmem:[#allocation2 + $0x3c] sm:$0x7]
        %v1932 = vld [vmem:[#allocation14] sm:$0xf]
        %vm1933 = vsmask.f32 3328
        %vm1934 = vsmask.f32 7440
        %vm1935 = vmor %vm1933, %vm1934
        %v1937 = vshrl.u32 %v1916, 16
        %v1939 = vrot.slane %v1937, 4
        %v1940 = vshll.u32 %v1916, 16
        %v1942 = vrot.slane %v1940, 5
        %v1943 = vor.u32 %v1939, %v1942
        %v1944 = vrot.slane %v1943, 4
        %v1946 = vshll.u32 %v1917, 16
        %v1948 = vrot.slane %v1946, 5
        %v1949 = vsel %vm1935, %v1944, %v1948
        %v1951 = vshrl.u32 %v1918, 16
        %v1953 = vrot.slane %v1951, 4
        %v1954 = vshll.u32 %v1918, 16
        %v1956 = vrot.slane %v1954, 5
        %v1957 = vor.u32 %v1953, %v1956
        %v1958 = vrot.slane %v1957, 4
        %v1960 = vshll.u32 %v1919, 16
        %v1962 = vrot.slane %v1960, 5
        %v1963 = vsel %vm1935, %v1958, %v1962
        %v1965 = vshrl.u32 %v1920, 16
        %v1967 = vrot.slane %v1965, 4
        %v1968 = vshll.u32 %v1920, 16
        %v1970 = vrot.slane %v1968, 5
        %v1971 = vor.u32 %v1967, %v1970
        %v1972 = vrot.slane %v1971, 4
        %v1974 = vshll.u32 %v1921, 16
        %v1976 = vrot.slane %v1974, 5
        %v1977 = vsel %vm1935, %v1972, %v1976
        %v1979 = vshrl.u32 %v1922, 16
        %v1981 = vrot.slane %v1979, 4
        %v1982 = vshll.u32 %v1922, 16
        %v1984 = vrot.slane %v1982, 5
        %v1985 = vor.u32 %v1981, %v1984
        %v1986 = vrot.slane %v1985, 4
        %v1988 = vshll.u32 %v1923, 16
        %v1990 = vrot.slane %v1988, 5
        %v1991 = vsel %vm1935, %v1986, %v1990
        %v1993 = vshrl.u32 %v1924, 16
        %v1995 = vrot.slane %v1993, 4
        %v1996 = vshll.u32 %v1924, 16
        %v1998 = vrot.slane %v1996, 5
        %v1999 = vor.u32 %v1995, %v1998
        %v2000 = vrot.slane %v1999, 4
        %v2002 = vshll.u32 %v1925, 16
        %v2004 = vrot.slane %v2002, 5
        %v2005 = vsel %vm1935, %v2000, %v2004
        %v2007 = vshrl.u32 %v1926, 16
        %v2009 = vrot.slane %v2007, 4
        %v2010 = vshll.u32 %v1926, 16
        %v2012 = vrot.slane %v2010, 5
        %v2013 = vor.u32 %v2009, %v2012
        %v2014 = vrot.slane %v2013, 4
        %v2016 = vshll.u32 %v1927, 16
        %v2018 = vrot.slane %v2016, 5
        %v2019 = vsel %vm1935, %v2014, %v2018
        %v2021 = vshrl.u32 %v1928, 16
        %v2023 = vrot.slane %v2021, 4
        %v2024 = vshll.u32 %v1928, 16
        %v2026 = vrot.slane %v2024, 5
        %v2027 = vor.u32 %v2023, %v2026
        %v2028 = vrot.slane %v2027, 4
        %v2030 = vshll.u32 %v1929, 16
        %v2032 = vrot.slane %v2030, 5
        %v2033 = vsel %vm1935, %v2028, %v2032
        %v2035 = vshrl.u32 %v1930, 16
        %v2037 = vrot.slane %v2035, 4
        %v2038 = vshll.u32 %v1930, 16
        %v2040 = vrot.slane %v2038, 5
        %v2041 = vor.u32 %v2037, %v2040
        %v2042 = vrot.slane %v2041, 4
        %v2044 = vshll.u32 %v1931, 16
        %v2046 = vrot.slane %v2044, 5
        %v2047 = vsel %vm1935, %v2042, %v2046
        %s2048 = scalar_lea.vmem [#allocation14], 4
        %v2049 = vld [vmem:[%s2048] sm:$0xf]
        %v2050 = vunpack.c.l.b16 %v1949
        %v2051 = vunpack.c.l.b16 %v1963
        %v2052 = vunpack.c.l.b16 %v1977
        %v2053 = vunpack.c.l.b16 %v1991
        %v2054 = vunpack.c.l.b16 %v2005
        %v2055 = vunpack.c.l.b16 %v2019
        %v2056 = vunpack.c.l.b16 %v2033
        %v2057 = vunpack.c.l.b16 %v2047
        %v2058 = vpack.c.b16 %v2051, %v2050
        %v2059 = vpack.c.b16 %v2053, %v2052
        %v2060 = vpack.c.b16 %v2055, %v2054
        %v2061 = vpack.c.b16 %v2057, %v2056
        %v2063 = vsel %vm990, %v2058, 0
        %v2066 = vsel %vm990, %v2059, 0
        %v2069 = vsel %vm990, %v2060, 0
        %v2072 = vsel %vm990, %v2061, 0
        %v2075 = vsel %vm1003, %v2049, 0
        %2077 = vmatprep.subr.bf16.mxu0 0
        %2078 = vmatpush1.bf16.msra.mxu0 %v2075
        %2079 = vmatprep.subr.bf16.mxu0 0
        %2080 = vmatpush1.bf16.msra.mxu0 0
        %2081 = vmatprep.subr.bf16.mxu0 0
        %2082 = vmatpush1.bf16.msra.mxu0 0
        %2083 = vmatprep.subr.bf16.mxu0 0
        %2084 = vmatpush1.bf16.msra.mxu0 0
        %2085 = vmatprep.subr.bf16.mxu0 0
        %2086 = vmatpush1.bf16.msra.mxu0 0
        %2087 = vmatprep.subr.bf16.mxu0 0
        %2088 = vmatpush1.bf16.msra.mxu0 0
        %2089 = vmatprep.subr.bf16.mxu0 0
        %2090 = vmatpush1.bf16.msra.mxu0 0
        %2091 = vmatprep.subr.bf16.mxu0 0
        %2092 = vmatpush1.bf16.msra.mxu0 0
        %2093 = vmatprep.subr.bf16.mxu0 0
        %2094 = vmatpush1.bf16.msra.mxu0 0
        %2095 = vmatprep.subr.bf16.mxu0 0
        %2096 = vmatpush1.bf16.msra.mxu0 0
        %2097 = vmatprep.subr.bf16.mxu0 0
        %2098 = vmatpush1.bf16.msra.mxu0 0
        %2099 = vmatprep.subr.bf16.mxu0 0
        %2100 = vmatpush1.bf16.msra.mxu0 0
        %2101 = vmatprep.subr.bf16.mxu0 0
        %2102 = vmatpush1.bf16.msra.mxu0 0
        %2103 = vmatprep.subr.bf16.mxu0 0
        %2104 = vmatpush1.bf16.msra.mxu0 0
        %2105 = vmatprep.subr.bf16.mxu0 0
        %2106 = vmatpush1.bf16.msra.mxu0 0
        %2107 = vmatprep.subr.bf16.mxu0 0
        %2108 = vmatpush1.bf16.msra.mxu0 0
        %2109 = vmatprep.mubr.bf16.mxu0 0
        %2110 = vmatmul.mubr.bf16.gmra.mrb[0].mxu0 %v2063
        %v2111 = vpop.f32.mrb[0].mxu0
        %v2112 = vadd.f32 0.0, %v2111
        %v2113 = vpop.f32.mrb[0].mxu0
        %v2114 = vpop.f32.mrb[0].mxu0
        %v2115 = vadd.f32 0.0, %v2114
        %v2116 = vpop.f32.mrb[0].mxu0
        %2117 = vmatprep.mubr.bf16.mxu0 0
        %2118 = vmatmul.mubr.bf16.gmra.mrb[0].mxu0 %v2066
        %v2119 = vpop.f32.mrb[0].mxu0
        %v2120 = vadd.f32 0.0, %v2119
        %v2121 = vpop.f32.mrb[0].mxu0
        %v2122 = vpop.f32.mrb[0].mxu0
        %v2123 = vadd.f32 0.0, %v2122
        %v2124 = vpop.f32.mrb[0].mxu0
        %2125 = vmatprep.mubr.bf16.mxu0 0
        %2126 = vmatmul.mubr.bf16.gmra.mrb[0].mxu0 %v2069
        %v2127 = vpop.f32.mrb[0].mxu0
        %v2128 = vadd.f32 0.0, %v2127
        %v2129 = vpop.f32.mrb[0].mxu0
        %v2130 = vpop.f32.mrb[0].mxu0
        %v2131 = vadd.f32 0.0, %v2130
        %v2132 = vpop.f32.mrb[0].mxu0
        %2133 = vmatprep.mubr.bf16.mxu0 0
        %2134 = vmatmul.mubr.bf16.gmra.mrb[0].mxu0 %v2072
        %v2135 = vpop.f32.mrb[0].mxu0
        %v2136 = vadd.f32 0.0, %v2135
        %v2137 = vpop.f32.mrb[0].mxu0
        %v2138 = vpop.f32.mrb[0].mxu0
        %v2139 = vadd.f32 0.0, %v2138
        %v2140 = vpop.f32.mrb[0].mxu0
        %2141 = vdwg.mxu0
        %v2150 = vunpack.c.l.b16 %v1916
        %v2151 = vunpack.c.l.b16 %v1918
        %v2152 = vunpack.c.l.b16 %v1920
        %v2153 = vunpack.c.l.b16 %v1922
        %v2154 = vunpack.c.l.b16 %v1924
        %v2155 = vunpack.c.l.b16 %v1926
        %v2156 = vunpack.c.l.b16 %v1928
        %v2157 = vunpack.c.l.b16 %v1930
        %v2158 = vpack.c.b16 %v2151, %v2150
        %v2159 = vpack.c.b16 %v2153, %v2152
        %v2160 = vpack.c.b16 %v2155, %v2154
        %v2161 = vpack.c.b16 %v2157, %v2156
        %v2163 = vsel %vm990, %v2158, 0
        %v2166 = vsel %vm990, %v2159, 0
        %v2169 = vsel %vm990, %v2160, 0
        %v2172 = vsel %vm990, %v2161, 0
        %v2175 = vsel %vm1003, %v1932, 0
        %2177 = vmatprep.subr.bf16.mxu0 0
        %2178 = vmatpush1.bf16.msra.mxu0 %v2175
        %2179 = vmatprep.subr.bf16.mxu0 0
        %2180 = vmatpush1.bf16.msra.mxu0 0
        %2181 = vmatprep.subr.bf16.mxu0 0
        %2182 = vmatpush1.bf16.msra.mxu0 0
        %2183 = vmatprep.subr.bf16.mxu0 0
        %2184 = vmatpush1.bf16.msra.mxu0 0
        %2185 = vmatprep.subr.bf16.mxu0 0
        %2186 = vmatpush1.bf16.msra.mxu0 0
        %2187 = vmatprep.subr.bf16.mxu0 0
        %2188 = vmatpush1.bf16.msra.mxu0 0
        %2189 = vmatprep.subr.bf16.mxu0 0
        %2190 = vmatpush1.bf16.msra.mxu0 0
        %2191 = vmatprep.subr.bf16.mxu0 0
        %2192 = vmatpush1.bf16.msra.mxu0 0
        %2193 = vmatprep.subr.bf16.mxu0 0
        %2194 = vmatpush1.bf16.msra.mxu0 0
        %2195 = vmatprep.subr.bf16.mxu0 0
        %2196 = vmatpush1.bf16.msra.mxu0 0
        %2197 = vmatprep.subr.bf16.mxu0 0
        %2198 = vmatpush1.bf16.msra.mxu0 0
        %2199 = vmatprep.subr.bf16.mxu0 0
        %2200 = vmatpush1.bf16.msra.mxu0 0
        %2201 = vmatprep.subr.bf16.mxu0 0
        %2202 = vmatpush1.bf16.msra.mxu0 0
        %2203 = vmatprep.subr.bf16.mxu0 0
        %2204 = vmatpush1.bf16.msra.mxu0 0
        %2205 = vmatprep.subr.bf16.mxu0 0
        %2206 = vmatpush1.bf16.msra.mxu0 0
        %2207 = vmatprep.subr.bf16.mxu0 0
        %2208 = vmatpush1.bf16.msra.mxu0 0
        %2209 = vmatprep.mubr.bf16.mxu0 0
        %2210 = vmatmul.mubr.bf16.gmra.mrb[0].mxu0 %v2163
        %v2211 = vpop.f32.mrb[0].mxu0
        %v2212 = vadd.f32 %v2112, %v2211
        %v2213 = vpop.f32.mrb[0].mxu0
        %v2214 = vpop.f32.mrb[0].mxu0
        %v2215 = vadd.f32 %v2115, %v2214
        %v2216 = vpop.f32.mrb[0].mxu0
        %2217 = vmatprep.mubr.bf16.mxu0 0
        %2218 = vmatmul.mubr.bf16.gmra.mrb[0].mxu0 %v2166
        %v2219 = vpop.f32.mrb[0].mxu0
        %v2220 = vadd.f32 %v2120, %v2219
        %v2221 = vpop.f32.mrb[0].mxu0
        %v2222 = vpop.f32.mrb[0].mxu0
        %v2223 = vadd.f32 %v2123, %v2222
        %v2224 = vpop.f32.mrb[0].mxu0
        %2225 = vmatprep.mubr.bf16.mxu0 0
        %2226 = vmatmul.mubr.bf16.gmra.mrb[0].mxu0 %v2169
        %v2227 = vpop.f32.mrb[0].mxu0
        %v2228 = vadd.f32 %v2128, %v2227
        %v2229 = vpop.f32.mrb[0].mxu0
        %v2230 = vpop.f32.mrb[0].mxu0
        %v2231 = vadd.f32 %v2131, %v2230
        %v2232 = vpop.f32.mrb[0].mxu0
        %2233 = vmatprep.mubr.bf16.mxu0 0
        %2234 = vmatmul.mubr.bf16.gmra.mrb[0].mxu0 %v2172
        %v2235 = vpop.f32.mrb[0].mxu0
        %v2236 = vadd.f32 %v2136, %v2235
        %v2237 = vpop.f32.mrb[0].mxu0
        %v2238 = vpop.f32.mrb[0].mxu0
        %v2239 = vadd.f32 %v2139, %v2238
        %v2240 = vpop.f32.mrb[0].mxu0
        %2241 = vdwg.mxu0
        %vm2250 = vcmask 1042432
        %vm2251 = vcmask 1046532
        %vm2252 = vmor %vm2250, %vm2251
        %v2253 = vrot.slane %v1916, 5
        %v2254 = vrot.slane %v2253, 4
        %v2255 = vrot.slane %v1917, 5
        %v2256 = vsel %vm2252, %v2254, %v2255
        %v2257 = vrot.slane %v1918, 5
        %v2258 = vrot.slane %v2257, 4
        %v2259 = vrot.slane %v1919, 5
        %v2260 = vsel %vm2252, %v2258, %v2259
        %v2261 = vrot.slane %v1920, 5
        %v2262 = vrot.slane %v2261, 4
        %v2263 = vrot.slane %v1921, 5
        %v2264 = vsel %vm2252, %v2262, %v2263
        %v2265 = vrot.slane %v1922, 5
        %v2266 = vrot.slane %v2265, 4
        %v2267 = vrot.slane %v1923, 5
        %v2268 = vsel %vm2252, %v2266, %v2267
        %v2269 = vrot.slane %v1924, 5
        %v2270 = vrot.slane %v2269, 4
        %v2271 = vrot.slane %v1925, 5
        %v2272 = vsel %vm2252, %v2270, %v2271
        %v2273 = vrot.slane %v1926, 5
        %v2274 = vrot.slane %v2273, 4
        %v2275 = vrot.slane %v1927, 5
        %v2276 = vsel %vm2252, %v2274, %v2275
        %v2277 = vrot.slane %v1928, 5
        %v2278 = vrot.slane %v2277, 4
        %v2279 = vrot.slane %v1929, 5
        %v2280 = vsel %vm2252, %v2278, %v2279
        %v2281 = vrot.slane %v1930, 5
        %v2282 = vrot.slane %v2281, 4
        %v2283 = vrot.slane %v1931, 5
        %v2284 = vsel %vm2252, %v2282, %v2283
        %s2285 = scalar_lea.vmem [#allocation14], 8
        %v2286 = vld [vmem:[%s2285] sm:$0xf]
        %v2287 = vunpack.c.l.b16 %v2256
        %v2288 = vunpack.c.l.b16 %v2260
        %v2289 = vunpack.c.l.b16 %v2264
        %v2290 = vunpack.c.l.b16 %v2268
        %v2291 = vunpack.c.l.b16 %v2272
        %v2292 = vunpack.c.l.b16 %v2276
        %v2293 = vunpack.c.l.b16 %v2280
        %v2294 = vunpack.c.l.b16 %v2284
        %v2295 = vpack.c.b16 %v2288, %v2287
        %v2296 = vpack.c.b16 %v2290, %v2289
        %v2297 = vpack.c.b16 %v2292, %v2291
        %v2298 = vpack.c.b16 %v2294, %v2293
        %v2300 = vsel %vm990, %v2295, 0
        %v2303 = vsel %vm990, %v2296, 0
        %v2306 = vsel %vm990, %v2297, 0
        %v2309 = vsel %vm990, %v2298, 0
        %v2312 = vsel %vm1003, %v2286, 0
        %2314 = vmatprep.subr.bf16.mxu0 0
        %2315 = vmatpush1.bf16.msra.mxu0 %v2312
        %2316 = vmatprep.subr.bf16.mxu0 0
        %2317 = vmatpush1.bf16.msra.mxu0 0
        %2318 = vmatprep.subr.bf16.mxu0 0
        %2319 = vmatpush1.bf16.msra.mxu0 0
        %2320 = vmatprep.subr.bf16.mxu0 0
        %2321 = vmatpush1.bf16.msra.mxu0 0
        %2322 = vmatprep.subr.bf16.mxu0 0
        %2323 = vmatpush1.bf16.msra.mxu0 0
        %2324 = vmatprep.subr.bf16.mxu0 0
        %2325 = vmatpush1.bf16.msra.mxu0 0
        %2326 = vmatprep.subr.bf16.mxu0 0
        %2327 = vmatpush1.bf16.msra.mxu0 0
        %2328 = vmatprep.subr.bf16.mxu0 0
        %2329 = vmatpush1.bf16.msra.mxu0 0
        %2330 = vmatprep.subr.bf16.mxu0 0
        %2331 = vmatpush1.bf16.msra.mxu0 0
        %2332 = vmatprep.subr.bf16.mxu0 0
        %2333 = vmatpush1.bf16.msra.mxu0 0
        %2334 = vmatprep.subr.bf16.mxu0 0
        %2335 = vmatpush1.bf16.msra.mxu0 0
        %2336 = vmatprep.subr.bf16.mxu0 0
        %2337 = vmatpush1.bf16.msra.mxu0 0
        %2338 = vmatprep.subr.bf16.mxu0 0
        %2339 = vmatpush1.bf16.msra.mxu0 0
        %2340 = vmatprep.subr.bf16.mxu0 0
        %2341 = vmatpush1.bf16.msra.mxu0 0
        %2342 = vmatprep.subr.bf16.mxu0 0
        %2343 = vmatpush1.bf16.msra.mxu0 0
        %2344 = vmatprep.subr.bf16.mxu0 0
        %2345 = vmatpush1.bf16.msra.mxu0 0
        %2346 = vmatprep.mubr.bf16.mxu0 0
        %2347 = vmatmul.mubr.bf16.gmra.mrb[0].mxu0 %v2300
        %v2348 = vpop.f32.mrb[0].mxu0
        %v2349 = vadd.f32 0.0, %v2348
        %v2350 = vpop.f32.mrb[0].mxu0
        %v2351 = vpop.f32.mrb[0].mxu0
        %v2352 = vadd.f32 0.0, %v2351
        %v2353 = vpop.f32.mrb[0].mxu0
        %2354 = vmatprep.mubr.bf16.mxu0 0
        %2355 = vmatmul.mubr.bf16.gmra.mrb[0].mxu0 %v2303
        %v2356 = vpop.f32.mrb[0].mxu0
        %v2357 = vadd.f32 0.0, %v2356
        %v2358 = vpop.f32.mrb[0].mxu0
        %v2359 = vpop.f32.mrb[0].mxu0
        %v2360 = vadd.f32 0.0, %v2359
        %v2361 = vpop.f32.mrb[0].mxu0
        %2362 = vmatprep.mubr.bf16.mxu0 0
        %2363 = vmatmul.mubr.bf16.gmra.mrb[0].mxu0 %v2306
        %v2364 = vpop.f32.mrb[0].mxu0
        %v2365 = vadd.f32 0.0, %v2364
        %v2366 = vpop.f32.mrb[0].mxu0
        %v2367 = vpop.f32.mrb[0].mxu0
        %v2368 = vadd.f32 0.0, %v2367
        %v2369 = vpop.f32.mrb[0].mxu0
        %2370 = vmatprep.mubr.bf16.mxu0 0
        %2371 = vmatmul.mubr.bf16.gmra.mrb[0].mxu0 %v2309
        %v2372 = vpop.f32.mrb[0].mxu0
        %v2373 = vadd.f32 0.0, %v2372
        %v2374 = vpop.f32.mrb[0].mxu0
        %v2375 = vpop.f32.mrb[0].mxu0
        %v2376 = vadd.f32 0.0, %v2375
        %v2377 = vpop.f32.mrb[0].mxu0
        %2378 = vdwg.mxu0
        %v2379 = vadd.f32 %v2212, %v2349
        %v2380 = vadd.f32 %v2215, %v2352
        %v2381 = vadd.f32 %v2220, %v2357
        %v2382 = vadd.f32 %v2223, %v2360
        %v2383 = vadd.f32 %v2228, %v2365
        %v2384 = vadd.f32 %v2231, %v2368
        %v2385 = vadd.f32 %v2236, %v2373
        %v2386 = vadd.f32 %v2239, %v2376
        %vm2387 = vsmask.f32 2304
        %vm2388 = vsmask.f32 6416
        %vm2389 = vmor %vm2387, %vm2388
        %v2390 = vrot.slane %v1937, 5
        %v2391 = vrot.slane %v1940, 6
        %v2392 = vor.u32 %v2390, %v2391
        %v2393 = vrot.slane %v2392, 4
        %v2394 = vshrl.u32 %v1917, 16
        %v2396 = vrot.slane %v2394, 5
        %v2397 = vrot.slane %v1946, 6
        %v2398 = vor.u32 %v2396, %v2397
        %v2399 = vsel %vm2389, %v2393, %v2398
        %v2400 = vrot.slane %v1951, 5
        %v2401 = vrot.slane %v1954, 6
        %v2402 = vor.u32 %v2400, %v2401
        %v2403 = vrot.slane %v2402, 4
        %v2404 = vshrl.u32 %v1919, 16
        %v2406 = vrot.slane %v2404, 5
        %v2407 = vrot.slane %v1960, 6
        %v2408 = vor.u32 %v2406, %v2407
        %v2409 = vsel %vm2389, %v2403, %v2408
        %v2410 = vrot.slane %v1965, 5
        %v2411 = vrot.slane %v1968, 6
        %v2412 = vor.u32 %v2410, %v2411
        %v2413 = vrot.slane %v2412, 4
        %v2414 = vshrl.u32 %v1921, 16
        %v2416 = vrot.slane %v2414, 5
        %v2417 = vrot.slane %v1974, 6
        %v2418 = vor.u32 %v2416, %v2417
        %v2419 = vsel %vm2389, %v2413, %v2418
        %v2420 = vrot.slane %v1979, 5
        %v2421 = vrot.slane %v1982, 6
        %v2422 = vor.u32 %v2420, %v2421
        %v2423 = vrot.slane %v2422, 4
        %v2424 = vshrl.u32 %v1923, 16
        %v2426 = vrot.slane %v2424, 5
        %v2427 = vrot.slane %v1988, 6
        %v2428 = vor.u32 %v2426, %v2427
        %v2429 = vsel %vm2389, %v2423, %v2428
        %v2430 = vrot.slane %v1993, 5
        %v2431 = vrot.slane %v1996, 6
        %v2432 = vor.u32 %v2430, %v2431
        %v2433 = vrot.slane %v2432, 4
        %v2434 = vshrl.u32 %v1925, 16
        %v2436 = vrot.slane %v2434, 5
        %v2437 = vrot.slane %v2002, 6
        %v2438 = vor.u32 %v2436, %v2437
        %v2439 = vsel %vm2389, %v2433, %v2438
        %v2440 = vrot.slane %v2007, 5
        %v2441 = vrot.slane %v2010, 6
        %v2442 = vor.u32 %v2440, %v2441
        %v2443 = vrot.slane %v2442, 4
        %v2444 = vshrl.u32 %v1927, 16
        %v2446 = vrot.slane %v2444, 5
        %v2447 = vrot.slane %v2016, 6
        %v2448 = vor.u32 %v2446, %v2447
        %v2449 = vsel %vm2389, %v2443, %v2448
        %v2450 = vrot.slane %v2021, 5
        %v2451 = vrot.slane %v2024, 6
        %v2452 = vor.u32 %v2450, %v2451
        %v2453 = vrot.slane %v2452, 4
        %v2454 = vshrl.u32 %v1929, 16
        %v2456 = vrot.slane %v2454, 5
        %v2457 = vrot.slane %v2030, 6
        %v2458 = vor.u32 %v2456, %v2457
        %v2459 = vsel %vm2389, %v2453, %v2458
        %v2460 = vrot.slane %v2035, 5
        %v2461 = vrot.slane %v2038, 6
        %v2462 = vor.u32 %v2460, %v2461
        %v2463 = vrot.slane %v2462, 4
        %v2464 = vshrl.u32 %v1931, 16
        %v2466 = vrot.slane %v2464, 5
        %v2467 = vrot.slane %v2044, 6
        %v2468 = vor.u32 %v2466, %v2467
        %v2469 = vsel %vm2389, %v2463, %v2468
        %s2470 = scalar_lea.vmem [#allocation14], 12
        %v2471 = vld [vmem:[%s2470] sm:$0xf]
        %v2472 = vunpack.c.l.b16 %v2399
        %v2473 = vunpack.c.l.b16 %v2409
        %v2474 = vunpack.c.l.b16 %v2419
        %v2475 = vunpack.c.l.b16 %v2429
        %v2476 = vunpack.c.l.b16 %v2439
        %v2477 = vunpack.c.l.b16 %v2449
        %v2478 = vunpack.c.l.b16 %v2459
        %v2479 = vunpack.c.l.b16 %v2469
        %v2480 = vpack.c.b16 %v2473, %v2472
        %v2481 = vpack.c.b16 %v2475, %v2474
        %v2482 = vpack.c.b16 %v2477, %v2476
        %v2483 = vpack.c.b16 %v2479, %v2478
        %v2485 = vsel %vm990, %v2480, 0
        %v2488 = vsel %vm990, %v2481, 0
        %v2491 = vsel %vm990, %v2482, 0
        %v2494 = vsel %vm990, %v2483, 0
        %v2497 = vsel %vm1003, %v2471, 0
        %2499 = vmatprep.subr.bf16.mxu0 0
        %2500 = vmatpush1.bf16.msra.mxu0 %v2497
        %2501 = vmatprep.subr.bf16.mxu0 0
        %2502 = vmatpush1.bf16.msra.mxu0 0
        %2503 = vmatprep.subr.bf16.mxu0 0
        %2504 = vmatpush1.bf16.msra.mxu0 0
        %2505 = vmatprep.subr.bf16.mxu0 0
        %2506 = vmatpush1.bf16.msra.mxu0 0
        %2507 = vmatprep.subr.bf16.mxu0 0
        %2508 = vmatpush1.bf16.msra.mxu0 0
        %2509 = vmatprep.subr.bf16.mxu0 0
        %2510 = vmatpush1.bf16.msra.mxu0 0
        %2511 = vmatprep.subr.bf16.mxu0 0
        %2512 = vmatpush1.bf16.msra.mxu0 0
        %2513 = vmatprep.subr.bf16.mxu0 0
        %2514 = vmatpush1.bf16.msra.mxu0 0
        %2515 = vmatprep.subr.bf16.mxu0 0
        %2516 = vmatpush1.bf16.msra.mxu0 0
        %2517 = vmatprep.subr.bf16.mxu0 0
        %2518 = vmatpush1.bf16.msra.mxu0 0
        %2519 = vmatprep.subr.bf16.mxu0 0
        %2520 = vmatpush1.bf16.msra.mxu0 0
        %2521 = vmatprep.subr.bf16.mxu0 0
        %2522 = vmatpush1.bf16.msra.mxu0 0
        %2523 = vmatprep.subr.bf16.mxu0 0
        %2524 = vmatpush1.bf16.msra.mxu0 0
        %2525 = vmatprep.subr.bf16.mxu0 0
        %2526 = vmatpush1.bf16.msra.mxu0 0
        %2527 = vmatprep.subr.bf16.mxu0 0
        %2528 = vmatpush1.bf16.msra.mxu0 0
        %2529 = vmatprep.subr.bf16.mxu0 0
        %2530 = vmatpush1.bf16.msra.mxu0 0
        %2531 = vmatprep.mubr.bf16.mxu0 0
        %2532 = vmatmul.mubr.bf16.gmra.mrb[0].mxu0 %v2485
        %v2533 = vpop.f32.mrb[0].mxu0
        %v2534 = vadd.f32 0.0, %v2533
        %v2535 = vpop.f32.mrb[0].mxu0
        %v2536 = vpop.f32.mrb[0].mxu0
        %v2537 = vadd.f32 0.0, %v2536
        %v2538 = vpop.f32.mrb[0].mxu0
        %2539 = vmatprep.mubr.bf16.mxu0 0
        %2540 = vmatmul.mubr.bf16.gmra.mrb[0].mxu0 %v2488
        %v2541 = vpop.f32.mrb[0].mxu0
        %v2542 = vadd.f32 0.0, %v2541
        %v2543 = vpop.f32.mrb[0].mxu0
        %v2544 = vpop.f32.mrb[0].mxu0
        %v2545 = vadd.f32 0.0, %v2544
        %v2546 = vpop.f32.mrb[0].mxu0
        %2547 = vmatprep.mubr.bf16.mxu0 0
        %2548 = vmatmul.mubr.bf16.gmra.mrb[0].mxu0 %v2491
        %v2549 = vpop.f32.mrb[0].mxu0
        %v2550 = vadd.f32 0.0, %v2549
        %v2551 = vpop.f32.mrb[0].mxu0
        %v2552 = vpop.f32.mrb[0].mxu0
        %v2553 = vadd.f32 0.0, %v2552
        %v2554 = vpop.f32.mrb[0].mxu0
        %2555 = vmatprep.mubr.bf16.mxu0 0
        %2556 = vmatmul.mubr.bf16.gmra.mrb[0].mxu0 %v2494
        %v2557 = vpop.f32.mrb[0].mxu0
        %v2558 = vadd.f32 0.0, %v2557
        %v2559 = vpop.f32.mrb[0].mxu0
        %v2560 = vpop.f32.mrb[0].mxu0
        %v2561 = vadd.f32 0.0, %v2560
        %v2562 = vpop.f32.mrb[0].mxu0
        %2563 = vdwg.mxu0
        %v2564 = vadd.f32 %v2379, %v2534
        %v2565 = vadd.f32 %v2380, %v2537
        %v2566 = vadd.f32 %v2381, %v2542
        %v2567 = vadd.f32 %v2382, %v2545
        %v2568 = vadd.f32 %v2383, %v2550
        %v2569 = vadd.f32 %v2384, %v2553
        %v2570 = vadd.f32 %v2385, %v2558
        %v2571 = vadd.f32 %v2386, %v2561
        %vm2572 = vcmask 1041408
        %vm2573 = vcmask 1045508
        %vm2574 = vmor %vm2572, %vm2573
        %v2575 = vrot.slane %v1916, 6
        %v2576 = vrot.slane %v2575, 4
        %v2577 = vrot.slane %v1917, 6
        %v2578 = vsel %vm2574, %v2576, %v2577
        %v2579 = vrot.slane %v1918, 6
        %v2580 = vrot.slane %v2579, 4
        %v2581 = vrot.slane %v1919, 6
        %v2582 = vsel %vm2574, %v2580, %v2581
        %v2583 = vrot.slane %v1920, 6
        %v2584 = vrot.slane %v2583, 4
        %v2585 = vrot.slane %v1921, 6
        %v2586 = vsel %vm2574, %v2584, %v2585
        %v2587 = vrot.slane %v1922, 6
        %v2588 = vrot.slane %v2587, 4
        %v2589 = vrot.slane %v1923, 6
        %v2590 = vsel %vm2574, %v2588, %v2589
        %v2591 = vrot.slane %v1924, 6
        %v2592 = vrot.slane %v2591, 4
        %v2593 = vrot.slane %v1925, 6
        %v2594 = vsel %vm2574, %v2592, %v2593
        %v2595 = vrot.slane %v1926, 6
        %v2596 = vrot.slane %v2595, 4
        %v2597 = vrot.slane %v1927, 6
        %v2598 = vsel %vm2574, %v2596, %v2597
        %v2599 = vrot.slane %v1928, 6
        %v2600 = vrot.slane %v2599, 4
        %v2601 = vrot.slane %v1929, 6
        %v2602 = vsel %vm2574, %v2600, %v2601
        %v2603 = vrot.slane %v1930, 6
        %v2604 = vrot.slane %v2603, 4
        %v2605 = vrot.slane %v1931, 6
        %v2606 = vsel %vm2574, %v2604, %v2605
        %s2607 = scalar_lea.vmem [#allocation14], 16
        %v2608 = vld [vmem:[%s2607] sm:$0xf]
        %v2609 = vunpack.c.l.b16 %v2578
        %v2610 = vunpack.c.l.b16 %v2582
        %v2611 = vunpack.c.l.b16 %v2586
        %v2612 = vunpack.c.l.b16 %v2590
        %v2613 = vunpack.c.l.b16 %v2594
        %v2614 = vunpack.c.l.b16 %v2598
        %v2615 = vunpack.c.l.b16 %v2602
        %v2616 = vunpack.c.l.b16 %v2606
        %v2617 = vpack.c.b16 %v2610, %v2609
        %v2618 = vpack.c.b16 %v2612, %v2611
        %v2619 = vpack.c.b16 %v2614, %v2613
        %v2620 = vpack.c.b16 %v2616, %v2615
        %v2622 = vsel %vm990, %v2617, 0
        %v2625 = vsel %vm990, %v2618, 0
        %v2628 = vsel %vm990, %v2619, 0
        %v2631 = vsel %vm990, %v2620, 0
        %v2634 = vsel %vm1003, %v2608, 0
        %2636 = vmatprep.subr.bf16.mxu0 0
        %2637 = vmatpush1.bf16.msra.mxu0 %v2634
        %2638 = vmatprep.subr.bf16.mxu0 0
        %2639 = vmatpush1.bf16.msra.mxu0 0
        %2640 = vmatprep.subr.bf16.mxu0 0
        %2641 = vmatpush1.bf16.msra.mxu0 0
        %2642 = vmatprep.subr.bf16.mxu0 0
        %2643 = vmatpush1.bf16.msra.mxu0 0
        %2644 = vmatprep.subr.bf16.mxu0 0
        %2645 = vmatpush1.bf16.msra.mxu0 0
        %2646 = vmatprep.subr.bf16.mxu0 0
        %2647 = vmatpush1.bf16.msra.mxu0 0
        %2648 = vmatprep.subr.bf16.mxu0 0
        %2649 = vmatpush1.bf16.msra.mxu0 0
        %2650 = vmatprep.subr.bf16.mxu0 0
        %2651 = vmatpush1.bf16.msra.mxu0 0
        %2652 = vmatprep.subr.bf16.mxu0 0
        %2653 = vmatpush1.bf16.msra.mxu0 0
        %2654 = vmatprep.subr.bf16.mxu0 0
        %2655 = vmatpush1.bf16.msra.mxu0 0
        %2656 = vmatprep.subr.bf16.mxu0 0
        %2657 = vmatpush1.bf16.msra.mxu0 0
        %2658 = vmatprep.subr.bf16.mxu0 0
        %2659 = vmatpush1.bf16.msra.mxu0 0
        %2660 = vmatprep.subr.bf16.mxu0 0
        %2661 = vmatpush1.bf16.msra.mxu0 0
        %2662 = vmatprep.subr.bf16.mxu0 0
        %2663 = vmatpush1.bf16.msra.mxu0 0
        %2664 = vmatprep.subr.bf16.mxu0 0
        %2665 = vmatpush1.bf16.msra.mxu0 0
        %2666 = vmatprep.subr.bf16.mxu0 0
        %2667 = vmatpush1.bf16.msra.mxu0 0
        %2668 = vmatprep.mubr.bf16.mxu0 0
        %2669 = vmatmul.mubr.bf16.gmra.mrb[0].mxu0 %v2622
        %v2670 = vpop.f32.mrb[0].mxu0
        %v2671 = vadd.f32 0.0, %v2670
        %v2672 = vpop.f32.mrb[0].mxu0
        %v2673 = vpop.f32.mrb[0].mxu0
        %v2674 = vadd.f32 0.0, %v2673
        %v2675 = vpop.f32.mrb[0].mxu0
        %2676 = vmatprep.mubr.bf16.mxu0 0
        %2677 = vmatmul.mubr.bf16.gmra.mrb[0].mxu0 %v2625
        %v2678 = vpop.f32.mrb[0].mxu0
        %v2679 = vadd.f32 0.0, %v2678
        %v2680 = vpop.f32.mrb[0].mxu0
        %v2681 = vpop.f32.mrb[0].mxu0
        %v2682 = vadd.f32 0.0, %v2681
        %v2683 = vpop.f32.mrb[0].mxu0
        %2684 = vmatprep.mubr.bf16.mxu0 0
        %2685 = vmatmul.mubr.bf16.gmra.mrb[0].mxu0 %v2628
        %v2686 = vpop.f32.mrb[0].mxu0
        %v2687 = vadd.f32 0.0, %v2686
        %v2688 = vpop.f32.mrb[0].mxu0
        %v2689 = vpop.f32.mrb[0].mxu0
        %v2690 = vadd.f32 0.0, %v2689
        %v2691 = vpop.f32.mrb[0].mxu0
        %2692 = vmatprep.mubr.bf16.mxu0 0
        %2693 = vmatmul.mubr.bf16.gmra.mrb[0].mxu0 %v2631
        %v2694 = vpop.f32.mrb[0].mxu0
        %v2695 = vadd.f32 0.0, %v2694
        %v2696 = vpop.f32.mrb[0].mxu0
        %v2697 = vpop.f32.mrb[0].mxu0
        %v2698 = vadd.f32 0.0, %v2697
        %v2699 = vpop.f32.mrb[0].mxu0
        %2700 = vdwg.mxu0
        %v2701 = vadd.f32 %v2564, %v2671
        %v2702 = vadd.f32 %v2565, %v2674
        %v2703 = vadd.f32 %v2566, %v2679
        %v2704 = vadd.f32 %v2567, %v2682
        %v2705 = vadd.f32 %v2568, %v2687
        %v2706 = vadd.f32 %v2569, %v2690
        %v2707 = vadd.f32 %v2570, %v2695
        %v2708 = vadd.f32 %v2571, %v2698
        %vm2709 = vsmask.f32 5392
        %vm2710 = vmor %vm1869, %vm2709
        %v2711 = vrot.slane %v1937, 6
        %v2712 = vrot.slane %v1940, 7
        %v2713 = vor.u32 %v2711, %v2712
        %v2714 = vrot.slane %v2713, 4
        %v2715 = vrot.slane %v2394, 6
        %v2716 = vrot.slane %v1946, 7
        %v2717 = vor.u32 %v2715, %v2716
        %v2718 = vsel %vm2710, %v2714, %v2717
        %v2719 = vrot.slane %v1951, 6
        %v2720 = vrot.slane %v1954, 7
        %v2721 = vor.u32 %v2719, %v2720
        %v2722 = vrot.slane %v2721, 4
        %v2723 = vrot.slane %v2404, 6
        %v2724 = vrot.slane %v1960, 7
        %v2725 = vor.u32 %v2723, %v2724
        %v2726 = vsel %vm2710, %v2722, %v2725
        %v2727 = vrot.slane %v1965, 6
        %v2728 = vrot.slane %v1968, 7
        %v2729 = vor.u32 %v2727, %v2728
        %v2730 = vrot.slane %v2729, 4
        %v2731 = vrot.slane %v2414, 6
        %v2732 = vrot.slane %v1974, 7
        %v2733 = vor.u32 %v2731, %v2732
        %v2734 = vsel %vm2710, %v2730, %v2733
        %v2735 = vrot.slane %v1979, 6
        %v2736 = vrot.slane %v1982, 7
        %v2737 = vor.u32 %v2735, %v2736
        %v2738 = vrot.slane %v2737, 4
        %v2739 = vrot.slane %v2424, 6
        %v2740 = vrot.slane %v1988, 7
        %v2741 = vor.u32 %v2739, %v2740
        %v2742 = vsel %vm2710, %v2738, %v2741
        %v2743 = vrot.slane %v1993, 6
        %v2744 = vrot.slane %v1996, 7
        %v2745 = vor.u32 %v2743, %v2744
        %v2746 = vrot.slane %v2745, 4
        %v2747 = vrot.slane %v2434, 6
        %v2748 = vrot.slane %v2002, 7
        %v2749 = vor.u32 %v2747, %v2748
        %v2750 = vsel %vm2710, %v2746, %v2749
        %v2751 = vrot.slane %v2007, 6
        %v2752 = vrot.slane %v2010, 7
        %v2753 = vor.u32 %v2751, %v2752
        %v2754 = vrot.slane %v2753, 4
        %v2755 = vrot.slane %v2444, 6
        %v2756 = vrot.slane %v2016, 7
        %v2757 = vor.u32 %v2755, %v2756
        %v2758 = vsel %vm2710, %v2754, %v2757
        %v2759 = vrot.slane %v2021, 6
        %v2760 = vrot.slane %v2024, 7
        %v2761 = vor.u32 %v2759, %v2760
        %v2762 = vrot.slane %v2761, 4
        %v2763 = vrot.slane %v2454, 6
        %v2764 = vrot.slane %v2030, 7
        %v2765 = vor.u32 %v2763, %v2764
        %v2766 = vsel %vm2710, %v2762, %v2765
        %v2767 = vrot.slane %v2035, 6
        %v2768 = vrot.slane %v2038, 7
        %v2769 = vor.u32 %v2767, %v2768
        %v2770 = vrot.slane %v2769, 4
        %v2771 = vrot.slane %v2464, 6
        %v2772 = vrot.slane %v2044, 7
        %v2773 = vor.u32 %v2771, %v2772
        %v2774 = vsel %vm2710, %v2770, %v2773
        %s2775 = scalar_lea.vmem [#allocation14], 20
        %v2776 = vld [vmem:[%s2775] sm:$0xf]
        %v2777 = vunpack.c.l.b16 %v2718
        %v2778 = vunpack.c.l.b16 %v2726
        %v2779 = vunpack.c.l.b16 %v2734
        %v2780 = vunpack.c.l.b16 %v2742
        %v2781 = vunpack.c.l.b16 %v2750
        %v2782 = vunpack.c.l.b16 %v2758
        %v2783 = vunpack.c.l.b16 %v2766
        %v2784 = vunpack.c.l.b16 %v2774
        %v2785 = vpack.c.b16 %v2778, %v2777
        %v2786 = vpack.c.b16 %v2780, %v2779
        %v2787 = vpack.c.b16 %v2782, %v2781
        %v2788 = vpack.c.b16 %v2784, %v2783
        %v2790 = vsel %vm990, %v2785, 0
        %v2793 = vsel %vm990, %v2786, 0
        %v2796 = vsel %vm990, %v2787, 0
        %v2799 = vsel %vm990, %v2788, 0
        %v2802 = vsel %vm1003, %v2776, 0
        %2804 = vmatprep.subr.bf16.mxu0 0
        %2805 = vmatpush1.bf16.msra.mxu0 %v2802
        %2806 = vmatprep.subr.bf16.mxu0 0
        %2807 = vmatpush1.bf16.msra.mxu0 0
        %2808 = vmatprep.subr.bf16.mxu0 0
        %2809 = vmatpush1.bf16.msra.mxu0 0
        %2810 = vmatprep.subr.bf16.mxu0 0
        %2811 = vmatpush1.bf16.msra.mxu0 0
        %2812 = vmatprep.subr.bf16.mxu0 0
        %2813 = vmatpush1.bf16.msra.mxu0 0
        %2814 = vmatprep.subr.bf16.mxu0 0
        %2815 = vmatpush1.bf16.msra.mxu0 0
        %2816 = vmatprep.subr.bf16.mxu0 0
        %2817 = vmatpush1.bf16.msra.mxu0 0
        %2818 = vmatprep.subr.bf16.mxu0 0
        %2819 = vmatpush1.bf16.msra.mxu0 0
        %2820 = vmatprep.subr.bf16.mxu0 0
        %2821 = vmatpush1.bf16.msra.mxu0 0
        %2822 = vmatprep.subr.bf16.mxu0 0
        %2823 = vmatpush1.bf16.msra.mxu0 0
        %2824 = vmatprep.subr.bf16.mxu0 0
        %2825 = vmatpush1.bf16.msra.mxu0 0
        %2826 = vmatprep.subr.bf16.mxu0 0
        %2827 = vmatpush1.bf16.msra.mxu0 0
        %2828 = vmatprep.subr.bf16.mxu0 0
        %2829 = vmatpush1.bf16.msra.mxu0 0
        %2830 = vmatprep.subr.bf16.mxu0 0
        %2831 = vmatpush1.bf16.msra.mxu0 0
        %2832 = vmatprep.subr.bf16.mxu0 0
        %2833 = vmatpush1.bf16.msra.mxu0 0
        %2834 = vmatprep.subr.bf16.mxu0 0
        %2835 = vmatpush1.bf16.msra.mxu0 0
        %2836 = vmatprep.mubr.bf16.mxu0 0
        %2837 = vmatmul.mubr.bf16.gmra.mrb[0].mxu0 %v2790
        %v2838 = vpop.f32.mrb[0].mxu0
        %v2839 = vadd.f32 0.0, %v2838
        %v2840 = vpop.f32.mrb[0].mxu0
        %v2841 = vpop.f32.mrb[0].mxu0
        %v2842 = vadd.f32 0.0, %v2841
        %v2843 = vpop.f32.mrb[0].mxu0
        %2844 = vmatprep.mubr.bf16.mxu0 0
        %2845 = vmatmul.mubr.bf16.gmra.mrb[0].mxu0 %v2793
        %v2846 = vpop.f32.mrb[0].mxu0
        %v2847 = vadd.f32 0.0, %v2846
        %v2848 = vpop.f32.mrb[0].mxu0
        %v2849 = vpop.f32.mrb[0].mxu0
        %v2850 = vadd.f32 0.0, %v2849
        %v2851 = vpop.f32.mrb[0].mxu0
        %2852 = vmatprep.mubr.bf16.mxu0 0
        %2853 = vmatmul.mubr.bf16.gmra.mrb[0].mxu0 %v2796
        %v2854 = vpop.f32.mrb[0].mxu0
        %v2855 = vadd.f32 0.0, %v2854
        %v2856 = vpop.f32.mrb[0].mxu0
        %v2857 = vpop.f32.mrb[0].mxu0
        %v2858 = vadd.f32 0.0, %v2857
        %v2859 = vpop.f32.mrb[0].mxu0
        %2860 = vmatprep.mubr.bf16.mxu0 0
        %2861 = vmatmul.mubr.bf16.gmra.mrb[0].mxu0 %v2799
        %v2862 = vpop.f32.mrb[0].mxu0
        %v2863 = vadd.f32 0.0, %v2862
        %v2864 = vpop.f32.mrb[0].mxu0
        %v2865 = vpop.f32.mrb[0].mxu0
        %v2866 = vadd.f32 0.0, %v2865
        %v2867 = vpop.f32.mrb[0].mxu0
        %2868 = vdwg.mxu0
        %v2869 = vadd.f32 %v2701, %v2839
        %v2870 = vadd.f32 %v2702, %v2842
        %v2871 = vadd.f32 %v2703, %v2847
        %v2872 = vadd.f32 %v2704, %v2850
        %v2873 = vadd.f32 %v2705, %v2855
        %v2874 = vadd.f32 %v2706, %v2858
        %v2875 = vadd.f32 %v2707, %v2863
        %v2876 = vadd.f32 %v2708, %v2866
        %vm2877 = vcmask 1040384
        %vm2878 = vcmask 1044484
        %vm2879 = vmor %vm2877, %vm2878
        %v2880 = vrot.slane %v1916, 7
        %v2881 = vrot.slane %v2880, 4
        %v2882 = vrot.slane %v1917, 7
        %v2883 = vsel %vm2879, %v2881, %v2882
        %v2884 = vrot.slane %v1918, 7
        %v2885 = vrot.slane %v2884, 4
        %v2886 = vrot.slane %v1919, 7
        %v2887 = vsel %vm2879, %v2885, %v2886
        %v2888 = vrot.slane %v1920, 7
        %v2889 = vrot.slane %v2888, 4
        %v2890 = vrot.slane %v1921, 7
        %v2891 = vsel %vm2879, %v2889, %v2890
        %v2892 = vrot.slane %v1922, 7
        %v2893 = vrot.slane %v2892, 4
        %v2894 = vrot.slane %v1923, 7
        %v2895 = vsel %vm2879, %v2893, %v2894
        %v2896 = vrot.slane %v1924, 7
        %v2897 = vrot.slane %v2896, 4
        %v2898 = vrot.slane %v1925, 7
        %v2899 = vsel %vm2879, %v2897, %v2898
        %v2900 = vrot.slane %v1926, 7
        %v2901 = vrot.slane %v2900, 4
        %v2902 = vrot.slane %v1927, 7
        %v2903 = vsel %vm2879, %v2901, %v2902
        %v2904 = vrot.slane %v1928, 7
        %v2905 = vrot.slane %v2904, 4
        %v2906 = vrot.slane %v1929, 7
        %v2907 = vsel %vm2879, %v2905, %v2906
        %v2908 = vrot.slane %v1930, 7
        %v2909 = vrot.slane %v2908, 4
        %v2910 = vrot.slane %v1931, 7
        %v2911 = vsel %vm2879, %v2909, %v2910
        %s2912 = scalar_lea.vmem [#allocation14], 24
        %v2913 = vld [vmem:[%s2912] sm:$0xf]
        %v2914 = vunpack.c.l.b16 %v2883
        %v2915 = vunpack.c.l.b16 %v2887
        %v2916 = vunpack.c.l.b16 %v2891
        %v2917 = vunpack.c.l.b16 %v2895
        %v2918 = vunpack.c.l.b16 %v2899
        %v2919 = vunpack.c.l.b16 %v2903
        %v2920 = vunpack.c.l.b16 %v2907
        %v2921 = vunpack.c.l.b16 %v2911
        %v2922 = vpack.c.b16 %v2915, %v2914
        %v2923 = vpack.c.b16 %v2917, %v2916
        %v2924 = vpack.c.b16 %v2919, %v2918
        %v2925 = vpack.c.b16 %v2921, %v2920
        %v2927 = vsel %vm990, %v2922, 0
        %v2930 = vsel %vm990, %v2923, 0
        %v2933 = vsel %vm990, %v2924, 0
        %v2936 = vsel %vm990, %v2925, 0
        %v2939 = vsel %vm1003, %v2913, 0
        %2941 = vmatprep.subr.bf16.mxu0 0
        %2942 = vmatpush1.bf16.msra.mxu0 %v2939
        %2943 = vmatprep.subr.bf16.mxu0 0
        %2944 = vmatpush1.bf16.msra.mxu0 0
        %2945 = vmatprep.subr.bf16.mxu0 0
        %2946 = vmatpush1.bf16.msra.mxu0 0
        %2947 = vmatprep.subr.bf16.mxu0 0
        %2948 = vmatpush1.bf16.msra.mxu0 0
        %2949 = vmatprep.subr.bf16.mxu0 0
        %2950 = vmatpush1.bf16.msra.mxu0 0
        %2951 = vmatprep.subr.bf16.mxu0 0
        %2952 = vmatpush1.bf16.msra.mxu0 0
        %2953 = vmatprep.subr.bf16.mxu0 0
        %2954 = vmatpush1.bf16.msra.mxu0 0
        %2955 = vmatprep.subr.bf16.mxu0 0
        %2956 = vmatpush1.bf16.msra.mxu0 0
        %2957 = vmatprep.subr.bf16.mxu0 0
        %2958 = vmatpush1.bf16.msra.mxu0 0
        %2959 = vmatprep.subr.bf16.mxu0 0
        %2960 = vmatpush1.bf16.msra.mxu0 0
        %2961 = vmatprep.subr.bf16.mxu0 0
        %2962 = vmatpush1.bf16.msra.mxu0 0
        %2963 = vmatprep.subr.bf16.mxu0 0
        %2964 = vmatpush1.bf16.msra.mxu0 0
        %2965 = vmatprep.subr.bf16.mxu0 0
        %2966 = vmatpush1.bf16.msra.mxu0 0
        %2967 = vmatprep.subr.bf16.mxu0 0
        %2968 = vmatpush1.bf16.msra.mxu0 0
        %2969 = vmatprep.subr.bf16.mxu0 0
        %2970 = vmatpush1.bf16.msra.mxu0 0
        %2971 = vmatprep.subr.bf16.mxu0 0
        %2972 = vmatpush1.bf16.msra.mxu0 0
        %2973 = vmatprep.mubr.bf16.mxu0 0
        %2974 = vmatmul.mubr.bf16.gmra.mrb[0].mxu0 %v2927
        %v2975 = vpop.f32.mrb[0].mxu0
        %v2976 = vadd.f32 0.0, %v2975
        %v2977 = vpop.f32.mrb[0].mxu0
        %v2978 = vpop.f32.mrb[0].mxu0
        %v2979 = vadd.f32 0.0, %v2978
        %v2980 = vpop.f32.mrb[0].mxu0
        %2981 = vmatprep.mubr.bf16.mxu0 0
        %2982 = vmatmul.mubr.bf16.gmra.mrb[0].mxu0 %v2930
        %v2983 = vpop.f32.mrb[0].mxu0
        %v2984 = vadd.f32 0.0, %v2983
        %v2985 = vpop.f32.mrb[0].mxu0
        %v2986 = vpop.f32.mrb[0].mxu0
        %v2987 = vadd.f32 0.0, %v2986
        %v2988 = vpop.f32.mrb[0].mxu0
        %2989 = vmatprep.mubr.bf16.mxu0 0
        %2990 = vmatmul.mubr.bf16.gmra.mrb[0].mxu0 %v2933
        %v2991 = vpop.f32.mrb[0].mxu0
        %v2992 = vadd.f32 0.0, %v2991
        %v2993 = vpop.f32.mrb[0].mxu0
        %v2994 = vpop.f32.mrb[0].mxu0
        %v2995 = vadd.f32 0.0, %v2994
        %v2996 = vpop.f32.mrb[0].mxu0
        %2997 = vmatprep.mubr.bf16.mxu0 0
        %2998 = vmatmul.mubr.bf16.gmra.mrb[0].mxu0 %v2936
        %v2999 = vpop.f32.mrb[0].mxu0
        %v3000 = vadd.f32 0.0, %v2999
        %v3001 = vpop.f32.mrb[0].mxu0
        %v3002 = vpop.f32.mrb[0].mxu0
        %v3003 = vadd.f32 0.0, %v3002
        %v3004 = vpop.f32.mrb[0].mxu0
        %3005 = vdwg.mxu0
        %v3006 = vadd.f32 %v2869, %v2976
        %v3007 = vadd.f32 %v2870, %v2979
        %v3008 = vadd.f32 %v2871, %v2984
        %v3009 = vadd.f32 %v2872, %v2987
        %v3010 = vadd.f32 %v2873, %v2992
        %v3011 = vadd.f32 %v2874, %v2995
        %v3012 = vadd.f32 %v2875, %v3000
        %v3013 = vadd.f32 %v2876, %v3003
        %v3014 = vld [vmem:[#allocation16] sm:$0x1]
        %v3016 = vlaneseq
        %v3017 = vshrl.u32 %v3016, 7
        %v3018 = vsub.s32 0, %v3017
        %v3019 = vrot.slane %v3014, %v3018
        %v3021 = vadd.f32 %v3006, %v3019
        %v3022 = vadd.f32 %v3007, %v3019
        %v3023 = vadd.f32 %v3008, %v3019
        %v3024 = vadd.f32 %v3009, %v3019
        %v3025 = vadd.f32 %v3010, %v3019
        %v3026 = vadd.f32 %v3011, %v3019
        %v3027 = vadd.f32 %v3012, %v3019
        %v3028 = vadd.f32 %v3013, %v3019
        %v3029 = vmax.f32 %v3021, 0.0
        %v3030 = vmax.f32 %v3022, 0.0
        %v3031 = vmax.f32 %v3023, 0.0
        %v3032 = vmax.f32 %v3024, 0.0
        %v3033 = vmax.f32 %v3025, 0.0
        %v3034 = vmax.f32 %v3026, 0.0
        %v3035 = vmax.f32 %v3027, 0.0
        %v3036 = vmax.f32 %v3028, 0.0
        %v3037 = vpack.c.bf16 %v3029, %v3029
        %v3038 = vpack.c.bf16 %v3030, %v3030
        %v3039 = vpack.c.bf16 %v3031, %v3031
        %v3040 = vpack.c.bf16 %v3032, %v3032
        %v3041 = vpack.c.bf16 %v3033, %v3033
        %v3042 = vpack.c.bf16 %v3034, %v3034
        %v3043 = vpack.c.bf16 %v3035, %v3035
        %v3044 = vpack.c.bf16 %v3036, %v3036
        %s3045 = scalar_lea.vmem [#allocation3], 12
        %3046 = vst.msk [vmem:[%s3045] sm:$0xf] %vm886, %v3037
        %3047 = vst.msk [vmem:[%s3045 + $0x4] sm:$0xf] %vm886, %v3038
        %3048 = vst.msk [vmem:[%s3045 + $0x8] sm:$0xf] %vm886, %v3039
        %3049 = vst.msk [vmem:[%s3045 + $0xc] sm:$0xf] %vm886, %v3040
        %3050 = vst.msk [vmem:[%s3045 + $0x10] sm:$0xf] %vm886, %v3041
        %3051 = vst.msk [vmem:[%s3045 + $0x14] sm:$0xf] %vm886, %v3042
        %3052 = vst.msk [vmem:[%s3045 + $0x18] sm:$0xf] %vm886, %v3043
        %3053 = vst.msk [vmem:[%s3045 + $0x1c] sm:$0xf] %vm886, %v3044
        %v3054 = vld [vmem:[#allocation3] sm:$0xf]
        %v3055 = vld [vmem:[#allocation3 + $0x4] sm:$0xf]
        %v3056 = vld [vmem:[#allocation3 + $0x8] sm:$0xf]
        %v3057 = vld [vmem:[#allocation3 + $0xc] sm:$0xf]
        %v3058 = vld [vmem:[#allocation3 + $0x10] sm:$0xf]
        %v3059 = vld [vmem:[#allocation3 + $0x14] sm:$0xf]
        %v3060 = vld [vmem:[#allocation3 + $0x18] sm:$0xf]
        %v3061 = vld [vmem:[#allocation3 + $0x1c] sm:$0xf]
        %v3062 = vld [vmem:[#allocation3 + $0x20] sm:$0xf]
        %v3063 = vld [vmem:[#allocation3 + $0x24] sm:$0xf]
        %v3064 = vld [vmem:[#allocation3 + $0x28] sm:$0xf]
        %v3065 = vld [vmem:[#allocation3 + $0x2c] sm:$0xf]
        %v3066 = vld [vmem:[#allocation3 + $0x30] sm:$0xf]
        %v3067 = vld [vmem:[#allocation3 + $0x34] sm:$0xf]
        %v3068 = vld [vmem:[#allocation17] sm:$0xff]
        %s3069 = scalar_lea.vmem [#allocation17], 8
        %v3070 = vld [vmem:[%s3069] sm:$0xff]
        %v3079 = vunpack.c.l.b16 %v3055
        %v3080 = vunpack.c.l.b16 %v3056
        %v3081 = vunpack.c.l.b16 %v3057
        %v3082 = vunpack.c.l.b16 %v3058
        %v3083 = vunpack.c.l.b16 %v3059
        %v3084 = vunpack.c.l.b16 %v3060
        %v3085 = vunpack.c.l.b16 %v3061
        %v3086 = vunpack.c.l.b16 %v3062
        %v3087 = vpack.c.b16 %v3080, %v3079
        %v3088 = vpack.c.b16 %v3082, %v3081
        %v3089 = vpack.c.b16 %v3084, %v3083
        %v3090 = vpack.c.b16 %v3086, %v3085
        %v3092 = vunpack.c.l.b16 %v3070
        %v3093 = vunpack.c.h.b16 %v3070
        %v3094 = vpack.c.b16 %v3092, %v3092
        %v3095 = vpack.c.b16 %v3093, %v3093
        %v3097 = vsel %vm990, %v3087, 0
        %v3100 = vsel %vm990, %v3088, 0
        %v3103 = vsel %vm990, %v3089, 0
        %v3106 = vsel %vm990, %v3090, 0
        %v3109 = vsel %vm1003, %v3094, 0
        %v3112 = vsel %vm1003, %v3095, 0
        %3114 = vmatprep.subr.bf16.mxu0 %v3112
        %3115 = vmatpush1.bf16.msra.mxu0 %v3109
        %3116 = vmatprep.subr.bf16.mxu0 0
        %3117 = vmatpush1.bf16.msra.mxu0 0
        %3118 = vmatprep.subr.bf16.mxu0 0
        %3119 = vmatpush1.bf16.msra.mxu0 0
        %3120 = vmatprep.subr.bf16.mxu0 0
        %3121 = vmatpush1.bf16.msra.mxu0 0
        %3122 = vmatprep.subr.bf16.mxu0 0
        %3123 = vmatpush1.bf16.msra.mxu0 0
        %3124 = vmatprep.subr.bf16.mxu0 0
        %3125 = vmatpush1.bf16.msra.mxu0 0
        %3126 = vmatprep.subr.bf16.mxu0 0
        %3127 = vmatpush1.bf16.msra.mxu0 0
        %3128 = vmatprep.subr.bf16.mxu0 0
        %3129 = vmatpush1.bf16.msra.mxu0 0
        %3130 = vmatprep.subr.bf16.mxu0 0
        %3131 = vmatpush1.bf16.msra.mxu0 0
        %3132 = vmatprep.subr.bf16.mxu0 0
        %3133 = vmatpush1.bf16.msra.mxu0 0
        %3134 = vmatprep.subr.bf16.mxu0 0
        %3135 = vmatpush1.bf16.msra.mxu0 0
        %3136 = vmatprep.subr.bf16.mxu0 0
        %3137 = vmatpush1.bf16.msra.mxu0 0
        %3138 = vmatprep.subr.bf16.mxu0 0
        %3139 = vmatpush1.bf16.msra.mxu0 0
        %3140 = vmatprep.subr.bf16.mxu0 0
        %3141 = vmatpush1.bf16.msra.mxu0 0
        %3142 = vmatprep.subr.bf16.mxu0 0
        %3143 = vmatpush1.bf16.msra.mxu0 0
        %3144 = vmatprep.subr.bf16.mxu0 0
        %3145 = vmatpush1.bf16.msra.mxu0 0
        %3146 = vmatprep.mubr.bf16.mxu0 0
        %3147 = vmatmul.mubr.bf16.gmra.mrb[0].mxu0 %v3097
        %v3148 = vpop.f32.mrb[0].mxu0
        %v3149 = vadd.f32 0.0, %v3148
        %v3150 = vpop.f32.mrb[0].mxu0
        %v3151 = vadd.f32 0.0, %v3150
        %v3152 = vpop.f32.mrb[0].mxu0
        %v3153 = vadd.f32 0.0, %v3152
        %v3154 = vpop.f32.mrb[0].mxu0
        %v3155 = vadd.f32 0.0, %v3154
        %3156 = vmatprep.mubr.bf16.mxu0 0
        %3157 = vmatmul.mubr.bf16.gmra.mrb[0].mxu0 %v3100
        %v3158 = vpop.f32.mrb[0].mxu0
        %v3159 = vadd.f32 0.0, %v3158
        %v3160 = vpop.f32.mrb[0].mxu0
        %v3161 = vadd.f32 0.0, %v3160
        %v3162 = vpop.f32.mrb[0].mxu0
        %v3163 = vadd.f32 0.0, %v3162
        %v3164 = vpop.f32.mrb[0].mxu0
        %v3165 = vadd.f32 0.0, %v3164
        %3166 = vmatprep.mubr.bf16.mxu0 0
        %3167 = vmatmul.mubr.bf16.gmra.mrb[0].mxu0 %v3103
        %v3168 = vpop.f32.mrb[0].mxu0
        %v3169 = vadd.f32 0.0, %v3168
        %v3170 = vpop.f32.mrb[0].mxu0
        %v3171 = vadd.f32 0.0, %v3170
        %v3172 = vpop.f32.mrb[0].mxu0
        %v3173 = vadd.f32 0.0, %v3172
        %v3174 = vpop.f32.mrb[0].mxu0
        %v3175 = vadd.f32 0.0, %v3174
        %3176 = vmatprep.mubr.bf16.mxu0 0
        %3177 = vmatmul.mubr.bf16.gmra.mrb[0].mxu0 %v3106
        %v3178 = vpop.f32.mrb[0].mxu0
        %v3179 = vadd.f32 0.0, %v3178
        %v3180 = vpop.f32.mrb[0].mxu0
        %v3181 = vadd.f32 0.0, %v3180
        %v3182 = vpop.f32.mrb[0].mxu0
        %v3183 = vadd.f32 0.0, %v3182
        %v3184 = vpop.f32.mrb[0].mxu0
        %v3185 = vadd.f32 0.0, %v3184
        %3186 = vdwg.mxu0
        %v3188 = vunpack.c.l.b16 %v3054
        %v3189 = vpack.c.b16 %v3079, %v3188
        %v3190 = vpack.c.b16 %v3081, %v3080
        %v3191 = vpack.c.b16 %v3083, %v3082
        %v3192 = vpack.c.b16 %v3085, %v3084
        %v3194 = vunpack.c.l.b16 %v3068
        %v3195 = vunpack.c.h.b16 %v3068
        %v3196 = vpack.c.b16 %v3194, %v3194
        %v3197 = vpack.c.b16 %v3195, %v3195
        %v3199 = vsel %vm990, %v3189, 0
        %v3202 = vsel %vm990, %v3190, 0
        %v3205 = vsel %vm990, %v3191, 0
        %v3208 = vsel %vm990, %v3192, 0
        %v3211 = vsel %vm1003, %v3196, 0
        %v3214 = vsel %vm1003, %v3197, 0
        %3216 = vmatprep.subr.bf16.mxu0 %v3214
        %3217 = vmatpush1.bf16.msra.mxu0 %v3211
        %3218 = vmatprep.subr.bf16.mxu0 0
        %3219 = vmatpush1.bf16.msra.mxu0 0
        %3220 = vmatprep.subr.bf16.mxu0 0
        %3221 = vmatpush1.bf16.msra.mxu0 0
        %3222 = vmatprep.subr.bf16.mxu0 0
        %3223 = vmatpush1.bf16.msra.mxu0 0
        %3224 = vmatprep.subr.bf16.mxu0 0
        %3225 = vmatpush1.bf16.msra.mxu0 0
        %3226 = vmatprep.subr.bf16.mxu0 0
        %3227 = vmatpush1.bf16.msra.mxu0 0
        %3228 = vmatprep.subr.bf16.mxu0 0
        %3229 = vmatpush1.bf16.msra.mxu0 0
        %3230 = vmatprep.subr.bf16.mxu0 0
        %3231 = vmatpush1.bf16.msra.mxu0 0
        %3232 = vmatprep.subr.bf16.mxu0 0
        %3233 = vmatpush1.bf16.msra.mxu0 0
        %3234 = vmatprep.subr.bf16.mxu0 0
        %3235 = vmatpush1.bf16.msra.mxu0 0
        %3236 = vmatprep.subr.bf16.mxu0 0
        %3237 = vmatpush1.bf16.msra.mxu0 0
        %3238 = vmatprep.subr.bf16.mxu0 0
        %3239 = vmatpush1.bf16.msra.mxu0 0
        %3240 = vmatprep.subr.bf16.mxu0 0
        %3241 = vmatpush1.bf16.msra.mxu0 0
        %3242 = vmatprep.subr.bf16.mxu0 0
        %3243 = vmatpush1.bf16.msra.mxu0 0
        %3244 = vmatprep.subr.bf16.mxu0 0
        %3245 = vmatpush1.bf16.msra.mxu0 0
        %3246 = vmatprep.subr.bf16.mxu0 0
        %3247 = vmatpush1.bf16.msra.mxu0 0
        %3248 = vmatprep.mubr.bf16.mxu0 0
        %3249 = vmatmul.mubr.bf16.gmra.mrb[0].mxu0 %v3199
        %v3250 = vpop.f32.mrb[0].mxu0
        %v3251 = vadd.f32 %v3149, %v3250
        %v3252 = vpop.f32.mrb[0].mxu0
        %v3253 = vadd.f32 %v3151, %v3252
        %v3254 = vpop.f32.mrb[0].mxu0
        %v3255 = vadd.f32 %v3153, %v3254
        %v3256 = vpop.f32.mrb[0].mxu0
        %v3257 = vadd.f32 %v3155, %v3256
        %3258 = vmatprep.mubr.bf16.mxu0 0
        %3259 = vmatmul.mubr.bf16.gmra.mrb[0].mxu0 %v3202
        %v3260 = vpop.f32.mrb[0].mxu0
        %v3261 = vadd.f32 %v3159, %v3260
        %v3262 = vpop.f32.mrb[0].mxu0
        %v3263 = vadd.f32 %v3161, %v3262
        %v3264 = vpop.f32.mrb[0].mxu0
        %v3265 = vadd.f32 %v3163, %v3264
        %v3266 = vpop.f32.mrb[0].mxu0
        %v3267 = vadd.f32 %v3165, %v3266
        %3268 = vmatprep.mubr.bf16.mxu0 0
        %3269 = vmatmul.mubr.bf16.gmra.mrb[0].mxu0 %v3205
        %v3270 = vpop.f32.mrb[0].mxu0
        %v3271 = vadd.f32 %v3169, %v3270
        %v3272 = vpop.f32.mrb[0].mxu0
        %v3273 = vadd.f32 %v3171, %v3272
        %v3274 = vpop.f32.mrb[0].mxu0
        %v3275 = vadd.f32 %v3173, %v3274
        %v3276 = vpop.f32.mrb[0].mxu0
        %v3277 = vadd.f32 %v3175, %v3276
        %3278 = vmatprep.mubr.bf16.mxu0 0
        %3279 = vmatmul.mubr.bf16.gmra.mrb[0].mxu0 %v3208
        %v3280 = vpop.f32.mrb[0].mxu0
        %v3281 = vadd.f32 %v3179, %v3280
        %v3282 = vpop.f32.mrb[0].mxu0
        %v3283 = vadd.f32 %v3181, %v3282
        %v3284 = vpop.f32.mrb[0].mxu0
        %v3285 = vadd.f32 %v3183, %v3284
        %v3286 = vpop.f32.mrb[0].mxu0
        %v3287 = vadd.f32 %v3185, %v3286
        %3288 = vdwg.mxu0
        %s3289 = scalar_lea.vmem [#allocation17], 16
        %v3290 = vld [vmem:[%s3289] sm:$0xff]
        %v3292 = vunpack.c.l.b16 %v3063
        %v3293 = vpack.c.b16 %v3292, %v3086
        %v3295 = vunpack.c.l.b16 %v3290
        %v3296 = vunpack.c.h.b16 %v3290
        %v3297 = vpack.c.b16 %v3295, %v3295
        %v3298 = vpack.c.b16 %v3296, %v3296
        %v3300 = vsel %vm990, %v3293, 0
        %v3303 = vsel %vm1003, %v3297, 0
        %v3306 = vsel %vm1003, %v3298, 0
        %3308 = vmatprep.subr.bf16.mxu0 %v3306
        %3309 = vmatpush1.bf16.msra.mxu0 %v3303
        %3310 = vmatprep.subr.bf16.mxu0 0
        %3311 = vmatpush1.bf16.msra.mxu0 0
        %3312 = vmatprep.subr.bf16.mxu0 0
        %3313 = vmatpush1.bf16.msra.mxu0 0
        %3314 = vmatprep.subr.bf16.mxu0 0
        %3315 = vmatpush1.bf16.msra.mxu0 0
        %3316 = vmatprep.subr.bf16.mxu0 0
        %3317 = vmatpush1.bf16.msra.mxu0 0
        %3318 = vmatprep.subr.bf16.mxu0 0
        %3319 = vmatpush1.bf16.msra.mxu0 0
        %3320 = vmatprep.subr.bf16.mxu0 0
        %3321 = vmatpush1.bf16.msra.mxu0 0
        %3322 = vmatprep.subr.bf16.mxu0 0
        %3323 = vmatpush1.bf16.msra.mxu0 0
        %3324 = vmatprep.subr.bf16.mxu0 0
        %3325 = vmatpush1.bf16.msra.mxu0 0
        %3326 = vmatprep.subr.bf16.mxu0 0
        %3327 = vmatpush1.bf16.msra.mxu0 0
        %3328 = vmatprep.subr.bf16.mxu0 0
        %3329 = vmatpush1.bf16.msra.mxu0 0
        %3330 = vmatprep.subr.bf16.mxu0 0
        %3331 = vmatpush1.bf16.msra.mxu0 0
        %3332 = vmatprep.subr.bf16.mxu0 0
        %3333 = vmatpush1.bf16.msra.mxu0 0
        %3334 = vmatprep.subr.bf16.mxu0 0
        %3335 = vmatpush1.bf16.msra.mxu0 0
        %3336 = vmatprep.subr.bf16.mxu0 0
        %3337 = vmatpush1.bf16.msra.mxu0 0
        %3338 = vmatprep.subr.bf16.mxu0 0
        %3339 = vmatpush1.bf16.msra.mxu0 0
        %3340 = vmatprep.mubr.bf16.mxu0 0
        %3341 = vmatmul.mubr.bf16.gmra.mrb[0].mxu0 %v3202
        %v3342 = vpop.f32.mrb[0].mxu0
        %v3343 = vadd.f32 0.0, %v3342
        %v3344 = vpop.f32.mrb[0].mxu0
        %v3345 = vadd.f32 0.0, %v3344
        %v3346 = vpop.f32.mrb[0].mxu0
        %v3347 = vadd.f32 0.0, %v3346
        %v3348 = vpop.f32.mrb[0].mxu0
        %v3349 = vadd.f32 0.0, %v3348
        %3350 = vmatprep.mubr.bf16.mxu0 0
        %3351 = vmatmul.mubr.bf16.gmra.mrb[0].mxu0 %v3205
        %v3352 = vpop.f32.mrb[0].mxu0
        %v3353 = vadd.f32 0.0, %v3352
        %v3354 = vpop.f32.mrb[0].mxu0
        %v3355 = vadd.f32 0.0, %v3354
        %v3356 = vpop.f32.mrb[0].mxu0
        %v3357 = vadd.f32 0.0, %v3356
        %v3358 = vpop.f32.mrb[0].mxu0
        %v3359 = vadd.f32 0.0, %v3358
        %3360 = vmatprep.mubr.bf16.mxu0 0
        %3361 = vmatmul.mubr.bf16.gmra.mrb[0].mxu0 %v3208
        %v3362 = vpop.f32.mrb[0].mxu0
        %v3363 = vadd.f32 0.0, %v3362
        %v3364 = vpop.f32.mrb[0].mxu0
        %v3365 = vadd.f32 0.0, %v3364
        %v3366 = vpop.f32.mrb[0].mxu0
        %v3367 = vadd.f32 0.0, %v3366
        %v3368 = vpop.f32.mrb[0].mxu0
        %v3369 = vadd.f32 0.0, %v3368
        %3370 = vmatprep.mubr.bf16.mxu0 0
        %3371 = vmatmul.mubr.bf16.gmra.mrb[0].mxu0 %v3300
        %v3372 = vpop.f32.mrb[0].mxu0
        %v3373 = vadd.f32 0.0, %v3372
        %v3374 = vpop.f32.mrb[0].mxu0
        %v3375 = vadd.f32 0.0, %v3374
        %v3376 = vpop.f32.mrb[0].mxu0
        %v3377 = vadd.f32 0.0, %v3376
        %v3378 = vpop.f32.mrb[0].mxu0
        %v3379 = vadd.f32 0.0, %v3378
        %3380 = vdwg.mxu0
        %v3381 = vadd.f32 %v3251, %v3343
        %v3382 = vadd.f32 %v3253, %v3345
        %v3383 = vadd.f32 %v3255, %v3347
        %v3384 = vadd.f32 %v3257, %v3349
        %v3385 = vadd.f32 %v3261, %v3353
        %v3386 = vadd.f32 %v3263, %v3355
        %v3387 = vadd.f32 %v3265, %v3357
        %v3388 = vadd.f32 %v3267, %v3359
        %v3389 = vadd.f32 %v3271, %v3363
        %v3390 = vadd.f32 %v3273, %v3365
        %v3391 = vadd.f32 %v3275, %v3367
        %v3392 = vadd.f32 %v3277, %v3369
        %v3393 = vadd.f32 %v3281, %v3373
        %v3394 = vadd.f32 %v3283, %v3375
        %v3395 = vadd.f32 %v3285, %v3377
        %v3396 = vadd.f32 %v3287, %v3379
        %s3397 = scalar_lea.vmem [#allocation17], 24
        %v3398 = vld [vmem:[%s3397] sm:$0xff]
        %v3400 = vunpack.c.l.b16 %v3064
        %v3401 = vpack.c.b16 %v3400, %v3292
        %v3403 = vunpack.c.l.b16 %v3398
        %v3404 = vunpack.c.h.b16 %v3398
        %v3405 = vpack.c.b16 %v3403, %v3403
        %v3406 = vpack.c.b16 %v3404, %v3404
        %v3408 = vsel %vm990, %v3401, 0
        %v3411 = vsel %vm1003, %v3405, 0
        %v3414 = vsel %vm1003, %v3406, 0
        %3416 = vmatprep.subr.bf16.mxu0 %v3414
        %3417 = vmatpush1.bf16.msra.mxu0 %v3411
        %3418 = vmatprep.subr.bf16.mxu0 0
        %3419 = vmatpush1.bf16.msra.mxu0 0
        %3420 = vmatprep.subr.bf16.mxu0 0
        %3421 = vmatpush1.bf16.msra.mxu0 0
        %3422 = vmatprep.subr.bf16.mxu0 0
        %3423 = vmatpush1.bf16.msra.mxu0 0
        %3424 = vmatprep.subr.bf16.mxu0 0
        %3425 = vmatpush1.bf16.msra.mxu0 0
        %3426 = vmatprep.subr.bf16.mxu0 0
        %3427 = vmatpush1.bf16.msra.mxu0 0
        %3428 = vmatprep.subr.bf16.mxu0 0
        %3429 = vmatpush1.bf16.msra.mxu0 0
        %3430 = vmatprep.subr.bf16.mxu0 0
        %3431 = vmatpush1.bf16.msra.mxu0 0
        %3432 = vmatprep.subr.bf16.mxu0 0
        %3433 = vmatpush1.bf16.msra.mxu0 0
        %3434 = vmatprep.subr.bf16.mxu0 0
        %3435 = vmatpush1.bf16.msra.mxu0 0
        %3436 = vmatprep.subr.bf16.mxu0 0
        %3437 = vmatpush1.bf16.msra.mxu0 0
        %3438 = vmatprep.subr.bf16.mxu0 0
        %3439 = vmatpush1.bf16.msra.mxu0 0
        %3440 = vmatprep.subr.bf16.mxu0 0
        %3441 = vmatpush1.bf16.msra.mxu0 0
        %3442 = vmatprep.subr.bf16.mxu0 0
        %3443 = vmatpush1.bf16.msra.mxu0 0
        %3444 = vmatprep.subr.bf16.mxu0 0
        %3445 = vmatpush1.bf16.msra.mxu0 0
        %3446 = vmatprep.subr.bf16.mxu0 0
        %3447 = vmatpush1.bf16.msra.mxu0 0
        %3448 = vmatprep.mubr.bf16.mxu0 0
        %3449 = vmatmul.mubr.bf16.gmra.mrb[0].mxu0 %v3100
        %v3450 = vpop.f32.mrb[0].mxu0
        %v3451 = vadd.f32 0.0, %v3450
        %v3452 = vpop.f32.mrb[0].mxu0
        %v3453 = vadd.f32 0.0, %v3452
        %v3454 = vpop.f32.mrb[0].mxu0
        %v3455 = vadd.f32 0.0, %v3454
        %v3456 = vpop.f32.mrb[0].mxu0
        %v3457 = vadd.f32 0.0, %v3456
        %3458 = vmatprep.mubr.bf16.mxu0 0
        %3459 = vmatmul.mubr.bf16.gmra.mrb[0].mxu0 %v3103
        %v3460 = vpop.f32.mrb[0].mxu0
        %v3461 = vadd.f32 0.0, %v3460
        %v3462 = vpop.f32.mrb[0].mxu0
        %v3463 = vadd.f32 0.0, %v3462
        %v3464 = vpop.f32.mrb[0].mxu0
        %v3465 = vadd.f32 0.0, %v3464
        %v3466 = vpop.f32.mrb[0].mxu0
        %v3467 = vadd.f32 0.0, %v3466
        %3468 = vmatprep.mubr.bf16.mxu0 0
        %3469 = vmatmul.mubr.bf16.gmra.mrb[0].mxu0 %v3106
        %v3470 = vpop.f32.mrb[0].mxu0
        %v3471 = vadd.f32 0.0, %v3470
        %v3472 = vpop.f32.mrb[0].mxu0
        %v3473 = vadd.f32 0.0, %v3472
        %v3474 = vpop.f32.mrb[0].mxu0
        %v3475 = vadd.f32 0.0, %v3474
        %v3476 = vpop.f32.mrb[0].mxu0
        %v3477 = vadd.f32 0.0, %v3476
        %3478 = vmatprep.mubr.bf16.mxu0 0
        %3479 = vmatmul.mubr.bf16.gmra.mrb[0].mxu0 %v3408
        %v3480 = vpop.f32.mrb[0].mxu0
        %v3481 = vadd.f32 0.0, %v3480
        %v3482 = vpop.f32.mrb[0].mxu0
        %v3483 = vadd.f32 0.0, %v3482
        %v3484 = vpop.f32.mrb[0].mxu0
        %v3485 = vadd.f32 0.0, %v3484
        %v3486 = vpop.f32.mrb[0].mxu0
        %v3487 = vadd.f32 0.0, %v3486
        %3488 = vdwg.mxu0
        %v3489 = vadd.f32 %v3381, %v3451
        %v3490 = vadd.f32 %v3382, %v3453
        %v3491 = vadd.f32 %v3383, %v3455
        %v3492 = vadd.f32 %v3384, %v3457
        %v3493 = vadd.f32 %v3385, %v3461
        %v3494 = vadd.f32 %v3386, %v3463
        %v3495 = vadd.f32 %v3387, %v3465
        %v3496 = vadd.f32 %v3388, %v3467
        %v3497 = vadd.f32 %v3389, %v3471
        %v3498 = vadd.f32 %v3390, %v3473
        %v3499 = vadd.f32 %v3391, %v3475
        %v3500 = vadd.f32 %v3392, %v3477
        %v3501 = vadd.f32 %v3393, %v3481
        %v3502 = vadd.f32 %v3394, %v3483
        %v3503 = vadd.f32 %v3395, %v3485
        %v3504 = vadd.f32 %v3396, %v3487
        %s3505 = scalar_lea.vmem [#allocation17], 32
        %v3506 = vld [vmem:[%s3505] sm:$0xff]
        %v3508 = vunpack.c.l.b16 %v3065
        %v3509 = vpack.c.b16 %v3508, %v3400
        %v3511 = vunpack.c.l.b16 %v3506
        %v3512 = vunpack.c.h.b16 %v3506
        %v3513 = vpack.c.b16 %v3511, %v3511
        %v3514 = vpack.c.b16 %v3512, %v3512
        %v3516 = vsel %vm990, %v3509, 0
        %v3519 = vsel %vm1003, %v3513, 0
        %v3522 = vsel %vm1003, %v3514, 0
        %3524 = vmatprep.subr.bf16.mxu0 %v3522
        %3525 = vmatpush1.bf16.msra.mxu0 %v3519
        %3526 = vmatprep.subr.bf16.mxu0 0
        %3527 = vmatpush1.bf16.msra.mxu0 0
        %3528 = vmatprep.subr.bf16.mxu0 0
        %3529 = vmatpush1.bf16.msra.mxu0 0
        %3530 = vmatprep.subr.bf16.mxu0 0
        %3531 = vmatpush1.bf16.msra.mxu0 0
        %3532 = vmatprep.subr.bf16.mxu0 0
        %3533 = vmatpush1.bf16.msra.mxu0 0
        %3534 = vmatprep.subr.bf16.mxu0 0
        %3535 = vmatpush1.bf16.msra.mxu0 0
        %3536 = vmatprep.subr.bf16.mxu0 0
        %3537 = vmatpush1.bf16.msra.mxu0 0
        %3538 = vmatprep.subr.bf16.mxu0 0
        %3539 = vmatpush1.bf16.msra.mxu0 0
        %3540 = vmatprep.subr.bf16.mxu0 0
        %3541 = vmatpush1.bf16.msra.mxu0 0
        %3542 = vmatprep.subr.bf16.mxu0 0
        %3543 = vmatpush1.bf16.msra.mxu0 0
        %3544 = vmatprep.subr.bf16.mxu0 0
        %3545 = vmatpush1.bf16.msra.mxu0 0
        %3546 = vmatprep.subr.bf16.mxu0 0
        %3547 = vmatpush1.bf16.msra.mxu0 0
        %3548 = vmatprep.subr.bf16.mxu0 0
        %3549 = vmatpush1.bf16.msra.mxu0 0
        %3550 = vmatprep.subr.bf16.mxu0 0
        %3551 = vmatpush1.bf16.msra.mxu0 0
        %3552 = vmatprep.subr.bf16.mxu0 0
        %3553 = vmatpush1.bf16.msra.mxu0 0
        %3554 = vmatprep.subr.bf16.mxu0 0
        %3555 = vmatpush1.bf16.msra.mxu0 0
        %3556 = vmatprep.mubr.bf16.mxu0 0
        %3557 = vmatmul.mubr.bf16.gmra.mrb[0].mxu0 %v3205
        %v3558 = vpop.f32.mrb[0].mxu0
        %v3559 = vadd.f32 0.0, %v3558
        %v3560 = vpop.f32.mrb[0].mxu0
        %v3561 = vadd.f32 0.0, %v3560
        %v3562 = vpop.f32.mrb[0].mxu0
        %v3563 = vadd.f32 0.0, %v3562
        %v3564 = vpop.f32.mrb[0].mxu0
        %v3565 = vadd.f32 0.0, %v3564
        %3566 = vmatprep.mubr.bf16.mxu0 0
        %3567 = vmatmul.mubr.bf16.gmra.mrb[0].mxu0 %v3208
        %v3568 = vpop.f32.mrb[0].mxu0
        %v3569 = vadd.f32 0.0, %v3568
        %v3570 = vpop.f32.mrb[0].mxu0
        %v3571 = vadd.f32 0.0, %v3570
        %v3572 = vpop.f32.mrb[0].mxu0
        %v3573 = vadd.f32 0.0, %v3572
        %v3574 = vpop.f32.mrb[0].mxu0
        %v3575 = vadd.f32 0.0, %v3574
        %3576 = vmatprep.mubr.bf16.mxu0 0
        %3577 = vmatmul.mubr.bf16.gmra.mrb[0].mxu0 %v3300
        %v3578 = vpop.f32.mrb[0].mxu0
        %v3579 = vadd.f32 0.0, %v3578
        %v3580 = vpop.f32.mrb[0].mxu0
        %v3581 = vadd.f32 0.0, %v3580
        %v3582 = vpop.f32.mrb[0].mxu0
        %v3583 = vadd.f32 0.0, %v3582
        %v3584 = vpop.f32.mrb[0].mxu0
        %v3585 = vadd.f32 0.0, %v3584
        %3586 = vmatprep.mubr.bf16.mxu0 0
        %3587 = vmatmul.mubr.bf16.gmra.mrb[0].mxu0 %v3516
        %v3588 = vpop.f32.mrb[0].mxu0
        %v3589 = vadd.f32 0.0, %v3588
        %v3590 = vpop.f32.mrb[0].mxu0
        %v3591 = vadd.f32 0.0, %v3590
        %v3592 = vpop.f32.mrb[0].mxu0
        %v3593 = vadd.f32 0.0, %v3592
        %v3594 = vpop.f32.mrb[0].mxu0
        %v3595 = vadd.f32 0.0, %v3594
        %3596 = vdwg.mxu0
        %v3597 = vadd.f32 %v3489, %v3559
        %v3598 = vadd.f32 %v3490, %v3561
        %v3599 = vadd.f32 %v3491, %v3563
        %v3600 = vadd.f32 %v3492, %v3565
        %v3601 = vadd.f32 %v3493, %v3569
        %v3602 = vadd.f32 %v3494, %v3571
        %v3603 = vadd.f32 %v3495, %v3573
        %v3604 = vadd.f32 %v3496, %v3575
        %v3605 = vadd.f32 %v3497, %v3579
        %v3606 = vadd.f32 %v3498, %v3581
        %v3607 = vadd.f32 %v3499, %v3583
        %v3608 = vadd.f32 %v3500, %v3585
        %v3609 = vadd.f32 %v3501, %v3589
        %v3610 = vadd.f32 %v3502, %v3591
        %v3611 = vadd.f32 %v3503, %v3593
        %v3612 = vadd.f32 %v3504, %v3595
        %s3613 = scalar_lea.vmem [#allocation17], 40
        %v3614 = vld [vmem:[%s3613] sm:$0xff]
        %v3616 = vunpack.c.l.b16 %v3066
        %v3617 = vpack.c.b16 %v3616, %v3508
        %v3619 = vunpack.c.l.b16 %v3614
        %v3620 = vunpack.c.h.b16 %v3614
        %v3621 = vpack.c.b16 %v3619, %v3619
        %v3622 = vpack.c.b16 %v3620, %v3620
        %v3624 = vsel %vm990, %v3617, 0
        %v3627 = vsel %vm1003, %v3621, 0
        %v3630 = vsel %vm1003, %v3622, 0
        %3632 = vmatprep.subr.bf16.mxu0 %v3630
        %3633 = vmatpush1.bf16.msra.mxu0 %v3627
        %3634 = vmatprep.subr.bf16.mxu0 0
        %3635 = vmatpush1.bf16.msra.mxu0 0
        %3636 = vmatprep.subr.bf16.mxu0 0
        %3637 = vmatpush1.bf16.msra.mxu0 0
        %3638 = vmatprep.subr.bf16.mxu0 0
        %3639 = vmatpush1.bf16.msra.mxu0 0
        %3640 = vmatprep.subr.bf16.mxu0 0
        %3641 = vmatpush1.bf16.msra.mxu0 0
        %3642 = vmatprep.subr.bf16.mxu0 0
        %3643 = vmatpush1.bf16.msra.mxu0 0
        %3644 = vmatprep.subr.bf16.mxu0 0
        %3645 = vmatpush1.bf16.msra.mxu0 0
        %3646 = vmatprep.subr.bf16.mxu0 0
        %3647 = vmatpush1.bf16.msra.mxu0 0
        %3648 = vmatprep.subr.bf16.mxu0 0
        %3649 = vmatpush1.bf16.msra.mxu0 0
        %3650 = vmatprep.subr.bf16.mxu0 0
        %3651 = vmatpush1.bf16.msra.mxu0 0
        %3652 = vmatprep.subr.bf16.mxu0 0
        %3653 = vmatpush1.bf16.msra.mxu0 0
        %3654 = vmatprep.subr.bf16.mxu0 0
        %3655 = vmatpush1.bf16.msra.mxu0 0
        %3656 = vmatprep.subr.bf16.mxu0 0
        %3657 = vmatpush1.bf16.msra.mxu0 0
        %3658 = vmatprep.subr.bf16.mxu0 0
        %3659 = vmatpush1.bf16.msra.mxu0 0
        %3660 = vmatprep.subr.bf16.mxu0 0
        %3661 = vmatpush1.bf16.msra.mxu0 0
        %3662 = vmatprep.subr.bf16.mxu0 0
        %3663 = vmatpush1.bf16.msra.mxu0 0
        %3664 = vmatprep.mubr.bf16.mxu0 0
        %3665 = vmatmul.mubr.bf16.gmra.mrb[0].mxu0 %v3103
        %v3666 = vpop.f32.mrb[0].mxu0
        %v3667 = vadd.f32 0.0, %v3666
        %v3668 = vpop.f32.mrb[0].mxu0
        %v3669 = vadd.f32 0.0, %v3668
        %v3670 = vpop.f32.mrb[0].mxu0
        %v3671 = vadd.f32 0.0, %v3670
        %v3672 = vpop.f32.mrb[0].mxu0
        %v3673 = vadd.f32 0.0, %v3672
        %3674 = vmatprep.mubr.bf16.mxu0 0
        %3675 = vmatmul.mubr.bf16.gmra.mrb[0].mxu0 %v3106
        %v3676 = vpop.f32.mrb[0].mxu0
        %v3677 = vadd.f32 0.0, %v3676
        %v3678 = vpop.f32.mrb[0].mxu0
        %v3679 = vadd.f32 0.0, %v3678
        %v3680 = vpop.f32.mrb[0].mxu0
        %v3681 = vadd.f32 0.0, %v3680
        %v3682 = vpop.f32.mrb[0].mxu0
        %v3683 = vadd.f32 0.0, %v3682
        %3684 = vmatprep.mubr.bf16.mxu0 0
        %3685 = vmatmul.mubr.bf16.gmra.mrb[0].mxu0 %v3408
        %v3686 = vpop.f32.mrb[0].mxu0
        %v3687 = vadd.f32 0.0, %v3686
        %v3688 = vpop.f32.mrb[0].mxu0
        %v3689 = vadd.f32 0.0, %v3688
        %v3690 = vpop.f32.mrb[0].mxu0
        %v3691 = vadd.f32 0.0, %v3690
        %v3692 = vpop.f32.mrb[0].mxu0
        %v3693 = vadd.f32 0.0, %v3692
        %3694 = vmatprep.mubr.bf16.mxu0 0
        %3695 = vmatmul.mubr.bf16.gmra.mrb[0].mxu0 %v3624
        %v3696 = vpop.f32.mrb[0].mxu0
        %v3697 = vadd.f32 0.0, %v3696
        %v3698 = vpop.f32.mrb[0].mxu0
        %v3699 = vadd.f32 0.0, %v3698
        %v3700 = vpop.f32.mrb[0].mxu0
        %v3701 = vadd.f32 0.0, %v3700
        %v3702 = vpop.f32.mrb[0].mxu0
        %v3703 = vadd.f32 0.0, %v3702
        %3704 = vdwg.mxu0
        %v3705 = vadd.f32 %v3597, %v3667
        %v3706 = vadd.f32 %v3598, %v3669
        %v3707 = vadd.f32 %v3599, %v3671
        %v3708 = vadd.f32 %v3600, %v3673
        %v3709 = vadd.f32 %v3601, %v3677
        %v3710 = vadd.f32 %v3602, %v3679
        %v3711 = vadd.f32 %v3603, %v3681
        %v3712 = vadd.f32 %v3604, %v3683
        %v3713 = vadd.f32 %v3605, %v3687
        %v3714 = vadd.f32 %v3606, %v3689
        %v3715 = vadd.f32 %v3607, %v3691
        %v3716 = vadd.f32 %v3608, %v3693
        %v3717 = vadd.f32 %v3609, %v3697
        %v3718 = vadd.f32 %v3610, %v3699
        %v3719 = vadd.f32 %v3611, %v3701
        %v3720 = vadd.f32 %v3612, %v3703
        %s3721 = scalar_lea.vmem [#allocation17], 48
        %v3722 = vld [vmem:[%s3721] sm:$0xff]
        %v3724 = vunpack.c.l.b16 %v3067
        %v3725 = vpack.c.b16 %v3724, %v3616
        %v3727 = vunpack.c.l.b16 %v3722
        %v3728 = vunpack.c.h.b16 %v3722
        %v3729 = vpack.c.b16 %v3727, %v3727
        %v3730 = vpack.c.b16 %v3728, %v3728
        %v3732 = vsel %vm990, %v3725, 0
        %v3735 = vsel %vm1003, %v3729, 0
        %v3738 = vsel %vm1003, %v3730, 0
        %3740 = vmatprep.subr.bf16.mxu0 %v3738
        %3741 = vmatpush1.bf16.msra.mxu0 %v3735
        %3742 = vmatprep.subr.bf16.mxu0 0
        %3743 = vmatpush1.bf16.msra.mxu0 0
        %3744 = vmatprep.subr.bf16.mxu0 0
        %3745 = vmatpush1.bf16.msra.mxu0 0
        %3746 = vmatprep.subr.bf16.mxu0 0
        %3747 = vmatpush1.bf16.msra.mxu0 0
        %3748 = vmatprep.subr.bf16.mxu0 0
        %3749 = vmatpush1.bf16.msra.mxu0 0
        %3750 = vmatprep.subr.bf16.mxu0 0
        %3751 = vmatpush1.bf16.msra.mxu0 0
        %3752 = vmatprep.subr.bf16.mxu0 0
        %3753 = vmatpush1.bf16.msra.mxu0 0
        %3754 = vmatprep.subr.bf16.mxu0 0
        %3755 = vmatpush1.bf16.msra.mxu0 0
        %3756 = vmatprep.subr.bf16.mxu0 0
        %3757 = vmatpush1.bf16.msra.mxu0 0
        %3758 = vmatprep.subr.bf16.mxu0 0
        %3759 = vmatpush1.bf16.msra.mxu0 0
        %3760 = vmatprep.subr.bf16.mxu0 0
        %3761 = vmatpush1.bf16.msra.mxu0 0
        %3762 = vmatprep.subr.bf16.mxu0 0
        %3763 = vmatpush1.bf16.msra.mxu0 0
        %3764 = vmatprep.subr.bf16.mxu0 0
        %3765 = vmatpush1.bf16.msra.mxu0 0
        %3766 = vmatprep.subr.bf16.mxu0 0
        %3767 = vmatpush1.bf16.msra.mxu0 0
        %3768 = vmatprep.subr.bf16.mxu0 0
        %3769 = vmatpush1.bf16.msra.mxu0 0
        %3770 = vmatprep.subr.bf16.mxu0 0
        %3771 = vmatpush1.bf16.msra.mxu0 0
        %3772 = vmatprep.mubr.bf16.mxu0 0
        %3773 = vmatmul.mubr.bf16.gmra.mrb[0].mxu0 %v3208
        %v3774 = vpop.f32.mrb[0].mxu0
        %v3775 = vadd.f32 0.0, %v3774
        %v3776 = vpop.f32.mrb[0].mxu0
        %v3777 = vadd.f32 0.0, %v3776
        %v3778 = vpop.f32.mrb[0].mxu0
        %v3779 = vadd.f32 0.0, %v3778
        %v3780 = vpop.f32.mrb[0].mxu0
        %v3781 = vadd.f32 0.0, %v3780
        %3782 = vmatprep.mubr.bf16.mxu0 0
        %3783 = vmatmul.mubr.bf16.gmra.mrb[0].mxu0 %v3300
        %v3784 = vpop.f32.mrb[0].mxu0
        %v3785 = vadd.f32 0.0, %v3784
        %v3786 = vpop.f32.mrb[0].mxu0
        %v3787 = vadd.f32 0.0, %v3786
        %v3788 = vpop.f32.mrb[0].mxu0
        %v3789 = vadd.f32 0.0, %v3788
        %v3790 = vpop.f32.mrb[0].mxu0
        %v3791 = vadd.f32 0.0, %v3790
        %3792 = vmatprep.mubr.bf16.mxu0 0
        %3793 = vmatmul.mubr.bf16.gmra.mrb[0].mxu0 %v3516
        %v3794 = vpop.f32.mrb[0].mxu0
        %v3795 = vadd.f32 0.0, %v3794
        %v3796 = vpop.f32.mrb[0].mxu0
        %v3797 = vadd.f32 0.0, %v3796
        %v3798 = vpop.f32.mrb[0].mxu0
        %v3799 = vadd.f32 0.0, %v3798
        %v3800 = vpop.f32.mrb[0].mxu0
        %v3801 = vadd.f32 0.0, %v3800
        %3802 = vmatprep.mubr.bf16.mxu0 0
        %3803 = vmatmul.mubr.bf16.gmra.mrb[0].mxu0 %v3732
        %v3804 = vpop.f32.mrb[0].mxu0
        %v3805 = vadd.f32 0.0, %v3804
        %v3806 = vpop.f32.mrb[0].mxu0
        %v3807 = vadd.f32 0.0, %v3806
        %v3808 = vpop.f32.mrb[0].mxu0
        %v3809 = vadd.f32 0.0, %v3808
        %v3810 = vpop.f32.mrb[0].mxu0
        %v3811 = vadd.f32 0.0, %v3810
        %3812 = vdwg.mxu0
        %v3813 = vadd.f32 %v3705, %v3775
        %v3814 = vadd.f32 %v3706, %v3777
        %v3815 = vadd.f32 %v3707, %v3779
        %v3816 = vadd.f32 %v3708, %v3781
        %v3817 = vadd.f32 %v3709, %v3785
        %v3818 = vadd.f32 %v3710, %v3787
        %v3819 = vadd.f32 %v3711, %v3789
        %v3820 = vadd.f32 %v3712, %v3791
        %v3821 = vadd.f32 %v3713, %v3795
        %v3822 = vadd.f32 %v3714, %v3797
        %v3823 = vadd.f32 %v3715, %v3799
        %v3824 = vadd.f32 %v3716, %v3801
        %v3825 = vadd.f32 %v3717, %v3805
        %v3826 = vadd.f32 %v3718, %v3807
        %v3827 = vadd.f32 %v3719, %v3809
        %v3828 = vadd.f32 %v3720, %v3811
        %v3829 = vld [vmem:[#allocation19] sm:$0x3]
        %v3831 = vlaneseq
        %v3832 = vshrl.u32 %v3831, 7
        %v3833 = vsub.s32 0, %v3832
        %v3834 = vrot.slane %v3829, %v3833
        %v3835 = vlaneseq
        %v3836 = vshrl.u32 %v3835, 7
        %v3837 = vsub.s32 1, %v3836
        %v3838 = vrot.slane %v3829, %v3837
        %v3841 = vadd.f32 %v3813, %v3834
        %v3842 = vadd.f32 %v3814, %v3838
        %v3843 = vadd.f32 %v3815, %v3834
        %v3844 = vadd.f32 %v3816, %v3838
        %v3845 = vadd.f32 %v3817, %v3834
        %v3846 = vadd.f32 %v3818, %v3838
        %v3847 = vadd.f32 %v3819, %v3834
        %v3848 = vadd.f32 %v3820, %v3838
        %v3849 = vadd.f32 %v3821, %v3834
        %v3850 = vadd.f32 %v3822, %v3838
        %v3851 = vadd.f32 %v3823, %v3834
        %v3852 = vadd.f32 %v3824, %v3838
        %v3853 = vadd.f32 %v3825, %v3834
        %v3854 = vadd.f32 %v3826, %v3838
        %v3855 = vadd.f32 %v3827, %v3834
        %v3856 = vadd.f32 %v3828, %v3838
        %v3857 = vmax.f32 %v3841, 0.0
        %v3858 = vmax.f32 %v3842, 0.0
        %v3859 = vmax.f32 %v3843, 0.0
        %v3860 = vmax.f32 %v3844, 0.0
        %v3861 = vmax.f32 %v3845, 0.0
        %v3862 = vmax.f32 %v3846, 0.0
        %v3863 = vmax.f32 %v3847, 0.0
        %v3864 = vmax.f32 %v3848, 0.0
        %v3865 = vmax.f32 %v3849, 0.0
        %v3866 = vmax.f32 %v3850, 0.0
        %v3867 = vmax.f32 %v3851, 0.0
        %v3868 = vmax.f32 %v3852, 0.0
        %v3869 = vmax.f32 %v3853, 0.0
        %v3870 = vmax.f32 %v3854, 0.0
        %v3871 = vmax.f32 %v3855, 0.0
        %v3872 = vmax.f32 %v3856, 0.0
        %s3873 = scalar_lea.vmem %s884, 128 [#allocation32]
        %3874 = vst [vmem:[%s3873] sm:$0xff] %v3857
        %3875 = vst.msk [vmem:[%s3873 + $0x8] sm:$0xff] %vm919, %v3858
        %3876 = vst [vmem:[%s3873 + $0x10] sm:$0xff] %v3859
        %3877 = vst.msk [vmem:[%s3873 + $0x18] sm:$0xff] %vm919, %v3860
        %3878 = vst [vmem:[%s3873 + $0x20] sm:$0xff] %v3861
        %3879 = vst.msk [vmem:[%s3873 + $0x28] sm:$0xff] %vm919, %v3862
        %3880 = vst [vmem:[%s3873 + $0x30] sm:$0xff] %v3863
        %3881 = vst.msk [vmem:[%s3873 + $0x38] sm:$0xff] %vm919, %v3864
        %3882 = vst [vmem:[%s3873 + $0x40] sm:$0xff] %v3865
        %3883 = vst.msk [vmem:[%s3873 + $0x48] sm:$0xff] %vm919, %v3866
        %3884 = vst [vmem:[%s3873 + $0x50] sm:$0xff] %v3867
        %3885 = vst.msk [vmem:[%s3873 + $0x58] sm:$0xff] %vm919, %v3868
        %3886 = vst [vmem:[%s3873 + $0x60] sm:$0xff] %v3869
        %3887 = vst.msk [vmem:[%s3873 + $0x68] sm:$0xff] %vm919, %v3870
        %3888 = vst [vmem:[%s3873 + $0x70] sm:$0xff] %v3871
        %3889 = vst.msk [vmem:[%s3873 + $0x78] sm:$0xff] %vm919, %v3872
        %v3890 = vld [vmem:[#allocation20] sm:$0xf]
        %v3891 = vld [vmem:[#allocation22] sm:$0x1]
        %v3893 = vlaneseq
        %v3894 = vshrl.u32 %v3893, 7
        %v3895 = vsub.s32 0, %v3894
        %v3896 = vrot.slane %v3891, %v3895
        %v3899 = vsel %vm1003, %v3890, 0
        %3901 = vmatprep.subr.bf16.mxu0 0
        %3902 = vmatpush1.bf16.msra.mxu0 %v3899
        %3903 = vmatprep.subr.bf16.mxu0 0
        %3904 = vmatpush1.bf16.msra.mxu0 0
        %3905 = vmatprep.subr.bf16.mxu0 0
        %3906 = vmatpush1.bf16.msra.mxu0 0
        %3907 = vmatprep.subr.bf16.mxu0 0
        %3908 = vmatpush1.bf16.msra.mxu0 0
        %3909 = vmatprep.subr.bf16.mxu0 0
        %3910 = vmatpush1.bf16.msra.mxu0 0
        %3911 = vmatprep.subr.bf16.mxu0 0
        %3912 = vmatpush1.bf16.msra.mxu0 0
        %3913 = vmatprep.subr.bf16.mxu0 0
        %3914 = vmatpush1.bf16.msra.mxu0 0
        %3915 = vmatprep.subr.bf16.mxu0 0
        %3916 = vmatpush1.bf16.msra.mxu0 0
        %3917 = vmatprep.subr.bf16.mxu0 0
        %3918 = vmatpush1.bf16.msra.mxu0 0
        %3919 = vmatprep.subr.bf16.mxu0 0
        %3920 = vmatpush1.bf16.msra.mxu0 0
        %3921 = vmatprep.subr.bf16.mxu0 0
        %3922 = vmatpush1.bf16.msra.mxu0 0
        %3923 = vmatprep.subr.bf16.mxu0 0
        %3924 = vmatpush1.bf16.msra.mxu0 0
        %3925 = vmatprep.subr.bf16.mxu0 0
        %3926 = vmatpush1.bf16.msra.mxu0 0
        %3927 = vmatprep.subr.bf16.mxu0 0
        %3928 = vmatpush1.bf16.msra.mxu0 0
        %3929 = vmatprep.subr.bf16.mxu0 0
        %3930 = vmatpush1.bf16.msra.mxu0 0
        %3931 = vmatprep.subr.bf16.mxu0 0
        %3932 = vmatpush1.bf16.msra.mxu0 0
        %3933 = vmatprep.mubr.bf16.mxu0 0
        %3934 = vmatmul.mubr.bf16.gmra.mrb[0].mxu0 %v992
        %v3935 = vpop.f32.mrb[0].mxu0
        %v3936 = vadd.f32 %v3896, %v3935
        %v3937 = vpop.f32.mrb[0].mxu0
        %v3938 = vpop.f32.mrb[0].mxu0
        %v3939 = vadd.f32 %v3896, %v3938
        %v3940 = vpop.f32.mrb[0].mxu0
        %3941 = vmatprep.mubr.bf16.mxu0 0
        %3942 = vmatmul.mubr.bf16.gmra.mrb[0].mxu0 %v995
        %v3943 = vpop.f32.mrb[0].mxu0
        %v3944 = vadd.f32 %v3896, %v3943
        %v3945 = vpop.f32.mrb[0].mxu0
        %v3946 = vpop.f32.mrb[0].mxu0
        %v3947 = vadd.f32 %v3896, %v3946
        %v3948 = vpop.f32.mrb[0].mxu0
        %3949 = vmatprep.mubr.bf16.mxu0 0
        %3950 = vmatmul.mubr.bf16.gmra.mrb[0].mxu0 %v998
        %v3951 = vpop.f32.mrb[0].mxu0
        %v3952 = vadd.f32 %v3896, %v3951
        %v3953 = vpop.f32.mrb[0].mxu0
        %v3954 = vpop.f32.mrb[0].mxu0
        %v3955 = vadd.f32 %v3896, %v3954
        %v3956 = vpop.f32.mrb[0].mxu0
        %3957 = vmatprep.mubr.bf16.mxu0 0
        %3958 = vmatmul.mubr.bf16.gmra.mrb[0].mxu0 %v1001
        %v3959 = vpop.f32.mrb[0].mxu0
        %v3960 = vadd.f32 %v3896, %v3959
        %v3961 = vpop.f32.mrb[0].mxu0
        %v3962 = vpop.f32.mrb[0].mxu0
        %v3963 = vadd.f32 %v3896, %v3962
        %v3964 = vpop.f32.mrb[0].mxu0
        %3965 = vdwg.mxu0
        %v3966 = vmax.f32 %v3936, 0.0
        %v3967 = vmax.f32 %v3939, 0.0
        %v3968 = vmax.f32 %v3944, 0.0
        %v3969 = vmax.f32 %v3947, 0.0
        %v3970 = vmax.f32 %v3952, 0.0
        %v3971 = vmax.f32 %v3955, 0.0
        %v3972 = vmax.f32 %v3960, 0.0
        %v3973 = vmax.f32 %v3963, 0.0
        %v3974 = vpack.c.bf16 %v3966, %v3966
        %v3975 = vpack.c.bf16 %v3967, %v3967
        %v3976 = vpack.c.bf16 %v3968, %v3968
        %v3977 = vpack.c.bf16 %v3969, %v3969
        %v3978 = vpack.c.bf16 %v3970, %v3970
        %v3979 = vpack.c.bf16 %v3971, %v3971
        %v3980 = vpack.c.bf16 %v3972, %v3972
        %v3981 = vpack.c.bf16 %v3973, %v3973
        %3982 = vst.msk [vmem:[%s3045] sm:$0xf] %vm886, %v3974
        %3983 = vst.msk [vmem:[%s3045 + $0x4] sm:$0xf] %vm886, %v3975
        %3984 = vst.msk [vmem:[%s3045 + $0x8] sm:$0xf] %vm886, %v3976
        %3985 = vst.msk [vmem:[%s3045 + $0xc] sm:$0xf] %vm886, %v3977
        %3986 = vst.msk [vmem:[%s3045 + $0x10] sm:$0xf] %vm886, %v3978
        %3987 = vst.msk [vmem:[%s3045 + $0x14] sm:$0xf] %vm886, %v3979
        %3988 = vst.msk [vmem:[%s3045 + $0x18] sm:$0xf] %vm886, %v3980
        %3989 = vst.msk [vmem:[%s3045 + $0x1c] sm:$0xf] %vm886, %v3981
        %v3990 = vld [vmem:[#allocation3] sm:$0xf]
        %v3991 = vld [vmem:[#allocation3 + $0x4] sm:$0xf]
        %v3992 = vld [vmem:[#allocation3 + $0x8] sm:$0xf]
        %v3993 = vld [vmem:[#allocation3 + $0xc] sm:$0xf]
        %v3994 = vld [vmem:[#allocation3 + $0x10] sm:$0xf]
        %v3995 = vld [vmem:[#allocation3 + $0x14] sm:$0xf]
        %v3996 = vld [vmem:[#allocation3 + $0x18] sm:$0xf]
        %v3997 = vld [vmem:[#allocation3 + $0x1c] sm:$0xf]
        %v3998 = vld [vmem:[#allocation3 + $0x20] sm:$0xf]
        %v3999 = vld [vmem:[#allocation3 + $0x24] sm:$0xf]
        %v4000 = vld [vmem:[#allocation3 + $0x28] sm:$0xf]
        %v4001 = vld [vmem:[#allocation3 + $0x2c] sm:$0xf]
        %v4002 = vld [vmem:[#allocation3 + $0x30] sm:$0xf]
        %v4003 = vld [vmem:[#allocation3 + $0x34] sm:$0xf]
        %v4004 = vld [vmem:[#allocation23] sm:$0xf]
        %s4005 = scalar_lea.vmem [#allocation23], 4
        %v4006 = vld [vmem:[%s4005] sm:$0xf]
        %v4015 = vunpack.c.l.b16 %v3991
        %v4016 = vunpack.c.l.b16 %v3992
        %v4017 = vunpack.c.l.b16 %v3993
        %v4018 = vunpack.c.l.b16 %v3994
        %v4019 = vunpack.c.l.b16 %v3995
        %v4020 = vunpack.c.l.b16 %v3996
        %v4021 = vunpack.c.l.b16 %v3997
        %v4022 = vunpack.c.l.b16 %v3998
        %v4023 = vpack.c.b16 %v4016, %v4015
        %v4024 = vpack.c.b16 %v4018, %v4017
        %v4025 = vpack.c.b16 %v4020, %v4019
        %v4026 = vpack.c.b16 %v4022, %v4021
        %v4028 = vsel %vm990, %v4023, 0
        %v4031 = vsel %vm990, %v4024, 0
        %v4034 = vsel %vm990, %v4025, 0
        %v4037 = vsel %vm990, %v4026, 0
        %v4040 = vsel %vm1003, %v4006, 0
        %4042 = vmatprep.subr.bf16.mxu0 0
        %4043 = vmatpush1.bf16.msra.mxu0 %v4040
        %4044 = vmatprep.subr.bf16.mxu0 0
        %4045 = vmatpush1.bf16.msra.mxu0 0
        %4046 = vmatprep.subr.bf16.mxu0 0
        %4047 = vmatpush1.bf16.msra.mxu0 0
        %4048 = vmatprep.subr.bf16.mxu0 0
        %4049 = vmatpush1.bf16.msra.mxu0 0
        %4050 = vmatprep.subr.bf16.mxu0 0
        %4051 = vmatpush1.bf16.msra.mxu0 0
        %4052 = vmatprep.subr.bf16.mxu0 0
        %4053 = vmatpush1.bf16.msra.mxu0 0
        %4054 = vmatprep.subr.bf16.mxu0 0
        %4055 = vmatpush1.bf16.msra.mxu0 0
        %4056 = vmatprep.subr.bf16.mxu0 0
        %4057 = vmatpush1.bf16.msra.mxu0 0
        %4058 = vmatprep.subr.bf16.mxu0 0
        %4059 = vmatpush1.bf16.msra.mxu0 0
        %4060 = vmatprep.subr.bf16.mxu0 0
        %4061 = vmatpush1.bf16.msra.mxu0 0
        %4062 = vmatprep.subr.bf16.mxu0 0
        %4063 = vmatpush1.bf16.msra.mxu0 0
        %4064 = vmatprep.subr.bf16.mxu0 0
        %4065 = vmatpush1.bf16.msra.mxu0 0
        %4066 = vmatprep.subr.bf16.mxu0 0
        %4067 = vmatpush1.bf16.msra.mxu0 0
        %4068 = vmatprep.subr.bf16.mxu0 0
        %4069 = vmatpush1.bf16.msra.mxu0 0
        %4070 = vmatprep.subr.bf16.mxu0 0
        %4071 = vmatpush1.bf16.msra.mxu0 0
        %4072 = vmatprep.subr.bf16.mxu0 0
        %4073 = vmatpush1.bf16.msra.mxu0 0
        %4074 = vmatprep.mubr.bf16.mxu0 0
        %4075 = vmatmul.mubr.bf16.gmra.mrb[0].mxu0 %v4028
        %v4076 = vpop.f32.mrb[0].mxu0
        %v4077 = vadd.f32 0.0, %v4076
        %v4078 = vpop.f32.mrb[0].mxu0
        %v4079 = vpop.f32.mrb[0].mxu0
        %v4080 = vadd.f32 0.0, %v4079
        %v4081 = vpop.f32.mrb[0].mxu0
        %4082 = vmatprep.mubr.bf16.mxu0 0
        %4083 = vmatmul.mubr.bf16.gmra.mrb[0].mxu0 %v4031
        %v4084 = vpop.f32.mrb[0].mxu0
        %v4085 = vadd.f32 0.0, %v4084
        %v4086 = vpop.f32.mrb[0].mxu0
        %v4087 = vpop.f32.mrb[0].mxu0
        %v4088 = vadd.f32 0.0, %v4087
        %v4089 = vpop.f32.mrb[0].mxu0
        %4090 = vmatprep.mubr.bf16.mxu0 0
        %4091 = vmatmul.mubr.bf16.gmra.mrb[0].mxu0 %v4034
        %v4092 = vpop.f32.mrb[0].mxu0
        %v4093 = vadd.f32 0.0, %v4092
        %v4094 = vpop.f32.mrb[0].mxu0
        %v4095 = vpop.f32.mrb[0].mxu0
        %v4096 = vadd.f32 0.0, %v4095
        %v4097 = vpop.f32.mrb[0].mxu0
        %4098 = vmatprep.mubr.bf16.mxu0 0
        %4099 = vmatmul.mubr.bf16.gmra.mrb[0].mxu0 %v4037
        %v4100 = vpop.f32.mrb[0].mxu0
        %v4101 = vadd.f32 0.0, %v4100
        %v4102 = vpop.f32.mrb[0].mxu0
        %v4103 = vpop.f32.mrb[0].mxu0
        %v4104 = vadd.f32 0.0, %v4103
        %v4105 = vpop.f32.mrb[0].mxu0
        %4106 = vdwg.mxu0
        %v4108 = vunpack.c.l.b16 %v3990
        %v4109 = vpack.c.b16 %v4015, %v4108
        %v4110 = vpack.c.b16 %v4017, %v4016
        %v4111 = vpack.c.b16 %v4019, %v4018
        %v4112 = vpack.c.b16 %v4021, %v4020
        %v4114 = vsel %vm990, %v4109, 0
        %v4117 = vsel %vm990, %v4110, 0
        %v4120 = vsel %vm990, %v4111, 0
        %v4123 = vsel %vm990, %v4112, 0
        %v4126 = vsel %vm1003, %v4004, 0
        %4128 = vmatprep.subr.bf16.mxu0 0
        %4129 = vmatpush1.bf16.msra.mxu0 %v4126
        %4130 = vmatprep.subr.bf16.mxu0 0
        %4131 = vmatpush1.bf16.msra.mxu0 0
        %4132 = vmatprep.subr.bf16.mxu0 0
        %4133 = vmatpush1.bf16.msra.mxu0 0
        %4134 = vmatprep.subr.bf16.mxu0 0
        %4135 = vmatpush1.bf16.msra.mxu0 0
        %4136 = vmatprep.subr.bf16.mxu0 0
        %4137 = vmatpush1.bf16.msra.mxu0 0
        %4138 = vmatprep.subr.bf16.mxu0 0
        %4139 = vmatpush1.bf16.msra.mxu0 0
        %4140 = vmatprep.subr.bf16.mxu0 0
        %4141 = vmatpush1.bf16.msra.mxu0 0
        %4142 = vmatprep.subr.bf16.mxu0 0
        %4143 = vmatpush1.bf16.msra.mxu0 0
        %4144 = vmatprep.subr.bf16.mxu0 0
        %4145 = vmatpush1.bf16.msra.mxu0 0
        %4146 = vmatprep.subr.bf16.mxu0 0
        %4147 = vmatpush1.bf16.msra.mxu0 0
        %4148 = vmatprep.subr.bf16.mxu0 0
        %4149 = vmatpush1.bf16.msra.mxu0 0
        %4150 = vmatprep.subr.bf16.mxu0 0
        %4151 = vmatpush1.bf16.msra.mxu0 0
        %4152 = vmatprep.subr.bf16.mxu0 0
        %4153 = vmatpush1.bf16.msra.mxu0 0
        %4154 = vmatprep.subr.bf16.mxu0 0
        %4155 = vmatpush1.bf16.msra.mxu0 0
        %4156 = vmatprep.subr.bf16.mxu0 0
        %4157 = vmatpush1.bf16.msra.mxu0 0
        %4158 = vmatprep.subr.bf16.mxu0 0
        %4159 = vmatpush1.bf16.msra.mxu0 0
        %4160 = vmatprep.mubr.bf16.mxu0 0
        %4161 = vmatmul.mubr.bf16.gmra.mrb[0].mxu0 %v4114
        %v4162 = vpop.f32.mrb[0].mxu0
        %v4163 = vadd.f32 %v4077, %v4162
        %v4164 = vpop.f32.mrb[0].mxu0
        %v4165 = vpop.f32.mrb[0].mxu0
        %v4166 = vadd.f32 %v4080, %v4165
        %v4167 = vpop.f32.mrb[0].mxu0
        %4168 = vmatprep.mubr.bf16.mxu0 0
        %4169 = vmatmul.mubr.bf16.gmra.mrb[0].mxu0 %v4117
        %v4170 = vpop.f32.mrb[0].mxu0
        %v4171 = vadd.f32 %v4085, %v4170
        %v4172 = vpop.f32.mrb[0].mxu0
        %v4173 = vpop.f32.mrb[0].mxu0
        %v4174 = vadd.f32 %v4088, %v4173
        %v4175 = vpop.f32.mrb[0].mxu0
        %4176 = vmatprep.mubr.bf16.mxu0 0
        %4177 = vmatmul.mubr.bf16.gmra.mrb[0].mxu0 %v4120
        %v4178 = vpop.f32.mrb[0].mxu0
        %v4179 = vadd.f32 %v4093, %v4178
        %v4180 = vpop.f32.mrb[0].mxu0
        %v4181 = vpop.f32.mrb[0].mxu0
        %v4182 = vadd.f32 %v4096, %v4181
        %v4183 = vpop.f32.mrb[0].mxu0
        %4184 = vmatprep.mubr.bf16.mxu0 0
        %4185 = vmatmul.mubr.bf16.gmra.mrb[0].mxu0 %v4123
        %v4186 = vpop.f32.mrb[0].mxu0
        %v4187 = vadd.f32 %v4101, %v4186
        %v4188 = vpop.f32.mrb[0].mxu0
        %v4189 = vpop.f32.mrb[0].mxu0
        %v4190 = vadd.f32 %v4104, %v4189
        %v4191 = vpop.f32.mrb[0].mxu0
        %4192 = vdwg.mxu0
        %s4193 = scalar_lea.vmem [#allocation23], 8
        %v4194 = vld [vmem:[%s4193] sm:$0xf]
        %v4196 = vunpack.c.l.b16 %v3999
        %v4197 = vpack.c.b16 %v4196, %v4022
        %v4199 = vsel %vm990, %v4197, 0
        %v4202 = vsel %vm1003, %v4194, 0
        %4204 = vmatprep.subr.bf16.mxu0 0
        %4205 = vmatpush1.bf16.msra.mxu0 %v4202
        %4206 = vmatprep.subr.bf16.mxu0 0
        %4207 = vmatpush1.bf16.msra.mxu0 0
        %4208 = vmatprep.subr.bf16.mxu0 0
        %4209 = vmatpush1.bf16.msra.mxu0 0
        %4210 = vmatprep.subr.bf16.mxu0 0
        %4211 = vmatpush1.bf16.msra.mxu0 0
        %4212 = vmatprep.subr.bf16.mxu0 0
        %4213 = vmatpush1.bf16.msra.mxu0 0
        %4214 = vmatprep.subr.bf16.mxu0 0
        %4215 = vmatpush1.bf16.msra.mxu0 0
        %4216 = vmatprep.subr.bf16.mxu0 0
        %4217 = vmatpush1.bf16.msra.mxu0 0
        %4218 = vmatprep.subr.bf16.mxu0 0
        %4219 = vmatpush1.bf16.msra.mxu0 0
        %4220 = vmatprep.subr.bf16.mxu0 0
        %4221 = vmatpush1.bf16.msra.mxu0 0
        %4222 = vmatprep.subr.bf16.mxu0 0
        %4223 = vmatpush1.bf16.msra.mxu0 0
        %4224 = vmatprep.subr.bf16.mxu0 0
        %4225 = vmatpush1.bf16.msra.mxu0 0
        %4226 = vmatprep.subr.bf16.mxu0 0
        %4227 = vmatpush1.bf16.msra.mxu0 0
        %4228 = vmatprep.subr.bf16.mxu0 0
        %4229 = vmatpush1.bf16.msra.mxu0 0
        %4230 = vmatprep.subr.bf16.mxu0 0
        %4231 = vmatpush1.bf16.msra.mxu0 0
        %4232 = vmatprep.subr.bf16.mxu0 0
        %4233 = vmatpush1.bf16.msra.mxu0 0
        %4234 = vmatprep.subr.bf16.mxu0 0
        %4235 = vmatpush1.bf16.msra.mxu0 0
        %4236 = vmatprep.mubr.bf16.mxu0 0
        %4237 = vmatmul.mubr.bf16.gmra.mrb[0].mxu0 %v4117
        %v4238 = vpop.f32.mrb[0].mxu0
        %v4239 = vadd.f32 0.0, %v4238
        %v4240 = vpop.f32.mrb[0].mxu0
        %v4241 = vpop.f32.mrb[0].mxu0
        %v4242 = vadd.f32 0.0, %v4241
        %v4243 = vpop.f32.mrb[0].mxu0
        %4244 = vmatprep.mubr.bf16.mxu0 0
        %4245 = vmatmul.mubr.bf16.gmra.mrb[0].mxu0 %v4120
        %v4246 = vpop.f32.mrb[0].mxu0
        %v4247 = vadd.f32 0.0, %v4246
        %v4248 = vpop.f32.mrb[0].mxu0
        %v4249 = vpop.f32.mrb[0].mxu0
        %v4250 = vadd.f32 0.0, %v4249
        %v4251 = vpop.f32.mrb[0].mxu0
        %4252 = vmatprep.mubr.bf16.mxu0 0
        %4253 = vmatmul.mubr.bf16.gmra.mrb[0].mxu0 %v4123
        %v4254 = vpop.f32.mrb[0].mxu0
        %v4255 = vadd.f32 0.0, %v4254
        %v4256 = vpop.f32.mrb[0].mxu0
        %v4257 = vpop.f32.mrb[0].mxu0
        %v4258 = vadd.f32 0.0, %v4257
        %v4259 = vpop.f32.mrb[0].mxu0
        %4260 = vmatprep.mubr.bf16.mxu0 0
        %4261 = vmatmul.mubr.bf16.gmra.mrb[0].mxu0 %v4199
        %v4262 = vpop.f32.mrb[0].mxu0
        %v4263 = vadd.f32 0.0, %v4262
        %v4264 = vpop.f32.mrb[0].mxu0
        %v4265 = vpop.f32.mrb[0].mxu0
        %v4266 = vadd.f32 0.0, %v4265
        %v4267 = vpop.f32.mrb[0].mxu0
        %4268 = vdwg.mxu0
        %v4269 = vadd.f32 %v4163, %v4239
        %v4270 = vadd.f32 %v4166, %v4242
        %v4271 = vadd.f32 %v4171, %v4247
        %v4272 = vadd.f32 %v4174, %v4250
        %v4273 = vadd.f32 %v4179, %v4255
        %v4274 = vadd.f32 %v4182, %v4258
        %v4275 = vadd.f32 %v4187, %v4263
        %v4276 = vadd.f32 %v4190, %v4266
        %s4277 = scalar_lea.vmem [#allocation23], 12
        %v4278 = vld [vmem:[%s4277] sm:$0xf]
        %v4280 = vunpack.c.l.b16 %v4000
        %v4281 = vpack.c.b16 %v4280, %v4196
        %v4283 = vsel %vm990, %v4281, 0
        %v4286 = vsel %vm1003, %v4278, 0
        %4288 = vmatprep.subr.bf16.mxu0 0
        %4289 = vmatpush1.bf16.msra.mxu0 %v4286
        %4290 = vmatprep.subr.bf16.mxu0 0
        %4291 = vmatpush1.bf16.msra.mxu0 0
        %4292 = vmatprep.subr.bf16.mxu0 0
        %4293 = vmatpush1.bf16.msra.mxu0 0
        %4294 = vmatprep.subr.bf16.mxu0 0
        %4295 = vmatpush1.bf16.msra.mxu0 0
        %4296 = vmatprep.subr.bf16.mxu0 0
        %4297 = vmatpush1.bf16.msra.mxu0 0
        %4298 = vmatprep.subr.bf16.mxu0 0
        %4299 = vmatpush1.bf16.msra.mxu0 0
        %4300 = vmatprep.subr.bf16.mxu0 0
        %4301 = vmatpush1.bf16.msra.mxu0 0
        %4302 = vmatprep.subr.bf16.mxu0 0
        %4303 = vmatpush1.bf16.msra.mxu0 0
        %4304 = vmatprep.subr.bf16.mxu0 0
        %4305 = vmatpush1.bf16.msra.mxu0 0
        %4306 = vmatprep.subr.bf16.mxu0 0
        %4307 = vmatpush1.bf16.msra.mxu0 0
        %4308 = vmatprep.subr.bf16.mxu0 0
        %4309 = vmatpush1.bf16.msra.mxu0 0
        %4310 = vmatprep.subr.bf16.mxu0 0
        %4311 = vmatpush1.bf16.msra.mxu0 0
        %4312 = vmatprep.subr.bf16.mxu0 0
        %4313 = vmatpush1.bf16.msra.mxu0 0
        %4314 = vmatprep.subr.bf16.mxu0 0
        %4315 = vmatpush1.bf16.msra.mxu0 0
        %4316 = vmatprep.subr.bf16.mxu0 0
        %4317 = vmatpush1.bf16.msra.mxu0 0
        %4318 = vmatprep.subr.bf16.mxu0 0
        %4319 = vmatpush1.bf16.msra.mxu0 0
        %4320 = vmatprep.mubr.bf16.mxu0 0
        %4321 = vmatmul.mubr.bf16.gmra.mrb[0].mxu0 %v4031
        %v4322 = vpop.f32.mrb[0].mxu0
        %v4323 = vadd.f32 0.0, %v4322
        %v4324 = vpop.f32.mrb[0].mxu0
        %v4325 = vpop.f32.mrb[0].mxu0
        %v4326 = vadd.f32 0.0, %v4325
        %v4327 = vpop.f32.mrb[0].mxu0
        %4328 = vmatprep.mubr.bf16.mxu0 0
        %4329 = vmatmul.mubr.bf16.gmra.mrb[0].mxu0 %v4034
        %v4330 = vpop.f32.mrb[0].mxu0
        %v4331 = vadd.f32 0.0, %v4330
        %v4332 = vpop.f32.mrb[0].mxu0
        %v4333 = vpop.f32.mrb[0].mxu0
        %v4334 = vadd.f32 0.0, %v4333
        %v4335 = vpop.f32.mrb[0].mxu0
        %4336 = vmatprep.mubr.bf16.mxu0 0
        %4337 = vmatmul.mubr.bf16.gmra.mrb[0].mxu0 %v4037
        %v4338 = vpop.f32.mrb[0].mxu0
        %v4339 = vadd.f32 0.0, %v4338
        %v4340 = vpop.f32.mrb[0].mxu0
        %v4341 = vpop.f32.mrb[0].mxu0
        %v4342 = vadd.f32 0.0, %v4341
        %v4343 = vpop.f32.mrb[0].mxu0
        %4344 = vmatprep.mubr.bf16.mxu0 0
        %4345 = vmatmul.mubr.bf16.gmra.mrb[0].mxu0 %v4283
        %v4346 = vpop.f32.mrb[0].mxu0
        %v4347 = vadd.f32 0.0, %v4346
        %v4348 = vpop.f32.mrb[0].mxu0
        %v4349 = vpop.f32.mrb[0].mxu0
        %v4350 = vadd.f32 0.0, %v4349
        %v4351 = vpop.f32.mrb[0].mxu0
        %4352 = vdwg.mxu0
        %v4353 = vadd.f32 %v4269, %v4323
        %v4354 = vadd.f32 %v4270, %v4326
        %v4355 = vadd.f32 %v4271, %v4331
        %v4356 = vadd.f32 %v4272, %v4334
        %v4357 = vadd.f32 %v4273, %v4339
        %v4358 = vadd.f32 %v4274, %v4342
        %v4359 = vadd.f32 %v4275, %v4347
        %v4360 = vadd.f32 %v4276, %v4350
        %s4361 = scalar_lea.vmem [#allocation23], 16
        %v4362 = vld [vmem:[%s4361] sm:$0xf]
        %v4364 = vunpack.c.l.b16 %v4001
        %v4365 = vpack.c.b16 %v4364, %v4280
        %v4367 = vsel %vm990, %v4365, 0
        %v4370 = vsel %vm1003, %v4362, 0
        %4372 = vmatprep.subr.bf16.mxu0 0
        %4373 = vmatpush1.bf16.msra.mxu0 %v4370
        %4374 = vmatprep.subr.bf16.mxu0 0
        %4375 = vmatpush1.bf16.msra.mxu0 0
        %4376 = vmatprep.subr.bf16.mxu0 0
        %4377 = vmatpush1.bf16.msra.mxu0 0
        %4378 = vmatprep.subr.bf16.mxu0 0
        %4379 = vmatpush1.bf16.msra.mxu0 0
        %4380 = vmatprep.subr.bf16.mxu0 0
        %4381 = vmatpush1.bf16.msra.mxu0 0
        %4382 = vmatprep.subr.bf16.mxu0 0
        %4383 = vmatpush1.bf16.msra.mxu0 0
        %4384 = vmatprep.subr.bf16.mxu0 0
        %4385 = vmatpush1.bf16.msra.mxu0 0
        %4386 = vmatprep.subr.bf16.mxu0 0
        %4387 = vmatpush1.bf16.msra.mxu0 0
        %4388 = vmatprep.subr.bf16.mxu0 0
        %4389 = vmatpush1.bf16.msra.mxu0 0
        %4390 = vmatprep.subr.bf16.mxu0 0
        %4391 = vmatpush1.bf16.msra.mxu0 0
        %4392 = vmatprep.subr.bf16.mxu0 0
        %4393 = vmatpush1.bf16.msra.mxu0 0
        %4394 = vmatprep.subr.bf16.mxu0 0
        %4395 = vmatpush1.bf16.msra.mxu0 0
        %4396 = vmatprep.subr.bf16.mxu0 0
        %4397 = vmatpush1.bf16.msra.mxu0 0
        %4398 = vmatprep.subr.bf16.mxu0 0
        %4399 = vmatpush1.bf16.msra.mxu0 0
        %4400 = vmatprep.subr.bf16.mxu0 0
        %4401 = vmatpush1.bf16.msra.mxu0 0
        %4402 = vmatprep.subr.bf16.mxu0 0
        %4403 = vmatpush1.bf16.msra.mxu0 0
        %4404 = vmatprep.mubr.bf16.mxu0 0
        %4405 = vmatmul.mubr.bf16.gmra.mrb[0].mxu0 %v4120
        %v4406 = vpop.f32.mrb[0].mxu0
        %v4407 = vadd.f32 0.0, %v4406
        %v4408 = vpop.f32.mrb[0].mxu0
        %v4409 = vpop.f32.mrb[0].mxu0
        %v4410 = vadd.f32 0.0, %v4409
        %v4411 = vpop.f32.mrb[0].mxu0
        %4412 = vmatprep.mubr.bf16.mxu0 0
        %4413 = vmatmul.mubr.bf16.gmra.mrb[0].mxu0 %v4123
        %v4414 = vpop.f32.mrb[0].mxu0
        %v4415 = vadd.f32 0.0, %v4414
        %v4416 = vpop.f32.mrb[0].mxu0
        %v4417 = vpop.f32.mrb[0].mxu0
        %v4418 = vadd.f32 0.0, %v4417
        %v4419 = vpop.f32.mrb[0].mxu0
        %4420 = vmatprep.mubr.bf16.mxu0 0
        %4421 = vmatmul.mubr.bf16.gmra.mrb[0].mxu0 %v4199
        %v4422 = vpop.f32.mrb[0].mxu0
        %v4423 = vadd.f32 0.0, %v4422
        %v4424 = vpop.f32.mrb[0].mxu0
        %v4425 = vpop.f32.mrb[0].mxu0
        %v4426 = vadd.f32 0.0, %v4425
        %v4427 = vpop.f32.mrb[0].mxu0
        %4428 = vmatprep.mubr.bf16.mxu0 0
        %4429 = vmatmul.mubr.bf16.gmra.mrb[0].mxu0 %v4367
        %v4430 = vpop.f32.mrb[0].mxu0
        %v4431 = vadd.f32 0.0, %v4430
        %v4432 = vpop.f32.mrb[0].mxu0
        %v4433 = vpop.f32.mrb[0].mxu0
        %v4434 = vadd.f32 0.0, %v4433
        %v4435 = vpop.f32.mrb[0].mxu0
        %4436 = vdwg.mxu0
        %v4437 = vadd.f32 %v4353, %v4407
        %v4438 = vadd.f32 %v4354, %v4410
        %v4439 = vadd.f32 %v4355, %v4415
        %v4440 = vadd.f32 %v4356, %v4418
        %v4441 = vadd.f32 %v4357, %v4423
        %v4442 = vadd.f32 %v4358, %v4426
        %v4443 = vadd.f32 %v4359, %v4431
        %v4444 = vadd.f32 %v4360, %v4434
        %s4445 = scalar_lea.vmem [#allocation23], 20
        %v4446 = vld [vmem:[%s4445] sm:$0xf]
        %v4448 = vunpack.c.l.b16 %v4002
        %v4449 = vpack.c.b16 %v4448, %v4364
        %v4451 = vsel %vm990, %v4449, 0
        %v4454 = vsel %vm1003, %v4446, 0
        %4456 = vmatprep.subr.bf16.mxu0 0
        %4457 = vmatpush1.bf16.msra.mxu0 %v4454
        %4458 = vmatprep.subr.bf16.mxu0 0
        %4459 = vmatpush1.bf16.msra.mxu0 0
        %4460 = vmatprep.subr.bf16.mxu0 0
        %4461 = vmatpush1.bf16.msra.mxu0 0
        %4462 = vmatprep.subr.bf16.mxu0 0
        %4463 = vmatpush1.bf16.msra.mxu0 0
        %4464 = vmatprep.subr.bf16.mxu0 0
        %4465 = vmatpush1.bf16.msra.mxu0 0
        %4466 = vmatprep.subr.bf16.mxu0 0
        %4467 = vmatpush1.bf16.msra.mxu0 0
        %4468 = vmatprep.subr.bf16.mxu0 0
        %4469 = vmatpush1.bf16.msra.mxu0 0
        %4470 = vmatprep.subr.bf16.mxu0 0
        %4471 = vmatpush1.bf16.msra.mxu0 0
        %4472 = vmatprep.subr.bf16.mxu0 0
        %4473 = vmatpush1.bf16.msra.mxu0 0
        %4474 = vmatprep.subr.bf16.mxu0 0
        %4475 = vmatpush1.bf16.msra.mxu0 0
        %4476 = vmatprep.subr.bf16.mxu0 0
        %4477 = vmatpush1.bf16.msra.mxu0 0
        %4478 = vmatprep.subr.bf16.mxu0 0
        %4479 = vmatpush1.bf16.msra.mxu0 0
        %4480 = vmatprep.subr.bf16.mxu0 0
        %4481 = vmatpush1.bf16.msra.mxu0 0
        %4482 = vmatprep.subr.bf16.mxu0 0
        %4483 = vmatpush1.bf16.msra.mxu0 0
        %4484 = vmatprep.subr.bf16.mxu0 0
        %4485 = vmatpush1.bf16.msra.mxu0 0
        %4486 = vmatprep.subr.bf16.mxu0 0
        %4487 = vmatpush1.bf16.msra.mxu0 0
        %4488 = vmatprep.mubr.bf16.mxu0 0
        %4489 = vmatmul.mubr.bf16.gmra.mrb[0].mxu0 %v4034
        %v4490 = vpop.f32.mrb[0].mxu0
        %v4491 = vadd.f32 0.0, %v4490
        %v4492 = vpop.f32.mrb[0].mxu0
        %v4493 = vpop.f32.mrb[0].mxu0
        %v4494 = vadd.f32 0.0, %v4493
        %v4495 = vpop.f32.mrb[0].mxu0
        %4496 = vmatprep.mubr.bf16.mxu0 0
        %4497 = vmatmul.mubr.bf16.gmra.mrb[0].mxu0 %v4037
        %v4498 = vpop.f32.mrb[0].mxu0
        %v4499 = vadd.f32 0.0, %v4498
        %v4500 = vpop.f32.mrb[0].mxu0
        %v4501 = vpop.f32.mrb[0].mxu0
        %v4502 = vadd.f32 0.0, %v4501
        %v4503 = vpop.f32.mrb[0].mxu0
        %4504 = vmatprep.mubr.bf16.mxu0 0
        %4505 = vmatmul.mubr.bf16.gmra.mrb[0].mxu0 %v4283
        %v4506 = vpop.f32.mrb[0].mxu0
        %v4507 = vadd.f32 0.0, %v4506
        %v4508 = vpop.f32.mrb[0].mxu0
        %v4509 = vpop.f32.mrb[0].mxu0
        %v4510 = vadd.f32 0.0, %v4509
        %v4511 = vpop.f32.mrb[0].mxu0
        %4512 = vmatprep.mubr.bf16.mxu0 0
        %4513 = vmatmul.mubr.bf16.gmra.mrb[0].mxu0 %v4451
        %v4514 = vpop.f32.mrb[0].mxu0
        %v4515 = vadd.f32 0.0, %v4514
        %v4516 = vpop.f32.mrb[0].mxu0
        %v4517 = vpop.f32.mrb[0].mxu0
        %v4518 = vadd.f32 0.0, %v4517
        %v4519 = vpop.f32.mrb[0].mxu0
        %4520 = vdwg.mxu0
        %v4521 = vadd.f32 %v4437, %v4491
        %v4522 = vadd.f32 %v4438, %v4494
        %v4523 = vadd.f32 %v4439, %v4499
        %v4524 = vadd.f32 %v4440, %v4502
        %v4525 = vadd.f32 %v4441, %v4507
        %v4526 = vadd.f32 %v4442, %v4510
        %v4527 = vadd.f32 %v4443, %v4515
        %v4528 = vadd.f32 %v4444, %v4518
        %s4529 = scalar_lea.vmem [#allocation23], 24
        %v4530 = vld [vmem:[%s4529] sm:$0xf]
        %v4532 = vunpack.c.l.b16 %v4003
        %v4533 = vpack.c.b16 %v4532, %v4448
        %v4535 = vsel %vm990, %v4533, 0
        %v4538 = vsel %vm1003, %v4530, 0
        %4540 = vmatprep.subr.bf16.mxu0 0
        %4541 = vmatpush1.bf16.msra.mxu0 %v4538
        %4542 = vmatprep.subr.bf16.mxu0 0
        %4543 = vmatpush1.bf16.msra.mxu0 0
        %4544 = vmatprep.subr.bf16.mxu0 0
        %4545 = vmatpush1.bf16.msra.mxu0 0
        %4546 = vmatprep.subr.bf16.mxu0 0
        %4547 = vmatpush1.bf16.msra.mxu0 0
        %4548 = vmatprep.subr.bf16.mxu0 0
        %4549 = vmatpush1.bf16.msra.mxu0 0
        %4550 = vmatprep.subr.bf16.mxu0 0
        %4551 = vmatpush1.bf16.msra.mxu0 0
        %4552 = vmatprep.subr.bf16.mxu0 0
        %4553 = vmatpush1.bf16.msra.mxu0 0
        %4554 = vmatprep.subr.bf16.mxu0 0
        %4555 = vmatpush1.bf16.msra.mxu0 0
        %4556 = vmatprep.subr.bf16.mxu0 0
        %4557 = vmatpush1.bf16.msra.mxu0 0
        %4558 = vmatprep.subr.bf16.mxu0 0
        %4559 = vmatpush1.bf16.msra.mxu0 0
        %4560 = vmatprep.subr.bf16.mxu0 0
        %4561 = vmatpush1.bf16.msra.mxu0 0
        %4562 = vmatprep.subr.bf16.mxu0 0
        %4563 = vmatpush1.bf16.msra.mxu0 0
        %4564 = vmatprep.subr.bf16.mxu0 0
        %4565 = vmatpush1.bf16.msra.mxu0 0
        %4566 = vmatprep.subr.bf16.mxu0 0
        %4567 = vmatpush1.bf16.msra.mxu0 0
        %4568 = vmatprep.subr.bf16.mxu0 0
        %4569 = vmatpush1.bf16.msra.mxu0 0
        %4570 = vmatprep.subr.bf16.mxu0 0
        %4571 = vmatpush1.bf16.msra.mxu0 0
        %4572 = vmatprep.mubr.bf16.mxu0 0
        %4573 = vmatmul.mubr.bf16.gmra.mrb[0].mxu0 %v4123
        %v4574 = vpop.f32.mrb[0].mxu0
        %v4575 = vadd.f32 0.0, %v4574
        %v4576 = vpop.f32.mrb[0].mxu0
        %v4577 = vpop.f32.mrb[0].mxu0
        %v4578 = vadd.f32 0.0, %v4577
        %v4579 = vpop.f32.mrb[0].mxu0
        %4580 = vmatprep.mubr.bf16.mxu0 0
        %4581 = vmatmul.mubr.bf16.gmra.mrb[0].mxu0 %v4199
        %v4582 = vpop.f32.mrb[0].mxu0
        %v4583 = vadd.f32 0.0, %v4582
        %v4584 = vpop.f32.mrb[0].mxu0
        %v4585 = vpop.f32.mrb[0].mxu0
        %v4586 = vadd.f32 0.0, %v4585
        %v4587 = vpop.f32.mrb[0].mxu0
        %4588 = vmatprep.mubr.bf16.mxu0 0
        %4589 = vmatmul.mubr.bf16.gmra.mrb[0].mxu0 %v4367
        %v4590 = vpop.f32.mrb[0].mxu0
        %v4591 = vadd.f32 0.0, %v4590
        %v4592 = vpop.f32.mrb[0].mxu0
        %v4593 = vpop.f32.mrb[0].mxu0
        %v4594 = vadd.f32 0.0, %v4593
        %v4595 = vpop.f32.mrb[0].mxu0
        %4596 = vmatprep.mubr.bf16.mxu0 0
        %4597 = vmatmul.mubr.bf16.gmra.mrb[0].mxu0 %v4535
        %v4598 = vpop.f32.mrb[0].mxu0
        %v4599 = vadd.f32 0.0, %v4598
        %v4600 = vpop.f32.mrb[0].mxu0
        %v4601 = vpop.f32.mrb[0].mxu0
        %v4602 = vadd.f32 0.0, %v4601
        %v4603 = vpop.f32.mrb[0].mxu0
        %4604 = vdwg.mxu0
        %v4605 = vadd.f32 %v4521, %v4575
        %v4606 = vadd.f32 %v4522, %v4578
        %v4607 = vadd.f32 %v4523, %v4583
        %v4608 = vadd.f32 %v4524, %v4586
        %v4609 = vadd.f32 %v4525, %v4591
        %v4610 = vadd.f32 %v4526, %v4594
        %v4611 = vadd.f32 %v4527, %v4599
        %v4612 = vadd.f32 %v4528, %v4602
        %v4613 = vld [vmem:[#allocation25] sm:$0x1]
        %v4615 = vlaneseq
        %v4616 = vshrl.u32 %v4615, 7
        %v4617 = vsub.s32 0, %v4616
        %v4618 = vrot.slane %v4613, %v4617
        %v4620 = vadd.f32 %v4605, %v4618
        %v4621 = vadd.f32 %v4606, %v4618
        %v4622 = vadd.f32 %v4607, %v4618
        %v4623 = vadd.f32 %v4608, %v4618
        %v4624 = vadd.f32 %v4609, %v4618
        %v4625 = vadd.f32 %v4610, %v4618
        %v4626 = vadd.f32 %v4611, %v4618
        %v4627 = vadd.f32 %v4612, %v4618
        %v4628 = vmax.f32 %v4620, 0.0
        %v4629 = vmax.f32 %v4621, 0.0
        %v4630 = vmax.f32 %v4622, 0.0
        %v4631 = vmax.f32 %v4623, 0.0
        %v4632 = vmax.f32 %v4624, 0.0
        %v4633 = vmax.f32 %v4625, 0.0
        %v4634 = vmax.f32 %v4626, 0.0
        %v4635 = vmax.f32 %v4627, 0.0
        %v4636 = vpack.c.bf16 %v4628, %v4628
        %v4637 = vpack.c.bf16 %v4629, %v4629
        %v4638 = vpack.c.bf16 %v4630, %v4630
        %v4639 = vpack.c.bf16 %v4631, %v4631
        %v4640 = vpack.c.bf16 %v4632, %v4632
        %v4641 = vpack.c.bf16 %v4633, %v4633
        %v4642 = vpack.c.bf16 %v4634, %v4634
        %v4643 = vpack.c.bf16 %v4635, %v4635
        %v4652 = vunpack.c.l.b16 %v4636
        %v4653 = vunpack.c.l.b16 %v4637
        %v4654 = vunpack.c.l.b16 %v4638
        %v4655 = vunpack.c.l.b16 %v4639
        %v4656 = vunpack.c.l.b16 %v4640
        %v4657 = vunpack.c.l.b16 %v4641
        %v4658 = vunpack.c.l.b16 %v4642
        %v4659 = vunpack.c.l.b16 %v4643
        %v4660 = vpack.c.b16 %v4652, %v4652
        %v4661 = vpack.c.b16 %v4653, %v4653
        %v4662 = vpack.c.b16 %v4654, %v4654
        %v4663 = vpack.c.b16 %v4655, %v4655
        %v4664 = vpack.c.b16 %v4656, %v4656
        %v4665 = vpack.c.b16 %v4657, %v4657
        %v4666 = vpack.c.b16 %v4658, %v4658
        %v4667 = vpack.c.b16 %v4659, %v4659
        %v4669 = vshrl.u32 %v4660, 16
        %v4671 = vrot.slane %v4669, 6
        %v4672 = vshll.u32 %v4660, 16
        %v4674 = vrot.slane %v4672, 7
        %v4675 = vor.u32 %v4671, %v4674
        %v4676 = vrot.slane %v4675, 4
        %v4678 = vshrl.u32 %v4661, 16
        %v4680 = vrot.slane %v4678, 6
        %v4681 = vshll.u32 %v4661, 16
        %v4683 = vrot.slane %v4681, 7
        %v4684 = vor.u32 %v4680, %v4683
        %v4685 = vrot.slane %v4684, 4
        %v4687 = vshrl.u32 %v4662, 16
        %v4689 = vrot.slane %v4687, 6
        %v4690 = vshll.u32 %v4662, 16
        %v4692 = vrot.slane %v4690, 7
        %v4693 = vor.u32 %v4689, %v4692
        %v4694 = vrot.slane %v4693, 4
        %v4696 = vshrl.u32 %v4663, 16
        %v4698 = vrot.slane %v4696, 6
        %v4699 = vshll.u32 %v4663, 16
        %v4701 = vrot.slane %v4699, 7
        %v4702 = vor.u32 %v4698, %v4701
        %v4703 = vrot.slane %v4702, 4
        %v4705 = vshrl.u32 %v4664, 16
        %v4707 = vrot.slane %v4705, 6
        %v4708 = vshll.u32 %v4664, 16
        %v4710 = vrot.slane %v4708, 7
        %v4711 = vor.u32 %v4707, %v4710
        %v4712 = vrot.slane %v4711, 4
        %v4714 = vshrl.u32 %v4665, 16
        %v4716 = vrot.slane %v4714, 6
        %v4717 = vshll.u32 %v4665, 16
        %v4719 = vrot.slane %v4717, 7
        %v4720 = vor.u32 %v4716, %v4719
        %v4721 = vrot.slane %v4720, 4
        %v4723 = vshrl.u32 %v4666, 16
        %v4725 = vrot.slane %v4723, 6
        %v4726 = vshll.u32 %v4666, 16
        %v4728 = vrot.slane %v4726, 7
        %v4729 = vor.u32 %v4725, %v4728
        %v4730 = vrot.slane %v4729, 4
        %v4732 = vshrl.u32 %v4667, 16
        %v4734 = vrot.slane %v4732, 6
        %v4735 = vshll.u32 %v4667, 16
        %v4737 = vrot.slane %v4735, 7
        %v4738 = vor.u32 %v4734, %v4737
        %v4739 = vrot.slane %v4738, 4
        %v4756 = vld [vmem:[#allocation2] sm:$0xe]
        %v4757 = vsel %vm1864, %v4675, %v4756
        %4758 = vst [vmem:[#allocation2] sm:$0xe] %v4757
        %v4759 = vld [vmem:[#allocation2 + $0x4] sm:$0x3]
        %v4760 = vsel %vm1870, %v4676, %v4759
        %4761 = vst [vmem:[#allocation2 + $0x4] sm:$0x3] %v4760
        %v4762 = vld [vmem:[#allocation2 + $0x8] sm:$0xe]
        %v4763 = vsel %vm1864, %v4684, %v4762
        %4764 = vst [vmem:[#allocation2 + $0x8] sm:$0xe] %v4763
        %v4765 = vld [vmem:[#allocation2 + $0xc] sm:$0x3]
        %v4766 = vsel %vm1870, %v4685, %v4765
        %4767 = vst [vmem:[#allocation2 + $0xc] sm:$0x3] %v4766
        %v4768 = vld [vmem:[#allocation2 + $0x10] sm:$0xe]
        %v4769 = vsel %vm1864, %v4693, %v4768
        %4770 = vst [vmem:[#allocation2 + $0x10] sm:$0xe] %v4769
        %v4771 = vld [vmem:[#allocation2 + $0x14] sm:$0x3]
        %v4772 = vsel %vm1870, %v4694, %v4771
        %4773 = vst [vmem:[#allocation2 + $0x14] sm:$0x3] %v4772
        %v4774 = vld [vmem:[#allocation2 + $0x18] sm:$0xe]
        %v4775 = vsel %vm1864, %v4702, %v4774
        %4776 = vst [vmem:[#allocation2 + $0x18] sm:$0xe] %v4775
        %v4777 = vld [vmem:[#allocation2 + $0x1c] sm:$0x3]
        %v4778 = vsel %vm1870, %v4703, %v4777
        %4779 = vst [vmem:[#allocation2 + $0x1c] sm:$0x3] %v4778
        %v4780 = vld [vmem:[#allocation2 + $0x20] sm:$0xe]
        %v4781 = vsel %vm1864, %v4711, %v4780
        %4782 = vst [vmem:[#allocation2 + $0x20] sm:$0xe] %v4781
        %v4783 = vld [vmem:[#allocation2 + $0x24] sm:$0x3]
        %v4784 = vsel %vm1870, %v4712, %v4783
        %4785 = vst [vmem:[#allocation2 + $0x24] sm:$0x3] %v4784
        %v4786 = vld [vmem:[#allocation2 + $0x28] sm:$0xe]
        %v4787 = vsel %vm1864, %v4720, %v4786
        %4788 = vst [vmem:[#allocation2 + $0x28] sm:$0xe] %v4787
        %v4789 = vld [vmem:[#allocation2 + $0x2c] sm:$0x3]
        %v4790 = vsel %vm1870, %v4721, %v4789
        %4791 = vst [vmem:[#allocation2 + $0x2c] sm:$0x3] %v4790
        %v4792 = vld [vmem:[#allocation2 + $0x30] sm:$0xe]
        %v4793 = vsel %vm1864, %v4729, %v4792
        %4794 = vst [vmem:[#allocation2 + $0x30] sm:$0xe] %v4793
        %v4795 = vld [vmem:[#allocation2 + $0x34] sm:$0x3]
        %v4796 = vsel %vm1870, %v4730, %v4795
        %4797 = vst [vmem:[#allocation2 + $0x34] sm:$0x3] %v4796
        %v4798 = vld [vmem:[#allocation2 + $0x38] sm:$0xe]
        %v4799 = vsel %vm1864, %v4738, %v4798
        %4800 = vst [vmem:[#allocation2 + $0x38] sm:$0xe] %v4799
        %v4801 = vld [vmem:[#allocation2 + $0x3c] sm:$0x3]
        %v4802 = vsel %vm1870, %v4739, %v4801
        %4803 = vst [vmem:[#allocation2 + $0x3c] sm:$0x3] %v4802
        %v4804 = vld [vmem:[#allocation2] sm:$0xf]
        %v4805 = vld [vmem:[#allocation2 + $0x4] sm:$0x7]
        %v4806 = vld [vmem:[#allocation2 + $0x8] sm:$0xf]
        %v4807 = vld [vmem:[#allocation2 + $0xc] sm:$0x7]
        %v4808 = vld [vmem:[#allocation2 + $0x10] sm:$0xf]
        %v4809 = vld [vmem:[#allocation2 + $0x14] sm:$0x7]
        %v4810 = vld [vmem:[#allocation2 + $0x18] sm:$0xf]
        %v4811 = vld [vmem:[#allocation2 + $0x1c] sm:$0x7]
        %v4812 = vld [vmem:[#allocation2 + $0x20] sm:$0xf]
        %v4813 = vld [vmem:[#allocation2 + $0x24] sm:$0x7]
        %v4814 = vld [vmem:[#allocation2 + $0x28] sm:$0xf]
        %v4815 = vld [vmem:[#allocation2 + $0x2c] sm:$0x7]
        %v4816 = vld [vmem:[#allocation2 + $0x30] sm:$0xf]
        %v4817 = vld [vmem:[#allocation2 + $0x34] sm:$0x7]
        %v4818 = vld [vmem:[#allocation2 + $0x38] sm:$0xf]
        %v4819 = vld [vmem:[#allocation2 + $0x3c] sm:$0x7]
        %v4820 = vld [vmem:[#allocation26] sm:$0xf]
        %v4822 = vshrl.u32 %v4804, 16
        %v4824 = vrot.slane %v4822, 4
        %v4825 = vshll.u32 %v4804, 16
        %v4827 = vrot.slane %v4825, 5
        %v4828 = vor.u32 %v4824, %v4827
        %v4829 = vrot.slane %v4828, 4
        %v4831 = vshll.u32 %v4805, 16
        %v4833 = vrot.slane %v4831, 5
        %v4834 = vsel %vm1935, %v4829, %v4833
        %v4836 = vshrl.u32 %v4806, 16
        %v4838 = vrot.slane %v4836, 4
        %v4839 = vshll.u32 %v4806, 16
        %v4841 = vrot.slane %v4839, 5
        %v4842 = vor.u32 %v4838, %v4841
        %v4843 = vrot.slane %v4842, 4
        %v4845 = vshll.u32 %v4807, 16
        %v4847 = vrot.slane %v4845, 5
        %v4848 = vsel %vm1935, %v4843, %v4847
        %v4850 = vshrl.u32 %v4808, 16
        %v4852 = vrot.slane %v4850, 4
        %v4853 = vshll.u32 %v4808, 16
        %v4855 = vrot.slane %v4853, 5
        %v4856 = vor.u32 %v4852, %v4855
        %v4857 = vrot.slane %v4856, 4
        %v4859 = vshll.u32 %v4809, 16
        %v4861 = vrot.slane %v4859, 5
        %v4862 = vsel %vm1935, %v4857, %v4861
        %v4864 = vshrl.u32 %v4810, 16
        %v4866 = vrot.slane %v4864, 4
        %v4867 = vshll.u32 %v4810, 16
        %v4869 = vrot.slane %v4867, 5
        %v4870 = vor.u32 %v4866, %v4869
        %v4871 = vrot.slane %v4870, 4
        %v4873 = vshll.u32 %v4811, 16
        %v4875 = vrot.slane %v4873, 5
        %v4876 = vsel %vm1935, %v4871, %v4875
        %v4878 = vshrl.u32 %v4812, 16
        %v4880 = vrot.slane %v4878, 4
        %v4881 = vshll.u32 %v4812, 16
        %v4883 = vrot.slane %v4881, 5
        %v4884 = vor.u32 %v4880, %v4883
        %v4885 = vrot.slane %v4884, 4
        %v4887 = vshll.u32 %v4813, 16
        %v4889 = vrot.slane %v4887, 5
        %v4890 = vsel %vm1935, %v4885, %v4889
        %v4892 = vshrl.u32 %v4814, 16
        %v4894 = vrot.slane %v4892, 4
        %v4895 = vshll.u32 %v4814, 16
        %v4897 = vrot.slane %v4895, 5
        %v4898 = vor.u32 %v4894, %v4897
        %v4899 = vrot.slane %v4898, 4
        %v4901 = vshll.u32 %v4815, 16
        %v4903 = vrot.slane %v4901, 5
        %v4904 = vsel %vm1935, %v4899, %v4903
        %v4906 = vshrl.u32 %v4816, 16
        %v4908 = vrot.slane %v4906, 4
        %v4909 = vshll.u32 %v4816, 16
        %v4911 = vrot.slane %v4909, 5
        %v4912 = vor.u32 %v4908, %v4911
        %v4913 = vrot.slane %v4912, 4
        %v4915 = vshll.u32 %v4817, 16
        %v4917 = vrot.slane %v4915, 5
        %v4918 = vsel %vm1935, %v4913, %v4917
        %v4920 = vshrl.u32 %v4818, 16
        %v4922 = vrot.slane %v4920, 4
        %v4923 = vshll.u32 %v4818, 16
        %v4925 = vrot.slane %v4923, 5
        %v4926 = vor.u32 %v4922, %v4925
        %v4927 = vrot.slane %v4926, 4
        %v4929 = vshll.u32 %v4819, 16
        %v4931 = vrot.slane %v4929, 5
        %v4932 = vsel %vm1935, %v4927, %v4931
        %s4933 = scalar_lea.vmem [#allocation26], 4
        %v4934 = vld [vmem:[%s4933] sm:$0xf]
        %v4935 = vunpack.c.l.b16 %v4834
        %v4936 = vunpack.c.l.b16 %v4848
        %v4937 = vunpack.c.l.b16 %v4862
        %v4938 = vunpack.c.l.b16 %v4876
        %v4939 = vunpack.c.l.b16 %v4890
        %v4940 = vunpack.c.l.b16 %v4904
        %v4941 = vunpack.c.l.b16 %v4918
        %v4942 = vunpack.c.l.b16 %v4932
        %v4943 = vpack.c.b16 %v4936, %v4935
        %v4944 = vpack.c.b16 %v4938, %v4937
        %v4945 = vpack.c.b16 %v4940, %v4939
        %v4946 = vpack.c.b16 %v4942, %v4941
        %v4948 = vsel %vm990, %v4943, 0
        %v4951 = vsel %vm990, %v4944, 0
        %v4954 = vsel %vm990, %v4945, 0
        %v4957 = vsel %vm990, %v4946, 0
        %v4960 = vsel %vm1003, %v4934, 0
        %4962 = vmatprep.subr.bf16.mxu0 0
        %4963 = vmatpush1.bf16.msra.mxu0 %v4960
        %4964 = vmatprep.subr.bf16.mxu0 0
        %4965 = vmatpush1.bf16.msra.mxu0 0
        %4966 = vmatprep.subr.bf16.mxu0 0
        %4967 = vmatpush1.bf16.msra.mxu0 0
        %4968 = vmatprep.subr.bf16.mxu0 0
        %4969 = vmatpush1.bf16.msra.mxu0 0
        %4970 = vmatprep.subr.bf16.mxu0 0
        %4971 = vmatpush1.bf16.msra.mxu0 0
        %4972 = vmatprep.subr.bf16.mxu0 0
        %4973 = vmatpush1.bf16.msra.mxu0 0
        %4974 = vmatprep.subr.bf16.mxu0 0
        %4975 = vmatpush1.bf16.msra.mxu0 0
        %4976 = vmatprep.subr.bf16.mxu0 0
        %4977 = vmatpush1.bf16.msra.mxu0 0
        %4978 = vmatprep.subr.bf16.mxu0 0
        %4979 = vmatpush1.bf16.msra.mxu0 0
        %4980 = vmatprep.subr.bf16.mxu0 0
        %4981 = vmatpush1.bf16.msra.mxu0 0
        %4982 = vmatprep.subr.bf16.mxu0 0
        %4983 = vmatpush1.bf16.msra.mxu0 0
        %4984 = vmatprep.subr.bf16.mxu0 0
        %4985 = vmatpush1.bf16.msra.mxu0 0
        %4986 = vmatprep.subr.bf16.mxu0 0
        %4987 = vmatpush1.bf16.msra.mxu0 0
        %4988 = vmatprep.subr.bf16.mxu0 0
        %4989 = vmatpush1.bf16.msra.mxu0 0
        %4990 = vmatprep.subr.bf16.mxu0 0
        %4991 = vmatpush1.bf16.msra.mxu0 0
        %4992 = vmatprep.subr.bf16.mxu0 0
        %4993 = vmatpush1.bf16.msra.mxu0 0
        %4994 = vmatprep.mubr.bf16.mxu0 0
        %4995 = vmatmul.mubr.bf16.gmra.mrb[0].mxu0 %v4948
        %v4996 = vpop.f32.mrb[0].mxu0
        %v4997 = vadd.f32 0.0, %v4996
        %v4998 = vpop.f32.mrb[0].mxu0
        %v4999 = vpop.f32.mrb[0].mxu0
        %v5000 = vadd.f32 0.0, %v4999
        %v5001 = vpop.f32.mrb[0].mxu0
        %5002 = vmatprep.mubr.bf16.mxu0 0
        %5003 = vmatmul.mubr.bf16.gmra.mrb[0].mxu0 %v4951
        %v5004 = vpop.f32.mrb[0].mxu0
        %v5005 = vadd.f32 0.0, %v5004
        %v5006 = vpop.f32.mrb[0].mxu0
        %v5007 = vpop.f32.mrb[0].mxu0
        %v5008 = vadd.f32 0.0, %v5007
        %v5009 = vpop.f32.mrb[0].mxu0
        %5010 = vmatprep.mubr.bf16.mxu0 0
        %5011 = vmatmul.mubr.bf16.gmra.mrb[0].mxu0 %v4954
        %v5012 = vpop.f32.mrb[0].mxu0
        %v5013 = vadd.f32 0.0, %v5012
        %v5014 = vpop.f32.mrb[0].mxu0
        %v5015 = vpop.f32.mrb[0].mxu0
        %v5016 = vadd.f32 0.0, %v5015
        %v5017 = vpop.f32.mrb[0].mxu0
        %5018 = vmatprep.mubr.bf16.mxu0 0
        %5019 = vmatmul.mubr.bf16.gmra.mrb[0].mxu0 %v4957
        %v5020 = vpop.f32.mrb[0].mxu0
        %v5021 = vadd.f32 0.0, %v5020
        %v5022 = vpop.f32.mrb[0].mxu0
        %v5023 = vpop.f32.mrb[0].mxu0
        %v5024 = vadd.f32 0.0, %v5023
        %v5025 = vpop.f32.mrb[0].mxu0
        %5026 = vdwg.mxu0
        %v5035 = vunpack.c.l.b16 %v4804
        %v5036 = vunpack.c.l.b16 %v4806
        %v5037 = vunpack.c.l.b16 %v4808
        %v5038 = vunpack.c.l.b16 %v4810
        %v5039 = vunpack.c.l.b16 %v4812
        %v5040 = vunpack.c.l.b16 %v4814
        %v5041 = vunpack.c.l.b16 %v4816
        %v5042 = vunpack.c.l.b16 %v4818
        %v5043 = vpack.c.b16 %v5036, %v5035
        %v5044 = vpack.c.b16 %v5038, %v5037
        %v5045 = vpack.c.b16 %v5040, %v5039
        %v5046 = vpack.c.b16 %v5042, %v5041
        %v5048 = vsel %vm990, %v5043, 0
        %v5051 = vsel %vm990, %v5044, 0
        %v5054 = vsel %vm990, %v5045, 0
        %v5057 = vsel %vm990, %v5046, 0
        %v5060 = vsel %vm1003, %v4820, 0
        %5062 = vmatprep.subr.bf16.mxu0 0
        %5063 = vmatpush1.bf16.msra.mxu0 %v5060
        %5064 = vmatprep.subr.bf16.mxu0 0
        %5065 = vmatpush1.bf16.msra.mxu0 0
        %5066 = vmatprep.subr.bf16.mxu0 0
        %5067 = vmatpush1.bf16.msra.mxu0 0
        %5068 = vmatprep.subr.bf16.mxu0 0
        %5069 = vmatpush1.bf16.msra.mxu0 0
        %5070 = vmatprep.subr.bf16.mxu0 0
        %5071 = vmatpush1.bf16.msra.mxu0 0
        %5072 = vmatprep.subr.bf16.mxu0 0
        %5073 = vmatpush1.bf16.msra.mxu0 0
        %5074 = vmatprep.subr.bf16.mxu0 0
        %5075 = vmatpush1.bf16.msra.mxu0 0
        %5076 = vmatprep.subr.bf16.mxu0 0
        %5077 = vmatpush1.bf16.msra.mxu0 0
        %5078 = vmatprep.subr.bf16.mxu0 0
        %5079 = vmatpush1.bf16.msra.mxu0 0
        %5080 = vmatprep.subr.bf16.mxu0 0
        %5081 = vmatpush1.bf16.msra.mxu0 0
        %5082 = vmatprep.subr.bf16.mxu0 0
        %5083 = vmatpush1.bf16.msra.mxu0 0
        %5084 = vmatprep.subr.bf16.mxu0 0
        %5085 = vmatpush1.bf16.msra.mxu0 0
        %5086 = vmatprep.subr.bf16.mxu0 0
        %5087 = vmatpush1.bf16.msra.mxu0 0
        %5088 = vmatprep.subr.bf16.mxu0 0
        %5089 = vmatpush1.bf16.msra.mxu0 0
        %5090 = vmatprep.subr.bf16.mxu0 0
        %5091 = vmatpush1.bf16.msra.mxu0 0
        %5092 = vmatprep.subr.bf16.mxu0 0
        %5093 = vmatpush1.bf16.msra.mxu0 0
        %5094 = vmatprep.mubr.bf16.mxu0 0
        %5095 = vmatmul.mubr.bf16.gmra.mrb[0].mxu0 %v5048
        %v5096 = vpop.f32.mrb[0].mxu0
        %v5097 = vadd.f32 %v4997, %v5096
        %v5098 = vpop.f32.mrb[0].mxu0
        %v5099 = vpop.f32.mrb[0].mxu0
        %v5100 = vadd.f32 %v5000, %v5099
        %v5101 = vpop.f32.mrb[0].mxu0
        %5102 = vmatprep.mubr.bf16.mxu0 0
        %5103 = vmatmul.mubr.bf16.gmra.mrb[0].mxu0 %v5051
        %v5104 = vpop.f32.mrb[0].mxu0
        %v5105 = vadd.f32 %v5005, %v5104
        %v5106 = vpop.f32.mrb[0].mxu0
        %v5107 = vpop.f32.mrb[0].mxu0
        %v5108 = vadd.f32 %v5008, %v5107
        %v5109 = vpop.f32.mrb[0].mxu0
        %5110 = vmatprep.mubr.bf16.mxu0 0
        %5111 = vmatmul.mubr.bf16.gmra.mrb[0].mxu0 %v5054
        %v5112 = vpop.f32.mrb[0].mxu0
        %v5113 = vadd.f32 %v5013, %v5112
        %v5114 = vpop.f32.mrb[0].mxu0
        %v5115 = vpop.f32.mrb[0].mxu0
        %v5116 = vadd.f32 %v5016, %v5115
        %v5117 = vpop.f32.mrb[0].mxu0
        %5118 = vmatprep.mubr.bf16.mxu0 0
        %5119 = vmatmul.mubr.bf16.gmra.mrb[0].mxu0 %v5057
        %v5120 = vpop.f32.mrb[0].mxu0
        %v5121 = vadd.f32 %v5021, %v5120
        %v5122 = vpop.f32.mrb[0].mxu0
        %v5123 = vpop.f32.mrb[0].mxu0
        %v5124 = vadd.f32 %v5024, %v5123
        %v5125 = vpop.f32.mrb[0].mxu0
        %5126 = vdwg.mxu0
        %v5135 = vrot.slane %v4804, 5
        %v5136 = vrot.slane %v5135, 4
        %v5137 = vrot.slane %v4805, 5
        %v5138 = vsel %vm2252, %v5136, %v5137
        %v5139 = vrot.slane %v4806, 5
        %v5140 = vrot.slane %v5139, 4
        %v5141 = vrot.slane %v4807, 5
        %v5142 = vsel %vm2252, %v5140, %v5141
        %v5143 = vrot.slane %v4808, 5
        %v5144 = vrot.slane %v5143, 4
        %v5145 = vrot.slane %v4809, 5
        %v5146 = vsel %vm2252, %v5144, %v5145
        %v5147 = vrot.slane %v4810, 5
        %v5148 = vrot.slane %v5147, 4
        %v5149 = vrot.slane %v4811, 5
        %v5150 = vsel %vm2252, %v5148, %v5149
        %v5151 = vrot.slane %v4812, 5
        %v5152 = vrot.slane %v5151, 4
        %v5153 = vrot.slane %v4813, 5
        %v5154 = vsel %vm2252, %v5152, %v5153
        %v5155 = vrot.slane %v4814, 5
        %v5156 = vrot.slane %v5155, 4
        %v5157 = vrot.slane %v4815, 5
        %v5158 = vsel %vm2252, %v5156, %v5157
        %v5159 = vrot.slane %v4816, 5
        %v5160 = vrot.slane %v5159, 4
        %v5161 = vrot.slane %v4817, 5
        %v5162 = vsel %vm2252, %v5160, %v5161
        %v5163 = vrot.slane %v4818, 5
        %v5164 = vrot.slane %v5163, 4
        %v5165 = vrot.slane %v4819, 5
        %v5166 = vsel %vm2252, %v5164, %v5165
        %s5167 = scalar_lea.vmem [#allocation26], 8
        %v5168 = vld [vmem:[%s5167] sm:$0xf]
        %v5169 = vunpack.c.l.b16 %v5138
        %v5170 = vunpack.c.l.b16 %v5142
        %v5171 = vunpack.c.l.b16 %v5146
        %v5172 = vunpack.c.l.b16 %v5150
        %v5173 = vunpack.c.l.b16 %v5154
        %v5174 = vunpack.c.l.b16 %v5158
        %v5175 = vunpack.c.l.b16 %v5162
        %v5176 = vunpack.c.l.b16 %v5166
        %v5177 = vpack.c.b16 %v5170, %v5169
        %v5178 = vpack.c.b16 %v5172, %v5171
        %v5179 = vpack.c.b16 %v5174, %v5173
        %v5180 = vpack.c.b16 %v5176, %v5175
        %v5182 = vsel %vm990, %v5177, 0
        %v5185 = vsel %vm990, %v5178, 0
        %v5188 = vsel %vm990, %v5179, 0
        %v5191 = vsel %vm990, %v5180, 0
        %v5194 = vsel %vm1003, %v5168, 0
        %5196 = vmatprep.subr.bf16.mxu0 0
        %5197 = vmatpush1.bf16.msra.mxu0 %v5194
        %5198 = vmatprep.subr.bf16.mxu0 0
        %5199 = vmatpush1.bf16.msra.mxu0 0
        %5200 = vmatprep.subr.bf16.mxu0 0
        %5201 = vmatpush1.bf16.msra.mxu0 0
        %5202 = vmatprep.subr.bf16.mxu0 0
        %5203 = vmatpush1.bf16.msra.mxu0 0
        %5204 = vmatprep.subr.bf16.mxu0 0
        %5205 = vmatpush1.bf16.msra.mxu0 0
        %5206 = vmatprep.subr.bf16.mxu0 0
        %5207 = vmatpush1.bf16.msra.mxu0 0
        %5208 = vmatprep.subr.bf16.mxu0 0
        %5209 = vmatpush1.bf16.msra.mxu0 0
        %5210 = vmatprep.subr.bf16.mxu0 0
        %5211 = vmatpush1.bf16.msra.mxu0 0
        %5212 = vmatprep.subr.bf16.mxu0 0
        %5213 = vmatpush1.bf16.msra.mxu0 0
        %5214 = vmatprep.subr.bf16.mxu0 0
        %5215 = vmatpush1.bf16.msra.mxu0 0
        %5216 = vmatprep.subr.bf16.mxu0 0
        %5217 = vmatpush1.bf16.msra.mxu0 0
        %5218 = vmatprep.subr.bf16.mxu0 0
        %5219 = vmatpush1.bf16.msra.mxu0 0
        %5220 = vmatprep.subr.bf16.mxu0 0
        %5221 = vmatpush1.bf16.msra.mxu0 0
        %5222 = vmatprep.subr.bf16.mxu0 0
        %5223 = vmatpush1.bf16.msra.mxu0 0
        %5224 = vmatprep.subr.bf16.mxu0 0
        %5225 = vmatpush1.bf16.msra.mxu0 0
        %5226 = vmatprep.subr.bf16.mxu0 0
        %5227 = vmatpush1.bf16.msra.mxu0 0
        %5228 = vmatprep.mubr.bf16.mxu0 0
        %5229 = vmatmul.mubr.bf16.gmra.mrb[0].mxu0 %v5182
        %v5230 = vpop.f32.mrb[0].mxu0
        %v5231 = vadd.f32 0.0, %v5230
        %v5232 = vpop.f32.mrb[0].mxu0
        %v5233 = vpop.f32.mrb[0].mxu0
        %v5234 = vadd.f32 0.0, %v5233
        %v5235 = vpop.f32.mrb[0].mxu0
        %5236 = vmatprep.mubr.bf16.mxu0 0
        %5237 = vmatmul.mubr.bf16.gmra.mrb[0].mxu0 %v5185
        %v5238 = vpop.f32.mrb[0].mxu0
        %v5239 = vadd.f32 0.0, %v5238
        %v5240 = vpop.f32.mrb[0].mxu0
        %v5241 = vpop.f32.mrb[0].mxu0
        %v5242 = vadd.f32 0.0, %v5241
        %v5243 = vpop.f32.mrb[0].mxu0
        %5244 = vmatprep.mubr.bf16.mxu0 0
        %5245 = vmatmul.mubr.bf16.gmra.mrb[0].mxu0 %v5188
        %v5246 = vpop.f32.mrb[0].mxu0
        %v5247 = vadd.f32 0.0, %v5246
        %v5248 = vpop.f32.mrb[0].mxu0
        %v5249 = vpop.f32.mrb[0].mxu0
        %v5250 = vadd.f32 0.0, %v5249
        %v5251 = vpop.f32.mrb[0].mxu0
        %5252 = vmatprep.mubr.bf16.mxu0 0
        %5253 = vmatmul.mubr.bf16.gmra.mrb[0].mxu0 %v5191
        %v5254 = vpop.f32.mrb[0].mxu0
        %v5255 = vadd.f32 0.0, %v5254
        %v5256 = vpop.f32.mrb[0].mxu0
        %v5257 = vpop.f32.mrb[0].mxu0
        %v5258 = vadd.f32 0.0, %v5257
        %v5259 = vpop.f32.mrb[0].mxu0
        %5260 = vdwg.mxu0
        %v5261 = vadd.f32 %v5097, %v5231
        %v5262 = vadd.f32 %v5100, %v5234
        %v5263 = vadd.f32 %v5105, %v5239
        %v5264 = vadd.f32 %v5108, %v5242
        %v5265 = vadd.f32 %v5113, %v5247
        %v5266 = vadd.f32 %v5116, %v5250
        %v5267 = vadd.f32 %v5121, %v5255
        %v5268 = vadd.f32 %v5124, %v5258
        %v5269 = vrot.slane %v4822, 5
        %v5270 = vrot.slane %v4825, 6
        %v5271 = vor.u32 %v5269, %v5270
        %v5272 = vrot.slane %v5271, 4
        %v5273 = vshrl.u32 %v4805, 16
        %v5275 = vrot.slane %v5273, 5
        %v5276 = vrot.slane %v4831, 6
        %v5277 = vor.u32 %v5275, %v5276
        %v5278 = vsel %vm2389, %v5272, %v5277
        %v5279 = vrot.slane %v4836, 5
        %v5280 = vrot.slane %v4839, 6
        %v5281 = vor.u32 %v5279, %v5280
        %v5282 = vrot.slane %v5281, 4
        %v5283 = vshrl.u32 %v4807, 16
        %v5285 = vrot.slane %v5283, 5
        %v5286 = vrot.slane %v4845, 6
        %v5287 = vor.u32 %v5285, %v5286
        %v5288 = vsel %vm2389, %v5282, %v5287
        %v5289 = vrot.slane %v4850, 5
        %v5290 = vrot.slane %v4853, 6
        %v5291 = vor.u32 %v5289, %v5290
        %v5292 = vrot.slane %v5291, 4
        %v5293 = vshrl.u32 %v4809, 16
        %v5295 = vrot.slane %v5293, 5
        %v5296 = vrot.slane %v4859, 6
        %v5297 = vor.u32 %v5295, %v5296
        %v5298 = vsel %vm2389, %v5292, %v5297
        %v5299 = vrot.slane %v4864, 5
        %v5300 = vrot.slane %v4867, 6
        %v5301 = vor.u32 %v5299, %v5300
        %v5302 = vrot.slane %v5301, 4
        %v5303 = vshrl.u32 %v4811, 16
        %v5305 = vrot.slane %v5303, 5
        %v5306 = vrot.slane %v4873, 6
        %v5307 = vor.u32 %v5305, %v5306
        %v5308 = vsel %vm2389, %v5302, %v5307
        %v5309 = vrot.slane %v4878, 5
        %v5310 = vrot.slane %v4881, 6
        %v5311 = vor.u32 %v5309, %v5310
        %v5312 = vrot.slane %v5311, 4
        %v5313 = vshrl.u32 %v4813, 16
        %v5315 = vrot.slane %v5313, 5
        %v5316 = vrot.slane %v4887, 6
        %v5317 = vor.u32 %v5315, %v5316
        %v5318 = vsel %vm2389, %v5312, %v5317
        %v5319 = vrot.slane %v4892, 5
        %v5320 = vrot.slane %v4895, 6
        %v5321 = vor.u32 %v5319, %v5320
        %v5322 = vrot.slane %v5321, 4
        %v5323 = vshrl.u32 %v4815, 16
        %v5325 = vrot.slane %v5323, 5
        %v5326 = vrot.slane %v4901, 6
        %v5327 = vor.u32 %v5325, %v5326
        %v5328 = vsel %vm2389, %v5322, %v5327
        %v5329 = vrot.slane %v4906, 5
        %v5330 = vrot.slane %v4909, 6
        %v5331 = vor.u32 %v5329, %v5330
        %v5332 = vrot.slane %v5331, 4
        %v5333 = vshrl.u32 %v4817, 16
        %v5335 = vrot.slane %v5333, 5
        %v5336 = vrot.slane %v4915, 6
        %v5337 = vor.u32 %v5335, %v5336
        %v5338 = vsel %vm2389, %v5332, %v5337
        %v5339 = vrot.slane %v4920, 5
        %v5340 = vrot.slane %v4923, 6
        %v5341 = vor.u32 %v5339, %v5340
        %v5342 = vrot.slane %v5341, 4
        %v5343 = vshrl.u32 %v4819, 16
        %v5345 = vrot.slane %v5343, 5
        %v5346 = vrot.slane %v4929, 6
        %v5347 = vor.u32 %v5345, %v5346
        %v5348 = vsel %vm2389, %v5342, %v5347
        %s5349 = scalar_lea.vmem [#allocation26], 12
        %v5350 = vld [vmem:[%s5349] sm:$0xf]
        %v5351 = vunpack.c.l.b16 %v5278
        %v5352 = vunpack.c.l.b16 %v5288
        %v5353 = vunpack.c.l.b16 %v5298
        %v5354 = vunpack.c.l.b16 %v5308
        %v5355 = vunpack.c.l.b16 %v5318
        %v5356 = vunpack.c.l.b16 %v5328
        %v5357 = vunpack.c.l.b16 %v5338
        %v5358 = vunpack.c.l.b16 %v5348
        %v5359 = vpack.c.b16 %v5352, %v5351
        %v5360 = vpack.c.b16 %v5354, %v5353
        %v5361 = vpack.c.b16 %v5356, %v5355
        %v5362 = vpack.c.b16 %v5358, %v5357
        %v5364 = vsel %vm990, %v5359, 0
        %v5367 = vsel %vm990, %v5360, 0
        %v5370 = vsel %vm990, %v5361, 0
        %v5373 = vsel %vm990, %v5362, 0
        %v5376 = vsel %vm1003, %v5350, 0
        %5378 = vmatprep.subr.bf16.mxu0 0
        %5379 = vmatpush1.bf16.msra.mxu0 %v5376
        %5380 = vmatprep.subr.bf16.mxu0 0
        %5381 = vmatpush1.bf16.msra.mxu0 0
        %5382 = vmatprep.subr.bf16.mxu0 0
        %5383 = vmatpush1.bf16.msra.mxu0 0
        %5384 = vmatprep.subr.bf16.mxu0 0
        %5385 = vmatpush1.bf16.msra.mxu0 0
        %5386 = vmatprep.subr.bf16.mxu0 0
        %5387 = vmatpush1.bf16.msra.mxu0 0
        %5388 = vmatprep.subr.bf16.mxu0 0
        %5389 = vmatpush1.bf16.msra.mxu0 0
        %5390 = vmatprep.subr.bf16.mxu0 0
        %5391 = vmatpush1.bf16.msra.mxu0 0
        %5392 = vmatprep.subr.bf16.mxu0 0
        %5393 = vmatpush1.bf16.msra.mxu0 0
        %5394 = vmatprep.subr.bf16.mxu0 0
        %5395 = vmatpush1.bf16.msra.mxu0 0
        %5396 = vmatprep.subr.bf16.mxu0 0
        %5397 = vmatpush1.bf16.msra.mxu0 0
        %5398 = vmatprep.subr.bf16.mxu0 0
        %5399 = vmatpush1.bf16.msra.mxu0 0
        %5400 = vmatprep.subr.bf16.mxu0 0
        %5401 = vmatpush1.bf16.msra.mxu0 0
        %5402 = vmatprep.subr.bf16.mxu0 0
        %5403 = vmatpush1.bf16.msra.mxu0 0
        %5404 = vmatprep.subr.bf16.mxu0 0
        %5405 = vmatpush1.bf16.msra.mxu0 0
        %5406 = vmatprep.subr.bf16.mxu0 0
        %5407 = vmatpush1.bf16.msra.mxu0 0
        %5408 = vmatprep.subr.bf16.mxu0 0
        %5409 = vmatpush1.bf16.msra.mxu0 0
        %5410 = vmatprep.mubr.bf16.mxu0 0
        %5411 = vmatmul.mubr.bf16.gmra.mrb[0].mxu0 %v5364
        %v5412 = vpop.f32.mrb[0].mxu0
        %v5413 = vadd.f32 0.0, %v5412
        %v5414 = vpop.f32.mrb[0].mxu0
        %v5415 = vpop.f32.mrb[0].mxu0
        %v5416 = vadd.f32 0.0, %v5415
        %v5417 = vpop.f32.mrb[0].mxu0
        %5418 = vmatprep.mubr.bf16.mxu0 0
        %5419 = vmatmul.mubr.bf16.gmra.mrb[0].mxu0 %v5367
        %v5420 = vpop.f32.mrb[0].mxu0
        %v5421 = vadd.f32 0.0, %v5420
        %v5422 = vpop.f32.mrb[0].mxu0
        %v5423 = vpop.f32.mrb[0].mxu0
        %v5424 = vadd.f32 0.0, %v5423
        %v5425 = vpop.f32.mrb[0].mxu0
        %5426 = vmatprep.mubr.bf16.mxu0 0
        %5427 = vmatmul.mubr.bf16.gmra.mrb[0].mxu0 %v5370
        %v5428 = vpop.f32.mrb[0].mxu0
        %v5429 = vadd.f32 0.0, %v5428
        %v5430 = vpop.f32.mrb[0].mxu0
        %v5431 = vpop.f32.mrb[0].mxu0
        %v5432 = vadd.f32 0.0, %v5431
        %v5433 = vpop.f32.mrb[0].mxu0
        %5434 = vmatprep.mubr.bf16.mxu0 0
        %5435 = vmatmul.mubr.bf16.gmra.mrb[0].mxu0 %v5373
        %v5436 = vpop.f32.mrb[0].mxu0
        %v5437 = vadd.f32 0.0, %v5436
        %v5438 = vpop.f32.mrb[0].mxu0
        %v5439 = vpop.f32.mrb[0].mxu0
        %v5440 = vadd.f32 0.0, %v5439
        %v5441 = vpop.f32.mrb[0].mxu0
        %5442 = vdwg.mxu0
        %v5443 = vadd.f32 %v5261, %v5413
        %v5444 = vadd.f32 %v5262, %v5416
        %v5445 = vadd.f32 %v5263, %v5421
        %v5446 = vadd.f32 %v5264, %v5424
        %v5447 = vadd.f32 %v5265, %v5429
        %v5448 = vadd.f32 %v5266, %v5432
        %v5449 = vadd.f32 %v5267, %v5437
        %v5450 = vadd.f32 %v5268, %v5440
        %v5451 = vrot.slane %v4804, 6
        %v5452 = vrot.slane %v5451, 4
        %v5453 = vrot.slane %v4805, 6
        %v5454 = vsel %vm2574, %v5452, %v5453
        %v5455 = vrot.slane %v4806, 6
        %v5456 = vrot.slane %v5455, 4
        %v5457 = vrot.slane %v4807, 6
        %v5458 = vsel %vm2574, %v5456, %v5457
        %v5459 = vrot.slane %v4808, 6
        %v5460 = vrot.slane %v5459, 4
        %v5461 = vrot.slane %v4809, 6
        %v5462 = vsel %vm2574, %v5460, %v5461
        %v5463 = vrot.slane %v4810, 6
        %v5464 = vrot.slane %v5463, 4
        %v5465 = vrot.slane %v4811, 6
        %v5466 = vsel %vm2574, %v5464, %v5465
        %v5467 = vrot.slane %v4812, 6
        %v5468 = vrot.slane %v5467, 4
        %v5469 = vrot.slane %v4813, 6
        %v5470 = vsel %vm2574, %v5468, %v5469
        %v5471 = vrot.slane %v4814, 6
        %v5472 = vrot.slane %v5471, 4
        %v5473 = vrot.slane %v4815, 6
        %v5474 = vsel %vm2574, %v5472, %v5473
        %v5475 = vrot.slane %v4816, 6
        %v5476 = vrot.slane %v5475, 4
        %v5477 = vrot.slane %v4817, 6
        %v5478 = vsel %vm2574, %v5476, %v5477
        %v5479 = vrot.slane %v4818, 6
        %v5480 = vrot.slane %v5479, 4
        %v5481 = vrot.slane %v4819, 6
        %v5482 = vsel %vm2574, %v5480, %v5481
        %s5483 = scalar_lea.vmem [#allocation26], 16
        %v5484 = vld [vmem:[%s5483] sm:$0xf]
        %v5485 = vunpack.c.l.b16 %v5454
        %v5486 = vunpack.c.l.b16 %v5458
        %v5487 = vunpack.c.l.b16 %v5462
        %v5488 = vunpack.c.l.b16 %v5466
        %v5489 = vunpack.c.l.b16 %v5470
        %v5490 = vunpack.c.l.b16 %v5474
        %v5491 = vunpack.c.l.b16 %v5478
        %v5492 = vunpack.c.l.b16 %v5482
        %v5493 = vpack.c.b16 %v5486, %v5485
        %v5494 = vpack.c.b16 %v5488, %v5487
        %v5495 = vpack.c.b16 %v5490, %v5489
        %v5496 = vpack.c.b16 %v5492, %v5491
        %v5498 = vsel %vm990, %v5493, 0
        %v5501 = vsel %vm990, %v5494, 0
        %v5504 = vsel %vm990, %v5495, 0
        %v5507 = vsel %vm990, %v5496, 0
        %v5510 = vsel %vm1003, %v5484, 0
        %5512 = vmatprep.subr.bf16.mxu0 0
        %5513 = vmatpush1.bf16.msra.mxu0 %v5510
        %5514 = vmatprep.subr.bf16.mxu0 0
        %5515 = vmatpush1.bf16.msra.mxu0 0
        %5516 = vmatprep.subr.bf16.mxu0 0
        %5517 = vmatpush1.bf16.msra.mxu0 0
        %5518 = vmatprep.subr.bf16.mxu0 0
        %5519 = vmatpush1.bf16.msra.mxu0 0
        %5520 = vmatprep.subr.bf16.mxu0 0
        %5521 = vmatpush1.bf16.msra.mxu0 0
        %5522 = vmatprep.subr.bf16.mxu0 0
        %5523 = vmatpush1.bf16.msra.mxu0 0
        %5524 = vmatprep.subr.bf16.mxu0 0
        %5525 = vmatpush1.bf16.msra.mxu0 0
        %5526 = vmatprep.subr.bf16.mxu0 0
        %5527 = vmatpush1.bf16.msra.mxu0 0
        %5528 = vmatprep.subr.bf16.mxu0 0
        %5529 = vmatpush1.bf16.msra.mxu0 0
        %5530 = vmatprep.subr.bf16.mxu0 0
        %5531 = vmatpush1.bf16.msra.mxu0 0
        %5532 = vmatprep.subr.bf16.mxu0 0
        %5533 = vmatpush1.bf16.msra.mxu0 0
        %5534 = vmatprep.subr.bf16.mxu0 0
        %5535 = vmatpush1.bf16.msra.mxu0 0
        %5536 = vmatprep.subr.bf16.mxu0 0
        %5537 = vmatpush1.bf16.msra.mxu0 0
        %5538 = vmatprep.subr.bf16.mxu0 0
        %5539 = vmatpush1.bf16.msra.mxu0 0
        %5540 = vmatprep.subr.bf16.mxu0 0
        %5541 = vmatpush1.bf16.msra.mxu0 0
        %5542 = vmatprep.subr.bf16.mxu0 0
        %5543 = vmatpush1.bf16.msra.mxu0 0
        %5544 = vmatprep.mubr.bf16.mxu0 0
        %5545 = vmatmul.mubr.bf16.gmra.mrb[0].mxu0 %v5498
        %v5546 = vpop.f32.mrb[0].mxu0
        %v5547 = vadd.f32 0.0, %v5546
        %v5548 = vpop.f32.mrb[0].mxu0
        %v5549 = vpop.f32.mrb[0].mxu0
        %v5550 = vadd.f32 0.0, %v5549
        %v5551 = vpop.f32.mrb[0].mxu0
        %5552 = vmatprep.mubr.bf16.mxu0 0
        %5553 = vmatmul.mubr.bf16.gmra.mrb[0].mxu0 %v5501
        %v5554 = vpop.f32.mrb[0].mxu0
        %v5555 = vadd.f32 0.0, %v5554
        %v5556 = vpop.f32.mrb[0].mxu0
        %v5557 = vpop.f32.mrb[0].mxu0
        %v5558 = vadd.f32 0.0, %v5557
        %v5559 = vpop.f32.mrb[0].mxu0
        %5560 = vmatprep.mubr.bf16.mxu0 0
        %5561 = vmatmul.mubr.bf16.gmra.mrb[0].mxu0 %v5504
        %v5562 = vpop.f32.mrb[0].mxu0
        %v5563 = vadd.f32 0.0, %v5562
        %v5564 = vpop.f32.mrb[0].mxu0
        %v5565 = vpop.f32.mrb[0].mxu0
        %v5566 = vadd.f32 0.0, %v5565
        %v5567 = vpop.f32.mrb[0].mxu0
        %5568 = vmatprep.mubr.bf16.mxu0 0
        %5569 = vmatmul.mubr.bf16.gmra.mrb[0].mxu0 %v5507
        %v5570 = vpop.f32.mrb[0].mxu0
        %v5571 = vadd.f32 0.0, %v5570
        %v5572 = vpop.f32.mrb[0].mxu0
        %v5573 = vpop.f32.mrb[0].mxu0
        %v5574 = vadd.f32 0.0, %v5573
        %v5575 = vpop.f32.mrb[0].mxu0
        %5576 = vdwg.mxu0
        %v5577 = vadd.f32 %v5443, %v5547
        %v5578 = vadd.f32 %v5444, %v5550
        %v5579 = vadd.f32 %v5445, %v5555
        %v5580 = vadd.f32 %v5446, %v5558
        %v5581 = vadd.f32 %v5447, %v5563
        %v5582 = vadd.f32 %v5448, %v5566
        %v5583 = vadd.f32 %v5449, %v5571
        %v5584 = vadd.f32 %v5450, %v5574
        %v5585 = vrot.slane %v4822, 6
        %v5586 = vrot.slane %v4825, 7
        %v5587 = vor.u32 %v5585, %v5586
        %v5588 = vrot.slane %v5587, 4
        %v5589 = vrot.slane %v5273, 6
        %v5590 = vrot.slane %v4831, 7
        %v5591 = vor.u32 %v5589, %v5590
        %v5592 = vsel %vm2710, %v5588, %v5591
        %v5593 = vrot.slane %v4836, 6
        %v5594 = vrot.slane %v4839, 7
        %v5595 = vor.u32 %v5593, %v5594
        %v5596 = vrot.slane %v5595, 4
        %v5597 = vrot.slane %v5283, 6
        %v5598 = vrot.slane %v4845, 7
        %v5599 = vor.u32 %v5597, %v5598
        %v5600 = vsel %vm2710, %v5596, %v5599
        %v5601 = vrot.slane %v4850, 6
        %v5602 = vrot.slane %v4853, 7
        %v5603 = vor.u32 %v5601, %v5602
        %v5604 = vrot.slane %v5603, 4
        %v5605 = vrot.slane %v5293, 6
        %v5606 = vrot.slane %v4859, 7
        %v5607 = vor.u32 %v5605, %v5606
        %v5608 = vsel %vm2710, %v5604, %v5607
        %v5609 = vrot.slane %v4864, 6
        %v5610 = vrot.slane %v4867, 7
        %v5611 = vor.u32 %v5609, %v5610
        %v5612 = vrot.slane %v5611, 4
        %v5613 = vrot.slane %v5303, 6
        %v5614 = vrot.slane %v4873, 7
        %v5615 = vor.u32 %v5613, %v5614
        %v5616 = vsel %vm2710, %v5612, %v5615
        %v5617 = vrot.slane %v4878, 6
        %v5618 = vrot.slane %v4881, 7
        %v5619 = vor.u32 %v5617, %v5618
        %v5620 = vrot.slane %v5619, 4
        %v5621 = vrot.slane %v5313, 6
        %v5622 = vrot.slane %v4887, 7
        %v5623 = vor.u32 %v5621, %v5622
        %v5624 = vsel %vm2710, %v5620, %v5623
        %v5625 = vrot.slane %v4892, 6
        %v5626 = vrot.slane %v4895, 7
        %v5627 = vor.u32 %v5625, %v5626
        %v5628 = vrot.slane %v5627, 4
        %v5629 = vrot.slane %v5323, 6
        %v5630 = vrot.slane %v4901, 7
        %v5631 = vor.u32 %v5629, %v5630
        %v5632 = vsel %vm2710, %v5628, %v5631
        %v5633 = vrot.slane %v4906, 6
        %v5634 = vrot.slane %v4909, 7
        %v5635 = vor.u32 %v5633, %v5634
        %v5636 = vrot.slane %v5635, 4
        %v5637 = vrot.slane %v5333, 6
        %v5638 = vrot.slane %v4915, 7
        %v5639 = vor.u32 %v5637, %v5638
        %v5640 = vsel %vm2710, %v5636, %v5639
        %v5641 = vrot.slane %v4920, 6
        %v5642 = vrot.slane %v4923, 7
        %v5643 = vor.u32 %v5641, %v5642
        %v5644 = vrot.slane %v5643, 4
        %v5645 = vrot.slane %v5343, 6
        %v5646 = vrot.slane %v4929, 7
        %v5647 = vor.u32 %v5645, %v5646
        %v5648 = vsel %vm2710, %v5644, %v5647
        %s5649 = scalar_lea.vmem [#allocation26], 20
        %v5650 = vld [vmem:[%s5649] sm:$0xf]
        %v5651 = vunpack.c.l.b16 %v5592
        %v5652 = vunpack.c.l.b16 %v5600
        %v5653 = vunpack.c.l.b16 %v5608
        %v5654 = vunpack.c.l.b16 %v5616
        %v5655 = vunpack.c.l.b16 %v5624
        %v5656 = vunpack.c.l.b16 %v5632
        %v5657 = vunpack.c.l.b16 %v5640
        %v5658 = vunpack.c.l.b16 %v5648
        %v5659 = vpack.c.b16 %v5652, %v5651
        %v5660 = vpack.c.b16 %v5654, %v5653
        %v5661 = vpack.c.b16 %v5656, %v5655
        %v5662 = vpack.c.b16 %v5658, %v5657
        %v5664 = vsel %vm990, %v5659, 0
        %v5667 = vsel %vm990, %v5660, 0
        %v5670 = vsel %vm990, %v5661, 0
        %v5673 = vsel %vm990, %v5662, 0
        %v5676 = vsel %vm1003, %v5650, 0
        %5678 = vmatprep.subr.bf16.mxu0 0
        %5679 = vmatpush1.bf16.msra.mxu0 %v5676
        %5680 = vmatprep.subr.bf16.mxu0 0
        %5681 = vmatpush1.bf16.msra.mxu0 0
        %5682 = vmatprep.subr.bf16.mxu0 0
        %5683 = vmatpush1.bf16.msra.mxu0 0
        %5684 = vmatprep.subr.bf16.mxu0 0
        %5685 = vmatpush1.bf16.msra.mxu0 0
        %5686 = vmatprep.subr.bf16.mxu0 0
        %5687 = vmatpush1.bf16.msra.mxu0 0
        %5688 = vmatprep.subr.bf16.mxu0 0
        %5689 = vmatpush1.bf16.msra.mxu0 0
        %5690 = vmatprep.subr.bf16.mxu0 0
        %5691 = vmatpush1.bf16.msra.mxu0 0
        %5692 = vmatprep.subr.bf16.mxu0 0
        %5693 = vmatpush1.bf16.msra.mxu0 0
        %5694 = vmatprep.subr.bf16.mxu0 0
        %5695 = vmatpush1.bf16.msra.mxu0 0
        %5696 = vmatprep.subr.bf16.mxu0 0
        %5697 = vmatpush1.bf16.msra.mxu0 0
        %5698 = vmatprep.subr.bf16.mxu0 0
        %5699 = vmatpush1.bf16.msra.mxu0 0
        %5700 = vmatprep.subr.bf16.mxu0 0
        %5701 = vmatpush1.bf16.msra.mxu0 0
        %5702 = vmatprep.subr.bf16.mxu0 0
        %5703 = vmatpush1.bf16.msra.mxu0 0
        %5704 = vmatprep.subr.bf16.mxu0 0
        %5705 = vmatpush1.bf16.msra.mxu0 0
        %5706 = vmatprep.subr.bf16.mxu0 0
        %5707 = vmatpush1.bf16.msra.mxu0 0
        %5708 = vmatprep.subr.bf16.mxu0 0
        %5709 = vmatpush1.bf16.msra.mxu0 0
        %5710 = vmatprep.mubr.bf16.mxu0 0
        %5711 = vmatmul.mubr.bf16.gmra.mrb[0].mxu0 %v5664
        %v5712 = vpop.f32.mrb[0].mxu0
        %v5713 = vadd.f32 0.0, %v5712
        %v5714 = vpop.f32.mrb[0].mxu0
        %v5715 = vpop.f32.mrb[0].mxu0
        %v5716 = vadd.f32 0.0, %v5715
        %v5717 = vpop.f32.mrb[0].mxu0
        %5718 = vmatprep.mubr.bf16.mxu0 0
        %5719 = vmatmul.mubr.bf16.gmra.mrb[0].mxu0 %v5667
        %v5720 = vpop.f32.mrb[0].mxu0
        %v5721 = vadd.f32 0.0, %v5720
        %v5722 = vpop.f32.mrb[0].mxu0
        %v5723 = vpop.f32.mrb[0].mxu0
        %v5724 = vadd.f32 0.0, %v5723
        %v5725 = vpop.f32.mrb[0].mxu0
        %5726 = vmatprep.mubr.bf16.mxu0 0
        %5727 = vmatmul.mubr.bf16.gmra.mrb[0].mxu0 %v5670
        %v5728 = vpop.f32.mrb[0].mxu0
        %v5729 = vadd.f32 0.0, %v5728
        %v5730 = vpop.f32.mrb[0].mxu0
        %v5731 = vpop.f32.mrb[0].mxu0
        %v5732 = vadd.f32 0.0, %v5731
        %v5733 = vpop.f32.mrb[0].mxu0
        %5734 = vmatprep.mubr.bf16.mxu0 0
        %5735 = vmatmul.mubr.bf16.gmra.mrb[0].mxu0 %v5673
        %v5736 = vpop.f32.mrb[0].mxu0
        %v5737 = vadd.f32 0.0, %v5736
        %v5738 = vpop.f32.mrb[0].mxu0
        %v5739 = vpop.f32.mrb[0].mxu0
        %v5740 = vadd.f32 0.0, %v5739
        %v5741 = vpop.f32.mrb[0].mxu0
        %5742 = vdwg.mxu0
        %v5743 = vadd.f32 %v5577, %v5713
        %v5744 = vadd.f32 %v5578, %v5716
        %v5745 = vadd.f32 %v5579, %v5721
        %v5746 = vadd.f32 %v5580, %v5724
        %v5747 = vadd.f32 %v5581, %v5729
        %v5748 = vadd.f32 %v5582, %v5732
        %v5749 = vadd.f32 %v5583, %v5737
        %v5750 = vadd.f32 %v5584, %v5740
        %v5751 = vrot.slane %v4804, 7
        %v5752 = vrot.slane %v5751, 4
        %v5753 = vrot.slane %v4805, 7
        %v5754 = vsel %vm2879, %v5752, %v5753
        %v5755 = vrot.slane %v4806, 7
        %v5756 = vrot.slane %v5755, 4
        %v5757 = vrot.slane %v4807, 7
        %v5758 = vsel %vm2879, %v5756, %v5757
        %v5759 = vrot.slane %v4808, 7
        %v5760 = vrot.slane %v5759, 4
        %v5761 = vrot.slane %v4809, 7
        %v5762 = vsel %vm2879, %v5760, %v5761
        %v5763 = vrot.slane %v4810, 7
        %v5764 = vrot.slane %v5763, 4
        %v5765 = vrot.slane %v4811, 7
        %v5766 = vsel %vm2879, %v5764, %v5765
        %v5767 = vrot.slane %v4812, 7
        %v5768 = vrot.slane %v5767, 4
        %v5769 = vrot.slane %v4813, 7
        %v5770 = vsel %vm2879, %v5768, %v5769
        %v5771 = vrot.slane %v4814, 7
        %v5772 = vrot.slane %v5771, 4
        %v5773 = vrot.slane %v4815, 7
        %v5774 = vsel %vm2879, %v5772, %v5773
        %v5775 = vrot.slane %v4816, 7
        %v5776 = vrot.slane %v5775, 4
        %v5777 = vrot.slane %v4817, 7
        %v5778 = vsel %vm2879, %v5776, %v5777
        %v5779 = vrot.slane %v4818, 7
        %v5780 = vrot.slane %v5779, 4
        %v5781 = vrot.slane %v4819, 7
        %v5782 = vsel %vm2879, %v5780, %v5781
        %s5783 = scalar_lea.vmem [#allocation26], 24
        %v5784 = vld [vmem:[%s5783] sm:$0xf]
        %v5785 = vunpack.c.l.b16 %v5754
        %v5786 = vunpack.c.l.b16 %v5758
        %v5787 = vunpack.c.l.b16 %v5762
        %v5788 = vunpack.c.l.b16 %v5766
        %v5789 = vunpack.c.l.b16 %v5770
        %v5790 = vunpack.c.l.b16 %v5774
        %v5791 = vunpack.c.l.b16 %v5778
        %v5792 = vunpack.c.l.b16 %v5782
        %v5793 = vpack.c.b16 %v5786, %v5785
        %v5794 = vpack.c.b16 %v5788, %v5787
        %v5795 = vpack.c.b16 %v5790, %v5789
        %v5796 = vpack.c.b16 %v5792, %v5791
        %v5798 = vsel %vm990, %v5793, 0
        %v5801 = vsel %vm990, %v5794, 0
        %v5804 = vsel %vm990, %v5795, 0
        %v5807 = vsel %vm990, %v5796, 0
        %v5810 = vsel %vm1003, %v5784, 0
        %5812 = vmatprep.subr.bf16.mxu0 0
        %5813 = vmatpush1.bf16.msra.mxu0 %v5810
        %5814 = vmatprep.subr.bf16.mxu0 0
        %5815 = vmatpush1.bf16.msra.mxu0 0
        %5816 = vmatprep.subr.bf16.mxu0 0
        %5817 = vmatpush1.bf16.msra.mxu0 0
        %5818 = vmatprep.subr.bf16.mxu0 0
        %5819 = vmatpush1.bf16.msra.mxu0 0
        %5820 = vmatprep.subr.bf16.mxu0 0
        %5821 = vmatpush1.bf16.msra.mxu0 0
        %5822 = vmatprep.subr.bf16.mxu0 0
        %5823 = vmatpush1.bf16.msra.mxu0 0
        %5824 = vmatprep.subr.bf16.mxu0 0
        %5825 = vmatpush1.bf16.msra.mxu0 0
        %5826 = vmatprep.subr.bf16.mxu0 0
        %5827 = vmatpush1.bf16.msra.mxu0 0
        %5828 = vmatprep.subr.bf16.mxu0 0
        %5829 = vmatpush1.bf16.msra.mxu0 0
        %5830 = vmatprep.subr.bf16.mxu0 0
        %5831 = vmatpush1.bf16.msra.mxu0 0
        %5832 = vmatprep.subr.bf16.mxu0 0
        %5833 = vmatpush1.bf16.msra.mxu0 0
        %5834 = vmatprep.subr.bf16.mxu0 0
        %5835 = vmatpush1.bf16.msra.mxu0 0
        %5836 = vmatprep.subr.bf16.mxu0 0
        %5837 = vmatpush1.bf16.msra.mxu0 0
        %5838 = vmatprep.subr.bf16.mxu0 0
        %5839 = vmatpush1.bf16.msra.mxu0 0
        %5840 = vmatprep.subr.bf16.mxu0 0
        %5841 = vmatpush1.bf16.msra.mxu0 0
        %5842 = vmatprep.subr.bf16.mxu0 0
        %5843 = vmatpush1.bf16.msra.mxu0 0
        %5844 = vmatprep.mubr.bf16.mxu0 0
        %5845 = vmatmul.mubr.bf16.gmra.mrb[0].mxu0 %v5798
        %v5846 = vpop.f32.mrb[0].mxu0
        %v5847 = vadd.f32 0.0, %v5846
        %v5848 = vpop.f32.mrb[0].mxu0
        %v5849 = vpop.f32.mrb[0].mxu0
        %v5850 = vadd.f32 0.0, %v5849
        %v5851 = vpop.f32.mrb[0].mxu0
        %5852 = vmatprep.mubr.bf16.mxu0 0
        %5853 = vmatmul.mubr.bf16.gmra.mrb[0].mxu0 %v5801
        %v5854 = vpop.f32.mrb[0].mxu0
        %v5855 = vadd.f32 0.0, %v5854
        %v5856 = vpop.f32.mrb[0].mxu0
        %v5857 = vpop.f32.mrb[0].mxu0
        %v5858 = vadd.f32 0.0, %v5857
        %v5859 = vpop.f32.mrb[0].mxu0
        %5860 = vmatprep.mubr.bf16.mxu0 0
        %5861 = vmatmul.mubr.bf16.gmra.mrb[0].mxu0 %v5804
        %v5862 = vpop.f32.mrb[0].mxu0
        %v5863 = vadd.f32 0.0, %v5862
        %v5864 = vpop.f32.mrb[0].mxu0
        %v5865 = vpop.f32.mrb[0].mxu0
        %v5866 = vadd.f32 0.0, %v5865
        %v5867 = vpop.f32.mrb[0].mxu0
        %5868 = vmatprep.mubr.bf16.mxu0 0
        %5869 = vmatmul.mubr.bf16.gmra.mrb[0].mxu0 %v5807
        %v5870 = vpop.f32.mrb[0].mxu0
        %v5871 = vadd.f32 0.0, %v5870
        %v5872 = vpop.f32.mrb[0].mxu0
        %v5873 = vpop.f32.mrb[0].mxu0
        %v5874 = vadd.f32 0.0, %v5873
        %v5875 = vpop.f32.mrb[0].mxu0
        %5876 = vdwg.mxu0
        %v5877 = vadd.f32 %v5743, %v5847
        %v5878 = vadd.f32 %v5744, %v5850
        %v5879 = vadd.f32 %v5745, %v5855
        %v5880 = vadd.f32 %v5746, %v5858
        %v5881 = vadd.f32 %v5747, %v5863
        %v5882 = vadd.f32 %v5748, %v5866
        %v5883 = vadd.f32 %v5749, %v5871
        %v5884 = vadd.f32 %v5750, %v5874
        %v5885 = vld [vmem:[#allocation28] sm:$0x1]
        %v5887 = vlaneseq
        %v5888 = vshrl.u32 %v5887, 7
        %v5889 = vsub.s32 0, %v5888
        %v5890 = vrot.slane %v5885, %v5889
        %v5892 = vadd.f32 %v5877, %v5890
        %v5893 = vadd.f32 %v5878, %v5890
        %v5894 = vadd.f32 %v5879, %v5890
        %v5895 = vadd.f32 %v5880, %v5890
        %v5896 = vadd.f32 %v5881, %v5890
        %v5897 = vadd.f32 %v5882, %v5890
        %v5898 = vadd.f32 %v5883, %v5890
        %v5899 = vadd.f32 %v5884, %v5890
        %v5900 = vmax.f32 %v5892, 0.0
        %v5901 = vmax.f32 %v5893, 0.0
        %v5902 = vmax.f32 %v5894, 0.0
        %v5903 = vmax.f32 %v5895, 0.0
        %v5904 = vmax.f32 %v5896, 0.0
        %v5905 = vmax.f32 %v5897, 0.0
        %v5906 = vmax.f32 %v5898, 0.0
        %v5907 = vmax.f32 %v5899, 0.0
        %v5908 = vpack.c.bf16 %v5900, %v5900
        %v5909 = vpack.c.bf16 %v5901, %v5901
        %v5910 = vpack.c.bf16 %v5902, %v5902
        %v5911 = vpack.c.bf16 %v5903, %v5903
        %v5912 = vpack.c.bf16 %v5904, %v5904
        %v5913 = vpack.c.bf16 %v5905, %v5905
        %v5914 = vpack.c.bf16 %v5906, %v5906
        %v5915 = vpack.c.bf16 %v5907, %v5907
        %5916 = vst.msk [vmem:[%s3045] sm:$0xf] %vm886, %v5908
        %5917 = vst.msk [vmem:[%s3045 + $0x4] sm:$0xf] %vm886, %v5909
        %5918 = vst.msk [vmem:[%s3045 + $0x8] sm:$0xf] %vm886, %v5910
        %5919 = vst.msk [vmem:[%s3045 + $0xc] sm:$0xf] %vm886, %v5911
        %5920 = vst.msk [vmem:[%s3045 + $0x10] sm:$0xf] %vm886, %v5912
        %5921 = vst.msk [vmem:[%s3045 + $0x14] sm:$0xf] %vm886, %v5913
        %5922 = vst.msk [vmem:[%s3045 + $0x18] sm:$0xf] %vm886, %v5914
        %5923 = vst.msk [vmem:[%s3045 + $0x1c] sm:$0xf] %vm886, %v5915
        %v5924 = vld [vmem:[#allocation3] sm:$0xf]
        %v5925 = vld [vmem:[#allocation3 + $0x4] sm:$0xf]
        %v5926 = vld [vmem:[#allocation3 + $0x8] sm:$0xf]
        %v5927 = vld [vmem:[#allocation3 + $0xc] sm:$0xf]
        %v5928 = vld [vmem:[#allocation3 + $0x10] sm:$0xf]
        %v5929 = vld [vmem:[#allocation3 + $0x14] sm:$0xf]
        %v5930 = vld [vmem:[#allocation3 + $0x18] sm:$0xf]
        %v5931 = vld [vmem:[#allocation3 + $0x1c] sm:$0xf]
        %v5932 = vld [vmem:[#allocation3 + $0x20] sm:$0xf]
        %v5933 = vld [vmem:[#allocation3 + $0x24] sm:$0xf]
        %v5934 = vld [vmem:[#allocation3 + $0x28] sm:$0xf]
        %v5935 = vld [vmem:[#allocation3 + $0x2c] sm:$0xf]
        %v5936 = vld [vmem:[#allocation3 + $0x30] sm:$0xf]
        %v5937 = vld [vmem:[#allocation3 + $0x34] sm:$0xf]
        %v5938 = vld [vmem:[#allocation29] sm:$0xf]
        %s5939 = scalar_lea.vmem [#allocation29], 4
        %v5940 = vld [vmem:[%s5939] sm:$0xf]
        %v5949 = vunpack.c.l.b16 %v5925
        %v5950 = vunpack.c.l.b16 %v5926
        %v5951 = vunpack.c.l.b16 %v5927
        %v5952 = vunpack.c.l.b16 %v5928
        %v5953 = vunpack.c.l.b16 %v5929
        %v5954 = vunpack.c.l.b16 %v5930
        %v5955 = vunpack.c.l.b16 %v5931
        %v5956 = vunpack.c.l.b16 %v5932
        %v5957 = vpack.c.b16 %v5950, %v5949
        %v5958 = vpack.c.b16 %v5952, %v5951
        %v5959 = vpack.c.b16 %v5954, %v5953
        %v5960 = vpack.c.b16 %v5956, %v5955
        %v5962 = vsel %vm990, %v5957, 0
        %v5965 = vsel %vm990, %v5958, 0
        %v5968 = vsel %vm990, %v5959, 0
        %v5971 = vsel %vm990, %v5960, 0
        %v5974 = vsel %vm1003, %v5940, 0
        %5976 = vmatprep.subr.bf16.mxu0 0
        %5977 = vmatpush1.bf16.msra.mxu0 %v5974
        %5978 = vmatprep.subr.bf16.mxu0 0
        %5979 = vmatpush1.bf16.msra.mxu0 0
        %5980 = vmatprep.subr.bf16.mxu0 0
        %5981 = vmatpush1.bf16.msra.mxu0 0
        %5982 = vmatprep.subr.bf16.mxu0 0
        %5983 = vmatpush1.bf16.msra.mxu0 0
        %5984 = vmatprep.subr.bf16.mxu0 0
        %5985 = vmatpush1.bf16.msra.mxu0 0
        %5986 = vmatprep.subr.bf16.mxu0 0
        %5987 = vmatpush1.bf16.msra.mxu0 0
        %5988 = vmatprep.subr.bf16.mxu0 0
        %5989 = vmatpush1.bf16.msra.mxu0 0
        %5990 = vmatprep.subr.bf16.mxu0 0
        %5991 = vmatpush1.bf16.msra.mxu0 0
        %5992 = vmatprep.subr.bf16.mxu0 0
        %5993 = vmatpush1.bf16.msra.mxu0 0
        %5994 = vmatprep.subr.bf16.mxu0 0
        %5995 = vmatpush1.bf16.msra.mxu0 0
        %5996 = vmatprep.subr.bf16.mxu0 0
        %5997 = vmatpush1.bf16.msra.mxu0 0
        %5998 = vmatprep.subr.bf16.mxu0 0
        %5999 = vmatpush1.bf16.msra.mxu0 0
        %6000 = vmatprep.subr.bf16.mxu0 0
        %6001 = vmatpush1.bf16.msra.mxu0 0
        %6002 = vmatprep.subr.bf16.mxu0 0
        %6003 = vmatpush1.bf16.msra.mxu0 0
        %6004 = vmatprep.subr.bf16.mxu0 0
        %6005 = vmatpush1.bf16.msra.mxu0 0
        %6006 = vmatprep.subr.bf16.mxu0 0
        %6007 = vmatpush1.bf16.msra.mxu0 0
        %6008 = vmatprep.mubr.bf16.mxu0 0
        %6009 = vmatmul.mubr.bf16.gmra.mrb[0].mxu0 %v5962
        %v6010 = vpop.f32.mrb[0].mxu0
        %v6011 = vadd.f32 0.0, %v6010
        %v6012 = vpop.f32.mrb[0].mxu0
        %v6013 = vpop.f32.mrb[0].mxu0
        %v6014 = vadd.f32 0.0, %v6013
        %v6015 = vpop.f32.mrb[0].mxu0
        %6016 = vmatprep.mubr.bf16.mxu0 0
        %6017 = vmatmul.mubr.bf16.gmra.mrb[0].mxu0 %v5965
        %v6018 = vpop.f32.mrb[0].mxu0
        %v6019 = vadd.f32 0.0, %v6018
        %v6020 = vpop.f32.mrb[0].mxu0
        %v6021 = vpop.f32.mrb[0].mxu0
        %v6022 = vadd.f32 0.0, %v6021
        %v6023 = vpop.f32.mrb[0].mxu0
        %6024 = vmatprep.mubr.bf16.mxu0 0
        %6025 = vmatmul.mubr.bf16.gmra.mrb[0].mxu0 %v5968
        %v6026 = vpop.f32.mrb[0].mxu0
        %v6027 = vadd.f32 0.0, %v6026
        %v6028 = vpop.f32.mrb[0].mxu0
        %v6029 = vpop.f32.mrb[0].mxu0
        %v6030 = vadd.f32 0.0, %v6029
        %v6031 = vpop.f32.mrb[0].mxu0
        %6032 = vmatprep.mubr.bf16.mxu0 0
        %6033 = vmatmul.mubr.bf16.gmra.mrb[0].mxu0 %v5971
        %v6034 = vpop.f32.mrb[0].mxu0
        %v6035 = vadd.f32 0.0, %v6034
        %v6036 = vpop.f32.mrb[0].mxu0
        %v6037 = vpop.f32.mrb[0].mxu0
        %v6038 = vadd.f32 0.0, %v6037
        %v6039 = vpop.f32.mrb[0].mxu0
        %6040 = vdwg.mxu0
        %v6042 = vunpack.c.l.b16 %v5924
        %v6043 = vpack.c.b16 %v5949, %v6042
        %v6044 = vpack.c.b16 %v5951, %v5950
        %v6045 = vpack.c.b16 %v5953, %v5952
        %v6046 = vpack.c.b16 %v5955, %v5954
        %v6048 = vsel %vm990, %v6043, 0
        %v6051 = vsel %vm990, %v6044, 0
        %v6054 = vsel %vm990, %v6045, 0
        %v6057 = vsel %vm990, %v6046, 0
        %v6060 = vsel %vm1003, %v5938, 0
        %6062 = vmatprep.subr.bf16.mxu0 0
        %6063 = vmatpush1.bf16.msra.mxu0 %v6060
        %6064 = vmatprep.subr.bf16.mxu0 0
        %6065 = vmatpush1.bf16.msra.mxu0 0
        %6066 = vmatprep.subr.bf16.mxu0 0
        %6067 = vmatpush1.bf16.msra.mxu0 0
        %6068 = vmatprep.subr.bf16.mxu0 0
        %6069 = vmatpush1.bf16.msra.mxu0 0
        %6070 = vmatprep.subr.bf16.mxu0 0
        %6071 = vmatpush1.bf16.msra.mxu0 0
        %6072 = vmatprep.subr.bf16.mxu0 0
        %6073 = vmatpush1.bf16.msra.mxu0 0
        %6074 = vmatprep.subr.bf16.mxu0 0
        %6075 = vmatpush1.bf16.msra.mxu0 0
        %6076 = vmatprep.subr.bf16.mxu0 0
        %6077 = vmatpush1.bf16.msra.mxu0 0
        %6078 = vmatprep.subr.bf16.mxu0 0
        %6079 = vmatpush1.bf16.msra.mxu0 0
        %6080 = vmatprep.subr.bf16.mxu0 0
        %6081 = vmatpush1.bf16.msra.mxu0 0
        %6082 = vmatprep.subr.bf16.mxu0 0
        %6083 = vmatpush1.bf16.msra.mxu0 0
        %6084 = vmatprep.subr.bf16.mxu0 0
        %6085 = vmatpush1.bf16.msra.mxu0 0
        %6086 = vmatprep.subr.bf16.mxu0 0
        %6087 = vmatpush1.bf16.msra.mxu0 0
        %6088 = vmatprep.subr.bf16.mxu0 0
        %6089 = vmatpush1.bf16.msra.mxu0 0
        %6090 = vmatprep.subr.bf16.mxu0 0
        %6091 = vmatpush1.bf16.msra.mxu0 0
        %6092 = vmatprep.subr.bf16.mxu0 0
        %6093 = vmatpush1.bf16.msra.mxu0 0
        %6094 = vmatprep.mubr.bf16.mxu0 0
        %6095 = vmatmul.mubr.bf16.gmra.mrb[0].mxu0 %v6048
        %v6096 = vpop.f32.mrb[0].mxu0
        %v6097 = vadd.f32 %v6011, %v6096
        %v6098 = vpop.f32.mrb[0].mxu0
        %v6099 = vpop.f32.mrb[0].mxu0
        %v6100 = vadd.f32 %v6014, %v6099
        %v6101 = vpop.f32.mrb[0].mxu0
        %6102 = vmatprep.mubr.bf16.mxu0 0
        %6103 = vmatmul.mubr.bf16.gmra.mrb[0].mxu0 %v6051
        %v6104 = vpop.f32.mrb[0].mxu0
        %v6105 = vadd.f32 %v6019, %v6104
        %v6106 = vpop.f32.mrb[0].mxu0
        %v6107 = vpop.f32.mrb[0].mxu0
        %v6108 = vadd.f32 %v6022, %v6107
        %v6109 = vpop.f32.mrb[0].mxu0
        %6110 = vmatprep.mubr.bf16.mxu0 0
        %6111 = vmatmul.mubr.bf16.gmra.mrb[0].mxu0 %v6054
        %v6112 = vpop.f32.mrb[0].mxu0
        %v6113 = vadd.f32 %v6027, %v6112
        %v6114 = vpop.f32.mrb[0].mxu0
        %v6115 = vpop.f32.mrb[0].mxu0
        %v6116 = vadd.f32 %v6030, %v6115
        %v6117 = vpop.f32.mrb[0].mxu0
        %6118 = vmatprep.mubr.bf16.mxu0 0
        %6119 = vmatmul.mubr.bf16.gmra.mrb[0].mxu0 %v6057
        %v6120 = vpop.f32.mrb[0].mxu0
        %v6121 = vadd.f32 %v6035, %v6120
        %v6122 = vpop.f32.mrb[0].mxu0
        %v6123 = vpop.f32.mrb[0].mxu0
        %v6124 = vadd.f32 %v6038, %v6123
        %v6125 = vpop.f32.mrb[0].mxu0
        %6126 = vdwg.mxu0
        %s6127 = scalar_lea.vmem [#allocation29], 8
        %v6128 = vld [vmem:[%s6127] sm:$0xf]
        %v6130 = vunpack.c.l.b16 %v5933
        %v6131 = vpack.c.b16 %v6130, %v5956
        %v6133 = vsel %vm990, %v6131, 0
        %v6136 = vsel %vm1003, %v6128, 0
        %6138 = vmatprep.subr.bf16.mxu0 0
        %6139 = vmatpush1.bf16.msra.mxu0 %v6136
        %6140 = vmatprep.subr.bf16.mxu0 0
        %6141 = vmatpush1.bf16.msra.mxu0 0
        %6142 = vmatprep.subr.bf16.mxu0 0
        %6143 = vmatpush1.bf16.msra.mxu0 0
        %6144 = vmatprep.subr.bf16.mxu0 0
        %6145 = vmatpush1.bf16.msra.mxu0 0
        %6146 = vmatprep.subr.bf16.mxu0 0
        %6147 = vmatpush1.bf16.msra.mxu0 0
        %6148 = vmatprep.subr.bf16.mxu0 0
        %6149 = vmatpush1.bf16.msra.mxu0 0
        %6150 = vmatprep.subr.bf16.mxu0 0
        %6151 = vmatpush1.bf16.msra.mxu0 0
        %6152 = vmatprep.subr.bf16.mxu0 0
        %6153 = vmatpush1.bf16.msra.mxu0 0
        %6154 = vmatprep.subr.bf16.mxu0 0
        %6155 = vmatpush1.bf16.msra.mxu0 0
        %6156 = vmatprep.subr.bf16.mxu0 0
        %6157 = vmatpush1.bf16.msra.mxu0 0
        %6158 = vmatprep.subr.bf16.mxu0 0
        %6159 = vmatpush1.bf16.msra.mxu0 0
        %6160 = vmatprep.subr.bf16.mxu0 0
        %6161 = vmatpush1.bf16.msra.mxu0 0
        %6162 = vmatprep.subr.bf16.mxu0 0
        %6163 = vmatpush1.bf16.msra.mxu0 0
        %6164 = vmatprep.subr.bf16.mxu0 0
        %6165 = vmatpush1.bf16.msra.mxu0 0
        %6166 = vmatprep.subr.bf16.mxu0 0
        %6167 = vmatpush1.bf16.msra.mxu0 0
        %6168 = vmatprep.subr.bf16.mxu0 0
        %6169 = vmatpush1.bf16.msra.mxu0 0
        %6170 = vmatprep.mubr.bf16.mxu0 0
        %6171 = vmatmul.mubr.bf16.gmra.mrb[0].mxu0 %v6051
        %v6172 = vpop.f32.mrb[0].mxu0
        %v6173 = vadd.f32 0.0, %v6172
        %v6174 = vpop.f32.mrb[0].mxu0
        %v6175 = vpop.f32.mrb[0].mxu0
        %v6176 = vadd.f32 0.0, %v6175
        %v6177 = vpop.f32.mrb[0].mxu0
        %6178 = vmatprep.mubr.bf16.mxu0 0
        %6179 = vmatmul.mubr.bf16.gmra.mrb[0].mxu0 %v6054
        %v6180 = vpop.f32.mrb[0].mxu0
        %v6181 = vadd.f32 0.0, %v6180
        %v6182 = vpop.f32.mrb[0].mxu0
        %v6183 = vpop.f32.mrb[0].mxu0
        %v6184 = vadd.f32 0.0, %v6183
        %v6185 = vpop.f32.mrb[0].mxu0
        %6186 = vmatprep.mubr.bf16.mxu0 0
        %6187 = vmatmul.mubr.bf16.gmra.mrb[0].mxu0 %v6057
        %v6188 = vpop.f32.mrb[0].mxu0
        %v6189 = vadd.f32 0.0, %v6188
        %v6190 = vpop.f32.mrb[0].mxu0
        %v6191 = vpop.f32.mrb[0].mxu0
        %v6192 = vadd.f32 0.0, %v6191
        %v6193 = vpop.f32.mrb[0].mxu0
        %6194 = vmatprep.mubr.bf16.mxu0 0
        %6195 = vmatmul.mubr.bf16.gmra.mrb[0].mxu0 %v6133
        %v6196 = vpop.f32.mrb[0].mxu0
        %v6197 = vadd.f32 0.0, %v6196
        %v6198 = vpop.f32.mrb[0].mxu0
        %v6199 = vpop.f32.mrb[0].mxu0
        %v6200 = vadd.f32 0.0, %v6199
        %v6201 = vpop.f32.mrb[0].mxu0
        %6202 = vdwg.mxu0
        %v6203 = vadd.f32 %v6097, %v6173
        %v6204 = vadd.f32 %v6100, %v6176
        %v6205 = vadd.f32 %v6105, %v6181
        %v6206 = vadd.f32 %v6108, %v6184
        %v6207 = vadd.f32 %v6113, %v6189
        %v6208 = vadd.f32 %v6116, %v6192
        %v6209 = vadd.f32 %v6121, %v6197
        %v6210 = vadd.f32 %v6124, %v6200
        %s6211 = scalar_lea.vmem [#allocation29], 12
        %v6212 = vld [vmem:[%s6211] sm:$0xf]
        %v6214 = vunpack.c.l.b16 %v5934
        %v6215 = vpack.c.b16 %v6214, %v6130
        %v6217 = vsel %vm990, %v6215, 0
        %v6220 = vsel %vm1003, %v6212, 0
        %6222 = vmatprep.subr.bf16.mxu0 0
        %6223 = vmatpush1.bf16.msra.mxu0 %v6220
        %6224 = vmatprep.subr.bf16.mxu0 0
        %6225 = vmatpush1.bf16.msra.mxu0 0
        %6226 = vmatprep.subr.bf16.mxu0 0
        %6227 = vmatpush1.bf16.msra.mxu0 0
        %6228 = vmatprep.subr.bf16.mxu0 0
        %6229 = vmatpush1.bf16.msra.mxu0 0
        %6230 = vmatprep.subr.bf16.mxu0 0
        %6231 = vmatpush1.bf16.msra.mxu0 0
        %6232 = vmatprep.subr.bf16.mxu0 0
        %6233 = vmatpush1.bf16.msra.mxu0 0
        %6234 = vmatprep.subr.bf16.mxu0 0
        %6235 = vmatpush1.bf16.msra.mxu0 0
        %6236 = vmatprep.subr.bf16.mxu0 0
        %6237 = vmatpush1.bf16.msra.mxu0 0
        %6238 = vmatprep.subr.bf16.mxu0 0
        %6239 = vmatpush1.bf16.msra.mxu0 0
        %6240 = vmatprep.subr.bf16.mxu0 0
        %6241 = vmatpush1.bf16.msra.mxu0 0
        %6242 = vmatprep.subr.bf16.mxu0 0
        %6243 = vmatpush1.bf16.msra.mxu0 0
        %6244 = vmatprep.subr.bf16.mxu0 0
        %6245 = vmatpush1.bf16.msra.mxu0 0
        %6246 = vmatprep.subr.bf16.mxu0 0
        %6247 = vmatpush1.bf16.msra.mxu0 0
        %6248 = vmatprep.subr.bf16.mxu0 0
        %6249 = vmatpush1.bf16.msra.mxu0 0
        %6250 = vmatprep.subr.bf16.mxu0 0
        %6251 = vmatpush1.bf16.msra.mxu0 0
        %6252 = vmatprep.subr.bf16.mxu0 0
        %6253 = vmatpush1.bf16.msra.mxu0 0
        %6254 = vmatprep.mubr.bf16.mxu0 0
        %6255 = vmatmul.mubr.bf16.gmra.mrb[0].mxu0 %v5965
        %v6256 = vpop.f32.mrb[0].mxu0
        %v6257 = vadd.f32 0.0, %v6256
        %v6258 = vpop.f32.mrb[0].mxu0
        %v6259 = vpop.f32.mrb[0].mxu0
        %v6260 = vadd.f32 0.0, %v6259
        %v6261 = vpop.f32.mrb[0].mxu0
        %6262 = vmatprep.mubr.bf16.mxu0 0
        %6263 = vmatmul.mubr.bf16.gmra.mrb[0].mxu0 %v5968
        %v6264 = vpop.f32.mrb[0].mxu0
        %v6265 = vadd.f32 0.0, %v6264
        %v6266 = vpop.f32.mrb[0].mxu0
        %v6267 = vpop.f32.mrb[0].mxu0
        %v6268 = vadd.f32 0.0, %v6267
        %v6269 = vpop.f32.mrb[0].mxu0
        %6270 = vmatprep.mubr.bf16.mxu0 0
        %6271 = vmatmul.mubr.bf16.gmra.mrb[0].mxu0 %v5971
        %v6272 = vpop.f32.mrb[0].mxu0
        %v6273 = vadd.f32 0.0, %v6272
        %v6274 = vpop.f32.mrb[0].mxu0
        %v6275 = vpop.f32.mrb[0].mxu0
        %v6276 = vadd.f32 0.0, %v6275
        %v6277 = vpop.f32.mrb[0].mxu0
        %6278 = vmatprep.mubr.bf16.mxu0 0
        %6279 = vmatmul.mubr.bf16.gmra.mrb[0].mxu0 %v6217
        %v6280 = vpop.f32.mrb[0].mxu0
        %v6281 = vadd.f32 0.0, %v6280
        %v6282 = vpop.f32.mrb[0].mxu0
        %v6283 = vpop.f32.mrb[0].mxu0
        %v6284 = vadd.f32 0.0, %v6283
        %v6285 = vpop.f32.mrb[0].mxu0
        %6286 = vdwg.mxu0
        %v6287 = vadd.f32 %v6203, %v6257
        %v6288 = vadd.f32 %v6204, %v6260
        %v6289 = vadd.f32 %v6205, %v6265
        %v6290 = vadd.f32 %v6206, %v6268
        %v6291 = vadd.f32 %v6207, %v6273
        %v6292 = vadd.f32 %v6208, %v6276
        %v6293 = vadd.f32 %v6209, %v6281
        %v6294 = vadd.f32 %v6210, %v6284
        %s6295 = scalar_lea.vmem [#allocation29], 16
        %v6296 = vld [vmem:[%s6295] sm:$0xf]
        %v6298 = vunpack.c.l.b16 %v5935
        %v6299 = vpack.c.b16 %v6298, %v6214
        %v6301 = vsel %vm990, %v6299, 0
        %v6304 = vsel %vm1003, %v6296, 0
        %6306 = vmatprep.subr.bf16.mxu0 0
        %6307 = vmatpush1.bf16.msra.mxu0 %v6304
        %6308 = vmatprep.subr.bf16.mxu0 0
        %6309 = vmatpush1.bf16.msra.mxu0 0
        %6310 = vmatprep.subr.bf16.mxu0 0
        %6311 = vmatpush1.bf16.msra.mxu0 0
        %6312 = vmatprep.subr.bf16.mxu0 0
        %6313 = vmatpush1.bf16.msra.mxu0 0
        %6314 = vmatprep.subr.bf16.mxu0 0
        %6315 = vmatpush1.bf16.msra.mxu0 0
        %6316 = vmatprep.subr.bf16.mxu0 0
        %6317 = vmatpush1.bf16.msra.mxu0 0
        %6318 = vmatprep.subr.bf16.mxu0 0
        %6319 = vmatpush1.bf16.msra.mxu0 0
        %6320 = vmatprep.subr.bf16.mxu0 0
        %6321 = vmatpush1.bf16.msra.mxu0 0
        %6322 = vmatprep.subr.bf16.mxu0 0
        %6323 = vmatpush1.bf16.msra.mxu0 0
        %6324 = vmatprep.subr.bf16.mxu0 0
        %6325 = vmatpush1.bf16.msra.mxu0 0
        %6326 = vmatprep.subr.bf16.mxu0 0
        %6327 = vmatpush1.bf16.msra.mxu0 0
        %6328 = vmatprep.subr.bf16.mxu0 0
        %6329 = vmatpush1.bf16.msra.mxu0 0
        %6330 = vmatprep.subr.bf16.mxu0 0
        %6331 = vmatpush1.bf16.msra.mxu0 0
        %6332 = vmatprep.subr.bf16.mxu0 0
        %6333 = vmatpush1.bf16.msra.mxu0 0
        %6334 = vmatprep.subr.bf16.mxu0 0
        %6335 = vmatpush1.bf16.msra.mxu0 0
        %6336 = vmatprep.subr.bf16.mxu0 0
        %6337 = vmatpush1.bf16.msra.mxu0 0
        %6338 = vmatprep.mubr.bf16.mxu0 0
        %6339 = vmatmul.mubr.bf16.gmra.mrb[0].mxu0 %v6054
        %v6340 = vpop.f32.mrb[0].mxu0
        %v6341 = vadd.f32 0.0, %v6340
        %v6342 = vpop.f32.mrb[0].mxu0
        %v6343 = vpop.f32.mrb[0].mxu0
        %v6344 = vadd.f32 0.0, %v6343
        %v6345 = vpop.f32.mrb[0].mxu0
        %6346 = vmatprep.mubr.bf16.mxu0 0
        %6347 = vmatmul.mubr.bf16.gmra.mrb[0].mxu0 %v6057
        %v6348 = vpop.f32.mrb[0].mxu0
        %v6349 = vadd.f32 0.0, %v6348
        %v6350 = vpop.f32.mrb[0].mxu0
        %v6351 = vpop.f32.mrb[0].mxu0
        %v6352 = vadd.f32 0.0, %v6351
        %v6353 = vpop.f32.mrb[0].mxu0
        %6354 = vmatprep.mubr.bf16.mxu0 0
        %6355 = vmatmul.mubr.bf16.gmra.mrb[0].mxu0 %v6133
        %v6356 = vpop.f32.mrb[0].mxu0
        %v6357 = vadd.f32 0.0, %v6356
        %v6358 = vpop.f32.mrb[0].mxu0
        %v6359 = vpop.f32.mrb[0].mxu0
        %v6360 = vadd.f32 0.0, %v6359
        %v6361 = vpop.f32.mrb[0].mxu0
        %6362 = vmatprep.mubr.bf16.mxu0 0
        %6363 = vmatmul.mubr.bf16.gmra.mrb[0].mxu0 %v6301
        %v6364 = vpop.f32.mrb[0].mxu0
        %v6365 = vadd.f32 0.0, %v6364
        %v6366 = vpop.f32.mrb[0].mxu0
        %v6367 = vpop.f32.mrb[0].mxu0
        %v6368 = vadd.f32 0.0, %v6367
        %v6369 = vpop.f32.mrb[0].mxu0
        %6370 = vdwg.mxu0
        %v6371 = vadd.f32 %v6287, %v6341
        %v6372 = vadd.f32 %v6288, %v6344
        %v6373 = vadd.f32 %v6289, %v6349
        %v6374 = vadd.f32 %v6290, %v6352
        %v6375 = vadd.f32 %v6291, %v6357
        %v6376 = vadd.f32 %v6292, %v6360
        %v6377 = vadd.f32 %v6293, %v6365
        %v6378 = vadd.f32 %v6294, %v6368
        %s6379 = scalar_lea.vmem [#allocation29], 20
        %v6380 = vld [vmem:[%s6379] sm:$0xf]
        %v6382 = vunpack.c.l.b16 %v5936
        %v6383 = vpack.c.b16 %v6382, %v6298
        %v6385 = vsel %vm990, %v6383, 0
        %v6388 = vsel %vm1003, %v6380, 0
        %6390 = vmatprep.subr.bf16.mxu0 0
        %6391 = vmatpush1.bf16.msra.mxu0 %v6388
        %6392 = vmatprep.subr.bf16.mxu0 0
        %6393 = vmatpush1.bf16.msra.mxu0 0
        %6394 = vmatprep.subr.bf16.mxu0 0
        %6395 = vmatpush1.bf16.msra.mxu0 0
        %6396 = vmatprep.subr.bf16.mxu0 0
        %6397 = vmatpush1.bf16.msra.mxu0 0
        %6398 = vmatprep.subr.bf16.mxu0 0
        %6399 = vmatpush1.bf16.msra.mxu0 0
        %6400 = vmatprep.subr.bf16.mxu0 0
        %6401 = vmatpush1.bf16.msra.mxu0 0
        %6402 = vmatprep.subr.bf16.mxu0 0
        %6403 = vmatpush1.bf16.msra.mxu0 0
        %6404 = vmatprep.subr.bf16.mxu0 0
        %6405 = vmatpush1.bf16.msra.mxu0 0
        %6406 = vmatprep.subr.bf16.mxu0 0
        %6407 = vmatpush1.bf16.msra.mxu0 0
        %6408 = vmatprep.subr.bf16.mxu0 0
        %6409 = vmatpush1.bf16.msra.mxu0 0
        %6410 = vmatprep.subr.bf16.mxu0 0
        %6411 = vmatpush1.bf16.msra.mxu0 0
        %6412 = vmatprep.subr.bf16.mxu0 0
        %6413 = vmatpush1.bf16.msra.mxu0 0
        %6414 = vmatprep.subr.bf16.mxu0 0
        %6415 = vmatpush1.bf16.msra.mxu0 0
        %6416 = vmatprep.subr.bf16.mxu0 0
        %6417 = vmatpush1.bf16.msra.mxu0 0
        %6418 = vmatprep.subr.bf16.mxu0 0
        %6419 = vmatpush1.bf16.msra.mxu0 0
        %6420 = vmatprep.subr.bf16.mxu0 0
        %6421 = vmatpush1.bf16.msra.mxu0 0
        %6422 = vmatprep.mubr.bf16.mxu0 0
        %6423 = vmatmul.mubr.bf16.gmra.mrb[0].mxu0 %v5968
        %v6424 = vpop.f32.mrb[0].mxu0
        %v6425 = vadd.f32 0.0, %v6424
        %v6426 = vpop.f32.mrb[0].mxu0
        %v6427 = vpop.f32.mrb[0].mxu0
        %v6428 = vadd.f32 0.0, %v6427
        %v6429 = vpop.f32.mrb[0].mxu0
        %6430 = vmatprep.mubr.bf16.mxu0 0
        %6431 = vmatmul.mubr.bf16.gmra.mrb[0].mxu0 %v5971
        %v6432 = vpop.f32.mrb[0].mxu0
        %v6433 = vadd.f32 0.0, %v6432
        %v6434 = vpop.f32.mrb[0].mxu0
        %v6435 = vpop.f32.mrb[0].mxu0
        %v6436 = vadd.f32 0.0, %v6435
        %v6437 = vpop.f32.mrb[0].mxu0
        %6438 = vmatprep.mubr.bf16.mxu0 0
        %6439 = vmatmul.mubr.bf16.gmra.mrb[0].mxu0 %v6217
        %v6440 = vpop.f32.mrb[0].mxu0
        %v6441 = vadd.f32 0.0, %v6440
        %v6442 = vpop.f32.mrb[0].mxu0
        %v6443 = vpop.f32.mrb[0].mxu0
        %v6444 = vadd.f32 0.0, %v6443
        %v6445 = vpop.f32.mrb[0].mxu0
        %6446 = vmatprep.mubr.bf16.mxu0 0
        %6447 = vmatmul.mubr.bf16.gmra.mrb[0].mxu0 %v6385
        %v6448 = vpop.f32.mrb[0].mxu0
        %v6449 = vadd.f32 0.0, %v6448
        %v6450 = vpop.f32.mrb[0].mxu0
        %v6451 = vpop.f32.mrb[0].mxu0
        %v6452 = vadd.f32 0.0, %v6451
        %v6453 = vpop.f32.mrb[0].mxu0
        %6454 = vdwg.mxu0
        %v6455 = vadd.f32 %v6371, %v6425
        %v6456 = vadd.f32 %v6372, %v6428
        %v6457 = vadd.f32 %v6373, %v6433
        %v6458 = vadd.f32 %v6374, %v6436
        %v6459 = vadd.f32 %v6375, %v6441
        %v6460 = vadd.f32 %v6376, %v6444
        %v6461 = vadd.f32 %v6377, %v6449
        %v6462 = vadd.f32 %v6378, %v6452
        %s6463 = scalar_lea.vmem [#allocation29], 24
        %v6464 = vld [vmem:[%s6463] sm:$0xf]
        %v6466 = vunpack.c.l.b16 %v5937
        %v6467 = vpack.c.b16 %v6466, %v6382
        %v6469 = vsel %vm990, %v6467, 0
        %v6472 = vsel %vm1003, %v6464, 0
        %6474 = vmatprep.subr.bf16.mxu0 0
        %6475 = vmatpush1.bf16.msra.mxu0 %v6472
        %6476 = vmatprep.subr.bf16.mxu0 0
        %6477 = vmatpush1.bf16.msra.mxu0 0
        %6478 = vmatprep.subr.bf16.mxu0 0
        %6479 = vmatpush1.bf16.msra.mxu0 0
        %6480 = vmatprep.subr.bf16.mxu0 0
        %6481 = vmatpush1.bf16.msra.mxu0 0
        %6482 = vmatprep.subr.bf16.mxu0 0
        %6483 = vmatpush1.bf16.msra.mxu0 0
        %6484 = vmatprep.subr.bf16.mxu0 0
        %6485 = vmatpush1.bf16.msra.mxu0 0
        %6486 = vmatprep.subr.bf16.mxu0 0
        %6487 = vmatpush1.bf16.msra.mxu0 0
        %6488 = vmatprep.subr.bf16.mxu0 0
        %6489 = vmatpush1.bf16.msra.mxu0 0
        %6490 = vmatprep.subr.bf16.mxu0 0
        %6491 = vmatpush1.bf16.msra.mxu0 0
        %6492 = vmatprep.subr.bf16.mxu0 0
        %6493 = vmatpush1.bf16.msra.mxu0 0
        %6494 = vmatprep.subr.bf16.mxu0 0
        %6495 = vmatpush1.bf16.msra.mxu0 0
        %6496 = vmatprep.subr.bf16.mxu0 0
        %6497 = vmatpush1.bf16.msra.mxu0 0
        %6498 = vmatprep.subr.bf16.mxu0 0
        %6499 = vmatpush1.bf16.msra.mxu0 0
        %6500 = vmatprep.subr.bf16.mxu0 0
        %6501 = vmatpush1.bf16.msra.mxu0 0
        %6502 = vmatprep.subr.bf16.mxu0 0
        %6503 = vmatpush1.bf16.msra.mxu0 0
        %6504 = vmatprep.subr.bf16.mxu0 0
        %6505 = vmatpush1.bf16.msra.mxu0 0
        %6506 = vmatprep.mubr.bf16.mxu0 0
        %6507 = vmatmul.mubr.bf16.gmra.mrb[0].mxu0 %v6057
        %v6508 = vpop.f32.mrb[0].mxu0
        %v6509 = vadd.f32 0.0, %v6508
        %v6510 = vpop.f32.mrb[0].mxu0
        %v6511 = vpop.f32.mrb[0].mxu0
        %v6512 = vadd.f32 0.0, %v6511
        %v6513 = vpop.f32.mrb[0].mxu0
        %6514 = vmatprep.mubr.bf16.mxu0 0
        %6515 = vmatmul.mubr.bf16.gmra.mrb[0].mxu0 %v6133
        %v6516 = vpop.f32.mrb[0].mxu0
        %v6517 = vadd.f32 0.0, %v6516
        %v6518 = vpop.f32.mrb[0].mxu0
        %v6519 = vpop.f32.mrb[0].mxu0
        %v6520 = vadd.f32 0.0, %v6519
        %v6521 = vpop.f32.mrb[0].mxu0
        %6522 = vmatprep.mubr.bf16.mxu0 0
        %6523 = vmatmul.mubr.bf16.gmra.mrb[0].mxu0 %v6301
        %v6524 = vpop.f32.mrb[0].mxu0
        %v6525 = vadd.f32 0.0, %v6524
        %v6526 = vpop.f32.mrb[0].mxu0
        %v6527 = vpop.f32.mrb[0].mxu0
        %v6528 = vadd.f32 0.0, %v6527
        %v6529 = vpop.f32.mrb[0].mxu0
        %6530 = vmatprep.mubr.bf16.mxu0 0
        %6531 = vmatmul.mubr.bf16.gmra.mrb[0].mxu0 %v6469
        %v6532 = vpop.f32.mrb[0].mxu0
        %v6533 = vadd.f32 0.0, %v6532
        %v6534 = vpop.f32.mrb[0].mxu0
        %v6535 = vpop.f32.mrb[0].mxu0
        %v6536 = vadd.f32 0.0, %v6535
        %v6537 = vpop.f32.mrb[0].mxu0
        %6538 = vdwg.mxu0
        %v6539 = vadd.f32 %v6455, %v6509
        %v6540 = vadd.f32 %v6456, %v6512
        %v6541 = vadd.f32 %v6457, %v6517
        %v6542 = vadd.f32 %v6458, %v6520
        %v6543 = vadd.f32 %v6459, %v6525
        %v6544 = vadd.f32 %v6460, %v6528
        %v6545 = vadd.f32 %v6461, %v6533
        %v6546 = vadd.f32 %v6462, %v6536
        %v6547 = vld [vmem:[#allocation31] sm:$0x1]
        %v6549 = vlaneseq
        %v6550 = vshrl.u32 %v6549, 7
        %v6551 = vsub.s32 0, %v6550
        %v6552 = vrot.slane %v6547, %v6551
        %v6554 = vadd.f32 %v6539, %v6552
        %v6555 = vadd.f32 %v6540, %v6552
        %v6556 = vadd.f32 %v6541, %v6552
        %v6557 = vadd.f32 %v6542, %v6552
        %v6558 = vadd.f32 %v6543, %v6552
        %v6559 = vadd.f32 %v6544, %v6552
        %v6560 = vadd.f32 %v6545, %v6552
        %v6561 = vadd.f32 %v6546, %v6552
        %v6562 = vmax.f32 %v6554, 0.0
        %v6563 = vmax.f32 %v6555, 0.0
        %v6564 = vmax.f32 %v6556, 0.0
        %v6565 = vmax.f32 %v6557, 0.0
        %v6566 = vmax.f32 %v6558, 0.0
        %v6567 = vmax.f32 %v6559, 0.0
        %v6568 = vmax.f32 %v6560, 0.0
        %v6569 = vmax.f32 %v6561, 0.0
        %v6570 = vpack.c.bf16 %v6562, %v6562
        %v6571 = vpack.c.bf16 %v6563, %v6563
        %v6572 = vpack.c.bf16 %v6564, %v6564
        %v6573 = vpack.c.bf16 %v6565, %v6565
        %v6574 = vpack.c.bf16 %v6566, %v6566
        %v6575 = vpack.c.bf16 %v6567, %v6567
        %v6576 = vpack.c.bf16 %v6568, %v6568
        %v6577 = vpack.c.bf16 %v6569, %v6569
        %v6586 = vunpack.c.l.b16 %v6570
        %v6587 = vunpack.c.l.b16 %v6571
        %v6588 = vunpack.c.l.b16 %v6572
        %v6589 = vunpack.c.l.b16 %v6573
        %v6590 = vunpack.c.l.b16 %v6574
        %v6591 = vunpack.c.l.b16 %v6575
        %v6592 = vunpack.c.l.b16 %v6576
        %v6593 = vunpack.c.l.b16 %v6577
        %v6594 = vpack.c.b16 %v6586, %v6586
        %v6595 = vpack.c.b16 %v6587, %v6587
        %v6596 = vpack.c.b16 %v6588, %v6588
        %v6597 = vpack.c.b16 %v6589, %v6589
        %v6598 = vpack.c.b16 %v6590, %v6590
        %v6599 = vpack.c.b16 %v6591, %v6591
        %v6600 = vpack.c.b16 %v6592, %v6592
        %v6601 = vpack.c.b16 %v6593, %v6593
        %v6603 = vshrl.u32 %v6594, 16
        %v6605 = vrot.slane %v6603, 6
        %v6606 = vshll.u32 %v6594, 16
        %v6608 = vrot.slane %v6606, 7
        %v6609 = vor.u32 %v6605, %v6608
        %v6610 = vrot.slane %v6609, 4
        %v6612 = vshrl.u32 %v6595, 16
        %v6614 = vrot.slane %v6612, 6
        %v6615 = vshll.u32 %v6595, 16
        %v6617 = vrot.slane %v6615, 7
        %v6618 = vor.u32 %v6614, %v6617
        %v6619 = vrot.slane %v6618, 4
        %v6621 = vshrl.u32 %v6596, 16
        %v6623 = vrot.slane %v6621, 6
        %v6624 = vshll.u32 %v6596, 16
        %v6626 = vrot.slane %v6624, 7
        %v6627 = vor.u32 %v6623, %v6626
        %v6628 = vrot.slane %v6627, 4
        %v6630 = vshrl.u32 %v6597, 16
        %v6632 = vrot.slane %v6630, 6
        %v6633 = vshll.u32 %v6597, 16
        %v6635 = vrot.slane %v6633, 7
        %v6636 = vor.u32 %v6632, %v6635
        %v6637 = vrot.slane %v6636, 4
        %v6639 = vshrl.u32 %v6598, 16
        %v6641 = vrot.slane %v6639, 6
        %v6642 = vshll.u32 %v6598, 16
        %v6644 = vrot.slane %v6642, 7
        %v6645 = vor.u32 %v6641, %v6644
        %v6646 = vrot.slane %v6645, 4
        %v6648 = vshrl.u32 %v6599, 16
        %v6650 = vrot.slane %v6648, 6
        %v6651 = vshll.u32 %v6599, 16
        %v6653 = vrot.slane %v6651, 7
        %v6654 = vor.u32 %v6650, %v6653
        %v6655 = vrot.slane %v6654, 4
        %v6657 = vshrl.u32 %v6600, 16
        %v6659 = vrot.slane %v6657, 6
        %v6660 = vshll.u32 %v6600, 16
        %v6662 = vrot.slane %v6660, 7
        %v6663 = vor.u32 %v6659, %v6662
        %v6664 = vrot.slane %v6663, 4
        %v6666 = vshrl.u32 %v6601, 16
        %v6668 = vrot.slane %v6666, 6
        %v6669 = vshll.u32 %v6601, 16
        %v6671 = vrot.slane %v6669, 7
        %v6672 = vor.u32 %v6668, %v6671
        %v6673 = vrot.slane %v6672, 4
        %v6690 = vld [vmem:[#allocation2] sm:$0xe]
        %v6691 = vsel %vm1864, %v6609, %v6690
        %6692 = vst [vmem:[#allocation2] sm:$0xe] %v6691
        %v6693 = vld [vmem:[#allocation2 + $0x4] sm:$0x3]
        %v6694 = vsel %vm1870, %v6610, %v6693
        %6695 = vst [vmem:[#allocation2 + $0x4] sm:$0x3] %v6694
        %v6696 = vld [vmem:[#allocation2 + $0x8] sm:$0xe]
        %v6697 = vsel %vm1864, %v6618, %v6696
        %6698 = vst [vmem:[#allocation2 + $0x8] sm:$0xe] %v6697
        %v6699 = vld [vmem:[#allocation2 + $0xc] sm:$0x3]
        %v6700 = vsel %vm1870, %v6619, %v6699
        %6701 = vst [vmem:[#allocation2 + $0xc] sm:$0x3] %v6700
        %v6702 = vld [vmem:[#allocation2 + $0x10] sm:$0xe]
        %v6703 = vsel %vm1864, %v6627, %v6702
        %6704 = vst [vmem:[#allocation2 + $0x10] sm:$0xe] %v6703
        %v6705 = vld [vmem:[#allocation2 + $0x14] sm:$0x3]
        %v6706 = vsel %vm1870, %v6628, %v6705
        %6707 = vst [vmem:[#allocation2 + $0x14] sm:$0x3] %v6706
        %v6708 = vld [vmem:[#allocation2 + $0x18] sm:$0xe]
        %v6709 = vsel %vm1864, %v6636, %v6708
        %6710 = vst [vmem:[#allocation2 + $0x18] sm:$0xe] %v6709
        %v6711 = vld [vmem:[#allocation2 + $0x1c] sm:$0x3]
        %v6712 = vsel %vm1870, %v6637, %v6711
        %6713 = vst [vmem:[#allocation2 + $0x1c] sm:$0x3] %v6712
        %v6714 = vld [vmem:[#allocation2 + $0x20] sm:$0xe]
        %v6715 = vsel %vm1864, %v6645, %v6714
        %6716 = vst [vmem:[#allocation2 + $0x20] sm:$0xe] %v6715
        %v6717 = vld [vmem:[#allocation2 + $0x24] sm:$0x3]
        %v6718 = vsel %vm1870, %v6646, %v6717
        %6719 = vst [vmem:[#allocation2 + $0x24] sm:$0x3] %v6718
        %v6720 = vld [vmem:[#allocation2 + $0x28] sm:$0xe]
        %v6721 = vsel %vm1864, %v6654, %v6720
        %6722 = vst [vmem:[#allocation2 + $0x28] sm:$0xe] %v6721
        %v6723 = vld [vmem:[#allocation2 + $0x2c] sm:$0x3]
        %v6724 = vsel %vm1870, %v6655, %v6723
        %6725 = vst [vmem:[#allocation2 + $0x2c] sm:$0x3] %v6724
        %v6726 = vld [vmem:[#allocation2 + $0x30] sm:$0xe]
        %v6727 = vsel %vm1864, %v6663, %v6726
        %6728 = vst [vmem:[#allocation2 + $0x30] sm:$0xe] %v6727
        %v6729 = vld [vmem:[#allocation2 + $0x34] sm:$0x3]
        %v6730 = vsel %vm1870, %v6664, %v6729
        %6731 = vst [vmem:[#allocation2 + $0x34] sm:$0x3] %v6730
        %v6732 = vld [vmem:[#allocation2 + $0x38] sm:$0xe]
        %v6733 = vsel %vm1864, %v6672, %v6732
        %6734 = vst [vmem:[#allocation2 + $0x38] sm:$0xe] %v6733
        %v6735 = vld [vmem:[#allocation2 + $0x3c] sm:$0x3]
        %v6736 = vsel %vm1870, %v6673, %v6735
        %6737 = vst [vmem:[#allocation2 + $0x3c] sm:$0x3] %v6736
        %v6738 = vld [vmem:[#allocation2] sm:$0xf]
        %v6739 = vld [vmem:[#allocation2 + $0x4] sm:$0x7]
        %v6740 = vld [vmem:[#allocation2 + $0x8] sm:$0xf]
        %v6741 = vld [vmem:[#allocation2 + $0xc] sm:$0x7]
        %v6742 = vld [vmem:[#allocation2 + $0x10] sm:$0xf]
        %v6743 = vld [vmem:[#allocation2 + $0x14] sm:$0x7]
        %v6744 = vld [vmem:[#allocation2 + $0x18] sm:$0xf]
        %v6745 = vld [vmem:[#allocation2 + $0x1c] sm:$0x7]
        %v6746 = vld [vmem:[#allocation2 + $0x20] sm:$0xf]
        %v6747 = vld [vmem:[#allocation2 + $0x24] sm:$0x7]
        %v6748 = vld [vmem:[#allocation2 + $0x28] sm:$0xf]
        %v6749 = vld [vmem:[#allocation2 + $0x2c] sm:$0x7]
        %v6750 = vld [vmem:[#allocation2 + $0x30] sm:$0xf]
        %v6751 = vld [vmem:[#allocation2 + $0x34] sm:$0x7]
        %v6752 = vld [vmem:[#allocation2 + $0x38] sm:$0xf]
        %v6753 = vld [vmem:[#allocation2 + $0x3c] sm:$0x7]
        %v6754 = vld [vmem:[%s17] sm:$0xff]
        %v6756 = vshrl.u32 %v6738, 16
        %v6758 = vrot.slane %v6756, 4
        %v6759 = vshll.u32 %v6738, 16
        %v6761 = vrot.slane %v6759, 5
        %v6762 = vor.u32 %v6758, %v6761
        %v6763 = vrot.slane %v6762, 4
        %v6765 = vshll.u32 %v6739, 16
        %v6767 = vrot.slane %v6765, 5
        %v6768 = vsel %vm1935, %v6763, %v6767
        %v6770 = vshrl.u32 %v6740, 16
        %v6772 = vrot.slane %v6770, 4
        %v6773 = vshll.u32 %v6740, 16
        %v6775 = vrot.slane %v6773, 5
        %v6776 = vor.u32 %v6772, %v6775
        %v6777 = vrot.slane %v6776, 4
        %v6779 = vshll.u32 %v6741, 16
        %v6781 = vrot.slane %v6779, 5
        %v6782 = vsel %vm1935, %v6777, %v6781
        %v6784 = vshrl.u32 %v6742, 16
        %v6786 = vrot.slane %v6784, 4
        %v6787 = vshll.u32 %v6742, 16
        %v6789 = vrot.slane %v6787, 5
        %v6790 = vor.u32 %v6786, %v6789
        %v6791 = vrot.slane %v6790, 4
        %v6793 = vshll.u32 %v6743, 16
        %v6795 = vrot.slane %v6793, 5
        %v6796 = vsel %vm1935, %v6791, %v6795
        %v6798 = vshrl.u32 %v6744, 16
        %v6800 = vrot.slane %v6798, 4
        %v6801 = vshll.u32 %v6744, 16
        %v6803 = vrot.slane %v6801, 5
        %v6804 = vor.u32 %v6800, %v6803
        %v6805 = vrot.slane %v6804, 4
        %v6807 = vshll.u32 %v6745, 16
        %v6809 = vrot.slane %v6807, 5
        %v6810 = vsel %vm1935, %v6805, %v6809
        %v6812 = vshrl.u32 %v6746, 16
        %v6814 = vrot.slane %v6812, 4
        %v6815 = vshll.u32 %v6746, 16
        %v6817 = vrot.slane %v6815, 5
        %v6818 = vor.u32 %v6814, %v6817
        %v6819 = vrot.slane %v6818, 4
        %v6821 = vshll.u32 %v6747, 16
        %v6823 = vrot.slane %v6821, 5
        %v6824 = vsel %vm1935, %v6819, %v6823
        %v6826 = vshrl.u32 %v6748, 16
        %v6828 = vrot.slane %v6826, 4
        %v6829 = vshll.u32 %v6748, 16
        %v6831 = vrot.slane %v6829, 5
        %v6832 = vor.u32 %v6828, %v6831
        %v6833 = vrot.slane %v6832, 4
        %v6835 = vshll.u32 %v6749, 16
        %v6837 = vrot.slane %v6835, 5
        %v6838 = vsel %vm1935, %v6833, %v6837
        %v6840 = vshrl.u32 %v6750, 16
        %v6842 = vrot.slane %v6840, 4
        %v6843 = vshll.u32 %v6750, 16
        %v6845 = vrot.slane %v6843, 5
        %v6846 = vor.u32 %v6842, %v6845
        %v6847 = vrot.slane %v6846, 4
        %v6849 = vshll.u32 %v6751, 16
        %v6851 = vrot.slane %v6849, 5
        %v6852 = vsel %vm1935, %v6847, %v6851
        %v6854 = vshrl.u32 %v6752, 16
        %v6856 = vrot.slane %v6854, 4
        %v6857 = vshll.u32 %v6752, 16
        %v6859 = vrot.slane %v6857, 5
        %v6860 = vor.u32 %v6856, %v6859
        %v6861 = vrot.slane %v6860, 4
        %v6863 = vshll.u32 %v6753, 16
        %v6865 = vrot.slane %v6863, 5
        %v6866 = vsel %vm1935, %v6861, %v6865
        %s6867 = scalar_lea.vmem %s17, 8
        %v6868 = vld [vmem:[%s6867] sm:$0xff]
        %v6869 = vunpack.c.l.b16 %v6768
        %v6870 = vunpack.c.l.b16 %v6782
        %v6871 = vunpack.c.l.b16 %v6796
        %v6872 = vunpack.c.l.b16 %v6810
        %v6873 = vunpack.c.l.b16 %v6824
        %v6874 = vunpack.c.l.b16 %v6838
        %v6875 = vunpack.c.l.b16 %v6852
        %v6876 = vunpack.c.l.b16 %v6866
        %v6877 = vpack.c.b16 %v6870, %v6869
        %v6878 = vpack.c.b16 %v6872, %v6871
        %v6879 = vpack.c.b16 %v6874, %v6873
        %v6880 = vpack.c.b16 %v6876, %v6875
        %v6882 = vunpack.c.l.b16 %v6868
        %v6883 = vunpack.c.h.b16 %v6868
        %v6884 = vpack.c.b16 %v6882, %v6882
        %v6885 = vpack.c.b16 %v6883, %v6883
        %v6887 = vsel %vm990, %v6877, 0
        %v6890 = vsel %vm990, %v6878, 0
        %v6893 = vsel %vm990, %v6879, 0
        %v6896 = vsel %vm990, %v6880, 0
        %v6899 = vsel %vm1003, %v6884, 0
        %v6902 = vsel %vm1003, %v6885, 0
        %6904 = vmatprep.subr.bf16.mxu0 %v6902
        %6905 = vmatpush1.bf16.msra.mxu0 %v6899
        %6906 = vmatprep.subr.bf16.mxu0 0
        %6907 = vmatpush1.bf16.msra.mxu0 0
        %6908 = vmatprep.subr.bf16.mxu0 0
        %6909 = vmatpush1.bf16.msra.mxu0 0
        %6910 = vmatprep.subr.bf16.mxu0 0
        %6911 = vmatpush1.bf16.msra.mxu0 0
        %6912 = vmatprep.subr.bf16.mxu0 0
        %6913 = vmatpush1.bf16.msra.mxu0 0
        %6914 = vmatprep.subr.bf16.mxu0 0
        %6915 = vmatpush1.bf16.msra.mxu0 0
        %6916 = vmatprep.subr.bf16.mxu0 0
        %6917 = vmatpush1.bf16.msra.mxu0 0
        %6918 = vmatprep.subr.bf16.mxu0 0
        %6919 = vmatpush1.bf16.msra.mxu0 0
        %6920 = vmatprep.subr.bf16.mxu0 0
        %6921 = vmatpush1.bf16.msra.mxu0 0
        %6922 = vmatprep.subr.bf16.mxu0 0
        %6923 = vmatpush1.bf16.msra.mxu0 0
        %6924 = vmatprep.subr.bf16.mxu0 0
        %6925 = vmatpush1.bf16.msra.mxu0 0
        %6926 = vmatprep.subr.bf16.mxu0 0
        %6927 = vmatpush1.bf16.msra.mxu0 0
        %6928 = vmatprep.subr.bf16.mxu0 0
        %6929 = vmatpush1.bf16.msra.mxu0 0
        %6930 = vmatprep.subr.bf16.mxu0 0
        %6931 = vmatpush1.bf16.msra.mxu0 0
        %6932 = vmatprep.subr.bf16.mxu0 0
        %6933 = vmatpush1.bf16.msra.mxu0 0
        %6934 = vmatprep.subr.bf16.mxu0 0
        %6935 = vmatpush1.bf16.msra.mxu0 0
        %6936 = vmatprep.mubr.bf16.mxu0 0
        %6937 = vmatmul.mubr.bf16.gmra.mrb[0].mxu0 %v6887
        %v6938 = vpop.f32.mrb[0].mxu0
        %v6939 = vadd.f32 0.0, %v6938
        %v6940 = vpop.f32.mrb[0].mxu0
        %v6941 = vadd.f32 0.0, %v6940
        %v6942 = vpop.f32.mrb[0].mxu0
        %v6943 = vadd.f32 0.0, %v6942
        %v6944 = vpop.f32.mrb[0].mxu0
        %v6945 = vadd.f32 0.0, %v6944
        %6946 = vmatprep.mubr.bf16.mxu0 0
        %6947 = vmatmul.mubr.bf16.gmra.mrb[0].mxu0 %v6890
        %v6948 = vpop.f32.mrb[0].mxu0
        %v6949 = vadd.f32 0.0, %v6948
        %v6950 = vpop.f32.mrb[0].mxu0
        %v6951 = vadd.f32 0.0, %v6950
        %v6952 = vpop.f32.mrb[0].mxu0
        %v6953 = vadd.f32 0.0, %v6952
        %v6954 = vpop.f32.mrb[0].mxu0
        %v6955 = vadd.f32 0.0, %v6954
        %6956 = vmatprep.mubr.bf16.mxu0 0
        %6957 = vmatmul.mubr.bf16.gmra.mrb[0].mxu0 %v6893
        %v6958 = vpop.f32.mrb[0].mxu0
        %v6959 = vadd.f32 0.0, %v6958
        %v6960 = vpop.f32.mrb[0].mxu0
        %v6961 = vadd.f32 0.0, %v6960
        %v6962 = vpop.f32.mrb[0].mxu0
        %v6963 = vadd.f32 0.0, %v6962
        %v6964 = vpop.f32.mrb[0].mxu0
        %v6965 = vadd.f32 0.0, %v6964
        %6966 = vmatprep.mubr.bf16.mxu0 0
        %6967 = vmatmul.mubr.bf16.gmra.mrb[0].mxu0 %v6896
        %v6968 = vpop.f32.mrb[0].mxu0
        %v6969 = vadd.f32 0.0, %v6968
        %v6970 = vpop.f32.mrb[0].mxu0
        %v6971 = vadd.f32 0.0, %v6970
        %v6972 = vpop.f32.mrb[0].mxu0
        %v6973 = vadd.f32 0.0, %v6972
        %v6974 = vpop.f32.mrb[0].mxu0
        %v6975 = vadd.f32 0.0, %v6974
        %6976 = vdwg.mxu0
        %v6985 = vunpack.c.l.b16 %v6738
        %v6986 = vunpack.c.l.b16 %v6740
        %v6987 = vunpack.c.l.b16 %v6742
        %v6988 = vunpack.c.l.b16 %v6744
        %v6989 = vunpack.c.l.b16 %v6746
        %v6990 = vunpack.c.l.b16 %v6748
        %v6991 = vunpack.c.l.b16 %v6750
        %v6992 = vunpack.c.l.b16 %v6752
        %v6993 = vpack.c.b16 %v6986, %v6985
        %v6994 = vpack.c.b16 %v6988, %v6987
        %v6995 = vpack.c.b16 %v6990, %v6989
        %v6996 = vpack.c.b16 %v6992, %v6991
        %v6998 = vunpack.c.l.b16 %v6754
        %v6999 = vunpack.c.h.b16 %v6754
        %v7000 = vpack.c.b16 %v6998, %v6998
        %v7001 = vpack.c.b16 %v6999, %v6999
        %v7003 = vsel %vm990, %v6993, 0
        %v7006 = vsel %vm990, %v6994, 0
        %v7009 = vsel %vm990, %v6995, 0
        %v7012 = vsel %vm990, %v6996, 0
        %v7015 = vsel %vm1003, %v7000, 0
        %v7018 = vsel %vm1003, %v7001, 0
        %7020 = vmatprep.subr.bf16.mxu0 %v7018
        %7021 = vmatpush1.bf16.msra.mxu0 %v7015
        %7022 = vmatprep.subr.bf16.mxu0 0
        %7023 = vmatpush1.bf16.msra.mxu0 0
        %7024 = vmatprep.subr.bf16.mxu0 0
        %7025 = vmatpush1.bf16.msra.mxu0 0
        %7026 = vmatprep.subr.bf16.mxu0 0
        %7027 = vmatpush1.bf16.msra.mxu0 0
        %7028 = vmatprep.subr.bf16.mxu0 0
        %7029 = vmatpush1.bf16.msra.mxu0 0
        %7030 = vmatprep.subr.bf16.mxu0 0
        %7031 = vmatpush1.bf16.msra.mxu0 0
        %7032 = vmatprep.subr.bf16.mxu0 0
        %7033 = vmatpush1.bf16.msra.mxu0 0
        %7034 = vmatprep.subr.bf16.mxu0 0
        %7035 = vmatpush1.bf16.msra.mxu0 0
        %7036 = vmatprep.subr.bf16.mxu0 0
        %7037 = vmatpush1.bf16.msra.mxu0 0
        %7038 = vmatprep.subr.bf16.mxu0 0
        %7039 = vmatpush1.bf16.msra.mxu0 0
        %7040 = vmatprep.subr.bf16.mxu0 0
        %7041 = vmatpush1.bf16.msra.mxu0 0
        %7042 = vmatprep.subr.bf16.mxu0 0
        %7043 = vmatpush1.bf16.msra.mxu0 0
        %7044 = vmatprep.subr.bf16.mxu0 0
        %7045 = vmatpush1.bf16.msra.mxu0 0
        %7046 = vmatprep.subr.bf16.mxu0 0
        %7047 = vmatpush1.bf16.msra.mxu0 0
        %7048 = vmatprep.subr.bf16.mxu0 0
        %7049 = vmatpush1.bf16.msra.mxu0 0
        %7050 = vmatprep.subr.bf16.mxu0 0
        %7051 = vmatpush1.bf16.msra.mxu0 0
        %7052 = vmatprep.mubr.bf16.mxu0 0
        %7053 = vmatmul.mubr.bf16.gmra.mrb[0].mxu0 %v7003
        %v7054 = vpop.f32.mrb[0].mxu0
        %v7055 = vadd.f32 %v6939, %v7054
        %v7056 = vpop.f32.mrb[0].mxu0
        %v7057 = vadd.f32 %v6941, %v7056
        %v7058 = vpop.f32.mrb[0].mxu0
        %v7059 = vadd.f32 %v6943, %v7058
        %v7060 = vpop.f32.mrb[0].mxu0
        %v7061 = vadd.f32 %v6945, %v7060
        %7062 = vmatprep.mubr.bf16.mxu0 0
        %7063 = vmatmul.mubr.bf16.gmra.mrb[0].mxu0 %v7006
        %v7064 = vpop.f32.mrb[0].mxu0
        %v7065 = vadd.f32 %v6949, %v7064
        %v7066 = vpop.f32.mrb[0].mxu0
        %v7067 = vadd.f32 %v6951, %v7066
        %v7068 = vpop.f32.mrb[0].mxu0
        %v7069 = vadd.f32 %v6953, %v7068
        %v7070 = vpop.f32.mrb[0].mxu0
        %v7071 = vadd.f32 %v6955, %v7070
        %7072 = vmatprep.mubr.bf16.mxu0 0
        %7073 = vmatmul.mubr.bf16.gmra.mrb[0].mxu0 %v7009
        %v7074 = vpop.f32.mrb[0].mxu0
        %v7075 = vadd.f32 %v6959, %v7074
        %v7076 = vpop.f32.mrb[0].mxu0
        %v7077 = vadd.f32 %v6961, %v7076
        %v7078 = vpop.f32.mrb[0].mxu0
        %v7079 = vadd.f32 %v6963, %v7078
        %v7080 = vpop.f32.mrb[0].mxu0
        %v7081 = vadd.f32 %v6965, %v7080
        %7082 = vmatprep.mubr.bf16.mxu0 0
        %7083 = vmatmul.mubr.bf16.gmra.mrb[0].mxu0 %v7012
        %v7084 = vpop.f32.mrb[0].mxu0
        %v7085 = vadd.f32 %v6969, %v7084
        %v7086 = vpop.f32.mrb[0].mxu0
        %v7087 = vadd.f32 %v6971, %v7086
        %v7088 = vpop.f32.mrb[0].mxu0
        %v7089 = vadd.f32 %v6973, %v7088
        %v7090 = vpop.f32.mrb[0].mxu0
        %v7091 = vadd.f32 %v6975, %v7090
        %7092 = vdwg.mxu0
        %v7101 = vrot.slane %v6738, 5
        %v7102 = vrot.slane %v7101, 4
        %v7103 = vrot.slane %v6739, 5
        %v7104 = vsel %vm2252, %v7102, %v7103
        %v7105 = vrot.slane %v6740, 5
        %v7106 = vrot.slane %v7105, 4
        %v7107 = vrot.slane %v6741, 5
        %v7108 = vsel %vm2252, %v7106, %v7107
        %v7109 = vrot.slane %v6742, 5
        %v7110 = vrot.slane %v7109, 4
        %v7111 = vrot.slane %v6743, 5
        %v7112 = vsel %vm2252, %v7110, %v7111
        %v7113 = vrot.slane %v6744, 5
        %v7114 = vrot.slane %v7113, 4
        %v7115 = vrot.slane %v6745, 5
        %v7116 = vsel %vm2252, %v7114, %v7115
        %v7117 = vrot.slane %v6746, 5
        %v7118 = vrot.slane %v7117, 4
        %v7119 = vrot.slane %v6747, 5
        %v7120 = vsel %vm2252, %v7118, %v7119
        %v7121 = vrot.slane %v6748, 5
        %v7122 = vrot.slane %v7121, 4
        %v7123 = vrot.slane %v6749, 5
        %v7124 = vsel %vm2252, %v7122, %v7123
        %v7125 = vrot.slane %v6750, 5
        %v7126 = vrot.slane %v7125, 4
        %v7127 = vrot.slane %v6751, 5
        %v7128 = vsel %vm2252, %v7126, %v7127
        %v7129 = vrot.slane %v6752, 5
        %v7130 = vrot.slane %v7129, 4
        %v7131 = vrot.slane %v6753, 5
        %v7132 = vsel %vm2252, %v7130, %v7131
        %s7133 = scalar_lea.vmem %s17, 16
        %v7134 = vld [vmem:[%s7133] sm:$0xff]
        %v7135 = vunpack.c.l.b16 %v7104
        %v7136 = vunpack.c.l.b16 %v7108
        %v7137 = vunpack.c.l.b16 %v7112
        %v7138 = vunpack.c.l.b16 %v7116
        %v7139 = vunpack.c.l.b16 %v7120
        %v7140 = vunpack.c.l.b16 %v7124
        %v7141 = vunpack.c.l.b16 %v7128
        %v7142 = vunpack.c.l.b16 %v7132
        %v7143 = vpack.c.b16 %v7136, %v7135
        %v7144 = vpack.c.b16 %v7138, %v7137
        %v7145 = vpack.c.b16 %v7140, %v7139
        %v7146 = vpack.c.b16 %v7142, %v7141
        %v7148 = vunpack.c.l.b16 %v7134
        %v7149 = vunpack.c.h.b16 %v7134
        %v7150 = vpack.c.b16 %v7148, %v7148
        %v7151 = vpack.c.b16 %v7149, %v7149
        %v7153 = vsel %vm990, %v7143, 0
        %v7156 = vsel %vm990, %v7144, 0
        %v7159 = vsel %vm990, %v7145, 0
        %v7162 = vsel %vm990, %v7146, 0
        %v7165 = vsel %vm1003, %v7150, 0
        %v7168 = vsel %vm1003, %v7151, 0
        %7170 = vmatprep.subr.bf16.mxu0 %v7168
        %7171 = vmatpush1.bf16.msra.mxu0 %v7165
        %7172 = vmatprep.subr.bf16.mxu0 0
        %7173 = vmatpush1.bf16.msra.mxu0 0
        %7174 = vmatprep.subr.bf16.mxu0 0
        %7175 = vmatpush1.bf16.msra.mxu0 0
        %7176 = vmatprep.subr.bf16.mxu0 0
        %7177 = vmatpush1.bf16.msra.mxu0 0
        %7178 = vmatprep.subr.bf16.mxu0 0
        %7179 = vmatpush1.bf16.msra.mxu0 0
        %7180 = vmatprep.subr.bf16.mxu0 0
        %7181 = vmatpush1.bf16.msra.mxu0 0
        %7182 = vmatprep.subr.bf16.mxu0 0
        %7183 = vmatpush1.bf16.msra.mxu0 0
        %7184 = vmatprep.subr.bf16.mxu0 0
        %7185 = vmatpush1.bf16.msra.mxu0 0
        %7186 = vmatprep.subr.bf16.mxu0 0
        %7187 = vmatpush1.bf16.msra.mxu0 0
        %7188 = vmatprep.subr.bf16.mxu0 0
        %7189 = vmatpush1.bf16.msra.mxu0 0
        %7190 = vmatprep.subr.bf16.mxu0 0
        %7191 = vmatpush1.bf16.msra.mxu0 0
        %7192 = vmatprep.subr.bf16.mxu0 0
        %7193 = vmatpush1.bf16.msra.mxu0 0
        %7194 = vmatprep.subr.bf16.mxu0 0
        %7195 = vmatpush1.bf16.msra.mxu0 0
        %7196 = vmatprep.subr.bf16.mxu0 0
        %7197 = vmatpush1.bf16.msra.mxu0 0
        %7198 = vmatprep.subr.bf16.mxu0 0
        %7199 = vmatpush1.bf16.msra.mxu0 0
        %7200 = vmatprep.subr.bf16.mxu0 0
        %7201 = vmatpush1.bf16.msra.mxu0 0
        %7202 = vmatprep.mubr.bf16.mxu0 0
        %7203 = vmatmul.mubr.bf16.gmra.mrb[0].mxu0 %v7153
        %v7204 = vpop.f32.mrb[0].mxu0
        %v7205 = vadd.f32 0.0, %v7204
        %v7206 = vpop.f32.mrb[0].mxu0
        %v7207 = vadd.f32 0.0, %v7206
        %v7208 = vpop.f32.mrb[0].mxu0
        %v7209 = vadd.f32 0.0, %v7208
        %v7210 = vpop.f32.mrb[0].mxu0
        %v7211 = vadd.f32 0.0, %v7210
        %7212 = vmatprep.mubr.bf16.mxu0 0
        %7213 = vmatmul.mubr.bf16.gmra.mrb[0].mxu0 %v7156
        %v7214 = vpop.f32.mrb[0].mxu0
        %v7215 = vadd.f32 0.0, %v7214
        %v7216 = vpop.f32.mrb[0].mxu0
        %v7217 = vadd.f32 0.0, %v7216
        %v7218 = vpop.f32.mrb[0].mxu0
        %v7219 = vadd.f32 0.0, %v7218
        %v7220 = vpop.f32.mrb[0].mxu0
        %v7221 = vadd.f32 0.0, %v7220
        %7222 = vmatprep.mubr.bf16.mxu0 0
        %7223 = vmatmul.mubr.bf16.gmra.mrb[0].mxu0 %v7159
        %v7224 = vpop.f32.mrb[0].mxu0
        %v7225 = vadd.f32 0.0, %v7224
        %v7226 = vpop.f32.mrb[0].mxu0
        %v7227 = vadd.f32 0.0, %v7226
        %v7228 = vpop.f32.mrb[0].mxu0
        %v7229 = vadd.f32 0.0, %v7228
        %v7230 = vpop.f32.mrb[0].mxu0
        %v7231 = vadd.f32 0.0, %v7230
        %7232 = vmatprep.mubr.bf16.mxu0 0
        %7233 = vmatmul.mubr.bf16.gmra.mrb[0].mxu0 %v7162
        %v7234 = vpop.f32.mrb[0].mxu0
        %v7235 = vadd.f32 0.0, %v7234
        %v7236 = vpop.f32.mrb[0].mxu0
        %v7237 = vadd.f32 0.0, %v7236
        %v7238 = vpop.f32.mrb[0].mxu0
        %v7239 = vadd.f32 0.0, %v7238
        %v7240 = vpop.f32.mrb[0].mxu0
        %v7241 = vadd.f32 0.0, %v7240
        %7242 = vdwg.mxu0
        %v7243 = vadd.f32 %v7055, %v7205
        %v7244 = vadd.f32 %v7057, %v7207
        %v7245 = vadd.f32 %v7059, %v7209
        %v7246 = vadd.f32 %v7061, %v7211
        %v7247 = vadd.f32 %v7065, %v7215
        %v7248 = vadd.f32 %v7067, %v7217
        %v7249 = vadd.f32 %v7069, %v7219
        %v7250 = vadd.f32 %v7071, %v7221
        %v7251 = vadd.f32 %v7075, %v7225
        %v7252 = vadd.f32 %v7077, %v7227
        %v7253 = vadd.f32 %v7079, %v7229
        %v7254 = vadd.f32 %v7081, %v7231
        %v7255 = vadd.f32 %v7085, %v7235
        %v7256 = vadd.f32 %v7087, %v7237
        %v7257 = vadd.f32 %v7089, %v7239
        %v7258 = vadd.f32 %v7091, %v7241
        %v7259 = vrot.slane %v6756, 5
        %v7260 = vrot.slane %v6759, 6
        %v7261 = vor.u32 %v7259, %v7260
        %v7262 = vrot.slane %v7261, 4
        %v7263 = vshrl.u32 %v6739, 16
        %v7265 = vrot.slane %v7263, 5
        %v7266 = vrot.slane %v6765, 6
        %v7267 = vor.u32 %v7265, %v7266
        %v7268 = vsel %vm2389, %v7262, %v7267
        %v7269 = vrot.slane %v6770, 5
        %v7270 = vrot.slane %v6773, 6
        %v7271 = vor.u32 %v7269, %v7270
        %v7272 = vrot.slane %v7271, 4
        %v7273 = vshrl.u32 %v6741, 16
        %v7275 = vrot.slane %v7273, 5
        %v7276 = vrot.slane %v6779, 6
        %v7277 = vor.u32 %v7275, %v7276
        %v7278 = vsel %vm2389, %v7272, %v7277
        %v7279 = vrot.slane %v6784, 5
        %v7280 = vrot.slane %v6787, 6
        %v7281 = vor.u32 %v7279, %v7280
        %v7282 = vrot.slane %v7281, 4
        %v7283 = vshrl.u32 %v6743, 16
        %v7285 = vrot.slane %v7283, 5
        %v7286 = vrot.slane %v6793, 6
        %v7287 = vor.u32 %v7285, %v7286
        %v7288 = vsel %vm2389, %v7282, %v7287
        %v7289 = vrot.slane %v6798, 5
        %v7290 = vrot.slane %v6801, 6
        %v7291 = vor.u32 %v7289, %v7290
        %v7292 = vrot.slane %v7291, 4
        %v7293 = vshrl.u32 %v6745, 16
        %v7295 = vrot.slane %v7293, 5
        %v7296 = vrot.slane %v6807, 6
        %v7297 = vor.u32 %v7295, %v7296
        %v7298 = vsel %vm2389, %v7292, %v7297
        %v7299 = vrot.slane %v6812, 5
        %v7300 = vrot.slane %v6815, 6
        %v7301 = vor.u32 %v7299, %v7300
        %v7302 = vrot.slane %v7301, 4
        %v7303 = vshrl.u32 %v6747, 16
        %v7305 = vrot.slane %v7303, 5
        %v7306 = vrot.slane %v6821, 6
        %v7307 = vor.u32 %v7305, %v7306
        %v7308 = vsel %vm2389, %v7302, %v7307
        %v7309 = vrot.slane %v6826, 5
        %v7310 = vrot.slane %v6829, 6
        %v7311 = vor.u32 %v7309, %v7310
        %v7312 = vrot.slane %v7311, 4
        %v7313 = vshrl.u32 %v6749, 16
        %v7315 = vrot.slane %v7313, 5
        %v7316 = vrot.slane %v6835, 6
        %v7317 = vor.u32 %v7315, %v7316
        %v7318 = vsel %vm2389, %v7312, %v7317
        %v7319 = vrot.slane %v6840, 5
        %v7320 = vrot.slane %v6843, 6
        %v7321 = vor.u32 %v7319, %v7320
        %v7322 = vrot.slane %v7321, 4
        %v7323 = vshrl.u32 %v6751, 16
        %v7325 = vrot.slane %v7323, 5
        %v7326 = vrot.slane %v6849, 6
        %v7327 = vor.u32 %v7325, %v7326
        %v7328 = vsel %vm2389, %v7322, %v7327
        %v7329 = vrot.slane %v6854, 5
        %v7330 = vrot.slane %v6857, 6
        %v7331 = vor.u32 %v7329, %v7330
        %v7332 = vrot.slane %v7331, 4
        %v7333 = vshrl.u32 %v6753, 16
        %v7335 = vrot.slane %v7333, 5
        %v7336 = vrot.slane %v6863, 6
        %v7337 = vor.u32 %v7335, %v7336
        %v7338 = vsel %vm2389, %v7332, %v7337
        %s7339 = scalar_lea.vmem %s17, 24
        %v7340 = vld [vmem:[%s7339] sm:$0xff]
        %v7341 = vunpack.c.l.b16 %v7268
        %v7342 = vunpack.c.l.b16 %v7278
        %v7343 = vunpack.c.l.b16 %v7288
        %v7344 = vunpack.c.l.b16 %v7298
        %v7345 = vunpack.c.l.b16 %v7308
        %v7346 = vunpack.c.l.b16 %v7318
        %v7347 = vunpack.c.l.b16 %v7328
        %v7348 = vunpack.c.l.b16 %v7338
        %v7349 = vpack.c.b16 %v7342, %v7341
        %v7350 = vpack.c.b16 %v7344, %v7343
        %v7351 = vpack.c.b16 %v7346, %v7345
        %v7352 = vpack.c.b16 %v7348, %v7347
        %v7354 = vunpack.c.l.b16 %v7340
        %v7355 = vunpack.c.h.b16 %v7340
        %v7356 = vpack.c.b16 %v7354, %v7354
        %v7357 = vpack.c.b16 %v7355, %v7355
        %v7359 = vsel %vm990, %v7349, 0
        %v7362 = vsel %vm990, %v7350, 0
        %v7365 = vsel %vm990, %v7351, 0
        %v7368 = vsel %vm990, %v7352, 0
        %v7371 = vsel %vm1003, %v7356, 0
        %v7374 = vsel %vm1003, %v7357, 0
        %7376 = vmatprep.subr.bf16.mxu0 %v7374
        %7377 = vmatpush1.bf16.msra.mxu0 %v7371
        %7378 = vmatprep.subr.bf16.mxu0 0
        %7379 = vmatpush1.bf16.msra.mxu0 0
        %7380 = vmatprep.subr.bf16.mxu0 0
        %7381 = vmatpush1.bf16.msra.mxu0 0
        %7382 = vmatprep.subr.bf16.mxu0 0
        %7383 = vmatpush1.bf16.msra.mxu0 0
        %7384 = vmatprep.subr.bf16.mxu0 0
        %7385 = vmatpush1.bf16.msra.mxu0 0
        %7386 = vmatprep.subr.bf16.mxu0 0
        %7387 = vmatpush1.bf16.msra.mxu0 0
        %7388 = vmatprep.subr.bf16.mxu0 0
        %7389 = vmatpush1.bf16.msra.mxu0 0
        %7390 = vmatprep.subr.bf16.mxu0 0
        %7391 = vmatpush1.bf16.msra.mxu0 0
        %7392 = vmatprep.subr.bf16.mxu0 0
        %7393 = vmatpush1.bf16.msra.mxu0 0
        %7394 = vmatprep.subr.bf16.mxu0 0
        %7395 = vmatpush1.bf16.msra.mxu0 0
        %7396 = vmatprep.subr.bf16.mxu0 0
        %7397 = vmatpush1.bf16.msra.mxu0 0
        %7398 = vmatprep.subr.bf16.mxu0 0
        %7399 = vmatpush1.bf16.msra.mxu0 0
        %7400 = vmatprep.subr.bf16.mxu0 0
        %7401 = vmatpush1.bf16.msra.mxu0 0
        %7402 = vmatprep.subr.bf16.mxu0 0
        %7403 = vmatpush1.bf16.msra.mxu0 0
        %7404 = vmatprep.subr.bf16.mxu0 0
        %7405 = vmatpush1.bf16.msra.mxu0 0
        %7406 = vmatprep.subr.bf16.mxu0 0
        %7407 = vmatpush1.bf16.msra.mxu0 0
        %7408 = vmatprep.mubr.bf16.mxu0 0
        %7409 = vmatmul.mubr.bf16.gmra.mrb[0].mxu0 %v7359
        %v7410 = vpop.f32.mrb[0].mxu0
        %v7411 = vadd.f32 0.0, %v7410
        %v7412 = vpop.f32.mrb[0].mxu0
        %v7413 = vadd.f32 0.0, %v7412
        %v7414 = vpop.f32.mrb[0].mxu0
        %v7415 = vadd.f32 0.0, %v7414
        %v7416 = vpop.f32.mrb[0].mxu0
        %v7417 = vadd.f32 0.0, %v7416
        %7418 = vmatprep.mubr.bf16.mxu0 0
        %7419 = vmatmul.mubr.bf16.gmra.mrb[0].mxu0 %v7362
        %v7420 = vpop.f32.mrb[0].mxu0
        %v7421 = vadd.f32 0.0, %v7420
        %v7422 = vpop.f32.mrb[0].mxu0
        %v7423 = vadd.f32 0.0, %v7422
        %v7424 = vpop.f32.mrb[0].mxu0
        %v7425 = vadd.f32 0.0, %v7424
        %v7426 = vpop.f32.mrb[0].mxu0
        %v7427 = vadd.f32 0.0, %v7426
        %7428 = vmatprep.mubr.bf16.mxu0 0
        %7429 = vmatmul.mubr.bf16.gmra.mrb[0].mxu0 %v7365
        %v7430 = vpop.f32.mrb[0].mxu0
        %v7431 = vadd.f32 0.0, %v7430
        %v7432 = vpop.f32.mrb[0].mxu0
        %v7433 = vadd.f32 0.0, %v7432
        %v7434 = vpop.f32.mrb[0].mxu0
        %v7435 = vadd.f32 0.0, %v7434
        %v7436 = vpop.f32.mrb[0].mxu0
        %v7437 = vadd.f32 0.0, %v7436
        %7438 = vmatprep.mubr.bf16.mxu0 0
        %7439 = vmatmul.mubr.bf16.gmra.mrb[0].mxu0 %v7368
        %v7440 = vpop.f32.mrb[0].mxu0
        %v7441 = vadd.f32 0.0, %v7440
        %v7442 = vpop.f32.mrb[0].mxu0
        %v7443 = vadd.f32 0.0, %v7442
        %v7444 = vpop.f32.mrb[0].mxu0
        %v7445 = vadd.f32 0.0, %v7444
        %v7446 = vpop.f32.mrb[0].mxu0
        %v7447 = vadd.f32 0.0, %v7446
        %7448 = vdwg.mxu0
        %v7449 = vadd.f32 %v7243, %v7411
        %v7450 = vadd.f32 %v7244, %v7413
        %v7451 = vadd.f32 %v7245, %v7415
        %v7452 = vadd.f32 %v7246, %v7417
        %v7453 = vadd.f32 %v7247, %v7421
        %v7454 = vadd.f32 %v7248, %v7423
        %v7455 = vadd.f32 %v7249, %v7425
        %v7456 = vadd.f32 %v7250, %v7427
        %v7457 = vadd.f32 %v7251, %v7431
        %v7458 = vadd.f32 %v7252, %v7433
        %v7459 = vadd.f32 %v7253, %v7435
        %v7460 = vadd.f32 %v7254, %v7437
        %v7461 = vadd.f32 %v7255, %v7441
        %v7462 = vadd.f32 %v7256, %v7443
        %v7463 = vadd.f32 %v7257, %v7445
        %v7464 = vadd.f32 %v7258, %v7447
        %v7465 = vrot.slane %v6738, 6
        %v7466 = vrot.slane %v7465, 4
        %v7467 = vrot.slane %v6739, 6
        %v7468 = vsel %vm2574, %v7466, %v7467
        %v7469 = vrot.slane %v6740, 6
        %v7470 = vrot.slane %v7469, 4
        %v7471 = vrot.slane %v6741, 6
        %v7472 = vsel %vm2574, %v7470, %v7471
        %v7473 = vrot.slane %v6742, 6
        %v7474 = vrot.slane %v7473, 4
        %v7475 = vrot.slane %v6743, 6
        %v7476 = vsel %vm2574, %v7474, %v7475
        %v7477 = vrot.slane %v6744, 6
        %v7478 = vrot.slane %v7477, 4
        %v7479 = vrot.slane %v6745, 6
        %v7480 = vsel %vm2574, %v7478, %v7479
        %v7481 = vrot.slane %v6746, 6
        %v7482 = vrot.slane %v7481, 4
        %v7483 = vrot.slane %v6747, 6
        %v7484 = vsel %vm2574, %v7482, %v7483
        %v7485 = vrot.slane %v6748, 6
        %v7486 = vrot.slane %v7485, 4
        %v7487 = vrot.slane %v6749, 6
        %v7488 = vsel %vm2574, %v7486, %v7487
        %v7489 = vrot.slane %v6750, 6
        %v7490 = vrot.slane %v7489, 4
        %v7491 = vrot.slane %v6751, 6
        %v7492 = vsel %vm2574, %v7490, %v7491
        %v7493 = vrot.slane %v6752, 6
        %v7494 = vrot.slane %v7493, 4
        %v7495 = vrot.slane %v6753, 6
        %v7496 = vsel %vm2574, %v7494, %v7495
        %s7497 = scalar_lea.vmem %s17, 32
        %v7498 = vld [vmem:[%s7497] sm:$0xff]
        %v7499 = vunpack.c.l.b16 %v7468
        %v7500 = vunpack.c.l.b16 %v7472
        %v7501 = vunpack.c.l.b16 %v7476
        %v7502 = vunpack.c.l.b16 %v7480
        %v7503 = vunpack.c.l.b16 %v7484
        %v7504 = vunpack.c.l.b16 %v7488
        %v7505 = vunpack.c.l.b16 %v7492
        %v7506 = vunpack.c.l.b16 %v7496
        %v7507 = vpack.c.b16 %v7500, %v7499
        %v7508 = vpack.c.b16 %v7502, %v7501
        %v7509 = vpack.c.b16 %v7504, %v7503
        %v7510 = vpack.c.b16 %v7506, %v7505
        %v7512 = vunpack.c.l.b16 %v7498
        %v7513 = vunpack.c.h.b16 %v7498
        %v7514 = vpack.c.b16 %v7512, %v7512
        %v7515 = vpack.c.b16 %v7513, %v7513
        %v7517 = vsel %vm990, %v7507, 0
        %v7520 = vsel %vm990, %v7508, 0
        %v7523 = vsel %vm990, %v7509, 0
        %v7526 = vsel %vm990, %v7510, 0
        %v7529 = vsel %vm1003, %v7514, 0
        %v7532 = vsel %vm1003, %v7515, 0
        %7534 = vmatprep.subr.bf16.mxu0 %v7532
        %7535 = vmatpush1.bf16.msra.mxu0 %v7529
        %7536 = vmatprep.subr.bf16.mxu0 0
        %7537 = vmatpush1.bf16.msra.mxu0 0
        %7538 = vmatprep.subr.bf16.mxu0 0
        %7539 = vmatpush1.bf16.msra.mxu0 0
        %7540 = vmatprep.subr.bf16.mxu0 0
        %7541 = vmatpush1.bf16.msra.mxu0 0
        %7542 = vmatprep.subr.bf16.mxu0 0
        %7543 = vmatpush1.bf16.msra.mxu0 0
        %7544 = vmatprep.subr.bf16.mxu0 0
        %7545 = vmatpush1.bf16.msra.mxu0 0
        %7546 = vmatprep.subr.bf16.mxu0 0
        %7547 = vmatpush1.bf16.msra.mxu0 0
        %7548 = vmatprep.subr.bf16.mxu0 0
        %7549 = vmatpush1.bf16.msra.mxu0 0
        %7550 = vmatprep.subr.bf16.mxu0 0
        %7551 = vmatpush1.bf16.msra.mxu0 0
        %7552 = vmatprep.subr.bf16.mxu0 0
        %7553 = vmatpush1.bf16.msra.mxu0 0
        %7554 = vmatprep.subr.bf16.mxu0 0
        %7555 = vmatpush1.bf16.msra.mxu0 0
        %7556 = vmatprep.subr.bf16.mxu0 0
        %7557 = vmatpush1.bf16.msra.mxu0 0
        %7558 = vmatprep.subr.bf16.mxu0 0
        %7559 = vmatpush1.bf16.msra.mxu0 0
        %7560 = vmatprep.subr.bf16.mxu0 0
        %7561 = vmatpush1.bf16.msra.mxu0 0
        %7562 = vmatprep.subr.bf16.mxu0 0
        %7563 = vmatpush1.bf16.msra.mxu0 0
        %7564 = vmatprep.subr.bf16.mxu0 0
        %7565 = vmatpush1.bf16.msra.mxu0 0
        %7566 = vmatprep.mubr.bf16.mxu0 0
        %7567 = vmatmul.mubr.bf16.gmra.mrb[0].mxu0 %v7517
        %v7568 = vpop.f32.mrb[0].mxu0
        %v7569 = vadd.f32 0.0, %v7568
        %v7570 = vpop.f32.mrb[0].mxu0
        %v7571 = vadd.f32 0.0, %v7570
        %v7572 = vpop.f32.mrb[0].mxu0
        %v7573 = vadd.f32 0.0, %v7572
        %v7574 = vpop.f32.mrb[0].mxu0
        %v7575 = vadd.f32 0.0, %v7574
        %7576 = vmatprep.mubr.bf16.mxu0 0
        %7577 = vmatmul.mubr.bf16.gmra.mrb[0].mxu0 %v7520
        %v7578 = vpop.f32.mrb[0].mxu0
        %v7579 = vadd.f32 0.0, %v7578
        %v7580 = vpop.f32.mrb[0].mxu0
        %v7581 = vadd.f32 0.0, %v7580
        %v7582 = vpop.f32.mrb[0].mxu0
        %v7583 = vadd.f32 0.0, %v7582
        %v7584 = vpop.f32.mrb[0].mxu0
        %v7585 = vadd.f32 0.0, %v7584
        %7586 = vmatprep.mubr.bf16.mxu0 0
        %7587 = vmatmul.mubr.bf16.gmra.mrb[0].mxu0 %v7523
        %v7588 = vpop.f32.mrb[0].mxu0
        %v7589 = vadd.f32 0.0, %v7588
        %v7590 = vpop.f32.mrb[0].mxu0
        %v7591 = vadd.f32 0.0, %v7590
        %v7592 = vpop.f32.mrb[0].mxu0
        %v7593 = vadd.f32 0.0, %v7592
        %v7594 = vpop.f32.mrb[0].mxu0
        %v7595 = vadd.f32 0.0, %v7594
        %7596 = vmatprep.mubr.bf16.mxu0 0
        %7597 = vmatmul.mubr.bf16.gmra.mrb[0].mxu0 %v7526
        %v7598 = vpop.f32.mrb[0].mxu0
        %v7599 = vadd.f32 0.0, %v7598
        %v7600 = vpop.f32.mrb[0].mxu0
        %v7601 = vadd.f32 0.0, %v7600
        %v7602 = vpop.f32.mrb[0].mxu0
        %v7603 = vadd.f32 0.0, %v7602
        %v7604 = vpop.f32.mrb[0].mxu0
        %v7605 = vadd.f32 0.0, %v7604
        %7606 = vdwg.mxu0
        %v7607 = vadd.f32 %v7449, %v7569
        %v7608 = vadd.f32 %v7450, %v7571
        %v7609 = vadd.f32 %v7451, %v7573
        %v7610 = vadd.f32 %v7452, %v7575
        %v7611 = vadd.f32 %v7453, %v7579
        %v7612 = vadd.f32 %v7454, %v7581
        %v7613 = vadd.f32 %v7455, %v7583
        %v7614 = vadd.f32 %v7456, %v7585
        %v7615 = vadd.f32 %v7457, %v7589
        %v7616 = vadd.f32 %v7458, %v7591
        %v7617 = vadd.f32 %v7459, %v7593
        %v7618 = vadd.f32 %v7460, %v7595
        %v7619 = vadd.f32 %v7461, %v7599
        %v7620 = vadd.f32 %v7462, %v7601
        %v7621 = vadd.f32 %v7463, %v7603
        %v7622 = vadd.f32 %v7464, %v7605
        %v7623 = vrot.slane %v6756, 6
        %v7624 = vrot.slane %v6759, 7
        %v7625 = vor.u32 %v7623, %v7624
        %v7626 = vrot.slane %v7625, 4
        %v7627 = vrot.slane %v7263, 6
        %v7628 = vrot.slane %v6765, 7
        %v7629 = vor.u32 %v7627, %v7628
        %v7630 = vsel %vm2710, %v7626, %v7629
        %v7631 = vrot.slane %v6770, 6
        %v7632 = vrot.slane %v6773, 7
        %v7633 = vor.u32 %v7631, %v7632
        %v7634 = vrot.slane %v7633, 4
        %v7635 = vrot.slane %v7273, 6
        %v7636 = vrot.slane %v6779, 7
        %v7637 = vor.u32 %v7635, %v7636
        %v7638 = vsel %vm2710, %v7634, %v7637
        %v7639 = vrot.slane %v6784, 6
        %v7640 = vrot.slane %v6787, 7
        %v7641 = vor.u32 %v7639, %v7640
        %v7642 = vrot.slane %v7641, 4
        %v7643 = vrot.slane %v7283, 6
        %v7644 = vrot.slane %v6793, 7
        %v7645 = vor.u32 %v7643, %v7644
        %v7646 = vsel %vm2710, %v7642, %v7645
        %v7647 = vrot.slane %v6798, 6
        %v7648 = vrot.slane %v6801, 7
        %v7649 = vor.u32 %v7647, %v7648
        %v7650 = vrot.slane %v7649, 4
        %v7651 = vrot.slane %v7293, 6
        %v7652 = vrot.slane %v6807, 7
        %v7653 = vor.u32 %v7651, %v7652
        %v7654 = vsel %vm2710, %v7650, %v7653
        %v7655 = vrot.slane %v6812, 6
        %v7656 = vrot.slane %v6815, 7
        %v7657 = vor.u32 %v7655, %v7656
        %v7658 = vrot.slane %v7657, 4
        %v7659 = vrot.slane %v7303, 6
        %v7660 = vrot.slane %v6821, 7
        %v7661 = vor.u32 %v7659, %v7660
        %v7662 = vsel %vm2710, %v7658, %v7661
        %v7663 = vrot.slane %v6826, 6
        %v7664 = vrot.slane %v6829, 7
        %v7665 = vor.u32 %v7663, %v7664
        %v7666 = vrot.slane %v7665, 4
        %v7667 = vrot.slane %v7313, 6
        %v7668 = vrot.slane %v6835, 7
        %v7669 = vor.u32 %v7667, %v7668
        %v7670 = vsel %vm2710, %v7666, %v7669
        %v7671 = vrot.slane %v6840, 6
        %v7672 = vrot.slane %v6843, 7
        %v7673 = vor.u32 %v7671, %v7672
        %v7674 = vrot.slane %v7673, 4
        %v7675 = vrot.slane %v7323, 6
        %v7676 = vrot.slane %v6849, 7
        %v7677 = vor.u32 %v7675, %v7676
        %v7678 = vsel %vm2710, %v7674, %v7677
        %v7679 = vrot.slane %v6854, 6
        %v7680 = vrot.slane %v6857, 7
        %v7681 = vor.u32 %v7679, %v7680
        %v7682 = vrot.slane %v7681, 4
        %v7683 = vrot.slane %v7333, 6
        %v7684 = vrot.slane %v6863, 7
        %v7685 = vor.u32 %v7683, %v7684
        %v7686 = vsel %vm2710, %v7682, %v7685
        %s7687 = scalar_lea.vmem %s17, 40
        %v7688 = vld [vmem:[%s7687] sm:$0xff]
        %v7689 = vunpack.c.l.b16 %v7630
        %v7690 = vunpack.c.l.b16 %v7638
        %v7691 = vunpack.c.l.b16 %v7646
        %v7692 = vunpack.c.l.b16 %v7654
        %v7693 = vunpack.c.l.b16 %v7662
        %v7694 = vunpack.c.l.b16 %v7670
        %v7695 = vunpack.c.l.b16 %v7678
        %v7696 = vunpack.c.l.b16 %v7686
        %v7697 = vpack.c.b16 %v7690, %v7689
        %v7698 = vpack.c.b16 %v7692, %v7691
        %v7699 = vpack.c.b16 %v7694, %v7693
        %v7700 = vpack.c.b16 %v7696, %v7695
        %v7702 = vunpack.c.l.b16 %v7688
        %v7703 = vunpack.c.h.b16 %v7688
        %v7704 = vpack.c.b16 %v7702, %v7702
        %v7705 = vpack.c.b16 %v7703, %v7703
        %v7707 = vsel %vm990, %v7697, 0
        %v7710 = vsel %vm990, %v7698, 0
        %v7713 = vsel %vm990, %v7699, 0
        %v7716 = vsel %vm990, %v7700, 0
        %v7719 = vsel %vm1003, %v7704, 0
        %v7722 = vsel %vm1003, %v7705, 0
        %7724 = vmatprep.subr.bf16.mxu0 %v7722
        %7725 = vmatpush1.bf16.msra.mxu0 %v7719
        %7726 = vmatprep.subr.bf16.mxu0 0
        %7727 = vmatpush1.bf16.msra.mxu0 0
        %7728 = vmatprep.subr.bf16.mxu0 0
        %7729 = vmatpush1.bf16.msra.mxu0 0
        %7730 = vmatprep.subr.bf16.mxu0 0
        %7731 = vmatpush1.bf16.msra.mxu0 0
        %7732 = vmatprep.subr.bf16.mxu0 0
        %7733 = vmatpush1.bf16.msra.mxu0 0
        %7734 = vmatprep.subr.bf16.mxu0 0
        %7735 = vmatpush1.bf16.msra.mxu0 0
        %7736 = vmatprep.subr.bf16.mxu0 0
        %7737 = vmatpush1.bf16.msra.mxu0 0
        %7738 = vmatprep.subr.bf16.mxu0 0
        %7739 = vmatpush1.bf16.msra.mxu0 0
        %7740 = vmatprep.subr.bf16.mxu0 0
        %7741 = vmatpush1.bf16.msra.mxu0 0
        %7742 = vmatprep.subr.bf16.mxu0 0
        %7743 = vmatpush1.bf16.msra.mxu0 0
        %7744 = vmatprep.subr.bf16.mxu0 0
        %7745 = vmatpush1.bf16.msra.mxu0 0
        %7746 = vmatprep.subr.bf16.mxu0 0
        %7747 = vmatpush1.bf16.msra.mxu0 0
        %7748 = vmatprep.subr.bf16.mxu0 0
        %7749 = vmatpush1.bf16.msra.mxu0 0
        %7750 = vmatprep.subr.bf16.mxu0 0
        %7751 = vmatpush1.bf16.msra.mxu0 0
        %7752 = vmatprep.subr.bf16.mxu0 0
        %7753 = vmatpush1.bf16.msra.mxu0 0
        %7754 = vmatprep.subr.bf16.mxu0 0
        %7755 = vmatpush1.bf16.msra.mxu0 0
        %7756 = vmatprep.mubr.bf16.mxu0 0
        %7757 = vmatmul.mubr.bf16.gmra.mrb[0].mxu0 %v7707
        %v7758 = vpop.f32.mrb[0].mxu0
        %v7759 = vadd.f32 0.0, %v7758
        %v7760 = vpop.f32.mrb[0].mxu0
        %v7761 = vadd.f32 0.0, %v7760
        %v7762 = vpop.f32.mrb[0].mxu0
        %v7763 = vadd.f32 0.0, %v7762
        %v7764 = vpop.f32.mrb[0].mxu0
        %v7765 = vadd.f32 0.0, %v7764
        %7766 = vmatprep.mubr.bf16.mxu0 0
        %7767 = vmatmul.mubr.bf16.gmra.mrb[0].mxu0 %v7710
        %v7768 = vpop.f32.mrb[0].mxu0
        %v7769 = vadd.f32 0.0, %v7768
        %v7770 = vpop.f32.mrb[0].mxu0
        %v7771 = vadd.f32 0.0, %v7770
        %v7772 = vpop.f32.mrb[0].mxu0
        %v7773 = vadd.f32 0.0, %v7772
        %v7774 = vpop.f32.mrb[0].mxu0
        %v7775 = vadd.f32 0.0, %v7774
        %7776 = vmatprep.mubr.bf16.mxu0 0
        %7777 = vmatmul.mubr.bf16.gmra.mrb[0].mxu0 %v7713
        %v7778 = vpop.f32.mrb[0].mxu0
        %v7779 = vadd.f32 0.0, %v7778
        %v7780 = vpop.f32.mrb[0].mxu0
        %v7781 = vadd.f32 0.0, %v7780
        %v7782 = vpop.f32.mrb[0].mxu0
        %v7783 = vadd.f32 0.0, %v7782
        %v7784 = vpop.f32.mrb[0].mxu0
        %v7785 = vadd.f32 0.0, %v7784
        %7786 = vmatprep.mubr.bf16.mxu0 0
        %7787 = vmatmul.mubr.bf16.gmra.mrb[0].mxu0 %v7716
        %v7788 = vpop.f32.mrb[0].mxu0
        %v7789 = vadd.f32 0.0, %v7788
        %v7790 = vpop.f32.mrb[0].mxu0
        %v7791 = vadd.f32 0.0, %v7790
        %v7792 = vpop.f32.mrb[0].mxu0
        %v7793 = vadd.f32 0.0, %v7792
        %v7794 = vpop.f32.mrb[0].mxu0
        %v7795 = vadd.f32 0.0, %v7794
        %7796 = vdwg.mxu0
        %v7797 = vadd.f32 %v7607, %v7759
        %v7798 = vadd.f32 %v7608, %v7761
        %v7799 = vadd.f32 %v7609, %v7763
        %v7800 = vadd.f32 %v7610, %v7765
        %v7801 = vadd.f32 %v7611, %v7769
        %v7802 = vadd.f32 %v7612, %v7771
        %v7803 = vadd.f32 %v7613, %v7773
        %v7804 = vadd.f32 %v7614, %v7775
        %v7805 = vadd.f32 %v7615, %v7779
        %v7806 = vadd.f32 %v7616, %v7781
        %v7807 = vadd.f32 %v7617, %v7783
        %v7808 = vadd.f32 %v7618, %v7785
        %v7809 = vadd.f32 %v7619, %v7789
        %v7810 = vadd.f32 %v7620, %v7791
        %v7811 = vadd.f32 %v7621, %v7793
        %v7812 = vadd.f32 %v7622, %v7795
        %v7813 = vrot.slane %v6738, 7
        %v7814 = vrot.slane %v7813, 4
        %v7815 = vrot.slane %v6739, 7
        %v7816 = vsel %vm2879, %v7814, %v7815
        %v7817 = vrot.slane %v6740, 7
        %v7818 = vrot.slane %v7817, 4
        %v7819 = vrot.slane %v6741, 7
        %v7820 = vsel %vm2879, %v7818, %v7819
        %v7821 = vrot.slane %v6742, 7
        %v7822 = vrot.slane %v7821, 4
        %v7823 = vrot.slane %v6743, 7
        %v7824 = vsel %vm2879, %v7822, %v7823
        %v7825 = vrot.slane %v6744, 7
        %v7826 = vrot.slane %v7825, 4
        %v7827 = vrot.slane %v6745, 7
        %v7828 = vsel %vm2879, %v7826, %v7827
        %v7829 = vrot.slane %v6746, 7
        %v7830 = vrot.slane %v7829, 4
        %v7831 = vrot.slane %v6747, 7
        %v7832 = vsel %vm2879, %v7830, %v7831
        %v7833 = vrot.slane %v6748, 7
        %v7834 = vrot.slane %v7833, 4
        %v7835 = vrot.slane %v6749, 7
        %v7836 = vsel %vm2879, %v7834, %v7835
        %v7837 = vrot.slane %v6750, 7
        %v7838 = vrot.slane %v7837, 4
        %v7839 = vrot.slane %v6751, 7
        %v7840 = vsel %vm2879, %v7838, %v7839
        %v7841 = vrot.slane %v6752, 7
        %v7842 = vrot.slane %v7841, 4
        %v7843 = vrot.slane %v6753, 7
        %v7844 = vsel %vm2879, %v7842, %v7843
        %s7845 = scalar_lea.vmem %s17, 48
        %v7846 = vld [vmem:[%s7845] sm:$0xff]
        %v7847 = vunpack.c.l.b16 %v7816
        %v7848 = vunpack.c.l.b16 %v7820
        %v7849 = vunpack.c.l.b16 %v7824
        %v7850 = vunpack.c.l.b16 %v7828
        %v7851 = vunpack.c.l.b16 %v7832
        %v7852 = vunpack.c.l.b16 %v7836
        %v7853 = vunpack.c.l.b16 %v7840
        %v7854 = vunpack.c.l.b16 %v7844
        %v7855 = vpack.c.b16 %v7848, %v7847
        %v7856 = vpack.c.b16 %v7850, %v7849
        %v7857 = vpack.c.b16 %v7852, %v7851
        %v7858 = vpack.c.b16 %v7854, %v7853
        %v7860 = vunpack.c.l.b16 %v7846
        %v7861 = vunpack.c.h.b16 %v7846
        %v7862 = vpack.c.b16 %v7860, %v7860
        %v7863 = vpack.c.b16 %v7861, %v7861
        %v7865 = vsel %vm990, %v7855, 0
        %v7868 = vsel %vm990, %v7856, 0
        %v7871 = vsel %vm990, %v7857, 0
        %v7874 = vsel %vm990, %v7858, 0
        %v7877 = vsel %vm1003, %v7862, 0
        %v7880 = vsel %vm1003, %v7863, 0
        %7882 = vmatprep.subr.bf16.mxu0 %v7880
        %7883 = vmatpush1.bf16.msra.mxu0 %v7877
        %7884 = vmatprep.subr.bf16.mxu0 0
        %7885 = vmatpush1.bf16.msra.mxu0 0
        %7886 = vmatprep.subr.bf16.mxu0 0
        %7887 = vmatpush1.bf16.msra.mxu0 0
        %7888 = vmatprep.subr.bf16.mxu0 0
        %7889 = vmatpush1.bf16.msra.mxu0 0
        %7890 = vmatprep.subr.bf16.mxu0 0
        %7891 = vmatpush1.bf16.msra.mxu0 0
        %7892 = vmatprep.subr.bf16.mxu0 0
        %7893 = vmatpush1.bf16.msra.mxu0 0
        %7894 = vmatprep.subr.bf16.mxu0 0
        %7895 = vmatpush1.bf16.msra.mxu0 0
        %7896 = vmatprep.subr.bf16.mxu0 0
        %7897 = vmatpush1.bf16.msra.mxu0 0
        %7898 = vmatprep.subr.bf16.mxu0 0
        %7899 = vmatpush1.bf16.msra.mxu0 0
        %7900 = vmatprep.subr.bf16.mxu0 0
        %7901 = vmatpush1.bf16.msra.mxu0 0
        %7902 = vmatprep.subr.bf16.mxu0 0
        %7903 = vmatpush1.bf16.msra.mxu0 0
        %7904 = vmatprep.subr.bf16.mxu0 0
        %7905 = vmatpush1.bf16.msra.mxu0 0
        %7906 = vmatprep.subr.bf16.mxu0 0
        %7907 = vmatpush1.bf16.msra.mxu0 0
        %7908 = vmatprep.subr.bf16.mxu0 0
        %7909 = vmatpush1.bf16.msra.mxu0 0
        %7910 = vmatprep.subr.bf16.mxu0 0
        %7911 = vmatpush1.bf16.msra.mxu0 0
        %7912 = vmatprep.subr.bf16.mxu0 0
        %7913 = vmatpush1.bf16.msra.mxu0 0
        %7914 = vmatprep.mubr.bf16.mxu0 0
        %7915 = vmatmul.mubr.bf16.gmra.mrb[0].mxu0 %v7865
        %v7916 = vpop.f32.mrb[0].mxu0
        %v7917 = vadd.f32 0.0, %v7916
        %v7918 = vpop.f32.mrb[0].mxu0
        %v7919 = vadd.f32 0.0, %v7918
        %v7920 = vpop.f32.mrb[0].mxu0
        %v7921 = vadd.f32 0.0, %v7920
        %v7922 = vpop.f32.mrb[0].mxu0
        %v7923 = vadd.f32 0.0, %v7922
        %7924 = vmatprep.mubr.bf16.mxu0 0
        %7925 = vmatmul.mubr.bf16.gmra.mrb[0].mxu0 %v7868
        %v7926 = vpop.f32.mrb[0].mxu0
        %v7927 = vadd.f32 0.0, %v7926
        %v7928 = vpop.f32.mrb[0].mxu0
        %v7929 = vadd.f32 0.0, %v7928
        %v7930 = vpop.f32.mrb[0].mxu0
        %v7931 = vadd.f32 0.0, %v7930
        %v7932 = vpop.f32.mrb[0].mxu0
        %v7933 = vadd.f32 0.0, %v7932
        %7934 = vmatprep.mubr.bf16.mxu0 0
        %7935 = vmatmul.mubr.bf16.gmra.mrb[0].mxu0 %v7871
        %v7936 = vpop.f32.mrb[0].mxu0
        %v7937 = vadd.f32 0.0, %v7936
        %v7938 = vpop.f32.mrb[0].mxu0
        %v7939 = vadd.f32 0.0, %v7938
        %v7940 = vpop.f32.mrb[0].mxu0
        %v7941 = vadd.f32 0.0, %v7940
        %v7942 = vpop.f32.mrb[0].mxu0
        %v7943 = vadd.f32 0.0, %v7942
        %7944 = vmatprep.mubr.bf16.mxu0 0
        %7945 = vmatmul.mubr.bf16.gmra.mrb[0].mxu0 %v7874
        %v7946 = vpop.f32.mrb[0].mxu0
        %v7947 = vadd.f32 0.0, %v7946
        %v7948 = vpop.f32.mrb[0].mxu0
        %v7949 = vadd.f32 0.0, %v7948
        %v7950 = vpop.f32.mrb[0].mxu0
        %v7951 = vadd.f32 0.0, %v7950
        %v7952 = vpop.f32.mrb[0].mxu0
        %v7953 = vadd.f32 0.0, %v7952
        %7954 = vdwg.mxu0
        %v7955 = vadd.f32 %v7797, %v7917
        %v7956 = vadd.f32 %v7798, %v7919
        %v7957 = vadd.f32 %v7799, %v7921
        %v7958 = vadd.f32 %v7800, %v7923
        %v7959 = vadd.f32 %v7801, %v7927
        %v7960 = vadd.f32 %v7802, %v7929
        %v7961 = vadd.f32 %v7803, %v7931
        %v7962 = vadd.f32 %v7804, %v7933
        %v7963 = vadd.f32 %v7805, %v7937
        %v7964 = vadd.f32 %v7806, %v7939
        %v7965 = vadd.f32 %v7807, %v7941
        %v7966 = vadd.f32 %v7808, %v7943
        %v7967 = vadd.f32 %v7809, %v7947
        %v7968 = vadd.f32 %v7810, %v7949
        %v7969 = vadd.f32 %v7811, %v7951
        %v7970 = vadd.f32 %v7812, %v7953
        %v7971 = vld [vmem:[%s18] sm:$0x3]
        %v7973 = vlaneseq
        %v7974 = vshrl.u32 %v7973, 7
        %v7975 = vsub.s32 0, %v7974
        %v7976 = vrot.slane %v7971, %v7975
        %v7977 = vlaneseq
        %v7978 = vshrl.u32 %v7977, 7
        %v7979 = vsub.s32 1, %v7978
        %v7980 = vrot.slane %v7971, %v7979
        %v7983 = vadd.f32 %v7955, %v7976
        %v7984 = vadd.f32 %v7956, %v7980
        %v7985 = vadd.f32 %v7957, %v7976
        %v7986 = vadd.f32 %v7958, %v7980
        %v7987 = vadd.f32 %v7959, %v7976
        %v7988 = vadd.f32 %v7960, %v7980
        %v7989 = vadd.f32 %v7961, %v7976
        %v7990 = vadd.f32 %v7962, %v7980
        %v7991 = vadd.f32 %v7963, %v7976
        %v7992 = vadd.f32 %v7964, %v7980
        %v7993 = vadd.f32 %v7965, %v7976
        %v7994 = vadd.f32 %v7966, %v7980
        %v7995 = vadd.f32 %v7967, %v7976
        %v7996 = vadd.f32 %v7968, %v7980
        %v7997 = vadd.f32 %v7969, %v7976
        %v7998 = vadd.f32 %v7970, %v7980
        %v7999 = vmax.f32 %v7983, 0.0
        %v8000 = vmax.f32 %v7984, 0.0
        %v8001 = vmax.f32 %v7985, 0.0
        %v8002 = vmax.f32 %v7986, 0.0
        %v8003 = vmax.f32 %v7987, 0.0
        %v8004 = vmax.f32 %v7988, 0.0
        %v8005 = vmax.f32 %v7989, 0.0
        %v8006 = vmax.f32 %v7990, 0.0
        %v8007 = vmax.f32 %v7991, 0.0
        %v8008 = vmax.f32 %v7992, 0.0
        %v8009 = vmax.f32 %v7993, 0.0
        %v8010 = vmax.f32 %v7994, 0.0
        %v8011 = vmax.f32 %v7995, 0.0
        %v8012 = vmax.f32 %v7996, 0.0
        %v8013 = vmax.f32 %v7997, 0.0
        %v8014 = vmax.f32 %v7998, 0.0
        %s8015 = scalar_lea.vmem %s884, 256 [#allocation32]
        %8016 = vst [vmem:[%s8015] sm:$0xff] %v7999
        %8017 = vst.msk [vmem:[%s8015 + $0x8] sm:$0xff] %vm919, %v8000
        %8018 = vst [vmem:[%s8015 + $0x10] sm:$0xff] %v8001
        %8019 = vst.msk [vmem:[%s8015 + $0x18] sm:$0xff] %vm919, %v8002
        %8020 = vst [vmem:[%s8015 + $0x20] sm:$0xff] %v8003
        %8021 = vst.msk [vmem:[%s8015 + $0x28] sm:$0xff] %vm919, %v8004
        %8022 = vst [vmem:[%s8015 + $0x30] sm:$0xff] %v8005
        %8023 = vst.msk [vmem:[%s8015 + $0x38] sm:$0xff] %vm919, %v8006
        %8024 = vst [vmem:[%s8015 + $0x40] sm:$0xff] %v8007
        %8025 = vst.msk [vmem:[%s8015 + $0x48] sm:$0xff] %vm919, %v8008
        %8026 = vst [vmem:[%s8015 + $0x50] sm:$0xff] %v8009
        %8027 = vst.msk [vmem:[%s8015 + $0x58] sm:$0xff] %vm919, %v8010
        %8028 = vst [vmem:[%s8015 + $0x60] sm:$0xff] %v8011
        %8029 = vst.msk [vmem:[%s8015 + $0x68] sm:$0xff] %vm919, %v8012
        %8030 = vst [vmem:[%s8015 + $0x70] sm:$0xff] %v8013
        %8031 = vst.msk [vmem:[%s8015 + $0x78] sm:$0xff] %vm919, %v8014
        %s8032 = sand.u32 %s500, 1
        %s8033 = scalar_lea.sflag [#allocation7], %s8032
        %s8034 = sand.u32 %s500, 1
        %s8035 = smul.addr %s8034, 512
        %s8036 = scalar_lea.vmem [#allocation32], %s8035
        // Predicated region
        $region173: #{tpu_custom_call.1} parent=103 // pred_check
          %p8037 = pneg %p510
        $region174: #{tpu_custom_call.1} parent=103 // pred_check_branch
          %8039 = sbr.rel (%p8037) target = $region176
        $region175: #{tpu_custom_call.1} parent=103 // pred_region
          %s8041 = ssub.s32 8192, 8192
          %8042 = vsyncadd %s8033, %s8041
          %s8043 = smul.addr %s46, 64
          %s8044 = smul.addr %s8043, 128
          %s8045 = scalar_lea.hbm %s21, %s8044
          %s8046 = sshll.u32 %s8036, 4
          %s8047 = int_to_ptr.vmem [resolvable:$true] %s8046
          %8052 = dma.vmem_to_hbm [thread:$0]  %s8047, 8192, %s8045, %s8033, 256, 256, 16
        $region176: #{tpu_custom_call.1} parent=103 // pred_fallthru
          _
      $region104: #{tpu_custom_call.1} parent=5 // pred_fallthru
        _
      %p8053 = scmp.le.s32.totalorder 2, %s41
      // Predicated region
      $region177: #{tpu_custom_call.1} parent=5 // pred_check
        %p8054 = pneg %p8053
      $region178: #{tpu_custom_call.1} parent=5 // pred_check_branch
        %8056 = sbr.rel (%p8054) target = $region180
      $region179: #{tpu_custom_call.1} parent=5 // pred_region
        %s8057 = ssub.s32 %s41, 2
        // Predicated region
        $region181: #{tpu_custom_call.1} parent=179 // pred_check
          %p8058 = pneg %p516
        $region182: #{tpu_custom_call.1} parent=179 // pred_check_branch
          %8060 = sbr.rel (%p8058) target = $region184
        $region183: #{tpu_custom_call.1} parent=179 // pred_region
          %s8061 = sand.u32 %s501, 1
          %s8062 = scalar_lea.sflag [#allocation7], %s8061
          %s8063 = sand.u32 %s501, 1
          %s8064 = smul.addr %s8063, 512
          %s8065 = scalar_lea.vmem [#allocation32], %s8064
          %8066 = dma.done %s8062, 8192
        $region184: #{tpu_custom_call.1} parent=179 // pred_fallthru
          _
      $region180: #{tpu_custom_call.1} parent=5 // pred_fallthru
        _
    $region6: #{tpu_custom_call.1} parent=1 // loop_footer
      %s45 = sadd.s32 1, %s41
    $region7: #{tpu_custom_call.1} parent=1 // loop_footer_branch
      %40 = sbr.rel target = $region3
    $region8: #{tpu_custom_call.1} parent=1 // loop_exit
      _
    %8067 = vsyncpa [#allocation6], 1
    %s8068 = scalar_lea.sflag [#allocation6], 1
    %8069 = vsyncpa %s8068, 1
    %8070 = vsyncpa [#allocation9], 1
    %8071 = vsyncpa [#allocation12], 1
    %8072 = vsyncpa [#allocation15], 1
    %8073 = vsyncpa [#allocation18], 1
    %8074 = vsyncpa [#allocation21], 1
    %8075 = vsyncpa [#allocation24], 1
    %8076 = vsyncpa [#allocation27], 1
    %8077 = vsyncpa [#allocation30], 1
    %8078 = vsyncpa [#allocation7], 1
    %s8079 = scalar_lea.sflag [#allocation7], 1
    %8080 = vsyncpa %s8079, 1

</llo_original>
